<compile_context>
chip_gen: v7x
topology: tpu7x:2x2x1
jax: 0.10.0
libtpu: 0.0.40
codegen_flags: <defaults>
</compile_context>

<pallas_src>
import functools

import jax
import jax.numpy as jnp
from jax.experimental import pallas as pl
from jax.experimental.pallas import tpu as pltpu

_VMEM_LIMIT = 48 * 1024 * 1024    # explicit scoped-VMEM budget (safe on v5e/v6e/v7x)


def _cparams(*sem):
    return pltpu.CompilerParams(dimension_semantics=sem,
                                vmem_limit_bytes=_VMEM_LIMIT)


def _activate(y, act):
    if act == "relu":
        return jnp.maximum(y, 0.0)
    if act == "swish":
        return y * jax.nn.sigmoid(y)
    return y


def _row_block(M, want):
    """Row-tile size + padded row count. `want` is a multiple of 8."""
    if M <= want:
        return M, M
    Mp = ((M + want - 1) // want) * want
    return want, Mp


# ----------------------------------------------------------------------------
# K1: generic M-tiled matmul + folded-BN + activation (used for the expand conv)
# ----------------------------------------------------------------------------
def _matmul_bn_act_kernel(x_ref, w_ref, scale_ref, shift_ref, o_ref, *, act):
    acc = jnp.dot(x_ref[...], w_ref[...], preferred_element_type=jnp.float32)
    y = acc * scale_ref[...] + shift_ref[...]
    o_ref[...] = _activate(y, act).astype(o_ref.dtype)


def matmul_bn_act(x, w, scale, shift, act="none", out_dtype=jnp.float32,
                  block_m=512):
    """act((x @ w) * scale + shift); grid over M row tiles, weight resident."""
    M, K = x.shape
    N = w.shape[1]
    bm, Mp = _row_block(M, block_m)
    xb = x.astype(jnp.bfloat16)
    if Mp != M:
        xb = jnp.pad(xb, ((0, Mp - M), (0, 0)))
    out = pl.pallas_call(
        functools.partial(_matmul_bn_act_kernel, act=act),
        grid=(Mp // bm,),
        in_specs=[pl.BlockSpec((bm, K), lambda i: (i, 0)),
                  pl.BlockSpec((K, N), lambda i: (0, 0)),
                  pl.BlockSpec((1, N), lambda i: (0, 0)),
                  pl.BlockSpec((1, N), lambda i: (0, 0))],
        out_specs=pl.BlockSpec((bm, N), lambda i: (i, 0)),
        out_shape=jax.ShapeDtypeStruct((Mp, N), out_dtype),
        compiler_params=_cparams("parallel"),
    )(xb, w.astype(jnp.bfloat16),
      scale.reshape(1, N).astype(jnp.float32),
      shift.reshape(1, N).astype(jnp.float32))
    return out if Mp == M else out[:M]


# ----------------------------------------------------------------------------
# K2: fused conv1-BN-ReLU  ->  conv2(1x1, 64->16)-BN-ReLU
#     (conv1 itself is a weight gather done in glue; see conv1_gather)
# ----------------------------------------------------------------------------
def _conv12_kernel(h_ref, w2_ref, s1_ref, b1_ref, s2_ref, b2_ref, o_ref):
    h = h_ref[...]
    y1 = jnp.maximum(h * s1_ref[...] + b1_ref[...], 0.0)          # BN1 + ReLU (f32)
    acc = jnp.dot(y1.astype(jnp.bfloat16), w2_ref[...],
                  preferred_element_type=jnp.float32)
    o_ref[...] = jnp.maximum(acc * s2_ref[...] + b2_ref[...], 0.0)


def conv12_bn_relu(h64, w2, s1, b1, s2, b2, block_m=1024):
    M, K = h64.shape
    N = w2.shape[1]
    bm, Mp = _row_block(M, block_m)
    x = h64.astype(jnp.float32)
    if Mp != M:
        x = jnp.pad(x, ((0, Mp - M), (0, 0)))
    out = pl.pallas_call(
        _conv12_kernel,
        grid=(Mp // bm,),
        in_specs=[pl.BlockSpec((bm, K), lambda i: (i, 0)),
                  pl.BlockSpec((K, N), lambda i: (0, 0)),
                  pl.BlockSpec((1, K), lambda i: (0, 0)),
                  pl.BlockSpec((1, K), lambda i: (0, 0)),
                  pl.BlockSpec((1, N), lambda i: (0, 0)),
                  pl.BlockSpec((1, N), lambda i: (0, 0))],
        out_specs=pl.BlockSpec((bm, N), lambda i: (i, 0)),
        out_shape=jax.ShapeDtypeStruct((Mp, N), jnp.float32),
        compiler_params=_cparams("parallel"),
    )(x, w2.astype(jnp.bfloat16),
      s1.reshape(1, K).astype(jnp.float32), b1.reshape(1, K).astype(jnp.float32),
      s2.reshape(1, N).astype(jnp.float32), b2.reshape(1, N).astype(jnp.float32))
    return out if Mp == M else out[:M]


# ----------------------------------------------------------------------------
# K3: fused stem = (qtembed scale + concat + AddCoords + conv0 8x8/s8) + BN + ReLU
#     conv0(patch35) == patch16 @ (W0a*qvec[b] + W0b) + coords_patch @ W0c
# ----------------------------------------------------------------------------
def _stem_kernel(x_ref, w_ref, cb_ref, scale_ref, shift_ref, o_ref):
    acc = jnp.dot(x_ref[0], w_ref[0], preferred_element_type=jnp.float32)
    y = (acc + cb_ref[...]) * scale_ref[...] + shift_ref[...]
    o_ref[0] = jnp.maximum(y, 0.0)


def stem_conv0(x_patch, w_eff, coord_bias, scale, shift, block_p=512):
    B, P, K = x_patch.shape
    N = w_eff.shape[-1]
    bp, Pp = _row_block(P, block_p)
    x = x_patch.astype(jnp.bfloat16)
    cb = coord_bias.astype(jnp.float32)
    if Pp != P:
        x = jnp.pad(x, ((0, 0), (0, Pp - P), (0, 0)))
        cb = jnp.pad(cb, ((0, Pp - P), (0, 0)))
    out = pl.pallas_call(
        _stem_kernel,
        grid=(B, Pp // bp),
        in_specs=[pl.BlockSpec((1, bp, K), lambda b, p: (b, p, 0)),
                  pl.BlockSpec((1, K, N), lambda b, p: (b, 0, 0)),
                  pl.BlockSpec((bp, N), lambda b, p: (p, 0)),
                  pl.BlockSpec((1, N), lambda b, p: (0, 0)),
                  pl.BlockSpec((1, N), lambda b, p: (0, 0))],
        out_specs=pl.BlockSpec((1, bp, N), lambda b, p: (b, p, 0)),
        out_shape=jax.ShapeDtypeStruct((B, Pp, N), jnp.float32),
        compiler_params=_cparams("parallel", "parallel"),
    )(x, w_eff.astype(jnp.bfloat16), cb,
      scale.reshape(1, N).astype(jnp.float32),
      shift.reshape(1, N).astype(jnp.float32))
    return out if Pp == P else out[:, :P]


# ----------------------------------------------------------------------------
# K4: depthwise 3x3 + BN + swish, channel-tiled, SE average-pool fused
# ----------------------------------------------------------------------------
def _dw3x3_kernel(xp_ref, w_ref, scale_ref, shift_ref, o_ref, pool_ref, *, H, W):
    x = xp_ref[0].astype(jnp.float32)            # (H+2, W+2, ct)
    w = w_ref[...].astype(jnp.float32)           # (3, 3, ct)
    ct = x.shape[-1]
    acc = jnp.zeros((H, W, ct), jnp.float32)
    for kh in range(3):                          # 9 static taps
        for kw in range(3):
            acc = acc + x[kh:kh + H, kw:kw + W, :] * w[kh, kw]
    y = acc * scale_ref[...] + shift_ref[...]
    y = y * jax.nn.sigmoid(y)                    # swish epilogue in f32
    o_ref[0] = y.astype(o_ref.dtype)
    # SE squeeze fused here: the whole spatial extent is in-block per channel tile
    pool_ref[...] = jnp.mean(y, axis=(0, 1), keepdims=True)


def depthwise3x3_bn_swish_pool(x, w, scale, shift, block_c=256):
    B, H, W, C = x.shape
    ct = block_c if C % block_c == 0 else C
    xp = jnp.pad(x.astype(jnp.bfloat16), ((0, 0), (1, 1), (1, 1), (0, 0)))
    y, pool = pl.pallas_call(
        functools.partial(_dw3x3_kernel, H=H, W=W),
        grid=(B, C // ct),
        in_specs=[pl.BlockSpec((1, H + 2, W + 2, ct), lambda b, c: (b, 0, 0, c)),
                  pl.BlockSpec((3, 3, ct), lambda b, c: (0, 0, c)),
                  pl.BlockSpec((1, ct), lambda b, c: (0, c)),
                  pl.BlockSpec((1, ct), lambda b, c: (0, c))],
        out_specs=[pl.BlockSpec((1, H, W, ct), lambda b, c: (b, 0, 0, c)),
                   pl.BlockSpec((1, 1, ct), lambda b, c: (b, 0, c))],
        out_shape=(jax.ShapeDtypeStruct((B, H, W, C), jnp.bfloat16),
                   jax.ShapeDtypeStruct((B, 1, C), jnp.float32)),
        compiler_params=_cparams("parallel", "parallel"),
    )(xp, w.astype(jnp.float32),
      scale.reshape(1, C).astype(jnp.float32),
      shift.reshape(1, C).astype(jnp.float32))
    return y, pool.reshape(B, C)


# ----------------------------------------------------------------------------
# K5: SE reduce->swish->expand->sigmoid collapsed into one tiny kernel
# ----------------------------------------------------------------------------
def _se_mlp_kernel(p_ref, wr_ref, br_ref, we_ref, be_ref, g_ref):
    p = p_ref[...].astype(jnp.bfloat16)
    s = jnp.dot(p, wr_ref[...], preferred_element_type=jnp.float32) + br_ref[...]
    s = s * jax.nn.sigmoid(s)                    # swish
    g = jnp.dot(s.astype(jnp.bfloat16), we_ref[...],
                preferred_element_type=jnp.float32) + be_ref[...]
    g_ref[...] = jax.nn.sigmoid(g)               # gate (applied in the proj kernel)


def se_gate(pooled, wr, br, we, be):
    B, C = pooled.shape
    S = wr.shape[1]
    return pl.pallas_call(
        _se_mlp_kernel,
        out_shape=jax.ShapeDtypeStruct((B, C), jnp.float32),
    )(pooled.astype(jnp.float32), wr.astype(jnp.bfloat16),
      br.reshape(1, S).astype(jnp.float32), we.astype(jnp.bfloat16),
      be.reshape(1, C).astype(jnp.float32))


# ----------------------------------------------------------------------------
# K6: projection 1x1 conv + BN with the SE sigmoid gate fused on the input side
# ----------------------------------------------------------------------------
def _proj_gate_kernel(x_ref, g_ref, w_ref, scale_ref, shift_ref, o_ref):
    g = g_ref[0]                                           # (1, Cexp) f32 gate
    xg = (x_ref[0].astype(jnp.float32) * g).astype(jnp.bfloat16)
    acc = jnp.dot(xg, w_ref[...], preferred_element_type=jnp.float32)
    o_ref[0] = acc * scale_ref[...] + shift_ref[...]       # BN, no activation


def proj_gated(x, gate, w, scale, shift, block_p=512):
    B, P, C = x.shape
    N = w.shape[1]
    bp, Pp = _row_block(P, block_p)
    xb = x.astype(jnp.bfloat16)
    if Pp != P:
        xb = jnp.pad(xb, ((0, 0), (0, Pp - P), (0, 0)))
    out = pl.pallas_call(
        _proj_gate_kernel,
        grid=(B, Pp // bp),
        in_specs=[pl.BlockSpec((1, bp, C), lambda b, p: (b, p, 0)),
                  pl.BlockSpec((1, 1, C), lambda b, p: (b, 0, 0)),
                  pl.BlockSpec((C, N), lambda b, p: (0, 0)),
                  pl.BlockSpec((1, N), lambda b, p: (0, 0)),
                  pl.BlockSpec((1, N), lambda b, p: (0, 0))],
        out_specs=pl.BlockSpec((1, bp, N), lambda b, p: (b, p, 0)),
        out_shape=jax.ShapeDtypeStruct((B, Pp, N), jnp.float32),
        compiler_params=_cparams("parallel", "parallel"),
    )(xb, gate.reshape(B, 1, C).astype(jnp.float32), w.astype(jnp.bfloat16),
      scale.reshape(1, N).astype(jnp.float32),
      shift.reshape(1, N).astype(jnp.float32))
    return out if Pp == P else out[:, :P]


# ----------------------------------------------------------------------------
# Parameter setup (deterministic, synthetic) + BN folding
# ----------------------------------------------------------------------------
def fold_bn(c, eps, conv_bias=None):
    gamma = jnp.ones((c,), jnp.float32)
    beta = jnp.zeros((c,), jnp.float32)
    rmean = jnp.zeros((c,), jnp.float32)
    rvar = jnp.ones((c,), jnp.float32)
    scale = gamma / jnp.sqrt(rvar + eps)
    shift = beta - rmean * scale
    if conv_bias is not None:
        shift = shift + conv_bias * scale
    return scale, shift


def make_coords(H, W):
    # AddCoords (meshgrid 'ij'): xx follows rows (H), yy follows cols (W)
    xx = jnp.broadcast_to(
        (jnp.arange(H, dtype=jnp.float32) / (H - 1) * 2.0 - 1.0)[:, None], (H, W))
    yy = jnp.broadcast_to(
        (jnp.arange(W, dtype=jnp.float32) / (W - 1) * 2.0 - 1.0)[None, :], (H, W))
    rr = jnp.sqrt((xx - 0.5) ** 2 + (yy - 0.5) ** 2)
    return jnp.stack([xx, yy, rr], axis=-1)[None]      # (1, H, W, 3)


def init_params(key, H, W):
    keys = iter(jax.random.split(key, 32))

    def rn(shape, s=0.05):
        return jax.random.normal(next(keys), shape, dtype=jnp.float32) * s

    p = {}
    p["qtembed_w"] = rn((64, 16), 1.0)                   # nn.Embedding(64, 16)

    # conv1: Conv2d(21->64, k=3, dilation=8, padding=8, bias=True) + BN + ReLU
    p["conv1_w"] = rn((3, 3, 21, 64))                    # (kh,kw,cin,cout) for gather
    b1 = rn((64,))
    p["conv1_scale"], p["conv1_shift"] = fold_bn(64, 1e-5, conv_bias=b1)

    # conv2: Conv2d(64->16, k=1, bias=False) + BN + ReLU
    p["conv2_w"] = rn((64, 16))
    p["conv2_scale"], p["conv2_shift"] = fold_bn(16, 1e-5)

    # conv0 stem: Conv2d(35->256, k=8, s=8, bias=False) + BN + ReLU
    p["conv0_w"] = rn((8, 8, 35, 256))                   # split into q/x/coord parts
    p["conv0_scale"], p["conv0_shift"] = fold_bn(256, 1e-5)

    # 3 x MBConvBlock(256 -> 256, expand 6 -> 1536, k=3, s=[1], se 0.25 -> 64)
    blocks = []
    for _ in range(3):
        blk = {}
        blk["expand_w"] = rn((256, 1536))
        blk["bn0_scale"], blk["bn0_shift"] = fold_bn(1536, 1e-3)
        blk["dw_w"] = rn((3, 3, 1536))
        blk["bn1_scale"], blk["bn1_shift"] = fold_bn(1536, 1e-3)
        blk["se_r_w"] = rn((1536, 64))
        blk["se_r_b"] = rn((64,))
        blk["se_e_w"] = rn((64, 1536))
        blk["se_e_b"] = rn((1536,))
        blk["proj_w"] = rn((1536, 256))
        blk["bn2_scale"], blk["bn2_shift"] = fold_bn(256, 1e-3)
        blocks.append(blk)
    p["mbconv"] = blocks
    return p


# ----------------------------------------------------------------------------
# Forward pass
# ----------------------------------------------------------------------------
def conv1_gather(x_idx, w1, H, W):
    # obembed is the identity one-hot, so conv1(one_hot(x)) is a per-tap row
    # gather of the (3,3,21->64) weights summed over the 9 dilation-8 taps.
    # Padded positions map to an appended all-zero class row (index 21).
    cout = w1.shape[-1]
    w1e = jnp.concatenate([w1, jnp.zeros((3, 3, 1, cout), w1.dtype)], axis=2)
    idx = jnp.pad(x_idx, ((0, 0), (8, 8), (8, 8)), constant_values=21)
    acc = None
    for kh in range(3):
        for kw in range(3):
            tap = jnp.take(w1e[kh, kw],
                           idx[:, kh * 8:kh * 8 + H, kw * 8:kw * 8 + W], axis=0)
            acc = tap if acc is None else acc + tap
    return acc                       # (B, H, W, 64); conv1 bias folded into BN shift


def mbconv_block(x, blk):
    B, Hb, Wb, Cin = x.shape
    P = Hb * Wb
    # expand 1x1 conv + BN + swish  (bf16 output: halves HBM traffic of the big tensor)
    h = matmul_bn_act(x.reshape(B * P, Cin), blk["expand_w"],
                      blk["bn0_scale"], blk["bn0_shift"],
                      act="swish", out_dtype=jnp.bfloat16)
    Cexp = h.shape[-1]
    h = h.reshape(B, Hb, Wb, Cexp)
    # depthwise 3x3 + BN + swish, SE average-pool fused in the epilogue
    y, pooled = depthwise3x3_bn_swish_pool(h, blk["dw_w"],
                                           blk["bn1_scale"], blk["bn1_shift"])
    # SE reduce/expand/sigmoid in one tiny kernel
    gate = se_gate(pooled, blk["se_r_w"], blk["se_r_b"],
                   blk["se_e_w"], blk["se_e_b"])
    # project 1x1 conv + BN with the gate applied inside the matmul kernel
    out = proj_gated(y.reshape(B, P, Cexp), gate, blk["proj_w"],
                     blk["bn2_scale"], blk["bn2_shift"])
    # id_skip residual intentionally NOT applied (stride == [1] != 1 in ref code)
    return out.reshape(B, Hb, Wb, -1)


def fph_forward(x_idx, qtable, params):
    B, H, W = x_idx.shape
    Hb, Wb = H // 8, W // 8
    P = Hb * Wb

    # --- conv1 (dilated 3x3 over one-hot) as gather, fused BN/ReLU + conv2 ---
    h64 = conv1_gather(x_idx, params["conv1_w"], H, W)              # (B,H,W,64)
    y16 = conv12_bn_relu(h64.reshape(B * H * W, 64), params["conv2_w"],
                         params["conv1_scale"], params["conv1_shift"],
                         params["conv2_scale"], params["conv2_shift"])
    # per-8x8-patch flatten (i, j, c) for the stride-8 stem (small glue transpose)
    y16 = y16.reshape(B, Hb, 8, Wb, 8, 16).transpose(0, 1, 3, 2, 4, 5)
    y16 = y16.reshape(B, P, 8 * 8 * 16)                             # (B, P, 1024)

    # --- qtembed scale + concat + AddCoords + conv0 folded into a per-batch
    #     (1024 x 256) weight plus a precomputed coord bias (tiny glue prep) ---
    w0 = params["conv0_w"]                                          # (8,8,35,256)
    w0a = w0[:, :, 0:16, :].reshape(1024, 256)                      # scaled-x part
    w0b = w0[:, :, 16:32, :].reshape(1024, 256)                     # raw-x part
    w0c = w0[:, :, 32:35, :].reshape(192, 256)                      # coord part
    qvec = params["qtembed_w"][qtable[:, 0]].reshape(B, 1024)       # (B, 8*8*16)
    w_eff = w0a[None] * qvec[:, :, None] + w0b[None]                # (B, 1024, 256)
    coords = make_coords(H, W)[0]                                   # (H, W, 3)
    cpatch = coords.reshape(Hb, 8, Wb, 8, 3).transpose(0, 2, 1, 3, 4).reshape(P, 192)
    coord_bias = cpatch @ w0c                  # (P, 256), constant per resolution
    h = stem_conv0(y16, w_eff, coord_bias,
                   params["conv0_scale"], params["conv0_shift"])    # (B, P, 256)
    h = h.reshape(B, Hb, Wb, 256)

    for blk in params["mbconv"]:
        h = mbconv_block(h, blk)

    # return NCHW to match PyTorch: (B, 256, H//8, W//8)
    return h.transpose(0, 3, 1, 2)


# ----------------------------------------------------------------------------
if __name__ == "__main__":
    key = jax.random.PRNGKey(0)
    k_x, k_q, k_p = jax.random.split(key, 3)

    B, H, W = 2, 16, 16
    x_idx = jax.random.randint(k_x, (B, H, W), 0, 21, dtype=jnp.int32)
    qtable = jax.random.randint(k_q, (B, 1, 8, 8), 0, 64, dtype=jnp.int32)
    params = init_params(k_p, H, W)

    out = jax.jit(fph_forward)(x_idx, qtable, params)
    out = jax.block_until_ready(out)
    assert out.shape == (B, 256, H // 8, W // 8), out.shape
    assert bool(jnp.isfinite(out).all())
    print("KERNEL_OK")
</pallas_src>

<mosaic_0001>
module attributes {stable_mosaic.version = 11 : i64} {
  func.func @_conv12_kernel(%arg0: i32, %arg1: memref<512x64xf32, #tpu.memory_space<vmem>>, %arg2: memref<64x16xbf16, #tpu.memory_space<vmem>>, %arg3: memref<1x64xf32, #tpu.memory_space<vmem>>, %arg4: memref<1x64xf32, #tpu.memory_space<vmem>>, %arg5: memref<1x16xf32, #tpu.memory_space<vmem>>, %arg6: memref<1x16xf32, #tpu.memory_space<vmem>>, %arg7: memref<512x16xf32, #tpu.memory_space<vmem>>) attributes {dimension_semantics = [#tpu.dimension_semantics<parallel>], iteration_bounds = array<i64: 1>, scalar_prefetch = 0 : i64, scratch_operands = 0 : i64, tpu.core_type = #tpu.core_type<tc>, window_params = [{transform_indices = @transform_0, window_bounds = array<i64: 512, 64>}, {pipeline_mode = #tpu.pipeline_mode<synchronous>, transform_indices = @transform_1, window_bounds = array<i64: 64, 16>}, {pipeline_mode = #tpu.pipeline_mode<synchronous>, transform_indices = @transform_2, window_bounds = array<i64: 1, 64>}, {pipeline_mode = #tpu.pipeline_mode<synchronous>, transform_indices = @transform_3, window_bounds = array<i64: 1, 64>}, {pipeline_mode = #tpu.pipeline_mode<synchronous>, transform_indices = @transform_4, window_bounds = array<i64: 1, 16>}, {pipeline_mode = #tpu.pipeline_mode<synchronous>, transform_indices = @transform_5, window_bounds = array<i64: 1, 16>}, {transform_indices = @transform_6, window_bounds = array<i64: 512, 16>}]} {
    %c0 = arith.constant 0 : index
    %c0_0 = arith.constant 0 : index
    %0 = vector.load %arg1[%c0, %c0_0] : memref<512x64xf32, #tpu.memory_space<vmem>>, vector<512x64xf32>
    %c0_1 = arith.constant 0 : index
    %c0_2 = arith.constant 0 : index
    %1 = vector.load %arg3[%c0_1, %c0_2] : memref<1x64xf32, #tpu.memory_space<vmem>>, vector<1x64xf32>
    %2 = vector.broadcast %1 : vector<1x64xf32> to vector<512x64xf32>
    %3 = arith.mulf %0, %2 : vector<512x64xf32>
    %c0_3 = arith.constant 0 : index
    %c0_4 = arith.constant 0 : index
    %4 = vector.load %arg4[%c0_3, %c0_4] : memref<1x64xf32, #tpu.memory_space<vmem>>, vector<1x64xf32>
    %5 = vector.broadcast %4 : vector<1x64xf32> to vector<512x64xf32>
    %6 = arith.addf %3, %5 : vector<512x64xf32>
    %cst = arith.constant 0.000000e+00 : f32
    %7 = vector.broadcast %cst : f32 to vector<512x64xf32>
    %8 = arith.maximumf %6, %7 : vector<512x64xf32>
    %9 = arith.truncf %8 : vector<512x64xf32> to vector<512x64xbf16>
    %c0_5 = arith.constant 0 : index
    %c0_6 = arith.constant 0 : index
    %10 = vector.load %arg2[%c0_5, %c0_6] : memref<64x16xbf16, #tpu.memory_space<vmem>>, vector<64x16xbf16>
    %cst_7 = arith.constant dense<0.000000e+00> : vector<512x16xf32>
    %11 = tpu.matmul %9, %10, %cst_7 {dimension_numbers = #tpu.dot_dimension_numbers<[1], [0], [0], [1], [0, 0, 1, 1], [], []>} : vector<512x64xbf16>, vector<64x16xbf16>, vector<512x16xf32> -> vector<512x16xf32>
    %c0_8 = arith.constant 0 : index
    %c0_9 = arith.constant 0 : index
    %12 = vector.load %arg5[%c0_8, %c0_9] : memref<1x16xf32, #tpu.memory_space<vmem>>, vector<1x16xf32>
    %13 = vector.broadcast %12 : vector<1x16xf32> to vector<512x16xf32>
    %14 = arith.mulf %11, %13 : vector<512x16xf32>
    %c0_10 = arith.constant 0 : index
    %c0_11 = arith.constant 0 : index
    %15 = vector.load %arg6[%c0_10, %c0_11] : memref<1x16xf32, #tpu.memory_space<vmem>>, vector<1x16xf32>
    %16 = vector.broadcast %15 : vector<1x16xf32> to vector<512x16xf32>
    %17 = arith.addf %14, %16 : vector<512x16xf32>
    %cst_12 = arith.constant 0.000000e+00 : f32
    %18 = vector.broadcast %cst_12 : f32 to vector<512x16xf32>
    %19 = arith.maximumf %17, %18 : vector<512x16xf32>
    %c0_13 = arith.constant 0 : index
    %c0_14 = arith.constant 0 : index
    %20 = vector.load %arg7[%c0_13, %c0_14] : memref<512x16xf32, #tpu.memory_space<vmem>>, vector<512x16xf32>
    tpu.vector_store %arg7[%c0_13, %c0_14], %19 {strides = array<i32>} : memref<512x16xf32, #tpu.memory_space<vmem>>, vector<512x16xf32>,
    return
  }
  func.func @transform_0(%arg0: i32) -> (i32, i32) {
    %c0_i32 = arith.constant 0 : i32
    %c0_i32_0 = arith.constant 0 : i32
    return %arg0, %c0_i32 : i32, i32
  }
  func.func @transform_1(%arg0: i32) -> (i32, i32) {
    %c0_i32 = arith.constant 0 : i32
    %c0_i32_0 = arith.constant 0 : i32
    %c0_i32_1 = arith.constant 0 : i32
    return %c0_i32, %c0_i32_0 : i32, i32
  }
  func.func @transform_2(%arg0: i32) -> (i32, i32) {
    %c0_i32 = arith.constant 0 : i32
    %c0_i32_0 = arith.constant 0 : i32
    %c0_i32_1 = arith.constant 0 : i32
    return %c0_i32, %c0_i32_0 : i32, i32
  }
  func.func @transform_3(%arg0: i32) -> (i32, i32) {
    %c0_i32 = arith.constant 0 : i32
    %c0_i32_0 = arith.constant 0 : i32
    %c0_i32_1 = arith.constant 0 : i32
    return %c0_i32, %c0_i32_0 : i32, i32
  }
  func.func @transform_4(%arg0: i32) -> (i32, i32) {
    %c0_i32 = arith.constant 0 : i32
    %c0_i32_0 = arith.constant 0 : i32
    %c0_i32_1 = arith.constant 0 : i32
    return %c0_i32, %c0_i32_0 : i32, i32
  }
  func.func @transform_5(%arg0: i32) -> (i32, i32) {
    %c0_i32 = arith.constant 0 : i32
    %c0_i32_0 = arith.constant 0 : i32
    %c0_i32_1 = arith.constant 0 : i32
    return %c0_i32, %c0_i32_0 : i32, i32
  }
  func.func @transform_6(%arg0: i32) -> (i32, i32) {
    %c0_i32 = arith.constant 0 : i32
    %c0_i32_0 = arith.constant 0 : i32
    return %arg0, %c0_i32 : i32, i32
  }
}

module attributes {stable_mosaic.version = 11 : i64} {
  func.func @_stem_kernel(%arg0: i32, %arg1: i32, %arg2: memref<1x4x1024xbf16, #tpu.memory_space<vmem>>, %arg3: memref<1x1024x256xbf16, #tpu.memory_space<vmem>>, %arg4: memref<4x256xf32, #tpu.memory_space<vmem>>, %arg5: memref<1x256xf32, #tpu.memory_space<vmem>>, %arg6: memref<1x256xf32, #tpu.memory_space<vmem>>, %arg7: memref<1x4x256xf32, #tpu.memory_space<vmem>>) attributes {dimension_semantics = [#tpu.dimension_semantics<parallel>, #tpu.dimension_semantics<parallel>], iteration_bounds = array<i64: 2, 1>, scalar_prefetch = 0 : i64, scratch_operands = 0 : i64, tpu.core_type = #tpu.core_type<tc>, window_params = [{transform_indices = @transform_0, window_bounds = array<i64: 1, 4, 1024>}, {transform_indices = @transform_1, window_bounds = array<i64: 1, 1024, 256>}, {transform_indices = @transform_2, window_bounds = array<i64: 4, 256>}, {pipeline_mode = #tpu.pipeline_mode<synchronous>, transform_indices = @transform_3, window_bounds = array<i64: 1, 256>}, {pipeline_mode = #tpu.pipeline_mode<synchronous>, transform_indices = @transform_4, window_bounds = array<i64: 1, 256>}, {transform_indices = @transform_5, window_bounds = array<i64: 1, 4, 256>}]} {
    %c0 = arith.constant 0 : index
    %c0_0 = arith.constant 0 : index
    %c0_1 = arith.constant 0 : index
    %0 = vector.load %arg2[%c0, %c0_0, %c0_1] : memref<1x4x1024xbf16, #tpu.memory_space<vmem>>, vector<1x4x1024xbf16>
    %1 = vector.shape_cast %0 : vector<1x4x1024xbf16> to vector<4x1024xbf16>
    %c0_2 = arith.constant 0 : index
    %c0_3 = arith.constant 0 : index
    %c0_4 = arith.constant 0 : index
    %2 = vector.load %arg3[%c0_2, %c0_3, %c0_4] : memref<1x1024x256xbf16, #tpu.memory_space<vmem>>, vector<1x1024x256xbf16>
    %3 = vector.shape_cast %2 : vector<1x1024x256xbf16> to vector<1024x256xbf16>
    %cst = arith.constant dense<0.000000e+00> : vector<4x256xf32>
    %4 = tpu.matmul %1, %3, %cst {dimension_numbers = #tpu.dot_dimension_numbers<[1], [0], [0], [1], [0, 0, 1, 1], [], []>} : vector<4x1024xbf16>, vector<1024x256xbf16>, vector<4x256xf32> -> vector<4x256xf32>
    %c0_5 = arith.constant 0 : index
    %c0_6 = arith.constant 0 : index
    %5 = vector.load %arg4[%c0_5, %c0_6] : memref<4x256xf32, #tpu.memory_space<vmem>>, vector<4x256xf32>
    %6 = arith.addf %4, %5 : vector<4x256xf32>
    %c0_7 = arith.constant 0 : index
    %c0_8 = arith.constant 0 : index
    %7 = vector.load %arg5[%c0_7, %c0_8] : memref<1x256xf32, #tpu.memory_space<vmem>>, vector<1x256xf32>
    %8 = vector.broadcast %7 : vector<1x256xf32> to vector<4x256xf32>
    %9 = arith.mulf %6, %8 : vector<4x256xf32>
    %c0_9 = arith.constant 0 : index
    %c0_10 = arith.constant 0 : index
    %10 = vector.load %arg6[%c0_9, %c0_10] : memref<1x256xf32, #tpu.memory_space<vmem>>, vector<1x256xf32>
    %11 = vector.broadcast %10 : vector<1x256xf32> to vector<4x256xf32>
    %12 = arith.addf %9, %11 : vector<4x256xf32>
    %cst_11 = arith.constant 0.000000e+00 : f32
    %13 = vector.broadcast %cst_11 : f32 to vector<4x256xf32>
    %14 = arith.maximumf %12, %13 : vector<4x256xf32>
    %c0_12 = arith.constant 0 : index
    %c0_13 = arith.constant 0 : index
    %c0_14 = arith.constant 0 : index
    %15 = vector.load %arg7[%c0_12, %c0_13, %c0_14] : memref<1x4x256xf32, #tpu.memory_space<vmem>>, vector<1x4x256xf32>
    %16 = vector.shape_cast %15 : vector<1x4x256xf32> to vector<4x256xf32>
    %17 = vector.shape_cast %14 : vector<4x256xf32> to vector<1x4x256xf32>
    tpu.vector_store %arg7[%c0_12, %c0_13, %c0_14], %17 {strides = array<i32>} : memref<1x4x256xf32, #tpu.memory_space<vmem>>, vector<1x4x256xf32>,
    return
  }
  func.func @transform_0(%arg0: i32, %arg1: i32) -> (i32, i32, i32) {
    %c0_i32 = arith.constant 0 : i32
    %c0_i32_0 = arith.constant 0 : i32
    return %arg0, %arg1, %c0_i32 : i32, i32, i32
  }
  func.func @transform_1(%arg0: i32, %arg1: i32) -> (i32, i32, i32) {
    %c0_i32 = arith.constant 0 : i32
    %c0_i32_0 = arith.constant 0 : i32
    %c0_i32_1 = arith.constant 0 : i32
    return %arg0, %c0_i32, %c0_i32_0 : i32, i32, i32
  }
  func.func @transform_2(%arg0: i32, %arg1: i32) -> (i32, i32) {
    %c0_i32 = arith.constant 0 : i32
    %c0_i32_0 = arith.constant 0 : i32
    return %arg1, %c0_i32 : i32, i32
  }
  func.func @transform_3(%arg0: i32, %arg1: i32) -> (i32, i32) {
    %c0_i32 = arith.constant 0 : i32
    %c0_i32_0 = arith.constant 0 : i32
    %c0_i32_1 = arith.constant 0 : i32
    return %c0_i32, %c0_i32_0 : i32, i32
  }
  func.func @transform_4(%arg0: i32, %arg1: i32) -> (i32, i32) {
    %c0_i32 = arith.constant 0 : i32
    %c0_i32_0 = arith.constant 0 : i32
    %c0_i32_1 = arith.constant 0 : i32
    return %c0_i32, %c0_i32_0 : i32, i32
  }
  func.func @transform_5(%arg0: i32, %arg1: i32) -> (i32, i32, i32) {
    %c0_i32 = arith.constant 0 : i32
    %c0_i32_0 = arith.constant 0 : i32
    return %arg0, %arg1, %c0_i32 : i32, i32, i32
  }
}

module attributes {stable_mosaic.version = 11 : i64} {
  func.func @_matmul_bn_act_kernel(%arg0: i32, %arg1: memref<8x256xbf16, #tpu.memory_space<vmem>>, %arg2: memref<256x1536xbf16, #tpu.memory_space<vmem>>, %arg3: memref<1x1536xf32, #tpu.memory_space<vmem>>, %arg4: memref<1x1536xf32, #tpu.memory_space<vmem>>, %arg5: memref<8x1536xbf16, #tpu.memory_space<vmem>>) attributes {dimension_semantics = [#tpu.dimension_semantics<parallel>], iteration_bounds = array<i64: 1>, scalar_prefetch = 0 : i64, scratch_operands = 0 : i64, tpu.core_type = #tpu.core_type<tc>, window_params = [{transform_indices = @transform_0, window_bounds = array<i64: 8, 256>}, {pipeline_mode = #tpu.pipeline_mode<synchronous>, transform_indices = @transform_1, window_bounds = array<i64: 256, 1536>}, {pipeline_mode = #tpu.pipeline_mode<synchronous>, transform_indices = @transform_2, window_bounds = array<i64: 1, 1536>}, {pipeline_mode = #tpu.pipeline_mode<synchronous>, transform_indices = @transform_3, window_bounds = array<i64: 1, 1536>}, {transform_indices = @transform_4, window_bounds = array<i64: 8, 1536>}]} {
    %c0 = arith.constant 0 : index
    %c0_0 = arith.constant 0 : index
    %0 = vector.load %arg1[%c0, %c0_0] : memref<8x256xbf16, #tpu.memory_space<vmem>>, vector<8x256xbf16>
    %c0_1 = arith.constant 0 : index
    %c0_2 = arith.constant 0 : index
    %1 = vector.load %arg2[%c0_1, %c0_2] : memref<256x1536xbf16, #tpu.memory_space<vmem>>, vector<256x1536xbf16>
    %cst = arith.constant dense<0.000000e+00> : vector<8x1536xf32>
    %2 = tpu.matmul %0, %1, %cst {dimension_numbers = #tpu.dot_dimension_numbers<[1], [0], [0], [1], [0, 0, 1, 1], [], []>} : vector<8x256xbf16>, vector<256x1536xbf16>, vector<8x1536xf32> -> vector<8x1536xf32>
    %c0_3 = arith.constant 0 : index
    %c0_4 = arith.constant 0 : index
    %3 = vector.load %arg3[%c0_3, %c0_4] : memref<1x1536xf32, #tpu.memory_space<vmem>>, vector<1x1536xf32>
    %4 = vector.broadcast %3 : vector<1x1536xf32> to vector<8x1536xf32>
    %5 = arith.mulf %2, %4 : vector<8x1536xf32>
    %c0_5 = arith.constant 0 : index
    %c0_6 = arith.constant 0 : index
    %6 = vector.load %arg4[%c0_5, %c0_6] : memref<1x1536xf32, #tpu.memory_space<vmem>>, vector<1x1536xf32>
    %7 = vector.broadcast %6 : vector<1x1536xf32> to vector<8x1536xf32>
    %8 = arith.addf %5, %7 : vector<8x1536xf32>
    %9 = arith.negf %8 : vector<8x1536xf32>
    %10 = math.exp %9 : vector<8x1536xf32>
    %cst_7 = arith.constant 1.000000e+00 : f32
    %11 = vector.broadcast %cst_7 : f32 to vector<8x1536xf32>
    %12 = arith.addf %11, %10 : vector<8x1536xf32>
    %13 = arith.divf %11, %12 : vector<8x1536xf32>
    %14 = arith.mulf %8, %13 : vector<8x1536xf32>
    %15 = arith.truncf %14 : vector<8x1536xf32> to vector<8x1536xbf16>
    %c0_8 = arith.constant 0 : index
    %c0_9 = arith.constant 0 : index
    %16 = vector.load %arg5[%c0_8, %c0_9] : memref<8x1536xbf16, #tpu.memory_space<vmem>>, vector<8x1536xbf16>
    tpu.vector_store %arg5[%c0_8, %c0_9], %15 {strides = array<i32>} : memref<8x1536xbf16, #tpu.memory_space<vmem>>, vector<8x1536xbf16>,
    return
  }
  func.func @transform_0(%arg0: i32) -> (i32, i32) {
    %c0_i32 = arith.constant 0 : i32
    %c0_i32_0 = arith.constant 0 : i32
    return %arg0, %c0_i32 : i32, i32
  }
  func.func @transform_1(%arg0: i32) -> (i32, i32) {
    %c0_i32 = arith.constant 0 : i32
    %c0_i32_0 = arith.constant 0 : i32
    %c0_i32_1 = arith.constant 0 : i32
    return %c0_i32, %c0_i32_0 : i32, i32
  }
  func.func @transform_2(%arg0: i32) -> (i32, i32) {
    %c0_i32 = arith.constant 0 : i32
    %c0_i32_0 = arith.constant 0 : i32
    %c0_i32_1 = arith.constant 0 : i32
    return %c0_i32, %c0_i32_0 : i32, i32
  }
  func.func @transform_3(%arg0: i32) -> (i32, i32) {
    %c0_i32 = arith.constant 0 : i32
    %c0_i32_0 = arith.constant 0 : i32
    %c0_i32_1 = arith.constant 0 : i32
    return %c0_i32, %c0_i32_0 : i32, i32
  }
  func.func @transform_4(%arg0: i32) -> (i32, i32) {
    %c0_i32 = arith.constant 0 : i32
    %c0_i32_0 = arith.constant 0 : i32
    return %arg0, %c0_i32 : i32, i32
  }
}

module attributes {stable_mosaic.version = 11 : i64} {
  func.func @_dw3x3_kernel(%arg0: i32, %arg1: i32, %arg2: memref<1x4x4x256xbf16, #tpu.memory_space<vmem>>, %arg3: memref<3x3x256xf32, #tpu.memory_space<vmem>>, %arg4: memref<1x256xf32, #tpu.memory_space<vmem>>, %arg5: memref<1x256xf32, #tpu.memory_space<vmem>>, %arg6: memref<1x2x2x256xbf16, #tpu.memory_space<vmem>>, %arg7: memref<1x1x256xf32, #tpu.memory_space<vmem>>) attributes {dimension_semantics = [#tpu.dimension_semantics<parallel>, #tpu.dimension_semantics<parallel>], iteration_bounds = array<i64: 2, 6>, scalar_prefetch = 0 : i64, scratch_operands = 0 : i64, tpu.core_type = #tpu.core_type<tc>, window_params = [{transform_indices = @transform_0, window_bounds = array<i64: 1, 4, 4, 256>}, {transform_indices = @transform_1, window_bounds = array<i64: 3, 3, 256>}, {transform_indices = @transform_2, window_bounds = array<i64: 1, 256>}, {transform_indices = @transform_3, window_bounds = array<i64: 1, 256>}, {transform_indices = @transform_4, window_bounds = array<i64: 1, 2, 2, 256>}, {transform_indices = @transform_5, window_bounds = array<i64: 1, 1, 256>}]} {
    %c0 = arith.constant 0 : index
    %c0_0 = arith.constant 0 : index
    %c0_1 = arith.constant 0 : index
    %c0_2 = arith.constant 0 : index
    %0 = vector.load %arg2[%c0, %c0_0, %c0_1, %c0_2] : memref<1x4x4x256xbf16, #tpu.memory_space<vmem>>, vector<1x4x4x256xbf16>
    %1 = vector.shape_cast %0 : vector<1x4x4x256xbf16> to vector<4x4x256xbf16>
    %2 = arith.extf %1 : vector<4x4x256xbf16> to vector<4x4x256xf32>
    %c0_3 = arith.constant 0 : index
    %c0_4 = arith.constant 0 : index
    %c0_5 = arith.constant 0 : index
    %3 = vector.load %arg3[%c0_3, %c0_4, %c0_5] : memref<3x3x256xf32, #tpu.memory_space<vmem>>, vector<3x3x256xf32>
    %cst = arith.constant 0.000000e+00 : f32
    %4 = vector.broadcast %cst : f32 to vector<2x2x256xf32>
    %5 = vector.extract_strided_slice %2 {offsets = [0, 0, 0], sizes = [2, 2, 256], strides = [1, 1, 1]} : vector<4x4x256xf32> to vector<2x2x256xf32>
    %6 = vector.extract_strided_slice %3 {offsets = [0, 0, 0], sizes = [1, 1, 256], strides = [1, 1, 1]} : vector<3x3x256xf32> to vector<1x1x256xf32>
    %7 = vector.shape_cast %6 : vector<1x1x256xf32> to vector<256xf32>
    %8 = vector.shape_cast %7 : vector<256xf32> to vector<1x1x256xf32>
    %9 = vector.broadcast %8 : vector<1x1x256xf32> to vector<2x2x256xf32>
    %10 = arith.mulf %5, %9 : vector<2x2x256xf32>
    %11 = arith.addf %4, %10 : vector<2x2x256xf32>
    %12 = vector.extract_strided_slice %2 {offsets = [0, 1, 0], sizes = [2, 2, 256], strides = [1, 1, 1]} : vector<4x4x256xf32> to vector<2x2x256xf32>
    %13 = vector.extract_strided_slice %3 {offsets = [0, 1, 0], sizes = [1, 1, 256], strides = [1, 1, 1]} : vector<3x3x256xf32> to vector<1x1x256xf32>
    %14 = vector.shape_cast %13 : vector<1x1x256xf32> to vector<256xf32>
    %15 = vector.shape_cast %14 : vector<256xf32> to vector<1x1x256xf32>
    %16 = vector.broadcast %15 : vector<1x1x256xf32> to vector<2x2x256xf32>
    %17 = arith.mulf %12, %16 : vector<2x2x256xf32>
    %18 = arith.addf %11, %17 : vector<2x2x256xf32>
    %19 = vector.extract_strided_slice %2 {offsets = [0, 2, 0], sizes = [2, 2, 256], strides = [1, 1, 1]} : vector<4x4x256xf32> to vector<2x2x256xf32>
    %20 = vector.extract_strided_slice %3 {offsets = [0, 2, 0], sizes = [1, 1, 256], strides = [1, 1, 1]} : vector<3x3x256xf32> to vector<1x1x256xf32>
    %21 = vector.shape_cast %20 : vector<1x1x256xf32> to vector<256xf32>
    %22 = vector.shape_cast %21 : vector<256xf32> to vector<1x1x256xf32>
    %23 = vector.broadcast %22 : vector<1x1x256xf32> to vector<2x2x256xf32>
    %24 = arith.mulf %19, %23 : vector<2x2x256xf32>
    %25 = arith.addf %18, %24 : vector<2x2x256xf32>
    %26 = vector.extract_strided_slice %2 {offsets = [1, 0, 0], sizes = [2, 2, 256], strides = [1, 1, 1]} : vector<4x4x256xf32> to vector<2x2x256xf32>
    %27 = vector.extract_strided_slice %3 {offsets = [1, 0, 0], sizes = [1, 1, 256], strides = [1, 1, 1]} : vector<3x3x256xf32> to vector<1x1x256xf32>
    %28 = vector.shape_cast %27 : vector<1x1x256xf32> to vector<256xf32>
    %29 = vector.shape_cast %28 : vector<256xf32> to vector<1x1x256xf32>
    %30 = vector.broadcast %29 : vector<1x1x256xf32> to vector<2x2x256xf32>
    %31 = arith.mulf %26, %30 : vector<2x2x256xf32>
    %32 = arith.addf %25, %31 : vector<2x2x256xf32>
    %33 = vector.extract_strided_slice %2 {offsets = [1, 1, 0], sizes = [2, 2, 256], strides = [1, 1, 1]} : vector<4x4x256xf32> to vector<2x2x256xf32>
    %34 = vector.extract_strided_slice %3 {offsets = [1, 1, 0], sizes = [1, 1, 256], strides = [1, 1, 1]} : vector<3x3x256xf32> to vector<1x1x256xf32>
    %35 = vector.shape_cast %34 : vector<1x1x256xf32> to vector<256xf32>
    %36 = vector.shape_cast %35 : vector<256xf32> to vector<1x1x256xf32>
    %37 = vector.broadcast %36 : vector<1x1x256xf32> to vector<2x2x256xf32>
    %38 = arith.mulf %33, %37 : vector<2x2x256xf32>
    %39 = arith.addf %32, %38 : vector<2x2x256xf32>
    %40 = vector.extract_strided_slice %2 {offsets = [1, 2, 0], sizes = [2, 2, 256], strides = [1, 1, 1]} : vector<4x4x256xf32> to vector<2x2x256xf32>
    %41 = vector.extract_strided_slice %3 {offsets = [1, 2, 0], sizes = [1, 1, 256], strides = [1, 1, 1]} : vector<3x3x256xf32> to vector<1x1x256xf32>
    %42 = vector.shape_cast %41 : vector<1x1x256xf32> to vector<256xf32>
    %43 = vector.shape_cast %42 : vector<256xf32> to vector<1x1x256xf32>
    %44 = vector.broadcast %43 : vector<1x1x256xf32> to vector<2x2x256xf32>
    %45 = arith.mulf %40, %44 : vector<2x2x256xf32>
    %46 = arith.addf %39, %45 : vector<2x2x256xf32>
    %47 = vector.extract_strided_slice %2 {offsets = [2, 0, 0], sizes = [2, 2, 256], strides = [1, 1, 1]} : vector<4x4x256xf32> to vector<2x2x256xf32>
    %48 = vector.extract_strided_slice %3 {offsets = [2, 0, 0], sizes = [1, 1, 256], strides = [1, 1, 1]} : vector<3x3x256xf32> to vector<1x1x256xf32>
    %49 = vector.shape_cast %48 : vector<1x1x256xf32> to vector<256xf32>
    %50 = vector.shape_cast %49 : vector<256xf32> to vector<1x1x256xf32>
    %51 = vector.broadcast %50 : vector<1x1x256xf32> to vector<2x2x256xf32>
    %52 = arith.mulf %47, %51 : vector<2x2x256xf32>
    %53 = arith.addf %46, %52 : vector<2x2x256xf32>
    %54 = vector.extract_strided_slice %2 {offsets = [2, 1, 0], sizes = [2, 2, 256], strides = [1, 1, 1]} : vector<4x4x256xf32> to vector<2x2x256xf32>
    %55 = vector.extract_strided_slice %3 {offsets = [2, 1, 0], sizes = [1, 1, 256], strides = [1, 1, 1]} : vector<3x3x256xf32> to vector<1x1x256xf32>
    %56 = vector.shape_cast %55 : vector<1x1x256xf32> to vector<256xf32>
    %57 = vector.shape_cast %56 : vector<256xf32> to vector<1x1x256xf32>
    %58 = vector.broadcast %57 : vector<1x1x256xf32> to vector<2x2x256xf32>
    %59 = arith.mulf %54, %58 : vector<2x2x256xf32>
    %60 = arith.addf %53, %59 : vector<2x2x256xf32>
    %61 = vector.extract_strided_slice %2 {offsets = [2, 2, 0], sizes = [2, 2, 256], strides = [1, 1, 1]} : vector<4x4x256xf32> to vector<2x2x256xf32>
    %62 = vector.extract_strided_slice %3 {offsets = [2, 2, 0], sizes = [1, 1, 256], strides = [1, 1, 1]} : vector<3x3x256xf32> to vector<1x1x256xf32>
    %63 = vector.shape_cast %62 : vector<1x1x256xf32> to vector<256xf32>
    %64 = vector.shape_cast %63 : vector<256xf32> to vector<1x1x256xf32>
    %65 = vector.broadcast %64 : vector<1x1x256xf32> to vector<2x2x256xf32>
    %66 = arith.mulf %61, %65 : vector<2x2x256xf32>
    %67 = arith.addf %60, %66 : vector<2x2x256xf32>
    %c0_6 = arith.constant 0 : index
    %c0_7 = arith.constant 0 : index
    %68 = vector.load %arg4[%c0_6, %c0_7] : memref<1x256xf32, #tpu.memory_space<vmem>>, vector<1x256xf32>
    %69 = vector.shape_cast %68 : vector<1x256xf32> to vector<1x1x256xf32>
    %70 = vector.broadcast %69 : vector<1x1x256xf32> to vector<2x2x256xf32>
    %71 = arith.mulf %67, %70 : vector<2x2x256xf32>
    %c0_8 = arith.constant 0 : index
    %c0_9 = arith.constant 0 : index
    %72 = vector.load %arg5[%c0_8, %c0_9] : memref<1x256xf32, #tpu.memory_space<vmem>>, vector<1x256xf32>
    %73 = vector.shape_cast %72 : vector<1x256xf32> to vector<1x1x256xf32>
    %74 = vector.broadcast %73 : vector<1x1x256xf32> to vector<2x2x256xf32>
    %75 = arith.addf %71, %74 : vector<2x2x256xf32>
    %76 = arith.negf %75 : vector<2x2x256xf32>
    %77 = math.exp %76 : vector<2x2x256xf32>
    %cst_10 = arith.constant 1.000000e+00 : f32
    %78 = vector.broadcast %cst_10 : f32 to vector<2x2x256xf32>
    %79 = arith.addf %78, %77 : vector<2x2x256xf32>
    %80 = arith.divf %78, %79 : vector<2x2x256xf32>
    %81 = arith.mulf %75, %80 : vector<2x2x256xf32>
    %82 = arith.truncf %81 : vector<2x2x256xf32> to vector<2x2x256xbf16>
    %c0_11 = arith.constant 0 : index
    %c0_12 = arith.constant 0 : index
    %c0_13 = arith.constant 0 : index
    %c0_14 = arith.constant 0 : index
    %83 = vector.load %arg6[%c0_11, %c0_12, %c0_13, %c0_14] : memref<1x2x2x256xbf16, #tpu.memory_space<vmem>>, vector<1x2x2x256xbf16>
    %84 = vector.shape_cast %83 : vector<1x2x2x256xbf16> to vector<2x2x256xbf16>
    %85 = vector.shape_cast %82 : vector<2x2x256xbf16> to vector<1x2x2x256xbf16>
    tpu.vector_store %arg6[%c0_11, %c0_12, %c0_13, %c0_14], %85 {strides = array<i32>} : memref<1x2x2x256xbf16, #tpu.memory_space<vmem>>, vector<1x2x2x256xbf16>,
    %cst_15 = arith.constant dense<0.000000e+00> : vector<256xf32>
    %86 = vector.multi_reduction <add>, %81, %cst_15 [0, 1] : vector<2x2x256xf32> to vector<256xf32>
    %87 = vector.shape_cast %86 : vector<256xf32> to vector<1x1x256xf32>
    %cst_16 = arith.constant 4.000000e+00 : f32
    %88 = vector.broadcast %cst_16 : f32 to vector<1x1x256xf32>
    %89 = arith.divf %87, %88 : vector<1x1x256xf32>
    %c0_17 = arith.constant 0 : index
    %c0_18 = arith.constant 0 : index
    %c0_19 = arith.constant 0 : index
    %90 = vector.load %arg7[%c0_17, %c0_18, %c0_19] : memref<1x1x256xf32, #tpu.memory_space<vmem>>, vector<1x1x256xf32>
    tpu.vector_store %arg7[%c0_17, %c0_18, %c0_19], %89 {strides = array<i32>} : memref<1x1x256xf32, #tpu.memory_space<vmem>>, vector<1x1x256xf32>,
    return
  }
  func.func @transform_0(%arg0: i32, %arg1: i32) -> (i32, i32, i32, i32) {
    %c0_i32 = arith.constant 0 : i32
    %c0_i32_0 = arith.constant 0 : i32
    %c0_i32_1 = arith.constant 0 : i32
    return %arg0, %c0_i32, %c0_i32_0, %arg1 : i32, i32, i32, i32
  }
  func.func @transform_1(%arg0: i32, %arg1: i32) -> (i32, i32, i32) {
    %c0_i32 = arith.constant 0 : i32
    %c0_i32_0 = arith.constant 0 : i32
    %c0_i32_1 = arith.constant 0 : i32
    return %c0_i32, %c0_i32_0, %arg1 : i32, i32, i32
  }
  func.func @transform_2(%arg0: i32, %arg1: i32) -> (i32, i32) {
    %c0_i32 = arith.constant 0 : i32
    %c0_i32_0 = arith.constant 0 : i32
    return %c0_i32, %arg1 : i32, i32
  }
  func.func @transform_3(%arg0: i32, %arg1: i32) -> (i32, i32) {
    %c0_i32 = arith.constant 0 : i32
    %c0_i32_0 = arith.constant 0 : i32
    return %c0_i32, %arg1 : i32, i32
  }
  func.func @transform_4(%arg0: i32, %arg1: i32) -> (i32, i32, i32, i32) {
    %c0_i32 = arith.constant 0 : i32
    %c0_i32_0 = arith.constant 0 : i32
    %c0_i32_1 = arith.constant 0 : i32
    return %arg0, %c0_i32, %c0_i32_0, %arg1 : i32, i32, i32, i32
  }
  func.func @transform_5(%arg0: i32, %arg1: i32) -> (i32, i32, i32) {
    %c0_i32 = arith.constant 0 : i32
    %c0_i32_0 = arith.constant 0 : i32
    return %arg0, %c0_i32, %arg1 : i32, i32, i32
  }
}

module attributes {stable_mosaic.version = 11 : i64} {
  func.func @_se_mlp_kernel(%arg0: memref<2x1536xf32, #tpu.memory_space<vmem>>, %arg1: memref<1536x64xbf16, #tpu.memory_space<vmem>>, %arg2: memref<1x64xf32, #tpu.memory_space<vmem>>, %arg3: memref<64x1536xbf16, #tpu.memory_space<vmem>>, %arg4: memref<1x1536xf32, #tpu.memory_space<vmem>>, %arg5: memref<2x1536xf32, #tpu.memory_space<vmem>>) attributes {dimension_semantics = [], scalar_prefetch = 0 : i64, scratch_operands = 0 : i64, tpu.core_type = #tpu.core_type<tc>} {
    %c0 = arith.constant 0 : index
    %c0_0 = arith.constant 0 : index
    %0 = vector.load %arg0[%c0, %c0_0] : memref<2x1536xf32, #tpu.memory_space<vmem>>, vector<2x1536xf32>
    %1 = arith.truncf %0 : vector<2x1536xf32> to vector<2x1536xbf16>
    %c0_1 = arith.constant 0 : index
    %c0_2 = arith.constant 0 : index
    %2 = vector.load %arg1[%c0_1, %c0_2] : memref<1536x64xbf16, #tpu.memory_space<vmem>>, vector<1536x64xbf16>
    %cst = arith.constant dense<0.000000e+00> : vector<2x64xf32>
    %3 = tpu.matmul %1, %2, %cst {dimension_numbers = #tpu.dot_dimension_numbers<[1], [0], [0], [1], [0, 0, 1, 1], [], []>} : vector<2x1536xbf16>, vector<1536x64xbf16>, vector<2x64xf32> -> vector<2x64xf32>
    %c0_3 = arith.constant 0 : index
    %c0_4 = arith.constant 0 : index
    %4 = vector.load %arg2[%c0_3, %c0_4] : memref<1x64xf32, #tpu.memory_space<vmem>>, vector<1x64xf32>
    %5 = vector.broadcast %4 : vector<1x64xf32> to vector<2x64xf32>
    %6 = arith.addf %3, %5 : vector<2x64xf32>
    %7 = arith.negf %6 : vector<2x64xf32>
    %8 = math.exp %7 : vector<2x64xf32>
    %cst_5 = arith.constant 1.000000e+00 : f32
    %9 = vector.broadcast %cst_5 : f32 to vector<2x64xf32>
    %10 = arith.addf %9, %8 : vector<2x64xf32>
    %11 = arith.divf %9, %10 : vector<2x64xf32>
    %12 = arith.mulf %6, %11 : vector<2x64xf32>
    %13 = arith.truncf %12 : vector<2x64xf32> to vector<2x64xbf16>
    %c0_6 = arith.constant 0 : index
    %c0_7 = arith.constant 0 : index
    %14 = vector.load %arg3[%c0_6, %c0_7] : memref<64x1536xbf16, #tpu.memory_space<vmem>>, vector<64x1536xbf16>
    %cst_8 = arith.constant dense<0.000000e+00> : vector<2x1536xf32>
    %15 = tpu.matmul %13, %14, %cst_8 {dimension_numbers = #tpu.dot_dimension_numbers<[1], [0], [0], [1], [0, 0, 1, 1], [], []>} : vector<2x64xbf16>, vector<64x1536xbf16>, vector<2x1536xf32> -> vector<2x1536xf32>
    %c0_9 = arith.constant 0 : index
    %c0_10 = arith.constant 0 : index
    %16 = vector.load %arg4[%c0_9, %c0_10] : memref<1x1536xf32, #tpu.memory_space<vmem>>, vector<1x1536xf32>
    %17 = vector.broadcast %16 : vector<1x1536xf32> to vector<2x1536xf32>
    %18 = arith.addf %15, %17 : vector<2x1536xf32>
    %19 = arith.negf %18 : vector<2x1536xf32>
    %20 = math.exp %19 : vector<2x1536xf32>
    %cst_11 = arith.constant 1.000000e+00 : f32
    %21 = vector.broadcast %cst_11 : f32 to vector<2x1536xf32>
    %22 = arith.addf %21, %20 : vector<2x1536xf32>
    %23 = arith.divf %21, %22 : vector<2x1536xf32>
    %c0_12 = arith.constant 0 : index
    %c0_13 = arith.constant 0 : index
    %24 = vector.load %arg5[%c0_12, %c0_13] : memref<2x1536xf32, #tpu.memory_space<vmem>>, vector<2x1536xf32>
    tpu.vector_store %arg5[%c0_12, %c0_13], %23 {strides = array<i32>} : memref<2x1536xf32, #tpu.memory_space<vmem>>, vector<2x1536xf32>,
    return
  }
}

module attributes {stable_mosaic.version = 11 : i64} {
  func.func @_proj_gate_kernel(%arg0: i32, %arg1: i32, %arg2: memref<1x4x1536xbf16, #tpu.memory_space<vmem>>, %arg3: memref<1x1x1536xf32, #tpu.memory_space<vmem>>, %arg4: memref<1536x256xbf16, #tpu.memory_space<vmem>>, %arg5: memref<1x256xf32, #tpu.memory_space<vmem>>, %arg6: memref<1x256xf32, #tpu.memory_space<vmem>>, %arg7: memref<1x4x256xf32, #tpu.memory_space<vmem>>) attributes {dimension_semantics = [#tpu.dimension_semantics<parallel>, #tpu.dimension_semantics<parallel>], iteration_bounds = array<i64: 2, 1>, scalar_prefetch = 0 : i64, scratch_operands = 0 : i64, tpu.core_type = #tpu.core_type<tc>, window_params = [{transform_indices = @transform_0, window_bounds = array<i64: 1, 4, 1536>}, {transform_indices = @transform_1, window_bounds = array<i64: 1, 1, 1536>}, {pipeline_mode = #tpu.pipeline_mode<synchronous>, transform_indices = @transform_2, window_bounds = array<i64: 1536, 256>}, {pipeline_mode = #tpu.pipeline_mode<synchronous>, transform_indices = @transform_3, window_bounds = array<i64: 1, 256>}, {pipeline_mode = #tpu.pipeline_mode<synchronous>, transform_indices = @transform_4, window_bounds = array<i64: 1, 256>}, {transform_indices = @transform_5, window_bounds = array<i64: 1, 4, 256>}]} {
    %c0 = arith.constant 0 : index
    %c0_0 = arith.constant 0 : index
    %c0_1 = arith.constant 0 : index
    %0 = vector.load %arg3[%c0, %c0_0, %c0_1] : memref<1x1x1536xf32, #tpu.memory_space<vmem>>, vector<1x1x1536xf32>
    %1 = vector.shape_cast %0 : vector<1x1x1536xf32> to vector<1x1536xf32>
    %c0_2 = arith.constant 0 : index
    %c0_3 = arith.constant 0 : index
    %c0_4 = arith.constant 0 : index
    %2 = vector.load %arg2[%c0_2, %c0_3, %c0_4] : memref<1x4x1536xbf16, #tpu.memory_space<vmem>>, vector<1x4x1536xbf16>
    %3 = vector.shape_cast %2 : vector<1x4x1536xbf16> to vector<4x1536xbf16>
    %4 = arith.extf %3 : vector<4x1536xbf16> to vector<4x1536xf32>
    %5 = vector.broadcast %1 : vector<1x1536xf32> to vector<4x1536xf32>
    %6 = arith.mulf %4, %5 : vector<4x1536xf32>
    %7 = arith.truncf %6 : vector<4x1536xf32> to vector<4x1536xbf16>
    %c0_5 = arith.constant 0 : index
    %c0_6 = arith.constant 0 : index
    %8 = vector.load %arg4[%c0_5, %c0_6] : memref<1536x256xbf16, #tpu.memory_space<vmem>>, vector<1536x256xbf16>
    %cst = arith.constant dense<0.000000e+00> : vector<4x256xf32>
    %9 = tpu.matmul %7, %8, %cst {dimension_numbers = #tpu.dot_dimension_numbers<[1], [0], [0], [1], [0, 0, 1, 1], [], []>} : vector<4x1536xbf16>, vector<1536x256xbf16>, vector<4x256xf32> -> vector<4x256xf32>
    %c0_7 = arith.constant 0 : index
    %c0_8 = arith.constant 0 : index
    %10 = vector.load %arg5[%c0_7, %c0_8] : memref<1x256xf32, #tpu.memory_space<vmem>>, vector<1x256xf32>
    %11 = vector.broadcast %10 : vector<1x256xf32> to vector<4x256xf32>
    %12 = arith.mulf %9, %11 : vector<4x256xf32>
    %c0_9 = arith.constant 0 : index
    %c0_10 = arith.constant 0 : index
    %13 = vector.load %arg6[%c0_9, %c0_10] : memref<1x256xf32, #tpu.memory_space<vmem>>, vector<1x256xf32>
    %14 = vector.broadcast %13 : vector<1x256xf32> to vector<4x256xf32>
    %15 = arith.addf %12, %14 : vector<4x256xf32>
    %c0_11 = arith.constant 0 : index
    %c0_12 = arith.constant 0 : index
    %c0_13 = arith.constant 0 : index
    %16 = vector.load %arg7[%c0_11, %c0_12, %c0_13] : memref<1x4x256xf32, #tpu.memory_space<vmem>>, vector<1x4x256xf32>
    %17 = vector.shape_cast %16 : vector<1x4x256xf32> to vector<4x256xf32>
    %18 = vector.shape_cast %15 : vector<4x256xf32> to vector<1x4x256xf32>
    tpu.vector_store %arg7[%c0_11, %c0_12, %c0_13], %18 {strides = array<i32>} : memref<1x4x256xf32, #tpu.memory_space<vmem>>, vector<1x4x256xf32>,
    return
  }
  func.func @transform_0(%arg0: i32, %arg1: i32) -> (i32, i32, i32) {
    %c0_i32 = arith.constant 0 : i32
    %c0_i32_0 = arith.constant 0 : i32
    return %arg0, %arg1, %c0_i32 : i32, i32, i32
  }
  func.func @transform_1(%arg0: i32, %arg1: i32) -> (i32, i32, i32) {
    %c0_i32 = arith.constant 0 : i32
    %c0_i32_0 = arith.constant 0 : i32
    %c0_i32_1 = arith.constant 0 : i32
    return %arg0, %c0_i32, %c0_i32_0 : i32, i32, i32
  }
  func.func @transform_2(%arg0: i32, %arg1: i32) -> (i32, i32) {
    %c0_i32 = arith.constant 0 : i32
    %c0_i32_0 = arith.constant 0 : i32
    %c0_i32_1 = arith.constant 0 : i32
    return %c0_i32, %c0_i32_0 : i32, i32
  }
  func.func @transform_3(%arg0: i32, %arg1: i32) -> (i32, i32) {
    %c0_i32 = arith.constant 0 : i32
    %c0_i32_0 = arith.constant 0 : i32
    %c0_i32_1 = arith.constant 0 : i32
    return %c0_i32, %c0_i32_0 : i32, i32
  }
  func.func @transform_4(%arg0: i32, %arg1: i32) -> (i32, i32) {
    %c0_i32 = arith.constant 0 : i32
    %c0_i32_0 = arith.constant 0 : i32
    %c0_i32_1 = arith.constant 0 : i32
    return %c0_i32, %c0_i32_0 : i32, i32
  }
  func.func @transform_5(%arg0: i32, %arg1: i32) -> (i32, i32, i32) {
    %c0_i32 = arith.constant 0 : i32
    %c0_i32_0 = arith.constant 0 : i32
    return %arg0, %arg1, %c0_i32 : i32, i32, i32
  }
}

</mosaic_0001>

<llo_original>
// kernel: fph_forward.14
$region0: #{fph_forward.14}
  #allocation0 [shape = 'u32[]', space=smem, size = 0x4, offset = 0x4, fixed_abs, tag = 'smem constant byte address 0x4 - core index']
  #allocation1 [shape = 'u32[144,128]{1,0:T(1,128)}', space=vmem, size = 0x12000, scoped, tag = 'internal scratch']
  %s0 = inlined_call_operand.vmem [shape: f32[512,64], index: 0, kind: input, shape index: {}]
  %s1 = inlined_call_operand.vmem [shape: bf16[64,16], index: 1, kind: input, shape index: {}]
  %s2 = inlined_call_operand.vmem [shape: f32[1,64], index: 2, kind: input, shape index: {}]
  %s3 = inlined_call_operand.vmem [shape: f32[1,64], index: 3, kind: input, shape index: {}]
  %s4 = inlined_call_operand.vmem [shape: f32[1,16], index: 4, kind: input, shape index: {}]
  %s5 = inlined_call_operand.vmem [shape: f32[1,16], index: 5, kind: input, shape index: {}]
  %s6 = inlined_call_operand.vmem [shape: f32[512,16], index: 6, kind: output, shape index: {}]
  %s7 = sld [smem:[#allocation0]]
  $region34: #{fph_forward.14} parent=0
    _
  %s9 = ssub.s32 1, %s7
  %s10 = scalar_select 0, %s9, %s7
  // Predicated region
  $region2: #{fph_forward.14} parent=0 // pred_check
    _
  $region3: #{fph_forward.14} parent=0 // pred_check_branch
    %12 = sbr.rel (0) target = $region5
  $region4: #{fph_forward.14} parent=0 // pred_region
    _
  $region5: #{fph_forward.14} parent=0 // pred_fallthru
    _
  // Predicated region
  $region6: #{fph_forward.14} parent=0 // pred_check
    _
  $region7: #{fph_forward.14} parent=0 // pred_check_branch
    %14 = sbr.rel (0) target = $region9
  $region8: #{fph_forward.14} parent=0 // pred_region
    _
  $region9: #{fph_forward.14} parent=0 // pred_fallthru
    _
  // Predicated region
  $region10: #{fph_forward.14} parent=0 // pred_check
    _
  $region11: #{fph_forward.14} parent=0 // pred_check_branch
    %16 = sbr.rel (0) target = $region13
  $region12: #{fph_forward.14} parent=0 // pred_region
    _
  $region13: #{fph_forward.14} parent=0 // pred_fallthru
    _
  // Predicated region
  $region14: #{fph_forward.14} parent=0 // pred_check
    _
  $region15: #{fph_forward.14} parent=0 // pred_check_branch
    %18 = sbr.rel (0) target = $region17
  $region16: #{fph_forward.14} parent=0 // pred_region
    _
  $region17: #{fph_forward.14} parent=0 // pred_fallthru
    _
  // Predicated region
  $region18: #{fph_forward.14} parent=0 // pred_check
    _
  $region19: #{fph_forward.14} parent=0 // pred_check_branch
    %20 = sbr.rel (0) target = $region21
  $region20: #{fph_forward.14} parent=0 // pred_region
    _
  $region21: #{fph_forward.14} parent=0 // pred_fallthru
    _
  // Predicated region
  $region22: #{fph_forward.14} parent=0 // pred_check
    _
  $region23: #{fph_forward.14} parent=0 // pred_check_branch
    %22 = sbr.rel (0) target = $region25
  $region24: #{fph_forward.14} parent=0 // pred_region
    _
  $region25: #{fph_forward.14} parent=0 // pred_fallthru
    _
  %v24 = vld [vmem:[%s0] sm:$0xff]
  %v25 = vld [vmem:[%s0 + $0x8] sm:$0xff]
  %v26 = vld [vmem:[%s0 + $0x10] sm:$0xff]
  %v27 = vld [vmem:[%s0 + $0x18] sm:$0xff]
  %v28 = vld [vmem:[%s0 + $0x20] sm:$0xff]
  %v29 = vld [vmem:[%s0 + $0x28] sm:$0xff]
  %v30 = vld [vmem:[%s0 + $0x30] sm:$0xff]
  %v31 = vld [vmem:[%s0 + $0x38] sm:$0xff]
  %v32 = vld [vmem:[%s0 + $0x40] sm:$0xff]
  %v33 = vld [vmem:[%s0 + $0x48] sm:$0xff]
  %v34 = vld [vmem:[%s0 + $0x50] sm:$0xff]
  %v35 = vld [vmem:[%s0 + $0x58] sm:$0xff]
  %v36 = vld [vmem:[%s0 + $0x60] sm:$0xff]
  %v37 = vld [vmem:[%s0 + $0x68] sm:$0xff]
  %v38 = vld [vmem:[%s0 + $0x70] sm:$0xff]
  %v39 = vld [vmem:[%s0 + $0x78] sm:$0xff]
  %v40 = vld [vmem:[%s0 + $0x80] sm:$0xff]
  %v41 = vld [vmem:[%s0 + $0x88] sm:$0xff]
  %v42 = vld [vmem:[%s0 + $0x90] sm:$0xff]
  %v43 = vld [vmem:[%s0 + $0x98] sm:$0xff]
  %v44 = vld [vmem:[%s0 + $0xa0] sm:$0xff]
  %v45 = vld [vmem:[%s0 + $0xa8] sm:$0xff]
  %v46 = vld [vmem:[%s0 + $0xb0] sm:$0xff]
  %v47 = vld [vmem:[%s0 + $0xb8] sm:$0xff]
  %v48 = vld [vmem:[%s0 + $0xc0] sm:$0xff]
  %v49 = vld [vmem:[%s0 + $0xc8] sm:$0xff]
  %v50 = vld [vmem:[%s0 + $0xd0] sm:$0xff]
  %v51 = vld [vmem:[%s0 + $0xd8] sm:$0xff]
  %v52 = vld [vmem:[%s0 + $0xe0] sm:$0xff]
  %v53 = vld [vmem:[%s0 + $0xe8] sm:$0xff]
  %v54 = vld [vmem:[%s0 + $0xf0] sm:$0xff]
  %v55 = vld [vmem:[%s0 + $0xf8] sm:$0xff]
  %v56 = vld [vmem:[%s0 + $0x100] sm:$0xff]
  %v57 = vld [vmem:[%s0 + $0x108] sm:$0xff]
  %v58 = vld [vmem:[%s0 + $0x110] sm:$0xff]
  %v59 = vld [vmem:[%s0 + $0x118] sm:$0xff]
  %v60 = vld [vmem:[%s0 + $0x120] sm:$0xff]
  %v61 = vld [vmem:[%s0 + $0x128] sm:$0xff]
  %v62 = vld [vmem:[%s0 + $0x130] sm:$0xff]
  %v63 = vld [vmem:[%s0 + $0x138] sm:$0xff]
  %v64 = vld [vmem:[%s0 + $0x140] sm:$0xff]
  %v65 = vld [vmem:[%s0 + $0x148] sm:$0xff]
  %v66 = vld [vmem:[%s0 + $0x150] sm:$0xff]
  %v67 = vld [vmem:[%s0 + $0x158] sm:$0xff]
  %v68 = vld [vmem:[%s0 + $0x160] sm:$0xff]
  %v69 = vld [vmem:[%s0 + $0x168] sm:$0xff]
  %v70 = vld [vmem:[%s0 + $0x170] sm:$0xff]
  %v71 = vld [vmem:[%s0 + $0x178] sm:$0xff]
  %v72 = vld [vmem:[%s0 + $0x180] sm:$0xff]
  %v73 = vld [vmem:[%s0 + $0x188] sm:$0xff]
  %v74 = vld [vmem:[%s0 + $0x190] sm:$0xff]
  %v75 = vld [vmem:[%s0 + $0x198] sm:$0xff]
  %v76 = vld [vmem:[%s0 + $0x1a0] sm:$0xff]
  %v77 = vld [vmem:[%s0 + $0x1a8] sm:$0xff]
  %v78 = vld [vmem:[%s0 + $0x1b0] sm:$0xff]
  %v79 = vld [vmem:[%s0 + $0x1b8] sm:$0xff]
  %v80 = vld [vmem:[%s0 + $0x1c0] sm:$0xff]
  %v81 = vld [vmem:[%s0 + $0x1c8] sm:$0xff]
  %v82 = vld [vmem:[%s0 + $0x1d0] sm:$0xff]
  %v83 = vld [vmem:[%s0 + $0x1d8] sm:$0xff]
  %v84 = vld [vmem:[%s0 + $0x1e0] sm:$0xff]
  %v85 = vld [vmem:[%s0 + $0x1e8] sm:$0xff]
  %v86 = vld [vmem:[%s0 + $0x1f0] sm:$0xff]
  %v87 = vld [vmem:[%s0 + $0x1f8] sm:$0xff]
  %v88 = vld [vmem:[%s2] sm:$0x1]
  %v90 = vlaneseq
  %v91 = vshrl.u32 %v90, 7
  %v92 = vsub.s32 0, %v91
  %v93 = vrot.slane %v88, %v92
  %v95 = vmul.f32 %v24, %v93
  %v96 = vmul.f32 %v25, %v93
  %v97 = vmul.f32 %v26, %v93
  %v98 = vmul.f32 %v27, %v93
  %v99 = vmul.f32 %v28, %v93
  %v100 = vmul.f32 %v29, %v93
  %v101 = vmul.f32 %v30, %v93
  %v102 = vmul.f32 %v31, %v93
  %v103 = vmul.f32 %v32, %v93
  %v104 = vmul.f32 %v33, %v93
  %v105 = vmul.f32 %v34, %v93
  %v106 = vmul.f32 %v35, %v93
  %v107 = vmul.f32 %v36, %v93
  %v108 = vmul.f32 %v37, %v93
  %v109 = vmul.f32 %v38, %v93
  %v110 = vmul.f32 %v39, %v93
  %v111 = vmul.f32 %v40, %v93
  %v112 = vmul.f32 %v41, %v93
  %v113 = vmul.f32 %v42, %v93
  %v114 = vmul.f32 %v43, %v93
  %v115 = vmul.f32 %v44, %v93
  %v116 = vmul.f32 %v45, %v93
  %v117 = vmul.f32 %v46, %v93
  %v118 = vmul.f32 %v47, %v93
  %v119 = vmul.f32 %v48, %v93
  %v120 = vmul.f32 %v49, %v93
  %v121 = vmul.f32 %v50, %v93
  %v122 = vmul.f32 %v51, %v93
  %v123 = vmul.f32 %v52, %v93
  %v124 = vmul.f32 %v53, %v93
  %v125 = vmul.f32 %v54, %v93
  %v126 = vmul.f32 %v55, %v93
  %v127 = vmul.f32 %v56, %v93
  %v128 = vmul.f32 %v57, %v93
  %v129 = vmul.f32 %v58, %v93
  %v130 = vmul.f32 %v59, %v93
  %v131 = vmul.f32 %v60, %v93
  %v132 = vmul.f32 %v61, %v93
  %v133 = vmul.f32 %v62, %v93
  %v134 = vmul.f32 %v63, %v93
  %v135 = vmul.f32 %v64, %v93
  %v136 = vmul.f32 %v65, %v93
  %v137 = vmul.f32 %v66, %v93
  %v138 = vmul.f32 %v67, %v93
  %v139 = vmul.f32 %v68, %v93
  %v140 = vmul.f32 %v69, %v93
  %v141 = vmul.f32 %v70, %v93
  %v142 = vmul.f32 %v71, %v93
  %v143 = vmul.f32 %v72, %v93
  %v144 = vmul.f32 %v73, %v93
  %v145 = vmul.f32 %v74, %v93
  %v146 = vmul.f32 %v75, %v93
  %v147 = vmul.f32 %v76, %v93
  %v148 = vmul.f32 %v77, %v93
  %v149 = vmul.f32 %v78, %v93
  %v150 = vmul.f32 %v79, %v93
  %v151 = vmul.f32 %v80, %v93
  %v152 = vmul.f32 %v81, %v93
  %v153 = vmul.f32 %v82, %v93
  %v154 = vmul.f32 %v83, %v93
  %v155 = vmul.f32 %v84, %v93
  %v156 = vmul.f32 %v85, %v93
  %v157 = vmul.f32 %v86, %v93
  %v158 = vmul.f32 %v87, %v93
  %v159 = vld [vmem:[%s3] sm:$0x1]
  %v161 = vlaneseq
  %v162 = vshrl.u32 %v161, 7
  %v163 = vsub.s32 0, %v162
  %v164 = vrot.slane %v159, %v163
  %v166 = vadd.f32 %v95, %v164
  %v167 = vadd.f32 %v96, %v164
  %v168 = vadd.f32 %v97, %v164
  %v169 = vadd.f32 %v98, %v164
  %v170 = vadd.f32 %v99, %v164
  %v171 = vadd.f32 %v100, %v164
  %v172 = vadd.f32 %v101, %v164
  %v173 = vadd.f32 %v102, %v164
  %v174 = vadd.f32 %v103, %v164
  %v175 = vadd.f32 %v104, %v164
  %v176 = vadd.f32 %v105, %v164
  %v177 = vadd.f32 %v106, %v164
  %v178 = vadd.f32 %v107, %v164
  %v179 = vadd.f32 %v108, %v164
  %v180 = vadd.f32 %v109, %v164
  %v181 = vadd.f32 %v110, %v164
  %v182 = vadd.f32 %v111, %v164
  %v183 = vadd.f32 %v112, %v164
  %v184 = vadd.f32 %v113, %v164
  %v185 = vadd.f32 %v114, %v164
  %v186 = vadd.f32 %v115, %v164
  %v187 = vadd.f32 %v116, %v164
  %v188 = vadd.f32 %v117, %v164
  %v189 = vadd.f32 %v118, %v164
  %v190 = vadd.f32 %v119, %v164
  %v191 = vadd.f32 %v120, %v164
  %v192 = vadd.f32 %v121, %v164
  %v193 = vadd.f32 %v122, %v164
  %v194 = vadd.f32 %v123, %v164
  %v195 = vadd.f32 %v124, %v164
  %v196 = vadd.f32 %v125, %v164
  %v197 = vadd.f32 %v126, %v164
  %v198 = vadd.f32 %v127, %v164
  %v199 = vadd.f32 %v128, %v164
  %v200 = vadd.f32 %v129, %v164
  %v201 = vadd.f32 %v130, %v164
  %v202 = vadd.f32 %v131, %v164
  %v203 = vadd.f32 %v132, %v164
  %v204 = vadd.f32 %v133, %v164
  %v205 = vadd.f32 %v134, %v164
  %v206 = vadd.f32 %v135, %v164
  %v207 = vadd.f32 %v136, %v164
  %v208 = vadd.f32 %v137, %v164
  %v209 = vadd.f32 %v138, %v164
  %v210 = vadd.f32 %v139, %v164
  %v211 = vadd.f32 %v140, %v164
  %v212 = vadd.f32 %v141, %v164
  %v213 = vadd.f32 %v142, %v164
  %v214 = vadd.f32 %v143, %v164
  %v215 = vadd.f32 %v144, %v164
  %v216 = vadd.f32 %v145, %v164
  %v217 = vadd.f32 %v146, %v164
  %v218 = vadd.f32 %v147, %v164
  %v219 = vadd.f32 %v148, %v164
  %v220 = vadd.f32 %v149, %v164
  %v221 = vadd.f32 %v150, %v164
  %v222 = vadd.f32 %v151, %v164
  %v223 = vadd.f32 %v152, %v164
  %v224 = vadd.f32 %v153, %v164
  %v225 = vadd.f32 %v154, %v164
  %v226 = vadd.f32 %v155, %v164
  %v227 = vadd.f32 %v156, %v164
  %v228 = vadd.f32 %v157, %v164
  %v229 = vadd.f32 %v158, %v164
  %v230 = vmax.f32 %v166, 0.0
  %v231 = vmax.f32 %v167, 0.0
  %v232 = vmax.f32 %v168, 0.0
  %v233 = vmax.f32 %v169, 0.0
  %v234 = vmax.f32 %v170, 0.0
  %v235 = vmax.f32 %v171, 0.0
  %v236 = vmax.f32 %v172, 0.0
  %v237 = vmax.f32 %v173, 0.0
  %v238 = vmax.f32 %v174, 0.0
  %v239 = vmax.f32 %v175, 0.0
  %v240 = vmax.f32 %v176, 0.0
  %v241 = vmax.f32 %v177, 0.0
  %v242 = vmax.f32 %v178, 0.0
  %v243 = vmax.f32 %v179, 0.0
  %v244 = vmax.f32 %v180, 0.0
  %v245 = vmax.f32 %v181, 0.0
  %v246 = vmax.f32 %v182, 0.0
  %v247 = vmax.f32 %v183, 0.0
  %v248 = vmax.f32 %v184, 0.0
  %v249 = vmax.f32 %v185, 0.0
  %v250 = vmax.f32 %v186, 0.0
  %v251 = vmax.f32 %v187, 0.0
  %v252 = vmax.f32 %v188, 0.0
  %v253 = vmax.f32 %v189, 0.0
  %v254 = vmax.f32 %v190, 0.0
  %v255 = vmax.f32 %v191, 0.0
  %v256 = vmax.f32 %v192, 0.0
  %v257 = vmax.f32 %v193, 0.0
  %v258 = vmax.f32 %v194, 0.0
  %v259 = vmax.f32 %v195, 0.0
  %v260 = vmax.f32 %v196, 0.0
  %v261 = vmax.f32 %v197, 0.0
  %v262 = vmax.f32 %v198, 0.0
  %v263 = vmax.f32 %v199, 0.0
  %v264 = vmax.f32 %v200, 0.0
  %v265 = vmax.f32 %v201, 0.0
  %v266 = vmax.f32 %v202, 0.0
  %v267 = vmax.f32 %v203, 0.0
  %v268 = vmax.f32 %v204, 0.0
  %v269 = vmax.f32 %v205, 0.0
  %v270 = vmax.f32 %v206, 0.0
  %v271 = vmax.f32 %v207, 0.0
  %v272 = vmax.f32 %v208, 0.0
  %v273 = vmax.f32 %v209, 0.0
  %v274 = vmax.f32 %v210, 0.0
  %v275 = vmax.f32 %v211, 0.0
  %v276 = vmax.f32 %v212, 0.0
  %v277 = vmax.f32 %v213, 0.0
  %v278 = vmax.f32 %v214, 0.0
  %v279 = vmax.f32 %v215, 0.0
  %v280 = vmax.f32 %v216, 0.0
  %v281 = vmax.f32 %v217, 0.0
  %v282 = vmax.f32 %v218, 0.0
  %v283 = vmax.f32 %v219, 0.0
  %v284 = vmax.f32 %v220, 0.0
  %v285 = vmax.f32 %v221, 0.0
  %v286 = vmax.f32 %v222, 0.0
  %v287 = vmax.f32 %v223, 0.0
  %v288 = vmax.f32 %v224, 0.0
  %v289 = vmax.f32 %v225, 0.0
  %v290 = vmax.f32 %v226, 0.0
  %v291 = vmax.f32 %v227, 0.0
  %v292 = vmax.f32 %v228, 0.0
  %v293 = vmax.f32 %v229, 0.0
  %v294 = vpack.c.bf16 %v231, %v230
  %v295 = vpack.c.bf16 %v233, %v232
  %v296 = vpack.c.bf16 %v235, %v234
  %v297 = vpack.c.bf16 %v237, %v236
  %v298 = vpack.c.bf16 %v239, %v238
  %v299 = vpack.c.bf16 %v241, %v240
  %v300 = vpack.c.bf16 %v243, %v242
  %v301 = vpack.c.bf16 %v245, %v244
  %v302 = vpack.c.bf16 %v247, %v246
  %v303 = vpack.c.bf16 %v249, %v248
  %v304 = vpack.c.bf16 %v251, %v250
  %v305 = vpack.c.bf16 %v253, %v252
  %v306 = vpack.c.bf16 %v255, %v254
  %v307 = vpack.c.bf16 %v257, %v256
  %v308 = vpack.c.bf16 %v259, %v258
  %v309 = vpack.c.bf16 %v261, %v260
  %v310 = vpack.c.bf16 %v263, %v262
  %v311 = vpack.c.bf16 %v265, %v264
  %v312 = vpack.c.bf16 %v267, %v266
  %v313 = vpack.c.bf16 %v269, %v268
  %v314 = vpack.c.bf16 %v271, %v270
  %v315 = vpack.c.bf16 %v273, %v272
  %v316 = vpack.c.bf16 %v275, %v274
  %v317 = vpack.c.bf16 %v277, %v276
  %v318 = vpack.c.bf16 %v279, %v278
  %v319 = vpack.c.bf16 %v281, %v280
  %v320 = vpack.c.bf16 %v283, %v282
  %v321 = vpack.c.bf16 %v285, %v284
  %v322 = vpack.c.bf16 %v287, %v286
  %v323 = vpack.c.bf16 %v289, %v288
  %v324 = vpack.c.bf16 %v291, %v290
  %v325 = vpack.c.bf16 %v293, %v292
  %v326 = vld [vmem:[%s1] sm:$0xf]
  %v327 = vld [vmem:[%s1 + $0x4] sm:$0xf]
  %v328 = vld [vmem:[%s1 + $0x8] sm:$0xf]
  %v329 = vld [vmem:[%s1 + $0xc] sm:$0xf]
  %v330 = vld [vmem:[%s1 + $0x10] sm:$0xf]
  %v331 = vld [vmem:[%s1 + $0x14] sm:$0xf]
  %v332 = vld [vmem:[%s1 + $0x18] sm:$0xf]
  %v333 = vld [vmem:[%s1 + $0x1c] sm:$0xf]
  %v342 = vunpack.c.l.b16 %v326
  %v343 = vunpack.c.l.b16 %v327
  %v344 = vunpack.c.l.b16 %v328
  %v345 = vunpack.c.l.b16 %v329
  %v346 = vunpack.c.l.b16 %v330
  %v347 = vunpack.c.l.b16 %v331
  %v348 = vunpack.c.l.b16 %v332
  %v349 = vunpack.c.l.b16 %v333
  %v350 = vpack.c.b16 %v343, %v342
  %v351 = vpack.c.b16 %v345, %v344
  %v352 = vpack.c.b16 %v347, %v346
  %v353 = vpack.c.b16 %v349, %v348
  %vm358 = vcmask 523264
  %v360 = vsel %vm358, %v294, 0
  %v363 = vsel %vm358, %v295, 0
  %v366 = vsel %vm358, %v296, 0
  %v369 = vsel %vm358, %v297, 0
  %v372 = vsel %vm358, %v298, 0
  %v375 = vsel %vm358, %v299, 0
  %v378 = vsel %vm358, %v300, 0
  %v381 = vsel %vm358, %v301, 0
  %v384 = vsel %vm358, %v302, 0
  %v387 = vsel %vm358, %v303, 0
  %v390 = vsel %vm358, %v304, 0
  %v393 = vsel %vm358, %v305, 0
  %v396 = vsel %vm358, %v306, 0
  %v399 = vsel %vm358, %v307, 0
  %v402 = vsel %vm358, %v308, 0
  %v405 = vsel %vm358, %v309, 0
  %v408 = vsel %vm358, %v310, 0
  %v411 = vsel %vm358, %v311, 0
  %v414 = vsel %vm358, %v312, 0
  %v417 = vsel %vm358, %v313, 0
  %v420 = vsel %vm358, %v314, 0
  %v423 = vsel %vm358, %v315, 0
  %v426 = vsel %vm358, %v316, 0
  %v429 = vsel %vm358, %v317, 0
  %v432 = vsel %vm358, %v318, 0
  %v435 = vsel %vm358, %v319, 0
  %v438 = vsel %vm358, %v320, 0
  %v441 = vsel %vm358, %v321, 0
  %v444 = vsel %vm358, %v322, 0
  %v447 = vsel %vm358, %v323, 0
  %v450 = vsel %vm358, %v324, 0
  %v453 = vsel %vm358, %v325, 0
  %455 = vmatprep.subr.bf16.mxu0 0
  %456 = vmatpush1.bf16.msra.mxu0 %v350
  %457 = vmatprep.subr.bf16.mxu0 0
  %458 = vmatpush1.bf16.msra.mxu0 %v351
  %459 = vmatprep.subr.bf16.mxu0 0
  %460 = vmatpush1.bf16.msra.mxu0 %v352
  %461 = vmatprep.subr.bf16.mxu0 0
  %462 = vmatpush1.bf16.msra.mxu0 %v353
  %463 = vmatprep.subr.bf16.mxu0 0
  %464 = vmatpush1.bf16.msra.mxu0 0
  %465 = vmatprep.subr.bf16.mxu0 0
  %466 = vmatpush1.bf16.msra.mxu0 0
  %467 = vmatprep.subr.bf16.mxu0 0
  %468 = vmatpush1.bf16.msra.mxu0 0
  %469 = vmatprep.subr.bf16.mxu0 0
  %470 = vmatpush1.bf16.msra.mxu0 0
  %471 = vmatprep.subr.bf16.mxu0 0
  %472 = vmatpush1.bf16.msra.mxu0 0
  %473 = vmatprep.subr.bf16.mxu0 0
  %474 = vmatpush1.bf16.msra.mxu0 0
  %475 = vmatprep.subr.bf16.mxu0 0
  %476 = vmatpush1.bf16.msra.mxu0 0
  %477 = vmatprep.subr.bf16.mxu0 0
  %478 = vmatpush1.bf16.msra.mxu0 0
  %479 = vmatprep.subr.bf16.mxu0 0
  %480 = vmatpush1.bf16.msra.mxu0 0
  %481 = vmatprep.subr.bf16.mxu0 0
  %482 = vmatpush1.bf16.msra.mxu0 0
  %483 = vmatprep.subr.bf16.mxu0 0
  %484 = vmatpush1.bf16.msra.mxu0 0
  %485 = vmatprep.subr.bf16.mxu0 0
  %486 = vmatpush1.bf16.msra.mxu0 0
  %487 = vmatprep.mubr.bf16.mxu0 0
  %488 = vmatmul.mubr.bf16.gmra.mrb[0].mxu0 %v360
  %v489 = vpop.f32.mrb[0].mxu0
  %v490 = vadd.f32 0.0, %v489
  %v491 = vpop.f32.mrb[0].mxu0
  %v492 = vpop.f32.mrb[0].mxu0
  %v493 = vadd.f32 0.0, %v492
  %v494 = vpop.f32.mrb[0].mxu0
  %495 = vmatprep.mubr.bf16.mxu0 0
  %496 = vmatmul.mubr.bf16.gmra.mrb[0].mxu0 %v363
  %v497 = vpop.f32.mrb[0].mxu0
  %v498 = vadd.f32 0.0, %v497
  %v499 = vpop.f32.mrb[0].mxu0
  %v500 = vpop.f32.mrb[0].mxu0
  %v501 = vadd.f32 0.0, %v500
  %v502 = vpop.f32.mrb[0].mxu0
  %503 = vmatprep.mubr.bf16.mxu0 0
  %504 = vmatmul.mubr.bf16.gmra.mrb[0].mxu0 %v366
  %v505 = vpop.f32.mrb[0].mxu0
  %v506 = vadd.f32 0.0, %v505
  %v507 = vpop.f32.mrb[0].mxu0
  %v508 = vpop.f32.mrb[0].mxu0
  %v509 = vadd.f32 0.0, %v508
  %v510 = vpop.f32.mrb[0].mxu0
  %511 = vmatprep.mubr.bf16.mxu0 0
  %512 = vmatmul.mubr.bf16.gmra.mrb[0].mxu0 %v369
  %v513 = vpop.f32.mrb[0].mxu0
  %v514 = vadd.f32 0.0, %v513
  %v515 = vpop.f32.mrb[0].mxu0
  %v516 = vpop.f32.mrb[0].mxu0
  %v517 = vadd.f32 0.0, %v516
  %v518 = vpop.f32.mrb[0].mxu0
  %519 = vmatprep.mubr.bf16.mxu0 0
  %520 = vmatmul.mubr.bf16.gmra.mrb[0].mxu0 %v372
  %v521 = vpop.f32.mrb[0].mxu0
  %v522 = vadd.f32 0.0, %v521
  %v523 = vpop.f32.mrb[0].mxu0
  %v524 = vpop.f32.mrb[0].mxu0
  %v525 = vadd.f32 0.0, %v524
  %v526 = vpop.f32.mrb[0].mxu0
  %527 = vmatprep.mubr.bf16.mxu0 0
  %528 = vmatmul.mubr.bf16.gmra.mrb[0].mxu0 %v375
  %v529 = vpop.f32.mrb[0].mxu0
  %v530 = vadd.f32 0.0, %v529
  %v531 = vpop.f32.mrb[0].mxu0
  %v532 = vpop.f32.mrb[0].mxu0
  %v533 = vadd.f32 0.0, %v532
  %v534 = vpop.f32.mrb[0].mxu0
  %535 = vmatprep.mubr.bf16.mxu0 0
  %536 = vmatmul.mubr.bf16.gmra.mrb[0].mxu0 %v378
  %v537 = vpop.f32.mrb[0].mxu0
  %v538 = vadd.f32 0.0, %v537
  %v539 = vpop.f32.mrb[0].mxu0
  %v540 = vpop.f32.mrb[0].mxu0
  %v541 = vadd.f32 0.0, %v540
  %v542 = vpop.f32.mrb[0].mxu0
  %543 = vmatprep.mubr.bf16.mxu0 0
  %544 = vmatmul.mubr.bf16.gmra.mrb[0].mxu0 %v381
  %v545 = vpop.f32.mrb[0].mxu0
  %v546 = vadd.f32 0.0, %v545
  %v547 = vpop.f32.mrb[0].mxu0
  %v548 = vpop.f32.mrb[0].mxu0
  %v549 = vadd.f32 0.0, %v548
  %v550 = vpop.f32.mrb[0].mxu0
  %551 = vmatprep.mubr.bf16.mxu0 0
  %552 = vmatmul.mubr.bf16.gmra.mrb[0].mxu0 %v384
  %v553 = vpop.f32.mrb[0].mxu0
  %v554 = vadd.f32 0.0, %v553
  %v555 = vpop.f32.mrb[0].mxu0
  %v556 = vpop.f32.mrb[0].mxu0
  %v557 = vadd.f32 0.0, %v556
  %v558 = vpop.f32.mrb[0].mxu0
  %559 = vmatprep.mubr.bf16.mxu0 0
  %560 = vmatmul.mubr.bf16.gmra.mrb[0].mxu0 %v387
  %v561 = vpop.f32.mrb[0].mxu0
  %v562 = vadd.f32 0.0, %v561
  %v563 = vpop.f32.mrb[0].mxu0
  %v564 = vpop.f32.mrb[0].mxu0
  %v565 = vadd.f32 0.0, %v564
  %v566 = vpop.f32.mrb[0].mxu0
  %567 = vmatprep.mubr.bf16.mxu0 0
  %568 = vmatmul.mubr.bf16.gmra.mrb[0].mxu0 %v390
  %v569 = vpop.f32.mrb[0].mxu0
  %v570 = vadd.f32 0.0, %v569
  %v571 = vpop.f32.mrb[0].mxu0
  %v572 = vpop.f32.mrb[0].mxu0
  %v573 = vadd.f32 0.0, %v572
  %v574 = vpop.f32.mrb[0].mxu0
  %575 = vmatprep.mubr.bf16.mxu0 0
  %576 = vmatmul.mubr.bf16.gmra.mrb[0].mxu0 %v393
  %v577 = vpop.f32.mrb[0].mxu0
  %v578 = vadd.f32 0.0, %v577
  %v579 = vpop.f32.mrb[0].mxu0
  %v580 = vpop.f32.mrb[0].mxu0
  %v581 = vadd.f32 0.0, %v580
  %v582 = vpop.f32.mrb[0].mxu0
  %583 = vmatprep.mubr.bf16.mxu0 0
  %584 = vmatmul.mubr.bf16.gmra.mrb[0].mxu0 %v396
  %v585 = vpop.f32.mrb[0].mxu0
  %v586 = vadd.f32 0.0, %v585
  %v587 = vpop.f32.mrb[0].mxu0
  %v588 = vpop.f32.mrb[0].mxu0
  %v589 = vadd.f32 0.0, %v588
  %v590 = vpop.f32.mrb[0].mxu0
  %591 = vmatprep.mubr.bf16.mxu0 0
  %592 = vmatmul.mubr.bf16.gmra.mrb[0].mxu0 %v399
  %v593 = vpop.f32.mrb[0].mxu0
  %v594 = vadd.f32 0.0, %v593
  %v595 = vpop.f32.mrb[0].mxu0
  %v596 = vpop.f32.mrb[0].mxu0
  %v597 = vadd.f32 0.0, %v596
  %v598 = vpop.f32.mrb[0].mxu0
  %599 = vmatprep.mubr.bf16.mxu0 0
  %600 = vmatmul.mubr.bf16.gmra.mrb[0].mxu0 %v402
  %v601 = vpop.f32.mrb[0].mxu0
  %v602 = vadd.f32 0.0, %v601
  %v603 = vpop.f32.mrb[0].mxu0
  %v604 = vpop.f32.mrb[0].mxu0
  %v605 = vadd.f32 0.0, %v604
  %v606 = vpop.f32.mrb[0].mxu0
  %607 = vmatprep.mubr.bf16.mxu0 0
  %608 = vmatmul.mubr.bf16.gmra.mrb[0].mxu0 %v405
  %v609 = vpop.f32.mrb[0].mxu0
  %v610 = vadd.f32 0.0, %v609
  %v611 = vpop.f32.mrb[0].mxu0
  %v612 = vpop.f32.mrb[0].mxu0
  %v613 = vadd.f32 0.0, %v612
  %v614 = vpop.f32.mrb[0].mxu0
  %615 = vmatprep.mubr.bf16.mxu0 0
  %616 = vmatmul.mubr.bf16.gmra.mrb[0].mxu0 %v408
  %v617 = vpop.f32.mrb[0].mxu0
  %v618 = vadd.f32 0.0, %v617
  %v619 = vpop.f32.mrb[0].mxu0
  %v620 = vpop.f32.mrb[0].mxu0
  %v621 = vadd.f32 0.0, %v620
  %v622 = vpop.f32.mrb[0].mxu0
  %623 = vmatprep.mubr.bf16.mxu0 0
  %624 = vmatmul.mubr.bf16.gmra.mrb[0].mxu0 %v411
  %v625 = vpop.f32.mrb[0].mxu0
  %v626 = vadd.f32 0.0, %v625
  %v627 = vpop.f32.mrb[0].mxu0
  %v628 = vpop.f32.mrb[0].mxu0
  %v629 = vadd.f32 0.0, %v628
  %v630 = vpop.f32.mrb[0].mxu0
  %631 = vmatprep.mubr.bf16.mxu0 0
  %632 = vmatmul.mubr.bf16.gmra.mrb[0].mxu0 %v414
  %v633 = vpop.f32.mrb[0].mxu0
  %v634 = vadd.f32 0.0, %v633
  %v635 = vpop.f32.mrb[0].mxu0
  %v636 = vpop.f32.mrb[0].mxu0
  %v637 = vadd.f32 0.0, %v636
  %v638 = vpop.f32.mrb[0].mxu0
  %639 = vmatprep.mubr.bf16.mxu0 0
  %640 = vmatmul.mubr.bf16.gmra.mrb[0].mxu0 %v417
  %v641 = vpop.f32.mrb[0].mxu0
  %v642 = vadd.f32 0.0, %v641
  %v643 = vpop.f32.mrb[0].mxu0
  %v644 = vpop.f32.mrb[0].mxu0
  %v645 = vadd.f32 0.0, %v644
  %v646 = vpop.f32.mrb[0].mxu0
  %647 = vmatprep.mubr.bf16.mxu0 0
  %648 = vmatmul.mubr.bf16.gmra.mrb[0].mxu0 %v420
  %v649 = vpop.f32.mrb[0].mxu0
  %v650 = vadd.f32 0.0, %v649
  %v651 = vpop.f32.mrb[0].mxu0
  %v652 = vpop.f32.mrb[0].mxu0
  %v653 = vadd.f32 0.0, %v652
  %v654 = vpop.f32.mrb[0].mxu0
  %655 = vmatprep.mubr.bf16.mxu0 0
  %656 = vmatmul.mubr.bf16.gmra.mrb[0].mxu0 %v423
  %v657 = vpop.f32.mrb[0].mxu0
  %v658 = vadd.f32 0.0, %v657
  %v659 = vpop.f32.mrb[0].mxu0
  %v660 = vpop.f32.mrb[0].mxu0
  %v661 = vadd.f32 0.0, %v660
  %v662 = vpop.f32.mrb[0].mxu0
  %663 = vmatprep.mubr.bf16.mxu0 0
  %664 = vmatmul.mubr.bf16.gmra.mrb[0].mxu0 %v426
  %v665 = vpop.f32.mrb[0].mxu0
  %v666 = vadd.f32 0.0, %v665
  %v667 = vpop.f32.mrb[0].mxu0
  %v668 = vpop.f32.mrb[0].mxu0
  %v669 = vadd.f32 0.0, %v668
  %v670 = vpop.f32.mrb[0].mxu0
  %671 = vmatprep.mubr.bf16.mxu0 0
  %672 = vmatmul.mubr.bf16.gmra.mrb[0].mxu0 %v429
  %v673 = vpop.f32.mrb[0].mxu0
  %v674 = vadd.f32 0.0, %v673
  %v675 = vpop.f32.mrb[0].mxu0
  %v676 = vpop.f32.mrb[0].mxu0
  %v677 = vadd.f32 0.0, %v676
  %v678 = vpop.f32.mrb[0].mxu0
  %679 = vmatprep.mubr.bf16.mxu0 0
  %680 = vmatmul.mubr.bf16.gmra.mrb[0].mxu0 %v432
  %v681 = vpop.f32.mrb[0].mxu0
  %v682 = vadd.f32 0.0, %v681
  %v683 = vpop.f32.mrb[0].mxu0
  %v684 = vpop.f32.mrb[0].mxu0
  %v685 = vadd.f32 0.0, %v684
  %v686 = vpop.f32.mrb[0].mxu0
  %687 = vmatprep.mubr.bf16.mxu0 0
  %688 = vmatmul.mubr.bf16.gmra.mrb[0].mxu0 %v435
  %v689 = vpop.f32.mrb[0].mxu0
  %v690 = vadd.f32 0.0, %v689
  %v691 = vpop.f32.mrb[0].mxu0
  %v692 = vpop.f32.mrb[0].mxu0
  %v693 = vadd.f32 0.0, %v692
  %v694 = vpop.f32.mrb[0].mxu0
  %695 = vmatprep.mubr.bf16.mxu0 0
  %696 = vmatmul.mubr.bf16.gmra.mrb[0].mxu0 %v438
  %v697 = vpop.f32.mrb[0].mxu0
  %v698 = vadd.f32 0.0, %v697
  %v699 = vpop.f32.mrb[0].mxu0
  %v700 = vpop.f32.mrb[0].mxu0
  %v701 = vadd.f32 0.0, %v700
  %v702 = vpop.f32.mrb[0].mxu0
  %703 = vmatprep.mubr.bf16.mxu0 0
  %704 = vmatmul.mubr.bf16.gmra.mrb[0].mxu0 %v441
  %v705 = vpop.f32.mrb[0].mxu0
  %v706 = vadd.f32 0.0, %v705
  %v707 = vpop.f32.mrb[0].mxu0
  %v708 = vpop.f32.mrb[0].mxu0
  %v709 = vadd.f32 0.0, %v708
  %v710 = vpop.f32.mrb[0].mxu0
  %711 = vmatprep.mubr.bf16.mxu0 0
  %712 = vmatmul.mubr.bf16.gmra.mrb[0].mxu0 %v444
  %v713 = vpop.f32.mrb[0].mxu0
  %v714 = vadd.f32 0.0, %v713
  %v715 = vpop.f32.mrb[0].mxu0
  %v716 = vpop.f32.mrb[0].mxu0
  %v717 = vadd.f32 0.0, %v716
  %v718 = vpop.f32.mrb[0].mxu0
  %719 = vmatprep.mubr.bf16.mxu0 0
  %720 = vmatmul.mubr.bf16.gmra.mrb[0].mxu0 %v447
  %v721 = vpop.f32.mrb[0].mxu0
  %v722 = vadd.f32 0.0, %v721
  %v723 = vpop.f32.mrb[0].mxu0
  %v724 = vpop.f32.mrb[0].mxu0
  %v725 = vadd.f32 0.0, %v724
  %v726 = vpop.f32.mrb[0].mxu0
  %727 = vmatprep.mubr.bf16.mxu0 0
  %728 = vmatmul.mubr.bf16.gmra.mrb[0].mxu0 %v450
  %v729 = vpop.f32.mrb[0].mxu0
  %v730 = vadd.f32 0.0, %v729
  %v731 = vpop.f32.mrb[0].mxu0
  %v732 = vpop.f32.mrb[0].mxu0
  %v733 = vadd.f32 0.0, %v732
  %v734 = vpop.f32.mrb[0].mxu0
  %735 = vmatprep.mubr.bf16.mxu0 0
  %736 = vmatmul.mubr.bf16.gmra.mrb[0].mxu0 %v453
  %v737 = vpop.f32.mrb[0].mxu0
  %v738 = vadd.f32 0.0, %v737
  %v739 = vpop.f32.mrb[0].mxu0
  %v740 = vpop.f32.mrb[0].mxu0
  %v741 = vadd.f32 0.0, %v740
  %v742 = vpop.f32.mrb[0].mxu0
  %743 = vdwg.mxu0
  %v744 = vld [vmem:[%s4] sm:$0x1]
  %v746 = vlaneseq
  %v747 = vshrl.u32 %v746, 7
  %v748 = vsub.s32 0, %v747
  %v749 = vrot.slane %v744, %v748
  %v751 = vmul.f32 %v490, %v749
  %v752 = vmul.f32 %v493, %v749
  %v753 = vmul.f32 %v498, %v749
  %v754 = vmul.f32 %v501, %v749
  %v755 = vmul.f32 %v506, %v749
  %v756 = vmul.f32 %v509, %v749
  %v757 = vmul.f32 %v514, %v749
  %v758 = vmul.f32 %v517, %v749
  %v759 = vmul.f32 %v522, %v749
  %v760 = vmul.f32 %v525, %v749
  %v761 = vmul.f32 %v530, %v749
  %v762 = vmul.f32 %v533, %v749
  %v763 = vmul.f32 %v538, %v749
  %v764 = vmul.f32 %v541, %v749
  %v765 = vmul.f32 %v546, %v749
  %v766 = vmul.f32 %v549, %v749
  %v767 = vmul.f32 %v554, %v749
  %v768 = vmul.f32 %v557, %v749
  %v769 = vmul.f32 %v562, %v749
  %v770 = vmul.f32 %v565, %v749
  %v771 = vmul.f32 %v570, %v749
  %v772 = vmul.f32 %v573, %v749
  %v773 = vmul.f32 %v578, %v749
  %v774 = vmul.f32 %v581, %v749
  %v775 = vmul.f32 %v586, %v749
  %v776 = vmul.f32 %v589, %v749
  %v777 = vmul.f32 %v594, %v749
  %v778 = vmul.f32 %v597, %v749
  %v779 = vmul.f32 %v602, %v749
  %v780 = vmul.f32 %v605, %v749
  %v781 = vmul.f32 %v610, %v749
  %v782 = vmul.f32 %v613, %v749
  %v783 = vmul.f32 %v618, %v749
  %v784 = vmul.f32 %v621, %v749
  %v785 = vmul.f32 %v626, %v749
  %v786 = vmul.f32 %v629, %v749
  %v787 = vmul.f32 %v634, %v749
  %v788 = vmul.f32 %v637, %v749
  %v789 = vmul.f32 %v642, %v749
  %v790 = vmul.f32 %v645, %v749
  %v791 = vmul.f32 %v650, %v749
  %v792 = vmul.f32 %v653, %v749
  %v793 = vmul.f32 %v658, %v749
  %v794 = vmul.f32 %v661, %v749
  %v795 = vmul.f32 %v666, %v749
  %v796 = vmul.f32 %v669, %v749
  %v797 = vmul.f32 %v674, %v749
  %v798 = vmul.f32 %v677, %v749
  %v799 = vmul.f32 %v682, %v749
  %v800 = vmul.f32 %v685, %v749
  %v801 = vmul.f32 %v690, %v749
  %v802 = vmul.f32 %v693, %v749
  %v803 = vmul.f32 %v698, %v749
  %v804 = vmul.f32 %v701, %v749
  %v805 = vmul.f32 %v706, %v749
  %v806 = vmul.f32 %v709, %v749
  %v807 = vmul.f32 %v714, %v749
  %v808 = vmul.f32 %v717, %v749
  %v809 = vmul.f32 %v722, %v749
  %v810 = vmul.f32 %v725, %v749
  %v811 = vmul.f32 %v730, %v749
  %v812 = vmul.f32 %v733, %v749
  %v813 = vmul.f32 %v738, %v749
  %v814 = vmul.f32 %v741, %v749
  %v815 = vld [vmem:[%s5] sm:$0x1]
  %v817 = vlaneseq
  %v818 = vshrl.u32 %v817, 7
  %v819 = vsub.s32 0, %v818
  %v820 = vrot.slane %v815, %v819
  %v822 = vadd.f32 %v751, %v820
  %v823 = vadd.f32 %v752, %v820
  %v824 = vadd.f32 %v753, %v820
  %v825 = vadd.f32 %v754, %v820
  %v826 = vadd.f32 %v755, %v820
  %v827 = vadd.f32 %v756, %v820
  %v828 = vadd.f32 %v757, %v820
  %v829 = vadd.f32 %v758, %v820
  %v830 = vadd.f32 %v759, %v820
  %v831 = vadd.f32 %v760, %v820
  %v832 = vadd.f32 %v761, %v820
  %v833 = vadd.f32 %v762, %v820
  %v834 = vadd.f32 %v763, %v820
  %v835 = vadd.f32 %v764, %v820
  %v836 = vadd.f32 %v765, %v820
  %v837 = vadd.f32 %v766, %v820
  %v838 = vadd.f32 %v767, %v820
  %v839 = vadd.f32 %v768, %v820
  %v840 = vadd.f32 %v769, %v820
  %v841 = vadd.f32 %v770, %v820
  %v842 = vadd.f32 %v771, %v820
  %v843 = vadd.f32 %v772, %v820
  %v844 = vadd.f32 %v773, %v820
  %v845 = vadd.f32 %v774, %v820
  %v846 = vadd.f32 %v775, %v820
  %v847 = vadd.f32 %v776, %v820
  %v848 = vadd.f32 %v777, %v820
  %v849 = vadd.f32 %v778, %v820
  %v850 = vadd.f32 %v779, %v820
  %v851 = vadd.f32 %v780, %v820
  %v852 = vadd.f32 %v781, %v820
  %v853 = vadd.f32 %v782, %v820
  %v854 = vadd.f32 %v783, %v820
  %v855 = vadd.f32 %v784, %v820
  %v856 = vadd.f32 %v785, %v820
  %v857 = vadd.f32 %v786, %v820
  %v858 = vadd.f32 %v787, %v820
  %v859 = vadd.f32 %v788, %v820
  %v860 = vadd.f32 %v789, %v820
  %v861 = vadd.f32 %v790, %v820
  %v862 = vadd.f32 %v791, %v820
  %v863 = vadd.f32 %v792, %v820
  %v864 = vadd.f32 %v793, %v820
  %v865 = vadd.f32 %v794, %v820
  %v866 = vadd.f32 %v795, %v820
  %v867 = vadd.f32 %v796, %v820
  %v868 = vadd.f32 %v797, %v820
  %v869 = vadd.f32 %v798, %v820
  %v870 = vadd.f32 %v799, %v820
  %v871 = vadd.f32 %v800, %v820
  %v872 = vadd.f32 %v801, %v820
  %v873 = vadd.f32 %v802, %v820
  %v874 = vadd.f32 %v803, %v820
  %v875 = vadd.f32 %v804, %v820
  %v876 = vadd.f32 %v805, %v820
  %v877 = vadd.f32 %v806, %v820
  %v878 = vadd.f32 %v807, %v820
  %v879 = vadd.f32 %v808, %v820
  %v880 = vadd.f32 %v809, %v820
  %v881 = vadd.f32 %v810, %v820
  %v882 = vadd.f32 %v811, %v820
  %v883 = vadd.f32 %v812, %v820
  %v884 = vadd.f32 %v813, %v820
  %v885 = vadd.f32 %v814, %v820
  %v886 = vmax.f32 %v822, 0.0
  %v887 = vmax.f32 %v823, 0.0
  %v888 = vmax.f32 %v824, 0.0
  %v889 = vmax.f32 %v825, 0.0
  %v890 = vmax.f32 %v826, 0.0
  %v891 = vmax.f32 %v827, 0.0
  %v892 = vmax.f32 %v828, 0.0
  %v893 = vmax.f32 %v829, 0.0
  %v894 = vmax.f32 %v830, 0.0
  %v895 = vmax.f32 %v831, 0.0
  %v896 = vmax.f32 %v832, 0.0
  %v897 = vmax.f32 %v833, 0.0
  %v898 = vmax.f32 %v834, 0.0
  %v899 = vmax.f32 %v835, 0.0
  %v900 = vmax.f32 %v836, 0.0
  %v901 = vmax.f32 %v837, 0.0
  %v902 = vmax.f32 %v838, 0.0
  %v903 = vmax.f32 %v839, 0.0
  %v904 = vmax.f32 %v840, 0.0
  %v905 = vmax.f32 %v841, 0.0
  %v906 = vmax.f32 %v842, 0.0
  %v907 = vmax.f32 %v843, 0.0
  %v908 = vmax.f32 %v844, 0.0
  %v909 = vmax.f32 %v845, 0.0
  %v910 = vmax.f32 %v846, 0.0
  %v911 = vmax.f32 %v847, 0.0
  %v912 = vmax.f32 %v848, 0.0
  %v913 = vmax.f32 %v849, 0.0
  %v914 = vmax.f32 %v850, 0.0
  %v915 = vmax.f32 %v851, 0.0
  %v916 = vmax.f32 %v852, 0.0
  %v917 = vmax.f32 %v853, 0.0
  %v918 = vmax.f32 %v854, 0.0
  %v919 = vmax.f32 %v855, 0.0
  %v920 = vmax.f32 %v856, 0.0
  %v921 = vmax.f32 %v857, 0.0
  %v922 = vmax.f32 %v858, 0.0
  %v923 = vmax.f32 %v859, 0.0
  %v924 = vmax.f32 %v860, 0.0
  %v925 = vmax.f32 %v861, 0.0
  %v926 = vmax.f32 %v862, 0.0
  %v927 = vmax.f32 %v863, 0.0
  %v928 = vmax.f32 %v864, 0.0
  %v929 = vmax.f32 %v865, 0.0
  %v930 = vmax.f32 %v866, 0.0
  %v931 = vmax.f32 %v867, 0.0
  %v932 = vmax.f32 %v868, 0.0
  %v933 = vmax.f32 %v869, 0.0
  %v934 = vmax.f32 %v870, 0.0
  %v935 = vmax.f32 %v871, 0.0
  %v936 = vmax.f32 %v872, 0.0
  %v937 = vmax.f32 %v873, 0.0
  %v938 = vmax.f32 %v874, 0.0
  %v939 = vmax.f32 %v875, 0.0
  %v940 = vmax.f32 %v876, 0.0
  %v941 = vmax.f32 %v877, 0.0
  %v942 = vmax.f32 %v878, 0.0
  %v943 = vmax.f32 %v879, 0.0
  %v944 = vmax.f32 %v880, 0.0
  %v945 = vmax.f32 %v881, 0.0
  %v946 = vmax.f32 %v882, 0.0
  %v947 = vmax.f32 %v883, 0.0
  %v948 = vmax.f32 %v884, 0.0
  %v949 = vmax.f32 %v885, 0.0
  %vm950 = vcmask 130048
  %951 = vst.msk [vmem:[%s6] sm:$0xff] %vm950, %v886
  %952 = vst.msk [vmem:[%s6 + $0x8] sm:$0xff] %vm950, %v887
  %953 = vst.msk [vmem:[%s6 + $0x10] sm:$0xff] %vm950, %v888
  %954 = vst.msk [vmem:[%s6 + $0x18] sm:$0xff] %vm950, %v889
  %955 = vst.msk [vmem:[%s6 + $0x20] sm:$0xff] %vm950, %v890
  %956 = vst.msk [vmem:[%s6 + $0x28] sm:$0xff] %vm950, %v891
  %957 = vst.msk [vmem:[%s6 + $0x30] sm:$0xff] %vm950, %v892
  %958 = vst.msk [vmem:[%s6 + $0x38] sm:$0xff] %vm950, %v893
  %959 = vst.msk [vmem:[%s6 + $0x40] sm:$0xff] %vm950, %v894
  %960 = vst.msk [vmem:[%s6 + $0x48] sm:$0xff] %vm950, %v895
  %961 = vst.msk [vmem:[%s6 + $0x50] sm:$0xff] %vm950, %v896
  %962 = vst.msk [vmem:[%s6 + $0x58] sm:$0xff] %vm950, %v897
  %963 = vst.msk [vmem:[%s6 + $0x60] sm:$0xff] %vm950, %v898
  %964 = vst.msk [vmem:[%s6 + $0x68] sm:$0xff] %vm950, %v899
  %965 = vst.msk [vmem:[%s6 + $0x70] sm:$0xff] %vm950, %v900
  %966 = vst.msk [vmem:[%s6 + $0x78] sm:$0xff] %vm950, %v901
  %967 = vst.msk [vmem:[%s6 + $0x80] sm:$0xff] %vm950, %v902
  %968 = vst.msk [vmem:[%s6 + $0x88] sm:$0xff] %vm950, %v903
  %969 = vst.msk [vmem:[%s6 + $0x90] sm:$0xff] %vm950, %v904
  %970 = vst.msk [vmem:[%s6 + $0x98] sm:$0xff] %vm950, %v905
  %971 = vst.msk [vmem:[%s6 + $0xa0] sm:$0xff] %vm950, %v906
  %972 = vst.msk [vmem:[%s6 + $0xa8] sm:$0xff] %vm950, %v907
  %973 = vst.msk [vmem:[%s6 + $0xb0] sm:$0xff] %vm950, %v908
  %974 = vst.msk [vmem:[%s6 + $0xb8] sm:$0xff] %vm950, %v909
  %975 = vst.msk [vmem:[%s6 + $0xc0] sm:$0xff] %vm950, %v910
  %976 = vst.msk [vmem:[%s6 + $0xc8] sm:$0xff] %vm950, %v911
  %977 = vst.msk [vmem:[%s6 + $0xd0] sm:$0xff] %vm950, %v912
  %978 = vst.msk [vmem:[%s6 + $0xd8] sm:$0xff] %vm950, %v913
  %979 = vst.msk [vmem:[%s6 + $0xe0] sm:$0xff] %vm950, %v914
  %980 = vst.msk [vmem:[%s6 + $0xe8] sm:$0xff] %vm950, %v915
  %981 = vst.msk [vmem:[%s6 + $0xf0] sm:$0xff] %vm950, %v916
  %982 = vst.msk [vmem:[%s6 + $0xf8] sm:$0xff] %vm950, %v917
  %983 = vst.msk [vmem:[%s6 + $0x100] sm:$0xff] %vm950, %v918
  %984 = vst.msk [vmem:[%s6 + $0x108] sm:$0xff] %vm950, %v919
  %985 = vst.msk [vmem:[%s6 + $0x110] sm:$0xff] %vm950, %v920
  %986 = vst.msk [vmem:[%s6 + $0x118] sm:$0xff] %vm950, %v921
  %987 = vst.msk [vmem:[%s6 + $0x120] sm:$0xff] %vm950, %v922
  %988 = vst.msk [vmem:[%s6 + $0x128] sm:$0xff] %vm950, %v923
  %989 = vst.msk [vmem:[%s6 + $0x130] sm:$0xff] %vm950, %v924
  %990 = vst.msk [vmem:[%s6 + $0x138] sm:$0xff] %vm950, %v925
  %991 = vst.msk [vmem:[%s6 + $0x140] sm:$0xff] %vm950, %v926
  %992 = vst.msk [vmem:[%s6 + $0x148] sm:$0xff] %vm950, %v927
  %993 = vst.msk [vmem:[%s6 + $0x150] sm:$0xff] %vm950, %v928
  %994 = vst.msk [vmem:[%s6 + $0x158] sm:$0xff] %vm950, %v929
  %995 = vst.msk [vmem:[%s6 + $0x160] sm:$0xff] %vm950, %v930
  %996 = vst.msk [vmem:[%s6 + $0x168] sm:$0xff] %vm950, %v931
  %997 = vst.msk [vmem:[%s6 + $0x170] sm:$0xff] %vm950, %v932
  %998 = vst.msk [vmem:[%s6 + $0x178] sm:$0xff] %vm950, %v933
  %999 = vst.msk [vmem:[%s6 + $0x180] sm:$0xff] %vm950, %v934
  %1000 = vst.msk [vmem:[%s6 + $0x188] sm:$0xff] %vm950, %v935
  %1001 = vst.msk [vmem:[%s6 + $0x190] sm:$0xff] %vm950, %v936
  %1002 = vst.msk [vmem:[%s6 + $0x198] sm:$0xff] %vm950, %v937
  %1003 = vst.msk [vmem:[%s6 + $0x1a0] sm:$0xff] %vm950, %v938
  %1004 = vst.msk [vmem:[%s6 + $0x1a8] sm:$0xff] %vm950, %v939
  %1005 = vst.msk [vmem:[%s6 + $0x1b0] sm:$0xff] %vm950, %v940
  %1006 = vst.msk [vmem:[%s6 + $0x1b8] sm:$0xff] %vm950, %v941
  %1007 = vst.msk [vmem:[%s6 + $0x1c0] sm:$0xff] %vm950, %v942
  %1008 = vst.msk [vmem:[%s6 + $0x1c8] sm:$0xff] %vm950, %v943
  %1009 = vst.msk [vmem:[%s6 + $0x1d0] sm:$0xff] %vm950, %v944
  %1010 = vst.msk [vmem:[%s6 + $0x1d8] sm:$0xff] %vm950, %v945
  %1011 = vst.msk [vmem:[%s6 + $0x1e0] sm:$0xff] %vm950, %v946
  %1012 = vst.msk [vmem:[%s6 + $0x1e8] sm:$0xff] %vm950, %v947
  %1013 = vst.msk [vmem:[%s6 + $0x1f0] sm:$0xff] %vm950, %v948
  %1014 = vst.msk [vmem:[%s6 + $0x1f8] sm:$0xff] %vm950, %v949
  // Predicated region
  $region26: #{fph_forward.14} parent=0 // pred_check
    _
  $region27: #{fph_forward.14} parent=0 // pred_check_branch
    %1016 = sbr.rel (0) target = $region29
  $region28: #{fph_forward.14} parent=0 // pred_region
    _
  $region29: #{fph_forward.14} parent=0 // pred_fallthru
    _
  // Predicated region
  $region30: #{fph_forward.14} parent=0 // pred_check
    _
  $region31: #{fph_forward.14} parent=0 // pred_check_branch
    %1018 = sbr.rel (0) target = $region33
  $region32: #{fph_forward.14} parent=0 // pred_region
    _
  $region33: #{fph_forward.14} parent=0 // pred_fallthru
    _

// kernel: mul.13
$region0: #{mul.13}
  %s0 = inlined_call_operand.vmem [shape: f32[128,16], index: 0, kind: input, shape index: {}]
  %s1 = inlined_call_operand.vmem [shape: f32[2,1024], index: 1, kind: output, shape index: {}]
  $region1: #{mul.13} parent=0
    #allocation0 [shape = 'u8[32768]{0}', space=vmem, size = 0x8000, scoped, tag = 'scoped mem for output reshape']
    %v2 = vld [vmem:[%s0] ss:$8 sm:$0xf]
    %v3 = vld [vmem:[%s0] ss:$8 sm:$0xf0]
    %vm4 = vcmask 1047556
    %v5 = vsel %vm4, %v3, %v2
    %vm6 = vcmask 130048
    %7 = vst.msk [vmem:[#allocation0] ss:$8 sm:$0xf] %vm6, %v5
    %8 = vst.msk [vmem:[#allocation0] ss:$8 sm:$0xf0] %vm6, %v5
    %s9 = scalar_lea.vmem %s0, 64
    %v10 = vld [vmem:[%s9] ss:$8 sm:$0xf]
    %s11 = scalar_lea.vmem %s0, 64
    %v12 = vld [vmem:[%s11] ss:$8 sm:$0xf0]
    %vm13 = vcmask 1047556
    %v14 = vsel %vm13, %v12, %v10
    %vm15 = vcmask 130048
    %s16 = scalar_lea.vmem [#allocation0], 1
    %17 = vst.msk [vmem:[%s16] ss:$8 sm:$0xf] %vm15, %v14
    %s18 = scalar_lea.vmem [#allocation0], 1
    %19 = vst.msk [vmem:[%s18] ss:$8 sm:$0xf0] %vm15, %v14
    %s20 = scalar_lea.vmem %s0, 7
    %v21 = vld [vmem:[%s20] sm:$0x1]
    %s22 = scalar_lea.vmem %s0, 127
    %s23 = smov 6
    %v24 = vld [vmem:[%s22] ss:$-56 sm:%s23]
    %vm25 = vcmask 1042433
    %v26 = vsel %vm25, %v24, %v21
    %s27 = scalar_lea.vmem %s0, 247
    %s28 = smov 24
    %v29 = vld [vmem:[%s27] ss:$-56 sm:%s28]
    %vm30 = vcmask 1044483
    %v31 = vsel %vm30, %v29, %v26
    %s32 = scalar_lea.vmem %s0, 367
    %s33 = smov 96
    %v34 = vld [vmem:[%s32] ss:$-56 sm:%s33]
    %vm35 = vcmask 1046533
    %v36 = vsel %vm35, %v34, %v31
    %s37 = scalar_lea.vmem %s0, 88
    %v38 = vld [vmem:[%s37] sm:$0x80]
    %vm39 = vcmask 1047559
    %v40 = vsel %vm39, %v38, %v36
    %41 = vrot.lane.b32.xlu0 %v40, 112
    %v42 = vpop.permute.xlu0 %41
    %vm43 = vcmask 1048448
    %44 = vst.msk [vmem:[#allocation0] sm:$0x3] %vm43, %v42
    %s45 = scalar_lea.vmem [#allocation0], 6
    %46 = vst.msk [vmem:[%s45] sm:$0xc] %vm43, %v42
    %s47 = scalar_lea.vmem [#allocation0], 12
    %48 = vst.msk [vmem:[%s47] sm:$0x30] %vm43, %v42
    %s49 = scalar_lea.vmem [#allocation0], 18
    %50 = vst.msk [vmem:[%s49] sm:$0xc0] %vm43, %v42
    %s51 = scalar_lea.vmem %s0, 39
    %v52 = vld [vmem:[%s51] sm:$0x1]
    %s53 = scalar_lea.vmem %s0, 159
    %s54 = smov 6
    %v55 = vld [vmem:[%s53] ss:$-56 sm:%s54]
    %vm56 = vcmask 1042433
    %v57 = vsel %vm56, %v55, %v52
    %s58 = scalar_lea.vmem %s0, 279
    %s59 = smov 24
    %v60 = vld [vmem:[%s58] ss:$-56 sm:%s59]
    %vm61 = vcmask 1044483
    %v62 = vsel %vm61, %v60, %v57
    %s63 = scalar_lea.vmem %s0, 399
    %s64 = smov 96
    %v65 = vld [vmem:[%s63] ss:$-56 sm:%s64]
    %vm66 = vcmask 1046533
    %v67 = vsel %vm66, %v65, %v62
    %s68 = scalar_lea.vmem %s0, 120
    %v69 = vld [vmem:[%s68] sm:$0x80]
    %vm70 = vcmask 1047559
    %v71 = vsel %vm70, %v69, %v67
    %72 = vrot.lane.b32.xlu0 %v71, 112
    %v73 = vpop.permute.xlu0 %72
    %vm74 = vcmask 1048448
    %s75 = scalar_lea.vmem [#allocation0], 32
    %76 = vst.msk [vmem:[%s75] sm:$0x3] %vm74, %v73
    %s77 = scalar_lea.vmem [#allocation0], 38
    %78 = vst.msk [vmem:[%s77] sm:$0xc] %vm74, %v73
    %s79 = scalar_lea.vmem [#allocation0], 44
    %80 = vst.msk [vmem:[%s79] sm:$0x30] %vm74, %v73
    %s81 = scalar_lea.vmem [#allocation0], 50
    %82 = vst.msk [vmem:[%s81] sm:$0xc0] %vm74, %v73
    %s83 = scalar_lea.vmem %s0, 6
    %v84 = vld [vmem:[%s83] sm:$0x1]
    %s85 = scalar_lea.vmem %s0, 126
    %s86 = smov 6
    %v87 = vld [vmem:[%s85] ss:$-56 sm:%s86]
    %vm88 = vcmask 1042433
    %v89 = vsel %vm88, %v87, %v84
    %s90 = scalar_lea.vmem %s0, 246
    %s91 = smov 24
    %v92 = vld [vmem:[%s90] ss:$-56 sm:%s91]
    %vm93 = vcmask 1044483
    %v94 = vsel %vm93, %v92, %v89
    %s95 = scalar_lea.vmem %s0, 366
    %s96 = smov 96
    %v97 = vld [vmem:[%s95] ss:$-56 sm:%s96]
    %vm98 = vcmask 1046533
    %v99 = vsel %vm98, %v97, %v94
    %s100 = scalar_lea.vmem %s0, 87
    %v101 = vld [vmem:[%s100] sm:$0x80]
    %vm102 = vcmask 1047559
    %v103 = vsel %vm102, %v101, %v99
    %104 = vrot.lane.b32.xlu0 %v103, 96
    %v105 = vpop.permute.xlu0 %104
    %vm106 = vcmask 917248
    %107 = vst.msk [vmem:[#allocation0] sm:$0x3] %vm106, %v105
    %s108 = scalar_lea.vmem [#allocation0], 6
    %109 = vst.msk [vmem:[%s108] sm:$0xc] %vm106, %v105
    %s110 = scalar_lea.vmem [#allocation0], 12
    %111 = vst.msk [vmem:[%s110] sm:$0x30] %vm106, %v105
    %s112 = scalar_lea.vmem [#allocation0], 18
    %113 = vst.msk [vmem:[%s112] sm:$0xc0] %vm106, %v105
    %s114 = scalar_lea.vmem %s0, 38
    %v115 = vld [vmem:[%s114] sm:$0x1]
    %s116 = scalar_lea.vmem %s0, 158
    %s117 = smov 6
    %v118 = vld [vmem:[%s116] ss:$-56 sm:%s117]
    %vm119 = vcmask 1042433
    %v120 = vsel %vm119, %v118, %v115
    %s121 = scalar_lea.vmem %s0, 278
    %s122 = smov 24
    %v123 = vld [vmem:[%s121] ss:$-56 sm:%s122]
    %vm124 = vcmask 1044483
    %v125 = vsel %vm124, %v123, %v120
    %s126 = scalar_lea.vmem %s0, 398
    %s127 = smov 96
    %v128 = vld [vmem:[%s126] ss:$-56 sm:%s127]
    %vm129 = vcmask 1046533
    %v130 = vsel %vm129, %v128, %v125
    %s131 = scalar_lea.vmem %s0, 119
    %v132 = vld [vmem:[%s131] sm:$0x80]
    %vm133 = vcmask 1047559
    %v134 = vsel %vm133, %v132, %v130
    %135 = vrot.lane.b32.xlu0 %v134, 96
    %v136 = vpop.permute.xlu0 %135
    %vm137 = vcmask 917248
    %s138 = scalar_lea.vmem [#allocation0], 32
    %139 = vst.msk [vmem:[%s138] sm:$0x3] %vm137, %v136
    %s140 = scalar_lea.vmem [#allocation0], 38
    %141 = vst.msk [vmem:[%s140] sm:$0xc] %vm137, %v136
    %s142 = scalar_lea.vmem [#allocation0], 44
    %143 = vst.msk [vmem:[%s142] sm:$0x30] %vm137, %v136
    %s144 = scalar_lea.vmem [#allocation0], 50
    %145 = vst.msk [vmem:[%s144] sm:$0xc0] %vm137, %v136
    %s146 = scalar_lea.vmem %s0, 5
    %v147 = vld [vmem:[%s146] sm:$0x1]
    %s148 = scalar_lea.vmem %s0, 125
    %s149 = smov 6
    %v150 = vld [vmem:[%s148] ss:$-56 sm:%s149]
    %vm151 = vcmask 1042433
    %v152 = vsel %vm151, %v150, %v147
    %s153 = scalar_lea.vmem %s0, 245
    %s154 = smov 24
    %v155 = vld [vmem:[%s153] ss:$-56 sm:%s154]
    %vm156 = vcmask 1044483
    %v157 = vsel %vm156, %v155, %v152
    %s158 = scalar_lea.vmem %s0, 365
    %s159 = smov 96
    %v160 = vld [vmem:[%s158] ss:$-56 sm:%s159]
    %vm161 = vcmask 1046533
    %v162 = vsel %vm161, %v160, %v157
    %s163 = scalar_lea.vmem %s0, 86
    %v164 = vld [vmem:[%s163] sm:$0x80]
    %vm165 = vcmask 1047559
    %v166 = vsel %vm165, %v164, %v162
    %167 = vrot.lane.b32.xlu0 %v166, 80
    %v168 = vpop.permute.xlu0 %167
    %vm169 = vcmask 786048
    %170 = vst.msk [vmem:[#allocation0] sm:$0x3] %vm169, %v168
    %s171 = scalar_lea.vmem [#allocation0], 6
    %172 = vst.msk [vmem:[%s171] sm:$0xc] %vm169, %v168
    %s173 = scalar_lea.vmem [#allocation0], 12
    %174 = vst.msk [vmem:[%s173] sm:$0x30] %vm169, %v168
    %s175 = scalar_lea.vmem [#allocation0], 18
    %176 = vst.msk [vmem:[%s175] sm:$0xc0] %vm169, %v168
    %s177 = scalar_lea.vmem %s0, 37
    %v178 = vld [vmem:[%s177] sm:$0x1]
    %s179 = scalar_lea.vmem %s0, 157
    %s180 = smov 6
    %v181 = vld [vmem:[%s179] ss:$-56 sm:%s180]
    %vm182 = vcmask 1042433
    %v183 = vsel %vm182, %v181, %v178
    %s184 = scalar_lea.vmem %s0, 277
    %s185 = smov 24
    %v186 = vld [vmem:[%s184] ss:$-56 sm:%s185]
    %vm187 = vcmask 1044483
    %v188 = vsel %vm187, %v186, %v183
    %s189 = scalar_lea.vmem %s0, 397
    %s190 = smov 96
    %v191 = vld [vmem:[%s189] ss:$-56 sm:%s190]
    %vm192 = vcmask 1046533
    %v193 = vsel %vm192, %v191, %v188
    %s194 = scalar_lea.vmem %s0, 118
    %v195 = vld [vmem:[%s194] sm:$0x80]
    %vm196 = vcmask 1047559
    %v197 = vsel %vm196, %v195, %v193
    %198 = vrot.lane.b32.xlu0 %v197, 80
    %v199 = vpop.permute.xlu0 %198
    %vm200 = vcmask 786048
    %s201 = scalar_lea.vmem [#allocation0], 32
    %202 = vst.msk [vmem:[%s201] sm:$0x3] %vm200, %v199
    %s203 = scalar_lea.vmem [#allocation0], 38
    %204 = vst.msk [vmem:[%s203] sm:$0xc] %vm200, %v199
    %s205 = scalar_lea.vmem [#allocation0], 44
    %206 = vst.msk [vmem:[%s205] sm:$0x30] %vm200, %v199
    %s207 = scalar_lea.vmem [#allocation0], 50
    %208 = vst.msk [vmem:[%s207] sm:$0xc0] %vm200, %v199
    %s209 = scalar_lea.vmem %s0, 4
    %v210 = vld [vmem:[%s209] sm:$0x1]
    %s211 = scalar_lea.vmem %s0, 124
    %s212 = smov 6
    %v213 = vld [vmem:[%s211] ss:$-56 sm:%s212]
    %vm214 = vcmask 1042433
    %v215 = vsel %vm214, %v213, %v210
    %s216 = scalar_lea.vmem %s0, 244
    %s217 = smov 24
    %v218 = vld [vmem:[%s216] ss:$-56 sm:%s217]
    %vm219 = vcmask 1044483
    %v220 = vsel %vm219, %v218, %v215
    %s221 = scalar_lea.vmem %s0, 364
    %s222 = smov 96
    %v223 = vld [vmem:[%s221] ss:$-56 sm:%s222]
    %vm224 = vcmask 1046533
    %v225 = vsel %vm224, %v223, %v220
    %s226 = scalar_lea.vmem %s0, 85
    %v227 = vld [vmem:[%s226] sm:$0x80]
    %vm228 = vcmask 1047559
    %v229 = vsel %vm228, %v227, %v225
    %230 = vrot.lane.b32.xlu0 %v229, 64
    %v231 = vpop.permute.xlu0 %230
    %vm232 = vcmask 654848
    %233 = vst.msk [vmem:[#allocation0] sm:$0x3] %vm232, %v231
    %s234 = scalar_lea.vmem [#allocation0], 6
    %235 = vst.msk [vmem:[%s234] sm:$0xc] %vm232, %v231
    %s236 = scalar_lea.vmem [#allocation0], 12
    %237 = vst.msk [vmem:[%s236] sm:$0x30] %vm232, %v231
    %s238 = scalar_lea.vmem [#allocation0], 18
    %239 = vst.msk [vmem:[%s238] sm:$0xc0] %vm232, %v231
    %s240 = scalar_lea.vmem %s0, 36
    %v241 = vld [vmem:[%s240] sm:$0x1]
    %s242 = scalar_lea.vmem %s0, 156
    %s243 = smov 6
    %v244 = vld [vmem:[%s242] ss:$-56 sm:%s243]
    %vm245 = vcmask 1042433
    %v246 = vsel %vm245, %v244, %v241
    %s247 = scalar_lea.vmem %s0, 276
    %s248 = smov 24
    %v249 = vld [vmem:[%s247] ss:$-56 sm:%s248]
    %vm250 = vcmask 1044483
    %v251 = vsel %vm250, %v249, %v246
    %s252 = scalar_lea.vmem %s0, 396
    %s253 = smov 96
    %v254 = vld [vmem:[%s252] ss:$-56 sm:%s253]
    %vm255 = vcmask 1046533
    %v256 = vsel %vm255, %v254, %v251
    %s257 = scalar_lea.vmem %s0, 117
    %v258 = vld [vmem:[%s257] sm:$0x80]
    %vm259 = vcmask 1047559
    %v260 = vsel %vm259, %v258, %v256
    %261 = vrot.lane.b32.xlu0 %v260, 64
    %v262 = vpop.permute.xlu0 %261
    %vm263 = vcmask 654848
    %s264 = scalar_lea.vmem [#allocation0], 32
    %265 = vst.msk [vmem:[%s264] sm:$0x3] %vm263, %v262
    %s266 = scalar_lea.vmem [#allocation0], 38
    %267 = vst.msk [vmem:[%s266] sm:$0xc] %vm263, %v262
    %s268 = scalar_lea.vmem [#allocation0], 44
    %269 = vst.msk [vmem:[%s268] sm:$0x30] %vm263, %v262
    %s270 = scalar_lea.vmem [#allocation0], 50
    %271 = vst.msk [vmem:[%s270] sm:$0xc0] %vm263, %v262
    %s272 = scalar_lea.vmem %s0, 3
    %v273 = vld [vmem:[%s272] sm:$0x1]
    %s274 = scalar_lea.vmem %s0, 123
    %s275 = smov 6
    %v276 = vld [vmem:[%s274] ss:$-56 sm:%s275]
    %vm277 = vcmask 1042433
    %v278 = vsel %vm277, %v276, %v273
    %s279 = scalar_lea.vmem %s0, 243
    %s280 = smov 24
    %v281 = vld [vmem:[%s279] ss:$-56 sm:%s280]
    %vm282 = vcmask 1044483
    %v283 = vsel %vm282, %v281, %v278
    %s284 = scalar_lea.vmem %s0, 363
    %s285 = smov 96
    %v286 = vld [vmem:[%s284] ss:$-56 sm:%s285]
    %vm287 = vcmask 1046533
    %v288 = vsel %vm287, %v286, %v283
    %s289 = scalar_lea.vmem %s0, 84
    %v290 = vld [vmem:[%s289] sm:$0x80]
    %vm291 = vcmask 1047559
    %v292 = vsel %vm291, %v290, %v288
    %293 = vrot.lane.b32.xlu0 %v292, 48
    %v294 = vpop.permute.xlu0 %293
    %vm295 = vcmask 523648
    %296 = vst.msk [vmem:[#allocation0] sm:$0x3] %vm295, %v294
    %s297 = scalar_lea.vmem [#allocation0], 6
    %298 = vst.msk [vmem:[%s297] sm:$0xc] %vm295, %v294
    %s299 = scalar_lea.vmem [#allocation0], 12
    %300 = vst.msk [vmem:[%s299] sm:$0x30] %vm295, %v294
    %s301 = scalar_lea.vmem [#allocation0], 18
    %302 = vst.msk [vmem:[%s301] sm:$0xc0] %vm295, %v294
    %s303 = scalar_lea.vmem %s0, 35
    %v304 = vld [vmem:[%s303] sm:$0x1]
    %s305 = scalar_lea.vmem %s0, 155
    %s306 = smov 6
    %v307 = vld [vmem:[%s305] ss:$-56 sm:%s306]
    %vm308 = vcmask 1042433
    %v309 = vsel %vm308, %v307, %v304
    %s310 = scalar_lea.vmem %s0, 275
    %s311 = smov 24
    %v312 = vld [vmem:[%s310] ss:$-56 sm:%s311]
    %vm313 = vcmask 1044483
    %v314 = vsel %vm313, %v312, %v309
    %s315 = scalar_lea.vmem %s0, 395
    %s316 = smov 96
    %v317 = vld [vmem:[%s315] ss:$-56 sm:%s316]
    %vm318 = vcmask 1046533
    %v319 = vsel %vm318, %v317, %v314
    %s320 = scalar_lea.vmem %s0, 116
    %v321 = vld [vmem:[%s320] sm:$0x80]
    %vm322 = vcmask 1047559
    %v323 = vsel %vm322, %v321, %v319
    %324 = vrot.lane.b32.xlu0 %v323, 48
    %v325 = vpop.permute.xlu0 %324
    %vm326 = vcmask 523648
    %s327 = scalar_lea.vmem [#allocation0], 32
    %328 = vst.msk [vmem:[%s327] sm:$0x3] %vm326, %v325
    %s329 = scalar_lea.vmem [#allocation0], 38
    %330 = vst.msk [vmem:[%s329] sm:$0xc] %vm326, %v325
    %s331 = scalar_lea.vmem [#allocation0], 44
    %332 = vst.msk [vmem:[%s331] sm:$0x30] %vm326, %v325
    %s333 = scalar_lea.vmem [#allocation0], 50
    %334 = vst.msk [vmem:[%s333] sm:$0xc0] %vm326, %v325
    %s335 = scalar_lea.vmem %s0, 2
    %v336 = vld [vmem:[%s335] sm:$0x1]
    %s337 = scalar_lea.vmem %s0, 122
    %s338 = smov 6
    %v339 = vld [vmem:[%s337] ss:$-56 sm:%s338]
    %vm340 = vcmask 1042433
    %v341 = vsel %vm340, %v339, %v336
    %s342 = scalar_lea.vmem %s0, 242
    %s343 = smov 24
    %v344 = vld [vmem:[%s342] ss:$-56 sm:%s343]
    %vm345 = vcmask 1044483
    %v346 = vsel %vm345, %v344, %v341
    %s347 = scalar_lea.vmem %s0, 362
    %s348 = smov 96
    %v349 = vld [vmem:[%s347] ss:$-56 sm:%s348]
    %vm350 = vcmask 1046533
    %v351 = vsel %vm350, %v349, %v346
    %s352 = scalar_lea.vmem %s0, 83
    %v353 = vld [vmem:[%s352] sm:$0x80]
    %vm354 = vcmask 1047559
    %v355 = vsel %vm354, %v353, %v351
    %356 = vrot.lane.b32.xlu0 %v355, 32
    %v357 = vpop.permute.xlu0 %356
    %vm358 = vcmask 392448
    %359 = vst.msk [vmem:[#allocation0] sm:$0x3] %vm358, %v357
    %s360 = scalar_lea.vmem [#allocation0], 6
    %361 = vst.msk [vmem:[%s360] sm:$0xc] %vm358, %v357
    %s362 = scalar_lea.vmem [#allocation0], 12
    %363 = vst.msk [vmem:[%s362] sm:$0x30] %vm358, %v357
    %s364 = scalar_lea.vmem [#allocation0], 18
    %365 = vst.msk [vmem:[%s364] sm:$0xc0] %vm358, %v357
    %s366 = scalar_lea.vmem %s0, 34
    %v367 = vld [vmem:[%s366] sm:$0x1]
    %s368 = scalar_lea.vmem %s0, 154
    %s369 = smov 6
    %v370 = vld [vmem:[%s368] ss:$-56 sm:%s369]
    %vm371 = vcmask 1042433
    %v372 = vsel %vm371, %v370, %v367
    %s373 = scalar_lea.vmem %s0, 274
    %s374 = smov 24
    %v375 = vld [vmem:[%s373] ss:$-56 sm:%s374]
    %vm376 = vcmask 1044483
    %v377 = vsel %vm376, %v375, %v372
    %s378 = scalar_lea.vmem %s0, 394
    %s379 = smov 96
    %v380 = vld [vmem:[%s378] ss:$-56 sm:%s379]
    %vm381 = vcmask 1046533
    %v382 = vsel %vm381, %v380, %v377
    %s383 = scalar_lea.vmem %s0, 115
    %v384 = vld [vmem:[%s383] sm:$0x80]
    %vm385 = vcmask 1047559
    %v386 = vsel %vm385, %v384, %v382
    %387 = vrot.lane.b32.xlu0 %v386, 32
    %v388 = vpop.permute.xlu0 %387
    %vm389 = vcmask 392448
    %s390 = scalar_lea.vmem [#allocation0], 32
    %391 = vst.msk [vmem:[%s390] sm:$0x3] %vm389, %v388
    %s392 = scalar_lea.vmem [#allocation0], 38
    %393 = vst.msk [vmem:[%s392] sm:$0xc] %vm389, %v388
    %s394 = scalar_lea.vmem [#allocation0], 44
    %395 = vst.msk [vmem:[%s394] sm:$0x30] %vm389, %v388
    %s396 = scalar_lea.vmem [#allocation0], 50
    %397 = vst.msk [vmem:[%s396] sm:$0xc0] %vm389, %v388
    %s398 = scalar_lea.vmem %s0, 1
    %v399 = vld [vmem:[%s398] sm:$0x1]
    %s400 = scalar_lea.vmem %s0, 121
    %s401 = smov 6
    %v402 = vld [vmem:[%s400] ss:$-56 sm:%s401]
    %vm403 = vcmask 1042433
    %v404 = vsel %vm403, %v402, %v399
    %s405 = scalar_lea.vmem %s0, 241
    %s406 = smov 24
    %v407 = vld [vmem:[%s405] ss:$-56 sm:%s406]
    %vm408 = vcmask 1044483
    %v409 = vsel %vm408, %v407, %v404
    %s410 = scalar_lea.vmem %s0, 361
    %s411 = smov 96
    %v412 = vld [vmem:[%s410] ss:$-56 sm:%s411]
    %vm413 = vcmask 1046533
    %v414 = vsel %vm413, %v412, %v409
    %s415 = scalar_lea.vmem %s0, 82
    %v416 = vld [vmem:[%s415] sm:$0x80]
    %vm417 = vcmask 1047559
    %v418 = vsel %vm417, %v416, %v414
    %419 = vrot.lane.b32.xlu0 %v418, 16
    %v420 = vpop.permute.xlu0 %419
    %vm421 = vcmask 261248
    %422 = vst.msk [vmem:[#allocation0] sm:$0x3] %vm421, %v420
    %s423 = scalar_lea.vmem [#allocation0], 6
    %424 = vst.msk [vmem:[%s423] sm:$0xc] %vm421, %v420
    %s425 = scalar_lea.vmem [#allocation0], 12
    %426 = vst.msk [vmem:[%s425] sm:$0x30] %vm421, %v420
    %s427 = scalar_lea.vmem [#allocation0], 18
    %428 = vst.msk [vmem:[%s427] sm:$0xc0] %vm421, %v420
    %s429 = scalar_lea.vmem %s0, 33
    %v430 = vld [vmem:[%s429] sm:$0x1]
    %s431 = scalar_lea.vmem %s0, 153
    %s432 = smov 6
    %v433 = vld [vmem:[%s431] ss:$-56 sm:%s432]
    %vm434 = vcmask 1042433
    %v435 = vsel %vm434, %v433, %v430
    %s436 = scalar_lea.vmem %s0, 273
    %s437 = smov 24
    %v438 = vld [vmem:[%s436] ss:$-56 sm:%s437]
    %vm439 = vcmask 1044483
    %v440 = vsel %vm439, %v438, %v435
    %s441 = scalar_lea.vmem %s0, 393
    %s442 = smov 96
    %v443 = vld [vmem:[%s441] ss:$-56 sm:%s442]
    %vm444 = vcmask 1046533
    %v445 = vsel %vm444, %v443, %v440
    %s446 = scalar_lea.vmem %s0, 114
    %v447 = vld [vmem:[%s446] sm:$0x80]
    %vm448 = vcmask 1047559
    %v449 = vsel %vm448, %v447, %v445
    %450 = vrot.lane.b32.xlu0 %v449, 16
    %v451 = vpop.permute.xlu0 %450
    %vm452 = vcmask 261248
    %s453 = scalar_lea.vmem [#allocation0], 32
    %454 = vst.msk [vmem:[%s453] sm:$0x3] %vm452, %v451
    %s455 = scalar_lea.vmem [#allocation0], 38
    %456 = vst.msk [vmem:[%s455] sm:$0xc] %vm452, %v451
    %s457 = scalar_lea.vmem [#allocation0], 44
    %458 = vst.msk [vmem:[%s457] sm:$0x30] %vm452, %v451
    %s459 = scalar_lea.vmem [#allocation0], 50
    %460 = vst.msk [vmem:[%s459] sm:$0xc0] %vm452, %v451
    %s462 = sshllo.u32 0, 2
    %v464 = vld [vmem:[#allocation0] sm:%s462]
    %s465 = sshllo.u32 0, 2
    %466 = vst [vmem:[%s1] sm:%s465] %v464
    %s467 = scalar_lea.vmem [#allocation0], 8
    %v468 = vld [vmem:[%s467] sm:%s462]
    %s469 = sshllo.u32 0, 2
    %s470 = scalar_lea.vmem %s1, 2
    %471 = vst [vmem:[%s470] sm:%s469] %v468
    %s472 = scalar_lea.vmem [#allocation0], 16
    %v473 = vld [vmem:[%s472] sm:%s462]
    %s474 = sshllo.u32 0, 2
    %s475 = smul.addr 2, 2
    %s476 = scalar_lea.vmem %s1, %s475
    %477 = vst [vmem:[%s476] sm:%s474] %v473
    %s478 = scalar_lea.vmem [#allocation0], 24
    %v479 = vld [vmem:[%s478] sm:%s462]
    %s480 = sshllo.u32 0, 2
    %s481 = smul.addr 2, 3
    %s482 = scalar_lea.vmem %s1, %s481
    %483 = vst [vmem:[%s482] sm:%s480] %v479
    %s484 = scalar_lea.vmem [#allocation0], 32
    %v485 = vld [vmem:[%s484] sm:%s462]
    %s486 = sshllo.u32 0, 2
    %s487 = smul.addr 2, 4
    %s488 = scalar_lea.vmem %s1, %s487
    %489 = vst [vmem:[%s488] sm:%s486] %v485
    %s490 = scalar_lea.vmem [#allocation0], 40
    %v491 = vld [vmem:[%s490] sm:%s462]
    %s492 = sshllo.u32 0, 2
    %s493 = smul.addr 2, 5
    %s494 = scalar_lea.vmem %s1, %s493
    %495 = vst [vmem:[%s494] sm:%s492] %v491
    %s496 = scalar_lea.vmem [#allocation0], 48
    %v497 = vld [vmem:[%s496] sm:%s462]
    %s498 = sshllo.u32 0, 2
    %s499 = smul.addr 2, 6
    %s500 = scalar_lea.vmem %s1, %s499
    %501 = vst [vmem:[%s500] sm:%s498] %v497
    %s502 = scalar_lea.vmem [#allocation0], 56
    %v503 = vld [vmem:[%s502] sm:%s462]
    %s504 = sshllo.u32 0, 2
    %s505 = smul.addr 2, 7
    %s506 = scalar_lea.vmem %s1, %s505
    %507 = vst [vmem:[%s506] sm:%s504] %v503

// kernel: fph_forward.15
$region0: #{fph_forward.15}
  #allocation0 [shape = 'u32[]', space=smem, size = 0x4, offset = 0x4, fixed_abs, tag = 'smem constant byte address 0x4 - core index']
  #allocation1 [shape = 'u32[144,128]{1,0:T(1,128)}', space=vmem, size = 0x12000, scoped, tag = 'internal scratch']
  %s0 = inlined_call_operand.vmem [shape: bf16[2,4,1024], index: 0, kind: input, shape index: {}]
  %s1 = inlined_call_operand.vmem [shape: bf16[2,1024,256], index: 1, kind: input, shape index: {}]
  %s2 = inlined_call_operand.vmem [shape: f32[4,256], index: 2, kind: input, shape index: {}]
  %s3 = inlined_call_operand.vmem [shape: f32[1,256], index: 3, kind: input, shape index: {}]
  %s4 = inlined_call_operand.vmem [shape: f32[1,256], index: 4, kind: input, shape index: {}]
  %s5 = inlined_call_operand.vmem [shape: f32[2,4,256], index: 5, kind: output, shape index: {}]
  %s6 = sld [smem:[#allocation0]]
  $region53: #{fph_forward.15} parent=0
    _
  %s8 = ssub.s32 1, %s6
  %s9 = scalar_select 0, %s8, %s6
  loop: start=0, step=1, limit=4
  $region2: #{fph_forward.15} parent=0 // loop_pre_header
    _
  $region3: #{fph_forward.15} parent=0 // loop_header
    %s11 = sphi 0, %s15
    %p12 = scmp.ge.s32.totalorder %s11, 4
    %s18 = sphi 0, %s30
    %s19 = sphi 0, %s26
    %s20 = sphi 0, %s18
    %s21 = sphi 0, %s19
    %s22 = sphi 0, %s20
    %s23 = sphi 0, %s21
    %s35 = sphi 0, %s37
    %s38 = sphi 0, %s35
    %s39 = sphi 0, %s38
    %s55 = sphi 0, %s39
    %s61 = sphi 0, %s63
    %s64 = sphi 0, %s61
    %s65 = sphi 0, %s64
    %s81 = sphi 0, %s65
    %s87 = sphi 0, %s89
    %s90 = sphi 0, %s87
    %s91 = sphi 0, %s90
    %s107 = sphi 0, %s91
    %s111 = sphi 0, %s111
    %s113 = sphi 0, %s111
    %s114 = sphi 0, %s113
    %s128 = sphi 0, %s114
    %s132 = sphi 0, %s132
    %s134 = sphi 0, %s132
    %s135 = sphi 0, %s134
    %s149 = sphi 0, %s135
    %s157 = sphi 0, %s159
    %s160 = sphi 0, %s157
    %s161 = sphi 0, %s160
    %s177 = sphi 0, %s161
  $region4: #{fph_forward.15} parent=0 // loop_header_branch
    %14 = sbr.rel (%p12) target = $region8
  $region5: #{fph_forward.15} parent=0 // loop_body
    %s16 = ssub.s32 %s11, 1
    %s17 = ssub.s32 %s11, 2
    %s24 = sadd.s32 1, %s19
    %p25 = scmp.ge.s32.totalorder %s24, 1
    %s26 = scalar_select %p25, 0, %s24
    %s27 = sadd.s32 1, %s18
    %s28 = scalar_select %p25, %s27, %s18
    %p29 = scmp.ge.s32.totalorder %s28, 2
    %s30 = scalar_select %p29, 0, %s28
    %s31 = ssub.s32 %s18, %s30
    %s32 = ssub.s32 %s19, %s26
    %s33 = sor.u32 %s31, %s32
    %p34 = scmp.eq.s32.totalorder %s33, 0
    %s36 = sadd.s32 %s35, 1
    %s37 = scalar_select %p34, %s35, %s36
    %p40 = pneg %p34
    %p41 = scmp.eq.s32.totalorder %s11, 1
    %p42 = por %p40, %p41
    %p43 = scmp.ne.s32.totalorder %s35, %s38
    %p44 = scmp.eq.s32.totalorder %s11, 0
    %p45 = por %p43, %p44
    %p46 = scmp.ne.s32.totalorder %s35, %s38
    %p47 = scmp.eq.s32.totalorder %s16, 1
    %p48 = por %p46, %p47
    %p49 = scmp.ne.s32.totalorder %s38, %s39
    %p50 = scmp.eq.s32.totalorder %s16, 0
    %p51 = por %p49, %p50
    %p52 = scmp.ne.s32.totalorder %s38, %s39
    %p53 = scmp.eq.s32.totalorder %s17, 1
    %p54 = por %p52, %p53
    %p56 = scmp.ne.s32.totalorder %s39, %s55
    %p57 = scmp.eq.s32.totalorder %s17, 0
    %p58 = por %p56, %p57
    %s59 = ssub.s32 %s18, %s30
    %p60 = scmp.eq.s32.totalorder %s59, 0
    %s62 = sadd.s32 %s61, 1
    %s63 = scalar_select %p60, %s61, %s62
    %p66 = pneg %p60
    %p67 = scmp.eq.s32.totalorder %s11, 1
    %p68 = por %p66, %p67
    %p69 = scmp.ne.s32.totalorder %s61, %s64
    %p70 = scmp.eq.s32.totalorder %s11, 0
    %p71 = por %p69, %p70
    %p72 = scmp.ne.s32.totalorder %s61, %s64
    %p73 = scmp.eq.s32.totalorder %s16, 1
    %p74 = por %p72, %p73
    %p75 = scmp.ne.s32.totalorder %s64, %s65
    %p76 = scmp.eq.s32.totalorder %s16, 0
    %p77 = por %p75, %p76
    %p78 = scmp.ne.s32.totalorder %s64, %s65
    %p79 = scmp.eq.s32.totalorder %s17, 1
    %p80 = por %p78, %p79
    %p82 = scmp.ne.s32.totalorder %s65, %s81
    %p83 = scmp.eq.s32.totalorder %s17, 0
    %p84 = por %p82, %p83
    %s85 = ssub.s32 %s19, %s26
    %p86 = scmp.eq.s32.totalorder %s85, 0
    %s88 = sadd.s32 %s87, 1
    %s89 = scalar_select %p86, %s87, %s88
    %p92 = pneg %p86
    %p93 = scmp.eq.s32.totalorder %s11, 1
    %p94 = por %p92, %p93
    %p95 = scmp.ne.s32.totalorder %s87, %s90
    %p96 = scmp.eq.s32.totalorder %s11, 0
    %p97 = por %p95, %p96
    %p98 = scmp.ne.s32.totalorder %s87, %s90
    %p99 = scmp.eq.s32.totalorder %s16, 1
    %p100 = por %p98, %p99
    %p101 = scmp.ne.s32.totalorder %s90, %s91
    %p102 = scmp.eq.s32.totalorder %s16, 0
    %p103 = por %p101, %p102
    %p104 = scmp.ne.s32.totalorder %s90, %s91
    %p105 = scmp.eq.s32.totalorder %s17, 1
    %p106 = por %p104, %p105
    %p108 = scmp.ne.s32.totalorder %s91, %s107
    %p109 = scmp.eq.s32.totalorder %s17, 0
    %p110 = por %p108, %p109
    %s112 = sadd.s32 %s111, 1
    %p115 = scmp.eq.s32.totalorder %s11, 1
    %p116 = scmp.ne.s32.totalorder %s111, %s113
    %p117 = scmp.eq.s32.totalorder %s11, 0
    %p118 = por %p116, %p117
    %p119 = scmp.ne.s32.totalorder %s111, %s113
    %p120 = scmp.eq.s32.totalorder %s16, 1
    %p121 = por %p119, %p120
    %p122 = scmp.ne.s32.totalorder %s113, %s114
    %p123 = scmp.eq.s32.totalorder %s16, 0
    %p124 = por %p122, %p123
    %p125 = scmp.ne.s32.totalorder %s113, %s114
    %p126 = scmp.eq.s32.totalorder %s17, 1
    %p127 = por %p125, %p126
    %p129 = scmp.ne.s32.totalorder %s114, %s128
    %p130 = scmp.eq.s32.totalorder %s17, 0
    %p131 = por %p129, %p130
    %s133 = sadd.s32 %s132, 1
    %p136 = scmp.eq.s32.totalorder %s11, 1
    %p137 = scmp.ne.s32.totalorder %s132, %s134
    %p138 = scmp.eq.s32.totalorder %s11, 0
    %p139 = por %p137, %p138
    %p140 = scmp.ne.s32.totalorder %s132, %s134
    %p141 = scmp.eq.s32.totalorder %s16, 1
    %p142 = por %p140, %p141
    %p143 = scmp.ne.s32.totalorder %s134, %s135
    %p144 = scmp.eq.s32.totalorder %s16, 0
    %p145 = por %p143, %p144
    %p146 = scmp.ne.s32.totalorder %s134, %s135
    %p147 = scmp.eq.s32.totalorder %s17, 1
    %p148 = por %p146, %p147
    %p150 = scmp.ne.s32.totalorder %s135, %s149
    %p151 = scmp.eq.s32.totalorder %s17, 0
    %p152 = por %p150, %p151
    %s153 = ssub.s32 %s18, %s30
    %s154 = ssub.s32 %s19, %s26
    %s155 = sor.u32 %s153, %s154
    %p156 = scmp.eq.s32.totalorder %s155, 0
    %s158 = sadd.s32 %s157, 1
    %s159 = scalar_select %p156, %s157, %s158
    %p162 = pneg %p156
    %p163 = scmp.eq.s32.totalorder %s11, 1
    %p164 = por %p162, %p163
    %p165 = scmp.ne.s32.totalorder %s157, %s160
    %p166 = scmp.eq.s32.totalorder %s11, 0
    %p167 = por %p165, %p166
    %p168 = scmp.ne.s32.totalorder %s157, %s160
    %p169 = scmp.eq.s32.totalorder %s16, 1
    %p170 = por %p168, %p169
    %p171 = scmp.ne.s32.totalorder %s160, %s161
    %p172 = scmp.eq.s32.totalorder %s16, 0
    %p173 = por %p171, %p172
    %p174 = scmp.ne.s32.totalorder %s160, %s161
    %p175 = scmp.eq.s32.totalorder %s17, 1
    %p176 = por %p174, %p175
    %p178 = scmp.ne.s32.totalorder %s161, %s177
    %p179 = scmp.eq.s32.totalorder %s17, 0
    %p180 = por %p178, %p179
    %p181 = scmp.le.s32.totalorder 1, %s11
    %p182 = scmp.lt.s32.totalorder %s11, 3
    %p183 = pnand %p181, %p182
    %p184 = pneg %p183
    // Predicated region
    $region9: #{fph_forward.15} parent=5 // pred_check
      _
    $region10: #{fph_forward.15} parent=5 // pred_check_branch
      %186 = sbr.rel (%p183) target = $region12
    $region11: #{fph_forward.15} parent=5 // pred_region
      %s187 = ssub.s32 %s11, 1
      // Predicated region
      $region13: #{fph_forward.15} parent=11 // pred_check
        %p188 = pneg %p103
      $region14: #{fph_forward.15} parent=11 // pred_check_branch
        %190 = sbr.rel (%p188) target = $region16
      $region15: #{fph_forward.15} parent=11 // pred_region
        %p191 = scmp.lt.s32.totalorder %s21, 0
        %s192 = scalar_select %p191, %s21, 0
        %s193 = smul.addr %s192, 2
        %s194 = smul.addr %s193, 4
        %s195 = scalar_lea.vmem %s2, %s194
      $region16: #{fph_forward.15} parent=11 // pred_fallthru
        _
      // Predicated region
      $region17: #{fph_forward.15} parent=11 // pred_check
        %p196 = pneg %p124
      $region18: #{fph_forward.15} parent=11 // pred_check_branch
        %198 = sbr.rel (%p196) target = $region20
      $region19: #{fph_forward.15} parent=11 // pred_region
        _
      $region20: #{fph_forward.15} parent=11 // pred_fallthru
        _
      // Predicated region
      $region21: #{fph_forward.15} parent=11 // pred_check
        %p199 = pneg %p145
      $region22: #{fph_forward.15} parent=11 // pred_check_branch
        %201 = sbr.rel (%p199) target = $region24
      $region23: #{fph_forward.15} parent=11 // pred_region
        _
      $region24: #{fph_forward.15} parent=11 // pred_fallthru
        _
    $region12: #{fph_forward.15} parent=5 // pred_fallthru
      _
    %p202 = scmp.lt.s32.totalorder %s11, 2
    // Predicated region
    $region25: #{fph_forward.15} parent=5 // pred_check
      %p203 = pneg %p202
    $region26: #{fph_forward.15} parent=5 // pred_check_branch
      %205 = sbr.rel (%p203) target = $region28
    $region27: #{fph_forward.15} parent=5 // pred_region
      // Predicated region
      $region29: #{fph_forward.15} parent=27 // pred_check
        %p206 = pneg %p45
      $region30: #{fph_forward.15} parent=27 // pred_check_branch
        %208 = sbr.rel (%p206) target = $region32
      $region31: #{fph_forward.15} parent=27 // pred_region
        %p209 = scmp.lt.s32.totalorder %s18, 1
        %s210 = scalar_select %p209, %s18, 1
        %p211 = scmp.lt.s32.totalorder %s19, 0
        %s212 = scalar_select %p211, %s19, 0
        %s213 = smul.addr %s212, 8
        %s214 = smul.addr %s210, 8
        %s215 = sadd.s32 %s213, %s214
        %s216 = smul.addr %s215, 2
        %s217 = scalar_lea.vmem %s0, %s216
      $region32: #{fph_forward.15} parent=27 // pred_fallthru
        _
      // Predicated region
      $region33: #{fph_forward.15} parent=27 // pred_check
        %p218 = pneg %p71
      $region34: #{fph_forward.15} parent=27 // pred_check_branch
        %220 = sbr.rel (%p218) target = $region36
      $region35: #{fph_forward.15} parent=27 // pred_region
        %p221 = scmp.lt.s32.totalorder %s18, 1
        %s222 = scalar_select %p221, %s18, 1
        %s223 = smul.addr %s222, 256
        %s224 = smul.addr %s223, 4
        %s225 = scalar_lea.vmem %s1, %s224
      $region36: #{fph_forward.15} parent=27 // pred_fallthru
        _
    $region28: #{fph_forward.15} parent=5 // pred_fallthru
      _
    %p226 = scmp.le.s32.totalorder 1, %s11
    %p227 = scmp.lt.s32.totalorder %s11, 3
    %p228 = pnand %p226, %p227
    %p229 = pneg %p228
    // Predicated region
    $region37: #{fph_forward.15} parent=5 // pred_check
      _
    $region38: #{fph_forward.15} parent=5 // pred_check_branch
      %231 = sbr.rel (%p228) target = $region40
    $region39: #{fph_forward.15} parent=5 // pred_region
      %s232 = ssub.s32 %s11, 1
      %p233 = scmp.lt.s32.totalorder %s20, 1
      %s234 = scalar_select %p233, %s20, 1
      %p235 = scmp.lt.s32.totalorder %s21, 0
      %s236 = scalar_select %p235, %s21, 0
      %s237 = smul.addr %s236, 8
      %s238 = smul.addr %s234, 8
      %s239 = sadd.s32 %s237, %s238
      %s240 = smul.addr %s239, 2
      %s241 = scalar_lea.vmem %s0, %s240
      %p242 = pneg %p51
      %p243 = pneg %p48
      %p244 = scmp.lt.s32.totalorder %s20, 1
      %s245 = scalar_select %p244, %s20, 1
      %s246 = smul.addr %s245, 256
      %s247 = smul.addr %s246, 4
      %s248 = scalar_lea.vmem %s1, %s247
      %p249 = pneg %p77
      %p250 = pneg %p74
      %p251 = scmp.lt.s32.totalorder %s21, 0
      %s252 = scalar_select %p251, %s21, 0
      %s253 = smul.addr %s252, 2
      %s254 = smul.addr %s253, 4
      %s255 = scalar_lea.vmem %s2, %s254
      %p256 = pneg %p103
      %p257 = pneg %p100
      %p258 = pneg %p124
      %p259 = pneg %p121
      %p260 = pneg %p145
      %p261 = pneg %p142
      %p262 = pneg %p173
      %p263 = pneg %p170
      %p264 = scmp.lt.s32.totalorder %s20, 1
      %s265 = scalar_select %p264, %s20, 1
      %p266 = scmp.lt.s32.totalorder %s21, 0
      %s267 = scalar_select %p266, %s21, 0
      %s268 = smul.addr %s267, 2
      %s269 = smul.addr %s265, 2
      %s270 = sadd.s32 %s268, %s269
      %s271 = smul.addr %s270, 4
      %s272 = scalar_lea.vmem %s5, %s271
      %p273 = scmp.lt.s32.totalorder %s20, 1
      %s274 = scalar_select %p273, %s20, 1
      %p275 = scmp.lt.s32.totalorder %s21, 0
      %s276 = scalar_select %p275, %s21, 0
      %s277 = smul.addr %s276, 8
      %s278 = smul.addr %s274, 8
      %s279 = sadd.s32 %s277, %s278
      %s280 = smul.addr %s279, 2
      %s281 = scalar_lea.vmem %s0, %s280
      %p282 = scmp.lt.s32.totalorder %s20, 1
      %s283 = scalar_select %p282, %s20, 1
      %s284 = smul.addr %s283, 256
      %s285 = smul.addr %s284, 4
      %s286 = scalar_lea.vmem %s1, %s285
      %p287 = scmp.lt.s32.totalorder %s21, 0
      %s288 = scalar_select %p287, %s21, 0
      %s289 = smul.addr %s288, 2
      %s290 = smul.addr %s289, 4
      %s291 = scalar_lea.vmem %s2, %s290
      %p292 = scmp.lt.s32.totalorder %s20, 1
      %s293 = scalar_select %p292, %s20, 1
      %p294 = scmp.lt.s32.totalorder %s21, 0
      %s295 = scalar_select %p294, %s21, 0
      %s296 = smul.addr %s295, 2
      %s297 = smul.addr %s293, 2
      %s298 = sadd.s32 %s296, %s297
      %s299 = smul.addr %s298, 4
      %s300 = scalar_lea.vmem %s5, %s299
      %v301 = vld [vmem:[%s281] sm:$0xff]
      %v302 = vld [vmem:[%s281 + $0x8] sm:$0xff]
      %v303 = vld [vmem:[%s286] sm:$0xff]
      %v304 = vld [vmem:[%s286 + $0x8] sm:$0xff]
      %v305 = vld [vmem:[%s286 + $0x10] sm:$0xff]
      %v306 = vld [vmem:[%s286 + $0x18] sm:$0xff]
      %v307 = vld [vmem:[%s286 + $0x20] sm:$0xff]
      %v308 = vld [vmem:[%s286 + $0x28] sm:$0xff]
      %v309 = vld [vmem:[%s286 + $0x30] sm:$0xff]
      %v310 = vld [vmem:[%s286 + $0x38] sm:$0xff]
      %v311 = vld [vmem:[%s286 + $0x40] sm:$0xff]
      %v312 = vld [vmem:[%s286 + $0x48] sm:$0xff]
      %v313 = vld [vmem:[%s286 + $0x50] sm:$0xff]
      %v314 = vld [vmem:[%s286 + $0x58] sm:$0xff]
      %v315 = vld [vmem:[%s286 + $0x60] sm:$0xff]
      %v316 = vld [vmem:[%s286 + $0x68] sm:$0xff]
      %v317 = vld [vmem:[%s286 + $0x70] sm:$0xff]
      %v318 = vld [vmem:[%s286 + $0x78] sm:$0xff]
      %v319 = vld [vmem:[%s286 + $0x80] sm:$0xff]
      %v320 = vld [vmem:[%s286 + $0x88] sm:$0xff]
      %v321 = vld [vmem:[%s286 + $0x90] sm:$0xff]
      %v322 = vld [vmem:[%s286 + $0x98] sm:$0xff]
      %v323 = vld [vmem:[%s286 + $0xa0] sm:$0xff]
      %v324 = vld [vmem:[%s286 + $0xa8] sm:$0xff]
      %v325 = vld [vmem:[%s286 + $0xb0] sm:$0xff]
      %v326 = vld [vmem:[%s286 + $0xb8] sm:$0xff]
      %v327 = vld [vmem:[%s286 + $0xc0] sm:$0xff]
      %v328 = vld [vmem:[%s286 + $0xc8] sm:$0xff]
      %v329 = vld [vmem:[%s286 + $0xd0] sm:$0xff]
      %v330 = vld [vmem:[%s286 + $0xd8] sm:$0xff]
      %v331 = vld [vmem:[%s286 + $0xe0] sm:$0xff]
      %v332 = vld [vmem:[%s286 + $0xe8] sm:$0xff]
      %v333 = vld [vmem:[%s286 + $0xf0] sm:$0xff]
      %v334 = vld [vmem:[%s286 + $0xf8] sm:$0xff]
      %v335 = vld [vmem:[%s286 + $0x100] sm:$0xff]
      %v336 = vld [vmem:[%s286 + $0x108] sm:$0xff]
      %v337 = vld [vmem:[%s286 + $0x110] sm:$0xff]
      %v338 = vld [vmem:[%s286 + $0x118] sm:$0xff]
      %v339 = vld [vmem:[%s286 + $0x120] sm:$0xff]
      %v340 = vld [vmem:[%s286 + $0x128] sm:$0xff]
      %v341 = vld [vmem:[%s286 + $0x130] sm:$0xff]
      %v342 = vld [vmem:[%s286 + $0x138] sm:$0xff]
      %v343 = vld [vmem:[%s286 + $0x140] sm:$0xff]
      %v344 = vld [vmem:[%s286 + $0x148] sm:$0xff]
      %v345 = vld [vmem:[%s286 + $0x150] sm:$0xff]
      %v346 = vld [vmem:[%s286 + $0x158] sm:$0xff]
      %v347 = vld [vmem:[%s286 + $0x160] sm:$0xff]
      %v348 = vld [vmem:[%s286 + $0x168] sm:$0xff]
      %v349 = vld [vmem:[%s286 + $0x170] sm:$0xff]
      %v350 = vld [vmem:[%s286 + $0x178] sm:$0xff]
      %v351 = vld [vmem:[%s286 + $0x180] sm:$0xff]
      %v352 = vld [vmem:[%s286 + $0x188] sm:$0xff]
      %v353 = vld [vmem:[%s286 + $0x190] sm:$0xff]
      %v354 = vld [vmem:[%s286 + $0x198] sm:$0xff]
      %v355 = vld [vmem:[%s286 + $0x1a0] sm:$0xff]
      %v356 = vld [vmem:[%s286 + $0x1a8] sm:$0xff]
      %v357 = vld [vmem:[%s286 + $0x1b0] sm:$0xff]
      %v358 = vld [vmem:[%s286 + $0x1b8] sm:$0xff]
      %v359 = vld [vmem:[%s286 + $0x1c0] sm:$0xff]
      %v360 = vld [vmem:[%s286 + $0x1c8] sm:$0xff]
      %v361 = vld [vmem:[%s286 + $0x1d0] sm:$0xff]
      %v362 = vld [vmem:[%s286 + $0x1d8] sm:$0xff]
      %v363 = vld [vmem:[%s286 + $0x1e0] sm:$0xff]
      %v364 = vld [vmem:[%s286 + $0x1e8] sm:$0xff]
      %v365 = vld [vmem:[%s286 + $0x1f0] sm:$0xff]
      %v366 = vld [vmem:[%s286 + $0x1f8] sm:$0xff]
      %v367 = vld [vmem:[%s286 + $0x200] sm:$0xff]
      %v368 = vld [vmem:[%s286 + $0x208] sm:$0xff]
      %v369 = vld [vmem:[%s286 + $0x210] sm:$0xff]
      %v370 = vld [vmem:[%s286 + $0x218] sm:$0xff]
      %v371 = vld [vmem:[%s286 + $0x220] sm:$0xff]
      %v372 = vld [vmem:[%s286 + $0x228] sm:$0xff]
      %v373 = vld [vmem:[%s286 + $0x230] sm:$0xff]
      %v374 = vld [vmem:[%s286 + $0x238] sm:$0xff]
      %v375 = vld [vmem:[%s286 + $0x240] sm:$0xff]
      %v376 = vld [vmem:[%s286 + $0x248] sm:$0xff]
      %v377 = vld [vmem:[%s286 + $0x250] sm:$0xff]
      %v378 = vld [vmem:[%s286 + $0x258] sm:$0xff]
      %v379 = vld [vmem:[%s286 + $0x260] sm:$0xff]
      %v380 = vld [vmem:[%s286 + $0x268] sm:$0xff]
      %v381 = vld [vmem:[%s286 + $0x270] sm:$0xff]
      %v382 = vld [vmem:[%s286 + $0x278] sm:$0xff]
      %v383 = vld [vmem:[%s286 + $0x280] sm:$0xff]
      %v384 = vld [vmem:[%s286 + $0x288] sm:$0xff]
      %v385 = vld [vmem:[%s286 + $0x290] sm:$0xff]
      %v386 = vld [vmem:[%s286 + $0x298] sm:$0xff]
      %v387 = vld [vmem:[%s286 + $0x2a0] sm:$0xff]
      %v388 = vld [vmem:[%s286 + $0x2a8] sm:$0xff]
      %v389 = vld [vmem:[%s286 + $0x2b0] sm:$0xff]
      %v390 = vld [vmem:[%s286 + $0x2b8] sm:$0xff]
      %v391 = vld [vmem:[%s286 + $0x2c0] sm:$0xff]
      %v392 = vld [vmem:[%s286 + $0x2c8] sm:$0xff]
      %v393 = vld [vmem:[%s286 + $0x2d0] sm:$0xff]
      %v394 = vld [vmem:[%s286 + $0x2d8] sm:$0xff]
      %v395 = vld [vmem:[%s286 + $0x2e0] sm:$0xff]
      %v396 = vld [vmem:[%s286 + $0x2e8] sm:$0xff]
      %v397 = vld [vmem:[%s286 + $0x2f0] sm:$0xff]
      %v398 = vld [vmem:[%s286 + $0x2f8] sm:$0xff]
      %v399 = vld [vmem:[%s286 + $0x300] sm:$0xff]
      %v400 = vld [vmem:[%s286 + $0x308] sm:$0xff]
      %v401 = vld [vmem:[%s286 + $0x310] sm:$0xff]
      %v402 = vld [vmem:[%s286 + $0x318] sm:$0xff]
      %v403 = vld [vmem:[%s286 + $0x320] sm:$0xff]
      %v404 = vld [vmem:[%s286 + $0x328] sm:$0xff]
      %v405 = vld [vmem:[%s286 + $0x330] sm:$0xff]
      %v406 = vld [vmem:[%s286 + $0x338] sm:$0xff]
      %v407 = vld [vmem:[%s286 + $0x340] sm:$0xff]
      %v408 = vld [vmem:[%s286 + $0x348] sm:$0xff]
      %v409 = vld [vmem:[%s286 + $0x350] sm:$0xff]
      %v410 = vld [vmem:[%s286 + $0x358] sm:$0xff]
      %v411 = vld [vmem:[%s286 + $0x360] sm:$0xff]
      %v412 = vld [vmem:[%s286 + $0x368] sm:$0xff]
      %v413 = vld [vmem:[%s286 + $0x370] sm:$0xff]
      %v414 = vld [vmem:[%s286 + $0x378] sm:$0xff]
      %v415 = vld [vmem:[%s286 + $0x380] sm:$0xff]
      %v416 = vld [vmem:[%s286 + $0x388] sm:$0xff]
      %v417 = vld [vmem:[%s286 + $0x390] sm:$0xff]
      %v418 = vld [vmem:[%s286 + $0x398] sm:$0xff]
      %v419 = vld [vmem:[%s286 + $0x3a0] sm:$0xff]
      %v420 = vld [vmem:[%s286 + $0x3a8] sm:$0xff]
      %v421 = vld [vmem:[%s286 + $0x3b0] sm:$0xff]
      %v422 = vld [vmem:[%s286 + $0x3b8] sm:$0xff]
      %v423 = vld [vmem:[%s286 + $0x3c0] sm:$0xff]
      %v424 = vld [vmem:[%s286 + $0x3c8] sm:$0xff]
      %v425 = vld [vmem:[%s286 + $0x3d0] sm:$0xff]
      %v426 = vld [vmem:[%s286 + $0x3d8] sm:$0xff]
      %v427 = vld [vmem:[%s286 + $0x3e0] sm:$0xff]
      %v428 = vld [vmem:[%s286 + $0x3e8] sm:$0xff]
      %v429 = vld [vmem:[%s286 + $0x3f0] sm:$0xff]
      %v430 = vld [vmem:[%s286 + $0x3f8] sm:$0xff]
      %v431 = vld [vmem:[%s291] sm:$0xff]
      %v434 = vcombine.high %v301, %v301
      %v436 = vunpack.c.l.s4 1983009808
      %v437 = vunpack.c.0.s8 %v436
      %v438 = vlaneseq
      %v439 = vshrl.u32 %v438, 7
      %v440 = vsub.s32 %v437, %v439
      %v441 = vrot.slane %v301, %v440
      %v443 = vunpack.c.l.s4 1983009808
      %v444 = vunpack.c.0.s8 %v443
      %v445 = vlaneseq
      %v446 = vshrl.u32 %v445, 7
      %v447 = vsub.s32 %v444, %v446
      %v448 = vrot.slane %v434, %v447
      %v449 = vcombine.high %v441, %v441
      %v450 = vcombine.high %v448, %v448
      %v451 = vcombine.high %v302, %v302
      %v453 = vunpack.c.l.s4 1983009808
      %v454 = vunpack.c.0.s8 %v453
      %v455 = vlaneseq
      %v456 = vshrl.u32 %v455, 7
      %v457 = vsub.s32 %v454, %v456
      %v458 = vrot.slane %v302, %v457
      %v460 = vunpack.c.l.s4 1983009808
      %v461 = vunpack.c.0.s8 %v460
      %v462 = vlaneseq
      %v463 = vshrl.u32 %v462, 7
      %v464 = vsub.s32 %v461, %v463
      %v465 = vrot.slane %v451, %v464
      %v466 = vcombine.high %v458, %v458
      %v467 = vcombine.high %v465, %v465
      %v604 = vunpack.c.l.b16 %v303
      %v605 = vunpack.c.h.b16 %v303
      %v606 = vunpack.c.l.b16 %v304
      %v607 = vunpack.c.h.b16 %v304
      %v608 = vunpack.c.l.b16 %v305
      %v609 = vunpack.c.h.b16 %v305
      %v610 = vunpack.c.l.b16 %v306
      %v611 = vunpack.c.h.b16 %v306
      %v612 = vunpack.c.l.b16 %v307
      %v613 = vunpack.c.h.b16 %v307
      %v614 = vunpack.c.l.b16 %v308
      %v615 = vunpack.c.h.b16 %v308
      %v616 = vunpack.c.l.b16 %v309
      %v617 = vunpack.c.h.b16 %v309
      %v618 = vunpack.c.l.b16 %v310
      %v619 = vunpack.c.h.b16 %v310
      %v620 = vunpack.c.l.b16 %v311
      %v621 = vunpack.c.h.b16 %v311
      %v622 = vunpack.c.l.b16 %v312
      %v623 = vunpack.c.h.b16 %v312
      %v624 = vunpack.c.l.b16 %v313
      %v625 = vunpack.c.h.b16 %v313
      %v626 = vunpack.c.l.b16 %v314
      %v627 = vunpack.c.h.b16 %v314
      %v628 = vunpack.c.l.b16 %v315
      %v629 = vunpack.c.h.b16 %v315
      %v630 = vunpack.c.l.b16 %v316
      %v631 = vunpack.c.h.b16 %v316
      %v632 = vunpack.c.l.b16 %v317
      %v633 = vunpack.c.h.b16 %v317
      %v634 = vunpack.c.l.b16 %v318
      %v635 = vunpack.c.h.b16 %v318
      %v636 = vunpack.c.l.b16 %v319
      %v637 = vunpack.c.h.b16 %v319
      %v638 = vunpack.c.l.b16 %v320
      %v639 = vunpack.c.h.b16 %v320
      %v640 = vunpack.c.l.b16 %v321
      %v641 = vunpack.c.h.b16 %v321
      %v642 = vunpack.c.l.b16 %v322
      %v643 = vunpack.c.h.b16 %v322
      %v644 = vunpack.c.l.b16 %v323
      %v645 = vunpack.c.h.b16 %v323
      %v646 = vunpack.c.l.b16 %v324
      %v647 = vunpack.c.h.b16 %v324
      %v648 = vunpack.c.l.b16 %v325
      %v649 = vunpack.c.h.b16 %v325
      %v650 = vunpack.c.l.b16 %v326
      %v651 = vunpack.c.h.b16 %v326
      %v652 = vunpack.c.l.b16 %v327
      %v653 = vunpack.c.h.b16 %v327
      %v654 = vunpack.c.l.b16 %v328
      %v655 = vunpack.c.h.b16 %v328
      %v656 = vunpack.c.l.b16 %v329
      %v657 = vunpack.c.h.b16 %v329
      %v658 = vunpack.c.l.b16 %v330
      %v659 = vunpack.c.h.b16 %v330
      %v660 = vunpack.c.l.b16 %v331
      %v661 = vunpack.c.h.b16 %v331
      %v662 = vunpack.c.l.b16 %v332
      %v663 = vunpack.c.h.b16 %v332
      %v664 = vunpack.c.l.b16 %v333
      %v665 = vunpack.c.h.b16 %v333
      %v666 = vunpack.c.l.b16 %v334
      %v667 = vunpack.c.h.b16 %v334
      %v668 = vunpack.c.l.b16 %v335
      %v669 = vunpack.c.h.b16 %v335
      %v670 = vunpack.c.l.b16 %v336
      %v671 = vunpack.c.h.b16 %v336
      %v672 = vunpack.c.l.b16 %v337
      %v673 = vunpack.c.h.b16 %v337
      %v674 = vunpack.c.l.b16 %v338
      %v675 = vunpack.c.h.b16 %v338
      %v676 = vunpack.c.l.b16 %v339
      %v677 = vunpack.c.h.b16 %v339
      %v678 = vunpack.c.l.b16 %v340
      %v679 = vunpack.c.h.b16 %v340
      %v680 = vunpack.c.l.b16 %v341
      %v681 = vunpack.c.h.b16 %v341
      %v682 = vunpack.c.l.b16 %v342
      %v683 = vunpack.c.h.b16 %v342
      %v684 = vunpack.c.l.b16 %v343
      %v685 = vunpack.c.h.b16 %v343
      %v686 = vunpack.c.l.b16 %v344
      %v687 = vunpack.c.h.b16 %v344
      %v688 = vunpack.c.l.b16 %v345
      %v689 = vunpack.c.h.b16 %v345
      %v690 = vunpack.c.l.b16 %v346
      %v691 = vunpack.c.h.b16 %v346
      %v692 = vunpack.c.l.b16 %v347
      %v693 = vunpack.c.h.b16 %v347
      %v694 = vunpack.c.l.b16 %v348
      %v695 = vunpack.c.h.b16 %v348
      %v696 = vunpack.c.l.b16 %v349
      %v697 = vunpack.c.h.b16 %v349
      %v698 = vunpack.c.l.b16 %v350
      %v699 = vunpack.c.h.b16 %v350
      %v700 = vunpack.c.l.b16 %v351
      %v701 = vunpack.c.h.b16 %v351
      %v702 = vunpack.c.l.b16 %v352
      %v703 = vunpack.c.h.b16 %v352
      %v704 = vunpack.c.l.b16 %v353
      %v705 = vunpack.c.h.b16 %v353
      %v706 = vunpack.c.l.b16 %v354
      %v707 = vunpack.c.h.b16 %v354
      %v708 = vunpack.c.l.b16 %v355
      %v709 = vunpack.c.h.b16 %v355
      %v710 = vunpack.c.l.b16 %v356
      %v711 = vunpack.c.h.b16 %v356
      %v712 = vunpack.c.l.b16 %v357
      %v713 = vunpack.c.h.b16 %v357
      %v714 = vunpack.c.l.b16 %v358
      %v715 = vunpack.c.h.b16 %v358
      %v716 = vunpack.c.l.b16 %v359
      %v717 = vunpack.c.h.b16 %v359
      %v718 = vunpack.c.l.b16 %v360
      %v719 = vunpack.c.h.b16 %v360
      %v720 = vunpack.c.l.b16 %v361
      %v721 = vunpack.c.h.b16 %v361
      %v722 = vunpack.c.l.b16 %v362
      %v723 = vunpack.c.h.b16 %v362
      %v724 = vunpack.c.l.b16 %v363
      %v725 = vunpack.c.h.b16 %v363
      %v726 = vunpack.c.l.b16 %v364
      %v727 = vunpack.c.h.b16 %v364
      %v728 = vunpack.c.l.b16 %v365
      %v729 = vunpack.c.h.b16 %v365
      %v730 = vunpack.c.l.b16 %v366
      %v731 = vunpack.c.h.b16 %v366
      %v732 = vunpack.c.l.b16 %v367
      %v733 = vunpack.c.h.b16 %v367
      %v734 = vunpack.c.l.b16 %v368
      %v735 = vunpack.c.h.b16 %v368
      %v736 = vunpack.c.l.b16 %v369
      %v737 = vunpack.c.h.b16 %v369
      %v738 = vunpack.c.l.b16 %v370
      %v739 = vunpack.c.h.b16 %v370
      %v740 = vunpack.c.l.b16 %v371
      %v741 = vunpack.c.h.b16 %v371
      %v742 = vunpack.c.l.b16 %v372
      %v743 = vunpack.c.h.b16 %v372
      %v744 = vunpack.c.l.b16 %v373
      %v745 = vunpack.c.h.b16 %v373
      %v746 = vunpack.c.l.b16 %v374
      %v747 = vunpack.c.h.b16 %v374
      %v748 = vunpack.c.l.b16 %v375
      %v749 = vunpack.c.h.b16 %v375
      %v750 = vunpack.c.l.b16 %v376
      %v751 = vunpack.c.h.b16 %v376
      %v752 = vunpack.c.l.b16 %v377
      %v753 = vunpack.c.h.b16 %v377
      %v754 = vunpack.c.l.b16 %v378
      %v755 = vunpack.c.h.b16 %v378
      %v756 = vunpack.c.l.b16 %v379
      %v757 = vunpack.c.h.b16 %v379
      %v758 = vunpack.c.l.b16 %v380
      %v759 = vunpack.c.h.b16 %v380
      %v760 = vunpack.c.l.b16 %v381
      %v761 = vunpack.c.h.b16 %v381
      %v762 = vunpack.c.l.b16 %v382
      %v763 = vunpack.c.h.b16 %v382
      %v764 = vunpack.c.l.b16 %v383
      %v765 = vunpack.c.h.b16 %v383
      %v766 = vunpack.c.l.b16 %v384
      %v767 = vunpack.c.h.b16 %v384
      %v768 = vunpack.c.l.b16 %v385
      %v769 = vunpack.c.h.b16 %v385
      %v770 = vunpack.c.l.b16 %v386
      %v771 = vunpack.c.h.b16 %v386
      %v772 = vunpack.c.l.b16 %v387
      %v773 = vunpack.c.h.b16 %v387
      %v774 = vunpack.c.l.b16 %v388
      %v775 = vunpack.c.h.b16 %v388
      %v776 = vunpack.c.l.b16 %v389
      %v777 = vunpack.c.h.b16 %v389
      %v778 = vunpack.c.l.b16 %v390
      %v779 = vunpack.c.h.b16 %v390
      %v780 = vunpack.c.l.b16 %v391
      %v781 = vunpack.c.h.b16 %v391
      %v782 = vunpack.c.l.b16 %v392
      %v783 = vunpack.c.h.b16 %v392
      %v784 = vunpack.c.l.b16 %v393
      %v785 = vunpack.c.h.b16 %v393
      %v786 = vunpack.c.l.b16 %v394
      %v787 = vunpack.c.h.b16 %v394
      %v788 = vunpack.c.l.b16 %v395
      %v789 = vunpack.c.h.b16 %v395
      %v790 = vunpack.c.l.b16 %v396
      %v791 = vunpack.c.h.b16 %v396
      %v792 = vunpack.c.l.b16 %v397
      %v793 = vunpack.c.h.b16 %v397
      %v794 = vunpack.c.l.b16 %v398
      %v795 = vunpack.c.h.b16 %v398
      %v796 = vunpack.c.l.b16 %v399
      %v797 = vunpack.c.h.b16 %v399
      %v798 = vunpack.c.l.b16 %v400
      %v799 = vunpack.c.h.b16 %v400
      %v800 = vunpack.c.l.b16 %v401
      %v801 = vunpack.c.h.b16 %v401
      %v802 = vunpack.c.l.b16 %v402
      %v803 = vunpack.c.h.b16 %v402
      %v804 = vunpack.c.l.b16 %v403
      %v805 = vunpack.c.h.b16 %v403
      %v806 = vunpack.c.l.b16 %v404
      %v807 = vunpack.c.h.b16 %v404
      %v808 = vunpack.c.l.b16 %v405
      %v809 = vunpack.c.h.b16 %v405
      %v810 = vunpack.c.l.b16 %v406
      %v811 = vunpack.c.h.b16 %v406
      %v812 = vunpack.c.l.b16 %v407
      %v813 = vunpack.c.h.b16 %v407
      %v814 = vunpack.c.l.b16 %v408
      %v815 = vunpack.c.h.b16 %v408
      %v816 = vunpack.c.l.b16 %v409
      %v817 = vunpack.c.h.b16 %v409
      %v818 = vunpack.c.l.b16 %v410
      %v819 = vunpack.c.h.b16 %v410
      %v820 = vunpack.c.l.b16 %v411
      %v821 = vunpack.c.h.b16 %v411
      %v822 = vunpack.c.l.b16 %v412
      %v823 = vunpack.c.h.b16 %v412
      %v824 = vunpack.c.l.b16 %v413
      %v825 = vunpack.c.h.b16 %v413
      %v826 = vunpack.c.l.b16 %v414
      %v827 = vunpack.c.h.b16 %v414
      %v828 = vunpack.c.l.b16 %v415
      %v829 = vunpack.c.h.b16 %v415
      %v830 = vunpack.c.l.b16 %v416
      %v831 = vunpack.c.h.b16 %v416
      %v832 = vunpack.c.l.b16 %v417
      %v833 = vunpack.c.h.b16 %v417
      %v834 = vunpack.c.l.b16 %v418
      %v835 = vunpack.c.h.b16 %v418
      %v836 = vunpack.c.l.b16 %v419
      %v837 = vunpack.c.h.b16 %v419
      %v838 = vunpack.c.l.b16 %v420
      %v839 = vunpack.c.h.b16 %v420
      %v840 = vunpack.c.l.b16 %v421
      %v841 = vunpack.c.h.b16 %v421
      %v842 = vunpack.c.l.b16 %v422
      %v843 = vunpack.c.h.b16 %v422
      %v844 = vunpack.c.l.b16 %v423
      %v845 = vunpack.c.h.b16 %v423
      %v846 = vunpack.c.l.b16 %v424
      %v847 = vunpack.c.h.b16 %v424
      %v848 = vunpack.c.l.b16 %v425
      %v849 = vunpack.c.h.b16 %v425
      %v850 = vunpack.c.l.b16 %v426
      %v851 = vunpack.c.h.b16 %v426
      %v852 = vunpack.c.l.b16 %v427
      %v853 = vunpack.c.h.b16 %v427
      %v854 = vunpack.c.l.b16 %v428
      %v855 = vunpack.c.h.b16 %v428
      %v856 = vunpack.c.l.b16 %v429
      %v857 = vunpack.c.h.b16 %v429
      %v858 = vunpack.c.l.b16 %v430
      %v859 = vunpack.c.h.b16 %v430
      %v860 = vpack.c.b16 %v606, %v604
      %v861 = vpack.c.b16 %v607, %v605
      %v862 = vpack.c.b16 %v610, %v608
      %v863 = vpack.c.b16 %v611, %v609
      %v864 = vpack.c.b16 %v614, %v612
      %v865 = vpack.c.b16 %v615, %v613
      %v866 = vpack.c.b16 %v618, %v616
      %v867 = vpack.c.b16 %v619, %v617
      %v868 = vpack.c.b16 %v622, %v620
      %v869 = vpack.c.b16 %v623, %v621
      %v870 = vpack.c.b16 %v626, %v624
      %v871 = vpack.c.b16 %v627, %v625
      %v872 = vpack.c.b16 %v630, %v628
      %v873 = vpack.c.b16 %v631, %v629
      %v874 = vpack.c.b16 %v634, %v632
      %v875 = vpack.c.b16 %v635, %v633
      %v876 = vpack.c.b16 %v638, %v636
      %v877 = vpack.c.b16 %v639, %v637
      %v878 = vpack.c.b16 %v642, %v640
      %v879 = vpack.c.b16 %v643, %v641
      %v880 = vpack.c.b16 %v646, %v644
      %v881 = vpack.c.b16 %v647, %v645
      %v882 = vpack.c.b16 %v650, %v648
      %v883 = vpack.c.b16 %v651, %v649
      %v884 = vpack.c.b16 %v654, %v652
      %v885 = vpack.c.b16 %v655, %v653
      %v886 = vpack.c.b16 %v658, %v656
      %v887 = vpack.c.b16 %v659, %v657
      %v888 = vpack.c.b16 %v662, %v660
      %v889 = vpack.c.b16 %v663, %v661
      %v890 = vpack.c.b16 %v666, %v664
      %v891 = vpack.c.b16 %v667, %v665
      %v892 = vpack.c.b16 %v670, %v668
      %v893 = vpack.c.b16 %v671, %v669
      %v894 = vpack.c.b16 %v674, %v672
      %v895 = vpack.c.b16 %v675, %v673
      %v896 = vpack.c.b16 %v678, %v676
      %v897 = vpack.c.b16 %v679, %v677
      %v898 = vpack.c.b16 %v682, %v680
      %v899 = vpack.c.b16 %v683, %v681
      %v900 = vpack.c.b16 %v686, %v684
      %v901 = vpack.c.b16 %v687, %v685
      %v902 = vpack.c.b16 %v690, %v688
      %v903 = vpack.c.b16 %v691, %v689
      %v904 = vpack.c.b16 %v694, %v692
      %v905 = vpack.c.b16 %v695, %v693
      %v906 = vpack.c.b16 %v698, %v696
      %v907 = vpack.c.b16 %v699, %v697
      %v908 = vpack.c.b16 %v702, %v700
      %v909 = vpack.c.b16 %v703, %v701
      %v910 = vpack.c.b16 %v706, %v704
      %v911 = vpack.c.b16 %v707, %v705
      %v912 = vpack.c.b16 %v710, %v708
      %v913 = vpack.c.b16 %v711, %v709
      %v914 = vpack.c.b16 %v714, %v712
      %v915 = vpack.c.b16 %v715, %v713
      %v916 = vpack.c.b16 %v718, %v716
      %v917 = vpack.c.b16 %v719, %v717
      %v918 = vpack.c.b16 %v722, %v720
      %v919 = vpack.c.b16 %v723, %v721
      %v920 = vpack.c.b16 %v726, %v724
      %v921 = vpack.c.b16 %v727, %v725
      %v922 = vpack.c.b16 %v730, %v728
      %v923 = vpack.c.b16 %v731, %v729
      %v924 = vpack.c.b16 %v734, %v732
      %v925 = vpack.c.b16 %v735, %v733
      %v926 = vpack.c.b16 %v738, %v736
      %v927 = vpack.c.b16 %v739, %v737
      %v928 = vpack.c.b16 %v742, %v740
      %v929 = vpack.c.b16 %v743, %v741
      %v930 = vpack.c.b16 %v746, %v744
      %v931 = vpack.c.b16 %v747, %v745
      %v932 = vpack.c.b16 %v750, %v748
      %v933 = vpack.c.b16 %v751, %v749
      %v934 = vpack.c.b16 %v754, %v752
      %v935 = vpack.c.b16 %v755, %v753
      %v936 = vpack.c.b16 %v758, %v756
      %v937 = vpack.c.b16 %v759, %v757
      %v938 = vpack.c.b16 %v762, %v760
      %v939 = vpack.c.b16 %v763, %v761
      %v940 = vpack.c.b16 %v766, %v764
      %v941 = vpack.c.b16 %v767, %v765
      %v942 = vpack.c.b16 %v770, %v768
      %v943 = vpack.c.b16 %v771, %v769
      %v944 = vpack.c.b16 %v774, %v772
      %v945 = vpack.c.b16 %v775, %v773
      %v946 = vpack.c.b16 %v778, %v776
      %v947 = vpack.c.b16 %v779, %v777
      %v948 = vpack.c.b16 %v782, %v780
      %v949 = vpack.c.b16 %v783, %v781
      %v950 = vpack.c.b16 %v786, %v784
      %v951 = vpack.c.b16 %v787, %v785
      %v952 = vpack.c.b16 %v790, %v788
      %v953 = vpack.c.b16 %v791, %v789
      %v954 = vpack.c.b16 %v794, %v792
      %v955 = vpack.c.b16 %v795, %v793
      %v956 = vpack.c.b16 %v798, %v796
      %v957 = vpack.c.b16 %v799, %v797
      %v958 = vpack.c.b16 %v802, %v800
      %v959 = vpack.c.b16 %v803, %v801
      %v960 = vpack.c.b16 %v806, %v804
      %v961 = vpack.c.b16 %v807, %v805
      %v962 = vpack.c.b16 %v810, %v808
      %v963 = vpack.c.b16 %v811, %v809
      %v964 = vpack.c.b16 %v814, %v812
      %v965 = vpack.c.b16 %v815, %v813
      %v966 = vpack.c.b16 %v818, %v816
      %v967 = vpack.c.b16 %v819, %v817
      %v968 = vpack.c.b16 %v822, %v820
      %v969 = vpack.c.b16 %v823, %v821
      %v970 = vpack.c.b16 %v826, %v824
      %v971 = vpack.c.b16 %v827, %v825
      %v972 = vpack.c.b16 %v830, %v828
      %v973 = vpack.c.b16 %v831, %v829
      %v974 = vpack.c.b16 %v834, %v832
      %v975 = vpack.c.b16 %v835, %v833
      %v976 = vpack.c.b16 %v838, %v836
      %v977 = vpack.c.b16 %v839, %v837
      %v978 = vpack.c.b16 %v842, %v840
      %v979 = vpack.c.b16 %v843, %v841
      %v980 = vpack.c.b16 %v846, %v844
      %v981 = vpack.c.b16 %v847, %v845
      %v982 = vpack.c.b16 %v850, %v848
      %v983 = vpack.c.b16 %v851, %v849
      %v984 = vpack.c.b16 %v854, %v852
      %v985 = vpack.c.b16 %v855, %v853
      %v986 = vpack.c.b16 %v858, %v856
      %v987 = vpack.c.b16 %v859, %v857
      %v1117 = vcombine.high %v431, %v431
      %1119 = vmatprep.subr.bf16.mxu0 %v861
      %1120 = vmatpush1.bf16.msra.mxu0 %v860
      %1121 = vmatprep.subr.bf16.mxu0 %v863
      %1122 = vmatpush1.bf16.msra.mxu0 %v862
      %1123 = vmatprep.subr.bf16.mxu0 %v865
      %1124 = vmatpush1.bf16.msra.mxu0 %v864
      %1125 = vmatprep.subr.bf16.mxu0 %v867
      %1126 = vmatpush1.bf16.msra.mxu0 %v866
      %1127 = vmatprep.subr.bf16.mxu0 %v869
      %1128 = vmatpush1.bf16.msra.mxu0 %v868
      %1129 = vmatprep.subr.bf16.mxu0 %v871
      %1130 = vmatpush1.bf16.msra.mxu0 %v870
      %1131 = vmatprep.subr.bf16.mxu0 %v873
      %1132 = vmatpush1.bf16.msra.mxu0 %v872
      %1133 = vmatprep.subr.bf16.mxu0 %v875
      %1134 = vmatpush1.bf16.msra.mxu0 %v874
      %1135 = vmatprep.subr.bf16.mxu0 %v877
      %1136 = vmatpush1.bf16.msra.mxu0 %v876
      %1137 = vmatprep.subr.bf16.mxu0 %v879
      %1138 = vmatpush1.bf16.msra.mxu0 %v878
      %1139 = vmatprep.subr.bf16.mxu0 %v881
      %1140 = vmatpush1.bf16.msra.mxu0 %v880
      %1141 = vmatprep.subr.bf16.mxu0 %v883
      %1142 = vmatpush1.bf16.msra.mxu0 %v882
      %1143 = vmatprep.subr.bf16.mxu0 %v885
      %1144 = vmatpush1.bf16.msra.mxu0 %v884
      %1145 = vmatprep.subr.bf16.mxu0 %v887
      %1146 = vmatpush1.bf16.msra.mxu0 %v886
      %1147 = vmatprep.subr.bf16.mxu0 %v889
      %1148 = vmatpush1.bf16.msra.mxu0 %v888
      %1149 = vmatprep.subr.bf16.mxu0 %v891
      %1150 = vmatpush1.bf16.msra.mxu0 %v890
      %1151 = vmatprep.mubr.bf16.mxu0 %v449
      %1152 = vmatmul.mubr.bf16.gmra.mrb[0].mxu0 %v441
      %v1153 = vpop.f32.mrb[0].mxu0
      %v1154 = vadd.f32 %v431, %v1153
      %v1155 = vpop.f32.mrb[0].mxu0
      %v1156 = vadd.f32 %v1117, %v1155
      %v1157 = vpop.f32.mrb[0].mxu0
      %v1158 = vpop.f32.mrb[0].mxu0
      %1159 = vdwg.mxu0
      %1160 = vmatprep.subr.bf16.mxu0 %v893
      %1161 = vmatpush1.bf16.msra.mxu0 %v892
      %1162 = vmatprep.subr.bf16.mxu0 %v895
      %1163 = vmatpush1.bf16.msra.mxu0 %v894
      %1164 = vmatprep.subr.bf16.mxu0 %v897
      %1165 = vmatpush1.bf16.msra.mxu0 %v896
      %1166 = vmatprep.subr.bf16.mxu0 %v899
      %1167 = vmatpush1.bf16.msra.mxu0 %v898
      %1168 = vmatprep.subr.bf16.mxu0 %v901
      %1169 = vmatpush1.bf16.msra.mxu0 %v900
      %1170 = vmatprep.subr.bf16.mxu0 %v903
      %1171 = vmatpush1.bf16.msra.mxu0 %v902
      %1172 = vmatprep.subr.bf16.mxu0 %v905
      %1173 = vmatpush1.bf16.msra.mxu0 %v904
      %1174 = vmatprep.subr.bf16.mxu0 %v907
      %1175 = vmatpush1.bf16.msra.mxu0 %v906
      %1176 = vmatprep.subr.bf16.mxu0 %v909
      %1177 = vmatpush1.bf16.msra.mxu0 %v908
      %1178 = vmatprep.subr.bf16.mxu0 %v911
      %1179 = vmatpush1.bf16.msra.mxu0 %v910
      %1180 = vmatprep.subr.bf16.mxu0 %v913
      %1181 = vmatpush1.bf16.msra.mxu0 %v912
      %1182 = vmatprep.subr.bf16.mxu0 %v915
      %1183 = vmatpush1.bf16.msra.mxu0 %v914
      %1184 = vmatprep.subr.bf16.mxu0 %v917
      %1185 = vmatpush1.bf16.msra.mxu0 %v916
      %1186 = vmatprep.subr.bf16.mxu0 %v919
      %1187 = vmatpush1.bf16.msra.mxu0 %v918
      %1188 = vmatprep.subr.bf16.mxu0 %v921
      %1189 = vmatpush1.bf16.msra.mxu0 %v920
      %1190 = vmatprep.subr.bf16.mxu0 %v923
      %1191 = vmatpush1.bf16.msra.mxu0 %v922
      %1192 = vmatprep.mubr.bf16.mxu0 %v450
      %1193 = vmatmul.mubr.bf16.gmra.mrb[0].mxu0 %v448
      %v1194 = vpop.f32.mrb[0].mxu0
      %v1195 = vadd.f32 %v1154, %v1194
      %v1196 = vpop.f32.mrb[0].mxu0
      %v1197 = vadd.f32 %v1156, %v1196
      %v1198 = vpop.f32.mrb[0].mxu0
      %v1199 = vpop.f32.mrb[0].mxu0
      %1200 = vdwg.mxu0
      %1201 = vmatprep.subr.bf16.mxu0 %v925
      %1202 = vmatpush1.bf16.msra.mxu0 %v924
      %1203 = vmatprep.subr.bf16.mxu0 %v927
      %1204 = vmatpush1.bf16.msra.mxu0 %v926
      %1205 = vmatprep.subr.bf16.mxu0 %v929
      %1206 = vmatpush1.bf16.msra.mxu0 %v928
      %1207 = vmatprep.subr.bf16.mxu0 %v931
      %1208 = vmatpush1.bf16.msra.mxu0 %v930
      %1209 = vmatprep.subr.bf16.mxu0 %v933
      %1210 = vmatpush1.bf16.msra.mxu0 %v932
      %1211 = vmatprep.subr.bf16.mxu0 %v935
      %1212 = vmatpush1.bf16.msra.mxu0 %v934
      %1213 = vmatprep.subr.bf16.mxu0 %v937
      %1214 = vmatpush1.bf16.msra.mxu0 %v936
      %1215 = vmatprep.subr.bf16.mxu0 %v939
      %1216 = vmatpush1.bf16.msra.mxu0 %v938
      %1217 = vmatprep.subr.bf16.mxu0 %v941
      %1218 = vmatpush1.bf16.msra.mxu0 %v940
      %1219 = vmatprep.subr.bf16.mxu0 %v943
      %1220 = vmatpush1.bf16.msra.mxu0 %v942
      %1221 = vmatprep.subr.bf16.mxu0 %v945
      %1222 = vmatpush1.bf16.msra.mxu0 %v944
      %1223 = vmatprep.subr.bf16.mxu0 %v947
      %1224 = vmatpush1.bf16.msra.mxu0 %v946
      %1225 = vmatprep.subr.bf16.mxu0 %v949
      %1226 = vmatpush1.bf16.msra.mxu0 %v948
      %1227 = vmatprep.subr.bf16.mxu0 %v951
      %1228 = vmatpush1.bf16.msra.mxu0 %v950
      %1229 = vmatprep.subr.bf16.mxu0 %v953
      %1230 = vmatpush1.bf16.msra.mxu0 %v952
      %1231 = vmatprep.subr.bf16.mxu0 %v955
      %1232 = vmatpush1.bf16.msra.mxu0 %v954
      %1233 = vmatprep.mubr.bf16.mxu0 %v466
      %1234 = vmatmul.mubr.bf16.gmra.mrb[0].mxu0 %v458
      %v1235 = vpop.f32.mrb[0].mxu0
      %v1236 = vadd.f32 %v1195, %v1235
      %v1237 = vpop.f32.mrb[0].mxu0
      %v1238 = vadd.f32 %v1197, %v1237
      %v1239 = vpop.f32.mrb[0].mxu0
      %v1240 = vpop.f32.mrb[0].mxu0
      %1241 = vdwg.mxu0
      %1242 = vmatprep.subr.bf16.mxu0 %v957
      %1243 = vmatpush1.bf16.msra.mxu0 %v956
      %1244 = vmatprep.subr.bf16.mxu0 %v959
      %1245 = vmatpush1.bf16.msra.mxu0 %v958
      %1246 = vmatprep.subr.bf16.mxu0 %v961
      %1247 = vmatpush1.bf16.msra.mxu0 %v960
      %1248 = vmatprep.subr.bf16.mxu0 %v963
      %1249 = vmatpush1.bf16.msra.mxu0 %v962
      %1250 = vmatprep.subr.bf16.mxu0 %v965
      %1251 = vmatpush1.bf16.msra.mxu0 %v964
      %1252 = vmatprep.subr.bf16.mxu0 %v967
      %1253 = vmatpush1.bf16.msra.mxu0 %v966
      %1254 = vmatprep.subr.bf16.mxu0 %v969
      %1255 = vmatpush1.bf16.msra.mxu0 %v968
      %1256 = vmatprep.subr.bf16.mxu0 %v971
      %1257 = vmatpush1.bf16.msra.mxu0 %v970
      %1258 = vmatprep.subr.bf16.mxu0 %v973
      %1259 = vmatpush1.bf16.msra.mxu0 %v972
      %1260 = vmatprep.subr.bf16.mxu0 %v975
      %1261 = vmatpush1.bf16.msra.mxu0 %v974
      %1262 = vmatprep.subr.bf16.mxu0 %v977
      %1263 = vmatpush1.bf16.msra.mxu0 %v976
      %1264 = vmatprep.subr.bf16.mxu0 %v979
      %1265 = vmatpush1.bf16.msra.mxu0 %v978
      %1266 = vmatprep.subr.bf16.mxu0 %v981
      %1267 = vmatpush1.bf16.msra.mxu0 %v980
      %1268 = vmatprep.subr.bf16.mxu0 %v983
      %1269 = vmatpush1.bf16.msra.mxu0 %v982
      %1270 = vmatprep.subr.bf16.mxu0 %v985
      %1271 = vmatpush1.bf16.msra.mxu0 %v984
      %1272 = vmatprep.subr.bf16.mxu0 %v987
      %1273 = vmatpush1.bf16.msra.mxu0 %v986
      %1274 = vmatprep.mubr.bf16.mxu0 %v467
      %1275 = vmatmul.mubr.bf16.gmra.mrb[0].mxu0 %v465
      %v1276 = vpop.f32.mrb[0].mxu0
      %v1277 = vadd.f32 %v1236, %v1276
      %v1278 = vpop.f32.mrb[0].mxu0
      %v1279 = vadd.f32 %v1238, %v1278
      %v1280 = vpop.f32.mrb[0].mxu0
      %v1281 = vpop.f32.mrb[0].mxu0
      %1282 = vdwg.mxu0
      %v1283 = vld [vmem:[%s3] sm:$0x3]
      %v1285 = vlaneseq
      %v1286 = vshrl.u32 %v1285, 7
      %v1287 = vsub.s32 0, %v1286
      %v1288 = vrot.slane %v1283, %v1287
      %v1289 = vlaneseq
      %v1290 = vshrl.u32 %v1289, 7
      %v1291 = vsub.s32 1, %v1290
      %v1292 = vrot.slane %v1283, %v1291
      %v1295 = vmul.f32 %v1277, %v1288
      %v1296 = vmul.f32 %v1279, %v1292
      %v1297 = vld [vmem:[%s4] sm:$0x3]
      %v1299 = vlaneseq
      %v1300 = vshrl.u32 %v1299, 7
      %v1301 = vsub.s32 0, %v1300
      %v1302 = vrot.slane %v1297, %v1301
      %v1303 = vlaneseq
      %v1304 = vshrl.u32 %v1303, 7
      %v1305 = vsub.s32 1, %v1304
      %v1306 = vrot.slane %v1297, %v1305
      %v1309 = vadd.f32 %v1295, %v1302
      %v1310 = vadd.f32 %v1296, %v1306
      %v1311 = vmax.f32 %v1309, 0.0
      %v1312 = vmax.f32 %v1310, 0.0
      %v1315 = vcombine.low %v1311, %v1312
      %1317 = vst [vmem:[%s300] sm:$0xff] %v1315
      %p1318 = scmp.lt.s32.totalorder %s20, 1
      %s1319 = scalar_select %p1318, %s20, 1
      %p1320 = scmp.lt.s32.totalorder %s21, 0
      %s1321 = scalar_select %p1320, %s21, 0
      %s1322 = smul.addr %s1321, 2
      %s1323 = smul.addr %s1319, 2
      %s1324 = sadd.s32 %s1322, %s1323
      %s1325 = smul.addr %s1324, 4
      %s1326 = scalar_lea.vmem %s5, %s1325
      // Predicated region
      $region41: #{fph_forward.15} parent=39 // pred_check
        %p1327 = pneg %p170
      $region42: #{fph_forward.15} parent=39 // pred_check_branch
        %1329 = sbr.rel (%p1327) target = $region44
      $region43: #{fph_forward.15} parent=39 // pred_region
        _
      $region44: #{fph_forward.15} parent=39 // pred_fallthru
        _
    $region40: #{fph_forward.15} parent=5 // pred_fallthru
      _
    %p1330 = scmp.le.s32.totalorder 2, %s11
    // Predicated region
    $region45: #{fph_forward.15} parent=5 // pred_check
      %p1331 = pneg %p1330
    $region46: #{fph_forward.15} parent=5 // pred_check_branch
      %1333 = sbr.rel (%p1331) target = $region48
    $region47: #{fph_forward.15} parent=5 // pred_region
      %s1334 = ssub.s32 %s11, 2
      // Predicated region
      $region49: #{fph_forward.15} parent=47 // pred_check
        %p1335 = pneg %p176
      $region50: #{fph_forward.15} parent=47 // pred_check_branch
        %1337 = sbr.rel (%p1335) target = $region52
      $region51: #{fph_forward.15} parent=47 // pred_region
        %p1338 = scmp.lt.s32.totalorder %s22, 1
        %s1339 = scalar_select %p1338, %s22, 1
        %p1340 = scmp.lt.s32.totalorder %s23, 0
        %s1341 = scalar_select %p1340, %s23, 0
        %s1342 = smul.addr %s1341, 2
        %s1343 = smul.addr %s1339, 2
        %s1344 = sadd.s32 %s1342, %s1343
        %s1345 = smul.addr %s1344, 4
        %s1346 = scalar_lea.vmem %s5, %s1345
      $region52: #{fph_forward.15} parent=47 // pred_fallthru
        _
    $region48: #{fph_forward.15} parent=5 // pred_fallthru
      _
  $region6: #{fph_forward.15} parent=0 // loop_footer
    %s15 = sadd.s32 1, %s11
  $region7: #{fph_forward.15} parent=0 // loop_footer_branch
    %10 = sbr.rel target = $region3
  $region8: #{fph_forward.15} parent=0 // loop_exit
    _

// kernel: fph_forward.16
$region0: #{fph_forward.16}
  #allocation0 [shape = 'u32[]', space=smem, size = 0x4, offset = 0x4, fixed_abs, tag = 'smem constant byte address 0x4 - core index']
  #allocation1 [shape = 'u32[144,128]{1,0:T(1,128)}', space=vmem, size = 0x12000, scoped, tag = 'internal scratch']
  %s0 = inlined_call_operand.vmem [shape: bf16[8,256], index: 0, kind: input, shape index: {}]
  %s1 = inlined_call_operand.vmem [shape: bf16[256,1536], index: 1, kind: input, shape index: {}]
  %s2 = inlined_call_operand.vmem [shape: f32[1,1536], index: 2, kind: input, shape index: {}]
  %s3 = inlined_call_operand.vmem [shape: f32[1,1536], index: 3, kind: input, shape index: {}]
  %s4 = inlined_call_operand.vmem [shape: bf16[8,1536], index: 4, kind: output, shape index: {}]
  %s5 = sld [smem:[#allocation0]]
  $region26: #{fph_forward.16} parent=0
    _
  %s7 = ssub.s32 1, %s5
  %s8 = scalar_select 0, %s7, %s5
  // Predicated region
  $region2: #{fph_forward.16} parent=0 // pred_check
    _
  $region3: #{fph_forward.16} parent=0 // pred_check_branch
    %10 = sbr.rel (0) target = $region5
  $region4: #{fph_forward.16} parent=0 // pred_region
    _
  $region5: #{fph_forward.16} parent=0 // pred_fallthru
    _
  // Predicated region
  $region6: #{fph_forward.16} parent=0 // pred_check
    _
  $region7: #{fph_forward.16} parent=0 // pred_check_branch
    %12 = sbr.rel (0) target = $region9
  $region8: #{fph_forward.16} parent=0 // pred_region
    _
  $region9: #{fph_forward.16} parent=0 // pred_fallthru
    _
  // Predicated region
  $region10: #{fph_forward.16} parent=0 // pred_check
    _
  $region11: #{fph_forward.16} parent=0 // pred_check_branch
    %14 = sbr.rel (0) target = $region13
  $region12: #{fph_forward.16} parent=0 // pred_region
    _
  $region13: #{fph_forward.16} parent=0 // pred_fallthru
    _
  // Predicated region
  $region14: #{fph_forward.16} parent=0 // pred_check
    _
  $region15: #{fph_forward.16} parent=0 // pred_check_branch
    %16 = sbr.rel (0) target = $region17
  $region16: #{fph_forward.16} parent=0 // pred_region
    _
  $region17: #{fph_forward.16} parent=0 // pred_fallthru
    _
  %v17 = vld [vmem:[%s0] sm:$0xff]
  %v18 = vld [vmem:[%s1] sm:$0xff]
  %v19 = vld [vmem:[%s1 + $0x8] sm:$0xff]
  %v20 = vld [vmem:[%s1 + $0x10] sm:$0xff]
  %v21 = vld [vmem:[%s1 + $0x18] sm:$0xff]
  %v22 = vld [vmem:[%s1 + $0x20] sm:$0xff]
  %v23 = vld [vmem:[%s1 + $0x28] sm:$0xff]
  %v24 = vld [vmem:[%s1 + $0x30] sm:$0xff]
  %v25 = vld [vmem:[%s1 + $0x38] sm:$0xff]
  %v26 = vld [vmem:[%s1 + $0x40] sm:$0xff]
  %v27 = vld [vmem:[%s1 + $0x48] sm:$0xff]
  %v28 = vld [vmem:[%s1 + $0x50] sm:$0xff]
  %v29 = vld [vmem:[%s1 + $0x58] sm:$0xff]
  %v30 = vld [vmem:[%s1 + $0x60] sm:$0xff]
  %v31 = vld [vmem:[%s1 + $0x68] sm:$0xff]
  %v32 = vld [vmem:[%s1 + $0x70] sm:$0xff]
  %v33 = vld [vmem:[%s1 + $0x78] sm:$0xff]
  %v34 = vld [vmem:[%s1 + $0x80] sm:$0xff]
  %v35 = vld [vmem:[%s1 + $0x88] sm:$0xff]
  %v36 = vld [vmem:[%s1 + $0x90] sm:$0xff]
  %v37 = vld [vmem:[%s1 + $0x98] sm:$0xff]
  %v38 = vld [vmem:[%s1 + $0xa0] sm:$0xff]
  %v39 = vld [vmem:[%s1 + $0xa8] sm:$0xff]
  %v40 = vld [vmem:[%s1 + $0xb0] sm:$0xff]
  %v41 = vld [vmem:[%s1 + $0xb8] sm:$0xff]
  %v42 = vld [vmem:[%s1 + $0xc0] sm:$0xff]
  %v43 = vld [vmem:[%s1 + $0xc8] sm:$0xff]
  %v44 = vld [vmem:[%s1 + $0xd0] sm:$0xff]
  %v45 = vld [vmem:[%s1 + $0xd8] sm:$0xff]
  %v46 = vld [vmem:[%s1 + $0xe0] sm:$0xff]
  %v47 = vld [vmem:[%s1 + $0xe8] sm:$0xff]
  %v48 = vld [vmem:[%s1 + $0xf0] sm:$0xff]
  %v49 = vld [vmem:[%s1 + $0xf8] sm:$0xff]
  %v50 = vld [vmem:[%s1 + $0x100] sm:$0xff]
  %v51 = vld [vmem:[%s1 + $0x108] sm:$0xff]
  %v52 = vld [vmem:[%s1 + $0x110] sm:$0xff]
  %v53 = vld [vmem:[%s1 + $0x118] sm:$0xff]
  %v54 = vld [vmem:[%s1 + $0x120] sm:$0xff]
  %v55 = vld [vmem:[%s1 + $0x128] sm:$0xff]
  %v56 = vld [vmem:[%s1 + $0x130] sm:$0xff]
  %v57 = vld [vmem:[%s1 + $0x138] sm:$0xff]
  %v58 = vld [vmem:[%s1 + $0x140] sm:$0xff]
  %v59 = vld [vmem:[%s1 + $0x148] sm:$0xff]
  %v60 = vld [vmem:[%s1 + $0x150] sm:$0xff]
  %v61 = vld [vmem:[%s1 + $0x158] sm:$0xff]
  %v62 = vld [vmem:[%s1 + $0x160] sm:$0xff]
  %v63 = vld [vmem:[%s1 + $0x168] sm:$0xff]
  %v64 = vld [vmem:[%s1 + $0x170] sm:$0xff]
  %v65 = vld [vmem:[%s1 + $0x178] sm:$0xff]
  %v66 = vld [vmem:[%s1 + $0x180] sm:$0xff]
  %v67 = vld [vmem:[%s1 + $0x188] sm:$0xff]
  %v68 = vld [vmem:[%s1 + $0x190] sm:$0xff]
  %v69 = vld [vmem:[%s1 + $0x198] sm:$0xff]
  %v70 = vld [vmem:[%s1 + $0x1a0] sm:$0xff]
  %v71 = vld [vmem:[%s1 + $0x1a8] sm:$0xff]
  %v72 = vld [vmem:[%s1 + $0x1b0] sm:$0xff]
  %v73 = vld [vmem:[%s1 + $0x1b8] sm:$0xff]
  %v74 = vld [vmem:[%s1 + $0x1c0] sm:$0xff]
  %v75 = vld [vmem:[%s1 + $0x1c8] sm:$0xff]
  %v76 = vld [vmem:[%s1 + $0x1d0] sm:$0xff]
  %v77 = vld [vmem:[%s1 + $0x1d8] sm:$0xff]
  %v78 = vld [vmem:[%s1 + $0x1e0] sm:$0xff]
  %v79 = vld [vmem:[%s1 + $0x1e8] sm:$0xff]
  %v80 = vld [vmem:[%s1 + $0x1f0] sm:$0xff]
  %v81 = vld [vmem:[%s1 + $0x1f8] sm:$0xff]
  %v82 = vld [vmem:[%s1 + $0x200] sm:$0xff]
  %v83 = vld [vmem:[%s1 + $0x208] sm:$0xff]
  %v84 = vld [vmem:[%s1 + $0x210] sm:$0xff]
  %v85 = vld [vmem:[%s1 + $0x218] sm:$0xff]
  %v86 = vld [vmem:[%s1 + $0x220] sm:$0xff]
  %v87 = vld [vmem:[%s1 + $0x228] sm:$0xff]
  %v88 = vld [vmem:[%s1 + $0x230] sm:$0xff]
  %v89 = vld [vmem:[%s1 + $0x238] sm:$0xff]
  %v90 = vld [vmem:[%s1 + $0x240] sm:$0xff]
  %v91 = vld [vmem:[%s1 + $0x248] sm:$0xff]
  %v92 = vld [vmem:[%s1 + $0x250] sm:$0xff]
  %v93 = vld [vmem:[%s1 + $0x258] sm:$0xff]
  %v94 = vld [vmem:[%s1 + $0x260] sm:$0xff]
  %v95 = vld [vmem:[%s1 + $0x268] sm:$0xff]
  %v96 = vld [vmem:[%s1 + $0x270] sm:$0xff]
  %v97 = vld [vmem:[%s1 + $0x278] sm:$0xff]
  %v98 = vld [vmem:[%s1 + $0x280] sm:$0xff]
  %v99 = vld [vmem:[%s1 + $0x288] sm:$0xff]
  %v100 = vld [vmem:[%s1 + $0x290] sm:$0xff]
  %v101 = vld [vmem:[%s1 + $0x298] sm:$0xff]
  %v102 = vld [vmem:[%s1 + $0x2a0] sm:$0xff]
  %v103 = vld [vmem:[%s1 + $0x2a8] sm:$0xff]
  %v104 = vld [vmem:[%s1 + $0x2b0] sm:$0xff]
  %v105 = vld [vmem:[%s1 + $0x2b8] sm:$0xff]
  %v106 = vld [vmem:[%s1 + $0x2c0] sm:$0xff]
  %v107 = vld [vmem:[%s1 + $0x2c8] sm:$0xff]
  %v108 = vld [vmem:[%s1 + $0x2d0] sm:$0xff]
  %v109 = vld [vmem:[%s1 + $0x2d8] sm:$0xff]
  %v110 = vld [vmem:[%s1 + $0x2e0] sm:$0xff]
  %v111 = vld [vmem:[%s1 + $0x2e8] sm:$0xff]
  %v112 = vld [vmem:[%s1 + $0x2f0] sm:$0xff]
  %v113 = vld [vmem:[%s1 + $0x2f8] sm:$0xff]
  %v114 = vld [vmem:[%s1 + $0x300] sm:$0xff]
  %v115 = vld [vmem:[%s1 + $0x308] sm:$0xff]
  %v116 = vld [vmem:[%s1 + $0x310] sm:$0xff]
  %v117 = vld [vmem:[%s1 + $0x318] sm:$0xff]
  %v118 = vld [vmem:[%s1 + $0x320] sm:$0xff]
  %v119 = vld [vmem:[%s1 + $0x328] sm:$0xff]
  %v120 = vld [vmem:[%s1 + $0x330] sm:$0xff]
  %v121 = vld [vmem:[%s1 + $0x338] sm:$0xff]
  %v122 = vld [vmem:[%s1 + $0x340] sm:$0xff]
  %v123 = vld [vmem:[%s1 + $0x348] sm:$0xff]
  %v124 = vld [vmem:[%s1 + $0x350] sm:$0xff]
  %v125 = vld [vmem:[%s1 + $0x358] sm:$0xff]
  %v126 = vld [vmem:[%s1 + $0x360] sm:$0xff]
  %v127 = vld [vmem:[%s1 + $0x368] sm:$0xff]
  %v128 = vld [vmem:[%s1 + $0x370] sm:$0xff]
  %v129 = vld [vmem:[%s1 + $0x378] sm:$0xff]
  %v130 = vld [vmem:[%s1 + $0x380] sm:$0xff]
  %v131 = vld [vmem:[%s1 + $0x388] sm:$0xff]
  %v132 = vld [vmem:[%s1 + $0x390] sm:$0xff]
  %v133 = vld [vmem:[%s1 + $0x398] sm:$0xff]
  %v134 = vld [vmem:[%s1 + $0x3a0] sm:$0xff]
  %v135 = vld [vmem:[%s1 + $0x3a8] sm:$0xff]
  %v136 = vld [vmem:[%s1 + $0x3b0] sm:$0xff]
  %v137 = vld [vmem:[%s1 + $0x3b8] sm:$0xff]
  %v138 = vld [vmem:[%s1 + $0x3c0] sm:$0xff]
  %v139 = vld [vmem:[%s1 + $0x3c8] sm:$0xff]
  %v140 = vld [vmem:[%s1 + $0x3d0] sm:$0xff]
  %v141 = vld [vmem:[%s1 + $0x3d8] sm:$0xff]
  %v142 = vld [vmem:[%s1 + $0x3e0] sm:$0xff]
  %v143 = vld [vmem:[%s1 + $0x3e8] sm:$0xff]
  %v144 = vld [vmem:[%s1 + $0x3f0] sm:$0xff]
  %v145 = vld [vmem:[%s1 + $0x3f8] sm:$0xff]
  %v146 = vld [vmem:[%s1 + $0x400] sm:$0xff]
  %v147 = vld [vmem:[%s1 + $0x408] sm:$0xff]
  %v148 = vld [vmem:[%s1 + $0x410] sm:$0xff]
  %v149 = vld [vmem:[%s1 + $0x418] sm:$0xff]
  %v150 = vld [vmem:[%s1 + $0x420] sm:$0xff]
  %v151 = vld [vmem:[%s1 + $0x428] sm:$0xff]
  %v152 = vld [vmem:[%s1 + $0x430] sm:$0xff]
  %v153 = vld [vmem:[%s1 + $0x438] sm:$0xff]
  %v154 = vld [vmem:[%s1 + $0x440] sm:$0xff]
  %v155 = vld [vmem:[%s1 + $0x448] sm:$0xff]
  %v156 = vld [vmem:[%s1 + $0x450] sm:$0xff]
  %v157 = vld [vmem:[%s1 + $0x458] sm:$0xff]
  %v158 = vld [vmem:[%s1 + $0x460] sm:$0xff]
  %v159 = vld [vmem:[%s1 + $0x468] sm:$0xff]
  %v160 = vld [vmem:[%s1 + $0x470] sm:$0xff]
  %v161 = vld [vmem:[%s1 + $0x478] sm:$0xff]
  %v162 = vld [vmem:[%s1 + $0x480] sm:$0xff]
  %v163 = vld [vmem:[%s1 + $0x488] sm:$0xff]
  %v164 = vld [vmem:[%s1 + $0x490] sm:$0xff]
  %v165 = vld [vmem:[%s1 + $0x498] sm:$0xff]
  %v166 = vld [vmem:[%s1 + $0x4a0] sm:$0xff]
  %v167 = vld [vmem:[%s1 + $0x4a8] sm:$0xff]
  %v168 = vld [vmem:[%s1 + $0x4b0] sm:$0xff]
  %v169 = vld [vmem:[%s1 + $0x4b8] sm:$0xff]
  %v170 = vld [vmem:[%s1 + $0x4c0] sm:$0xff]
  %v171 = vld [vmem:[%s1 + $0x4c8] sm:$0xff]
  %v172 = vld [vmem:[%s1 + $0x4d0] sm:$0xff]
  %v173 = vld [vmem:[%s1 + $0x4d8] sm:$0xff]
  %v174 = vld [vmem:[%s1 + $0x4e0] sm:$0xff]
  %v175 = vld [vmem:[%s1 + $0x4e8] sm:$0xff]
  %v176 = vld [vmem:[%s1 + $0x4f0] sm:$0xff]
  %v177 = vld [vmem:[%s1 + $0x4f8] sm:$0xff]
  %v178 = vld [vmem:[%s1 + $0x500] sm:$0xff]
  %v179 = vld [vmem:[%s1 + $0x508] sm:$0xff]
  %v180 = vld [vmem:[%s1 + $0x510] sm:$0xff]
  %v181 = vld [vmem:[%s1 + $0x518] sm:$0xff]
  %v182 = vld [vmem:[%s1 + $0x520] sm:$0xff]
  %v183 = vld [vmem:[%s1 + $0x528] sm:$0xff]
  %v184 = vld [vmem:[%s1 + $0x530] sm:$0xff]
  %v185 = vld [vmem:[%s1 + $0x538] sm:$0xff]
  %v186 = vld [vmem:[%s1 + $0x540] sm:$0xff]
  %v187 = vld [vmem:[%s1 + $0x548] sm:$0xff]
  %v188 = vld [vmem:[%s1 + $0x550] sm:$0xff]
  %v189 = vld [vmem:[%s1 + $0x558] sm:$0xff]
  %v190 = vld [vmem:[%s1 + $0x560] sm:$0xff]
  %v191 = vld [vmem:[%s1 + $0x568] sm:$0xff]
  %v192 = vld [vmem:[%s1 + $0x570] sm:$0xff]
  %v193 = vld [vmem:[%s1 + $0x578] sm:$0xff]
  %v194 = vld [vmem:[%s1 + $0x580] sm:$0xff]
  %v195 = vld [vmem:[%s1 + $0x588] sm:$0xff]
  %v196 = vld [vmem:[%s1 + $0x590] sm:$0xff]
  %v197 = vld [vmem:[%s1 + $0x598] sm:$0xff]
  %v198 = vld [vmem:[%s1 + $0x5a0] sm:$0xff]
  %v199 = vld [vmem:[%s1 + $0x5a8] sm:$0xff]
  %v200 = vld [vmem:[%s1 + $0x5b0] sm:$0xff]
  %v201 = vld [vmem:[%s1 + $0x5b8] sm:$0xff]
  %v202 = vld [vmem:[%s1 + $0x5c0] sm:$0xff]
  %v203 = vld [vmem:[%s1 + $0x5c8] sm:$0xff]
  %v204 = vld [vmem:[%s1 + $0x5d0] sm:$0xff]
  %v205 = vld [vmem:[%s1 + $0x5d8] sm:$0xff]
  %v206 = vld [vmem:[%s1 + $0x5e0] sm:$0xff]
  %v207 = vld [vmem:[%s1 + $0x5e8] sm:$0xff]
  %v208 = vld [vmem:[%s1 + $0x5f0] sm:$0xff]
  %v209 = vld [vmem:[%s1 + $0x5f8] sm:$0xff]
  %v211 = vunpack.c.l.b16 %v17
  %v212 = vunpack.c.h.b16 %v17
  %v213 = vpack.c.b16 %v211, %v211
  %v214 = vpack.c.b16 %v212, %v212
  %v409 = vunpack.c.l.b16 %v18
  %v410 = vunpack.c.h.b16 %v18
  %v411 = vunpack.c.l.b16 %v19
  %v412 = vunpack.c.h.b16 %v19
  %v413 = vunpack.c.l.b16 %v20
  %v414 = vunpack.c.h.b16 %v20
  %v415 = vunpack.c.l.b16 %v21
  %v416 = vunpack.c.h.b16 %v21
  %v417 = vunpack.c.l.b16 %v22
  %v418 = vunpack.c.h.b16 %v22
  %v419 = vunpack.c.l.b16 %v23
  %v420 = vunpack.c.h.b16 %v23
  %v421 = vunpack.c.l.b16 %v24
  %v422 = vunpack.c.h.b16 %v24
  %v423 = vunpack.c.l.b16 %v25
  %v424 = vunpack.c.h.b16 %v25
  %v425 = vunpack.c.l.b16 %v26
  %v426 = vunpack.c.h.b16 %v26
  %v427 = vunpack.c.l.b16 %v27
  %v428 = vunpack.c.h.b16 %v27
  %v429 = vunpack.c.l.b16 %v28
  %v430 = vunpack.c.h.b16 %v28
  %v431 = vunpack.c.l.b16 %v29
  %v432 = vunpack.c.h.b16 %v29
  %v433 = vunpack.c.l.b16 %v30
  %v434 = vunpack.c.h.b16 %v30
  %v435 = vunpack.c.l.b16 %v31
  %v436 = vunpack.c.h.b16 %v31
  %v437 = vunpack.c.l.b16 %v32
  %v438 = vunpack.c.h.b16 %v32
  %v439 = vunpack.c.l.b16 %v33
  %v440 = vunpack.c.h.b16 %v33
  %v441 = vunpack.c.l.b16 %v34
  %v442 = vunpack.c.h.b16 %v34
  %v443 = vunpack.c.l.b16 %v35
  %v444 = vunpack.c.h.b16 %v35
  %v445 = vunpack.c.l.b16 %v36
  %v446 = vunpack.c.h.b16 %v36
  %v447 = vunpack.c.l.b16 %v37
  %v448 = vunpack.c.h.b16 %v37
  %v449 = vunpack.c.l.b16 %v38
  %v450 = vunpack.c.h.b16 %v38
  %v451 = vunpack.c.l.b16 %v39
  %v452 = vunpack.c.h.b16 %v39
  %v453 = vunpack.c.l.b16 %v40
  %v454 = vunpack.c.h.b16 %v40
  %v455 = vunpack.c.l.b16 %v41
  %v456 = vunpack.c.h.b16 %v41
  %v457 = vunpack.c.l.b16 %v42
  %v458 = vunpack.c.h.b16 %v42
  %v459 = vunpack.c.l.b16 %v43
  %v460 = vunpack.c.h.b16 %v43
  %v461 = vunpack.c.l.b16 %v44
  %v462 = vunpack.c.h.b16 %v44
  %v463 = vunpack.c.l.b16 %v45
  %v464 = vunpack.c.h.b16 %v45
  %v465 = vunpack.c.l.b16 %v46
  %v466 = vunpack.c.h.b16 %v46
  %v467 = vunpack.c.l.b16 %v47
  %v468 = vunpack.c.h.b16 %v47
  %v469 = vunpack.c.l.b16 %v48
  %v470 = vunpack.c.h.b16 %v48
  %v471 = vunpack.c.l.b16 %v49
  %v472 = vunpack.c.h.b16 %v49
  %v473 = vunpack.c.l.b16 %v50
  %v474 = vunpack.c.h.b16 %v50
  %v475 = vunpack.c.l.b16 %v51
  %v476 = vunpack.c.h.b16 %v51
  %v477 = vunpack.c.l.b16 %v52
  %v478 = vunpack.c.h.b16 %v52
  %v479 = vunpack.c.l.b16 %v53
  %v480 = vunpack.c.h.b16 %v53
  %v481 = vunpack.c.l.b16 %v54
  %v482 = vunpack.c.h.b16 %v54
  %v483 = vunpack.c.l.b16 %v55
  %v484 = vunpack.c.h.b16 %v55
  %v485 = vunpack.c.l.b16 %v56
  %v486 = vunpack.c.h.b16 %v56
  %v487 = vunpack.c.l.b16 %v57
  %v488 = vunpack.c.h.b16 %v57
  %v489 = vunpack.c.l.b16 %v58
  %v490 = vunpack.c.h.b16 %v58
  %v491 = vunpack.c.l.b16 %v59
  %v492 = vunpack.c.h.b16 %v59
  %v493 = vunpack.c.l.b16 %v60
  %v494 = vunpack.c.h.b16 %v60
  %v495 = vunpack.c.l.b16 %v61
  %v496 = vunpack.c.h.b16 %v61
  %v497 = vunpack.c.l.b16 %v62
  %v498 = vunpack.c.h.b16 %v62
  %v499 = vunpack.c.l.b16 %v63
  %v500 = vunpack.c.h.b16 %v63
  %v501 = vunpack.c.l.b16 %v64
  %v502 = vunpack.c.h.b16 %v64
  %v503 = vunpack.c.l.b16 %v65
  %v504 = vunpack.c.h.b16 %v65
  %v505 = vunpack.c.l.b16 %v66
  %v506 = vunpack.c.h.b16 %v66
  %v507 = vunpack.c.l.b16 %v67
  %v508 = vunpack.c.h.b16 %v67
  %v509 = vunpack.c.l.b16 %v68
  %v510 = vunpack.c.h.b16 %v68
  %v511 = vunpack.c.l.b16 %v69
  %v512 = vunpack.c.h.b16 %v69
  %v513 = vunpack.c.l.b16 %v70
  %v514 = vunpack.c.h.b16 %v70
  %v515 = vunpack.c.l.b16 %v71
  %v516 = vunpack.c.h.b16 %v71
  %v517 = vunpack.c.l.b16 %v72
  %v518 = vunpack.c.h.b16 %v72
  %v519 = vunpack.c.l.b16 %v73
  %v520 = vunpack.c.h.b16 %v73
  %v521 = vunpack.c.l.b16 %v74
  %v522 = vunpack.c.h.b16 %v74
  %v523 = vunpack.c.l.b16 %v75
  %v524 = vunpack.c.h.b16 %v75
  %v525 = vunpack.c.l.b16 %v76
  %v526 = vunpack.c.h.b16 %v76
  %v527 = vunpack.c.l.b16 %v77
  %v528 = vunpack.c.h.b16 %v77
  %v529 = vunpack.c.l.b16 %v78
  %v530 = vunpack.c.h.b16 %v78
  %v531 = vunpack.c.l.b16 %v79
  %v532 = vunpack.c.h.b16 %v79
  %v533 = vunpack.c.l.b16 %v80
  %v534 = vunpack.c.h.b16 %v80
  %v535 = vunpack.c.l.b16 %v81
  %v536 = vunpack.c.h.b16 %v81
  %v537 = vunpack.c.l.b16 %v82
  %v538 = vunpack.c.h.b16 %v82
  %v539 = vunpack.c.l.b16 %v83
  %v540 = vunpack.c.h.b16 %v83
  %v541 = vunpack.c.l.b16 %v84
  %v542 = vunpack.c.h.b16 %v84
  %v543 = vunpack.c.l.b16 %v85
  %v544 = vunpack.c.h.b16 %v85
  %v545 = vunpack.c.l.b16 %v86
  %v546 = vunpack.c.h.b16 %v86
  %v547 = vunpack.c.l.b16 %v87
  %v548 = vunpack.c.h.b16 %v87
  %v549 = vunpack.c.l.b16 %v88
  %v550 = vunpack.c.h.b16 %v88
  %v551 = vunpack.c.l.b16 %v89
  %v552 = vunpack.c.h.b16 %v89
  %v553 = vunpack.c.l.b16 %v90
  %v554 = vunpack.c.h.b16 %v90
  %v555 = vunpack.c.l.b16 %v91
  %v556 = vunpack.c.h.b16 %v91
  %v557 = vunpack.c.l.b16 %v92
  %v558 = vunpack.c.h.b16 %v92
  %v559 = vunpack.c.l.b16 %v93
  %v560 = vunpack.c.h.b16 %v93
  %v561 = vunpack.c.l.b16 %v94
  %v562 = vunpack.c.h.b16 %v94
  %v563 = vunpack.c.l.b16 %v95
  %v564 = vunpack.c.h.b16 %v95
  %v565 = vunpack.c.l.b16 %v96
  %v566 = vunpack.c.h.b16 %v96
  %v567 = vunpack.c.l.b16 %v97
  %v568 = vunpack.c.h.b16 %v97
  %v569 = vunpack.c.l.b16 %v98
  %v570 = vunpack.c.h.b16 %v98
  %v571 = vunpack.c.l.b16 %v99
  %v572 = vunpack.c.h.b16 %v99
  %v573 = vunpack.c.l.b16 %v100
  %v574 = vunpack.c.h.b16 %v100
  %v575 = vunpack.c.l.b16 %v101
  %v576 = vunpack.c.h.b16 %v101
  %v577 = vunpack.c.l.b16 %v102
  %v578 = vunpack.c.h.b16 %v102
  %v579 = vunpack.c.l.b16 %v103
  %v580 = vunpack.c.h.b16 %v103
  %v581 = vunpack.c.l.b16 %v104
  %v582 = vunpack.c.h.b16 %v104
  %v583 = vunpack.c.l.b16 %v105
  %v584 = vunpack.c.h.b16 %v105
  %v585 = vunpack.c.l.b16 %v106
  %v586 = vunpack.c.h.b16 %v106
  %v587 = vunpack.c.l.b16 %v107
  %v588 = vunpack.c.h.b16 %v107
  %v589 = vunpack.c.l.b16 %v108
  %v590 = vunpack.c.h.b16 %v108
  %v591 = vunpack.c.l.b16 %v109
  %v592 = vunpack.c.h.b16 %v109
  %v593 = vunpack.c.l.b16 %v110
  %v594 = vunpack.c.h.b16 %v110
  %v595 = vunpack.c.l.b16 %v111
  %v596 = vunpack.c.h.b16 %v111
  %v597 = vunpack.c.l.b16 %v112
  %v598 = vunpack.c.h.b16 %v112
  %v599 = vunpack.c.l.b16 %v113
  %v600 = vunpack.c.h.b16 %v113
  %v601 = vunpack.c.l.b16 %v114
  %v602 = vunpack.c.h.b16 %v114
  %v603 = vunpack.c.l.b16 %v115
  %v604 = vunpack.c.h.b16 %v115
  %v605 = vunpack.c.l.b16 %v116
  %v606 = vunpack.c.h.b16 %v116
  %v607 = vunpack.c.l.b16 %v117
  %v608 = vunpack.c.h.b16 %v117
  %v609 = vunpack.c.l.b16 %v118
  %v610 = vunpack.c.h.b16 %v118
  %v611 = vunpack.c.l.b16 %v119
  %v612 = vunpack.c.h.b16 %v119
  %v613 = vunpack.c.l.b16 %v120
  %v614 = vunpack.c.h.b16 %v120
  %v615 = vunpack.c.l.b16 %v121
  %v616 = vunpack.c.h.b16 %v121
  %v617 = vunpack.c.l.b16 %v122
  %v618 = vunpack.c.h.b16 %v122
  %v619 = vunpack.c.l.b16 %v123
  %v620 = vunpack.c.h.b16 %v123
  %v621 = vunpack.c.l.b16 %v124
  %v622 = vunpack.c.h.b16 %v124
  %v623 = vunpack.c.l.b16 %v125
  %v624 = vunpack.c.h.b16 %v125
  %v625 = vunpack.c.l.b16 %v126
  %v626 = vunpack.c.h.b16 %v126
  %v627 = vunpack.c.l.b16 %v127
  %v628 = vunpack.c.h.b16 %v127
  %v629 = vunpack.c.l.b16 %v128
  %v630 = vunpack.c.h.b16 %v128
  %v631 = vunpack.c.l.b16 %v129
  %v632 = vunpack.c.h.b16 %v129
  %v633 = vunpack.c.l.b16 %v130
  %v634 = vunpack.c.h.b16 %v130
  %v635 = vunpack.c.l.b16 %v131
  %v636 = vunpack.c.h.b16 %v131
  %v637 = vunpack.c.l.b16 %v132
  %v638 = vunpack.c.h.b16 %v132
  %v639 = vunpack.c.l.b16 %v133
  %v640 = vunpack.c.h.b16 %v133
  %v641 = vunpack.c.l.b16 %v134
  %v642 = vunpack.c.h.b16 %v134
  %v643 = vunpack.c.l.b16 %v135
  %v644 = vunpack.c.h.b16 %v135
  %v645 = vunpack.c.l.b16 %v136
  %v646 = vunpack.c.h.b16 %v136
  %v647 = vunpack.c.l.b16 %v137
  %v648 = vunpack.c.h.b16 %v137
  %v649 = vunpack.c.l.b16 %v138
  %v650 = vunpack.c.h.b16 %v138
  %v651 = vunpack.c.l.b16 %v139
  %v652 = vunpack.c.h.b16 %v139
  %v653 = vunpack.c.l.b16 %v140
  %v654 = vunpack.c.h.b16 %v140
  %v655 = vunpack.c.l.b16 %v141
  %v656 = vunpack.c.h.b16 %v141
  %v657 = vunpack.c.l.b16 %v142
  %v658 = vunpack.c.h.b16 %v142
  %v659 = vunpack.c.l.b16 %v143
  %v660 = vunpack.c.h.b16 %v143
  %v661 = vunpack.c.l.b16 %v144
  %v662 = vunpack.c.h.b16 %v144
  %v663 = vunpack.c.l.b16 %v145
  %v664 = vunpack.c.h.b16 %v145
  %v665 = vunpack.c.l.b16 %v146
  %v666 = vunpack.c.h.b16 %v146
  %v667 = vunpack.c.l.b16 %v147
  %v668 = vunpack.c.h.b16 %v147
  %v669 = vunpack.c.l.b16 %v148
  %v670 = vunpack.c.h.b16 %v148
  %v671 = vunpack.c.l.b16 %v149
  %v672 = vunpack.c.h.b16 %v149
  %v673 = vunpack.c.l.b16 %v150
  %v674 = vunpack.c.h.b16 %v150
  %v675 = vunpack.c.l.b16 %v151
  %v676 = vunpack.c.h.b16 %v151
  %v677 = vunpack.c.l.b16 %v152
  %v678 = vunpack.c.h.b16 %v152
  %v679 = vunpack.c.l.b16 %v153
  %v680 = vunpack.c.h.b16 %v153
  %v681 = vunpack.c.l.b16 %v154
  %v682 = vunpack.c.h.b16 %v154
  %v683 = vunpack.c.l.b16 %v155
  %v684 = vunpack.c.h.b16 %v155
  %v685 = vunpack.c.l.b16 %v156
  %v686 = vunpack.c.h.b16 %v156
  %v687 = vunpack.c.l.b16 %v157
  %v688 = vunpack.c.h.b16 %v157
  %v689 = vunpack.c.l.b16 %v158
  %v690 = vunpack.c.h.b16 %v158
  %v691 = vunpack.c.l.b16 %v159
  %v692 = vunpack.c.h.b16 %v159
  %v693 = vunpack.c.l.b16 %v160
  %v694 = vunpack.c.h.b16 %v160
  %v695 = vunpack.c.l.b16 %v161
  %v696 = vunpack.c.h.b16 %v161
  %v697 = vunpack.c.l.b16 %v162
  %v698 = vunpack.c.h.b16 %v162
  %v699 = vunpack.c.l.b16 %v163
  %v700 = vunpack.c.h.b16 %v163
  %v701 = vunpack.c.l.b16 %v164
  %v702 = vunpack.c.h.b16 %v164
  %v703 = vunpack.c.l.b16 %v165
  %v704 = vunpack.c.h.b16 %v165
  %v705 = vunpack.c.l.b16 %v166
  %v706 = vunpack.c.h.b16 %v166
  %v707 = vunpack.c.l.b16 %v167
  %v708 = vunpack.c.h.b16 %v167
  %v709 = vunpack.c.l.b16 %v168
  %v710 = vunpack.c.h.b16 %v168
  %v711 = vunpack.c.l.b16 %v169
  %v712 = vunpack.c.h.b16 %v169
  %v713 = vunpack.c.l.b16 %v170
  %v714 = vunpack.c.h.b16 %v170
  %v715 = vunpack.c.l.b16 %v171
  %v716 = vunpack.c.h.b16 %v171
  %v717 = vunpack.c.l.b16 %v172
  %v718 = vunpack.c.h.b16 %v172
  %v719 = vunpack.c.l.b16 %v173
  %v720 = vunpack.c.h.b16 %v173
  %v721 = vunpack.c.l.b16 %v174
  %v722 = vunpack.c.h.b16 %v174
  %v723 = vunpack.c.l.b16 %v175
  %v724 = vunpack.c.h.b16 %v175
  %v725 = vunpack.c.l.b16 %v176
  %v726 = vunpack.c.h.b16 %v176
  %v727 = vunpack.c.l.b16 %v177
  %v728 = vunpack.c.h.b16 %v177
  %v729 = vunpack.c.l.b16 %v178
  %v730 = vunpack.c.h.b16 %v178
  %v731 = vunpack.c.l.b16 %v179
  %v732 = vunpack.c.h.b16 %v179
  %v733 = vunpack.c.l.b16 %v180
  %v734 = vunpack.c.h.b16 %v180
  %v735 = vunpack.c.l.b16 %v181
  %v736 = vunpack.c.h.b16 %v181
  %v737 = vunpack.c.l.b16 %v182
  %v738 = vunpack.c.h.b16 %v182
  %v739 = vunpack.c.l.b16 %v183
  %v740 = vunpack.c.h.b16 %v183
  %v741 = vunpack.c.l.b16 %v184
  %v742 = vunpack.c.h.b16 %v184
  %v743 = vunpack.c.l.b16 %v185
  %v744 = vunpack.c.h.b16 %v185
  %v745 = vunpack.c.l.b16 %v186
  %v746 = vunpack.c.h.b16 %v186
  %v747 = vunpack.c.l.b16 %v187
  %v748 = vunpack.c.h.b16 %v187
  %v749 = vunpack.c.l.b16 %v188
  %v750 = vunpack.c.h.b16 %v188
  %v751 = vunpack.c.l.b16 %v189
  %v752 = vunpack.c.h.b16 %v189
  %v753 = vunpack.c.l.b16 %v190
  %v754 = vunpack.c.h.b16 %v190
  %v755 = vunpack.c.l.b16 %v191
  %v756 = vunpack.c.h.b16 %v191
  %v757 = vunpack.c.l.b16 %v192
  %v758 = vunpack.c.h.b16 %v192
  %v759 = vunpack.c.l.b16 %v193
  %v760 = vunpack.c.h.b16 %v193
  %v761 = vunpack.c.l.b16 %v194
  %v762 = vunpack.c.h.b16 %v194
  %v763 = vunpack.c.l.b16 %v195
  %v764 = vunpack.c.h.b16 %v195
  %v765 = vunpack.c.l.b16 %v196
  %v766 = vunpack.c.h.b16 %v196
  %v767 = vunpack.c.l.b16 %v197
  %v768 = vunpack.c.h.b16 %v197
  %v769 = vunpack.c.l.b16 %v198
  %v770 = vunpack.c.h.b16 %v198
  %v771 = vunpack.c.l.b16 %v199
  %v772 = vunpack.c.h.b16 %v199
  %v773 = vunpack.c.l.b16 %v200
  %v774 = vunpack.c.h.b16 %v200
  %v775 = vunpack.c.l.b16 %v201
  %v776 = vunpack.c.h.b16 %v201
  %v777 = vunpack.c.l.b16 %v202
  %v778 = vunpack.c.h.b16 %v202
  %v779 = vunpack.c.l.b16 %v203
  %v780 = vunpack.c.h.b16 %v203
  %v781 = vunpack.c.l.b16 %v204
  %v782 = vunpack.c.h.b16 %v204
  %v783 = vunpack.c.l.b16 %v205
  %v784 = vunpack.c.h.b16 %v205
  %v785 = vunpack.c.l.b16 %v206
  %v786 = vunpack.c.h.b16 %v206
  %v787 = vunpack.c.l.b16 %v207
  %v788 = vunpack.c.h.b16 %v207
  %v789 = vunpack.c.l.b16 %v208
  %v790 = vunpack.c.h.b16 %v208
  %v791 = vunpack.c.l.b16 %v209
  %v792 = vunpack.c.h.b16 %v209
  %v793 = vpack.c.b16 %v421, %v409
  %v794 = vpack.c.b16 %v422, %v410
  %v795 = vpack.c.b16 %v423, %v411
  %v796 = vpack.c.b16 %v424, %v412
  %v797 = vpack.c.b16 %v425, %v413
  %v798 = vpack.c.b16 %v426, %v414
  %v799 = vpack.c.b16 %v427, %v415
  %v800 = vpack.c.b16 %v428, %v416
  %v801 = vpack.c.b16 %v429, %v417
  %v802 = vpack.c.b16 %v430, %v418
  %v803 = vpack.c.b16 %v431, %v419
  %v804 = vpack.c.b16 %v432, %v420
  %v805 = vpack.c.b16 %v445, %v433
  %v806 = vpack.c.b16 %v446, %v434
  %v807 = vpack.c.b16 %v447, %v435
  %v808 = vpack.c.b16 %v448, %v436
  %v809 = vpack.c.b16 %v449, %v437
  %v810 = vpack.c.b16 %v450, %v438
  %v811 = vpack.c.b16 %v451, %v439
  %v812 = vpack.c.b16 %v452, %v440
  %v813 = vpack.c.b16 %v453, %v441
  %v814 = vpack.c.b16 %v454, %v442
  %v815 = vpack.c.b16 %v455, %v443
  %v816 = vpack.c.b16 %v456, %v444
  %v817 = vpack.c.b16 %v469, %v457
  %v818 = vpack.c.b16 %v470, %v458
  %v819 = vpack.c.b16 %v471, %v459
  %v820 = vpack.c.b16 %v472, %v460
  %v821 = vpack.c.b16 %v473, %v461
  %v822 = vpack.c.b16 %v474, %v462
  %v823 = vpack.c.b16 %v475, %v463
  %v824 = vpack.c.b16 %v476, %v464
  %v825 = vpack.c.b16 %v477, %v465
  %v826 = vpack.c.b16 %v478, %v466
  %v827 = vpack.c.b16 %v479, %v467
  %v828 = vpack.c.b16 %v480, %v468
  %v829 = vpack.c.b16 %v493, %v481
  %v830 = vpack.c.b16 %v494, %v482
  %v831 = vpack.c.b16 %v495, %v483
  %v832 = vpack.c.b16 %v496, %v484
  %v833 = vpack.c.b16 %v497, %v485
  %v834 = vpack.c.b16 %v498, %v486
  %v835 = vpack.c.b16 %v499, %v487
  %v836 = vpack.c.b16 %v500, %v488
  %v837 = vpack.c.b16 %v501, %v489
  %v838 = vpack.c.b16 %v502, %v490
  %v839 = vpack.c.b16 %v503, %v491
  %v840 = vpack.c.b16 %v504, %v492
  %v841 = vpack.c.b16 %v517, %v505
  %v842 = vpack.c.b16 %v518, %v506
  %v843 = vpack.c.b16 %v519, %v507
  %v844 = vpack.c.b16 %v520, %v508
  %v845 = vpack.c.b16 %v521, %v509
  %v846 = vpack.c.b16 %v522, %v510
  %v847 = vpack.c.b16 %v523, %v511
  %v848 = vpack.c.b16 %v524, %v512
  %v849 = vpack.c.b16 %v525, %v513
  %v850 = vpack.c.b16 %v526, %v514
  %v851 = vpack.c.b16 %v527, %v515
  %v852 = vpack.c.b16 %v528, %v516
  %v853 = vpack.c.b16 %v541, %v529
  %v854 = vpack.c.b16 %v542, %v530
  %v855 = vpack.c.b16 %v543, %v531
  %v856 = vpack.c.b16 %v544, %v532
  %v857 = vpack.c.b16 %v545, %v533
  %v858 = vpack.c.b16 %v546, %v534
  %v859 = vpack.c.b16 %v547, %v535
  %v860 = vpack.c.b16 %v548, %v536
  %v861 = vpack.c.b16 %v549, %v537
  %v862 = vpack.c.b16 %v550, %v538
  %v863 = vpack.c.b16 %v551, %v539
  %v864 = vpack.c.b16 %v552, %v540
  %v865 = vpack.c.b16 %v565, %v553
  %v866 = vpack.c.b16 %v566, %v554
  %v867 = vpack.c.b16 %v567, %v555
  %v868 = vpack.c.b16 %v568, %v556
  %v869 = vpack.c.b16 %v569, %v557
  %v870 = vpack.c.b16 %v570, %v558
  %v871 = vpack.c.b16 %v571, %v559
  %v872 = vpack.c.b16 %v572, %v560
  %v873 = vpack.c.b16 %v573, %v561
  %v874 = vpack.c.b16 %v574, %v562
  %v875 = vpack.c.b16 %v575, %v563
  %v876 = vpack.c.b16 %v576, %v564
  %v877 = vpack.c.b16 %v589, %v577
  %v878 = vpack.c.b16 %v590, %v578
  %v879 = vpack.c.b16 %v591, %v579
  %v880 = vpack.c.b16 %v592, %v580
  %v881 = vpack.c.b16 %v593, %v581
  %v882 = vpack.c.b16 %v594, %v582
  %v883 = vpack.c.b16 %v595, %v583
  %v884 = vpack.c.b16 %v596, %v584
  %v885 = vpack.c.b16 %v597, %v585
  %v886 = vpack.c.b16 %v598, %v586
  %v887 = vpack.c.b16 %v599, %v587
  %v888 = vpack.c.b16 %v600, %v588
  %v889 = vpack.c.b16 %v613, %v601
  %v890 = vpack.c.b16 %v614, %v602
  %v891 = vpack.c.b16 %v615, %v603
  %v892 = vpack.c.b16 %v616, %v604
  %v893 = vpack.c.b16 %v617, %v605
  %v894 = vpack.c.b16 %v618, %v606
  %v895 = vpack.c.b16 %v619, %v607
  %v896 = vpack.c.b16 %v620, %v608
  %v897 = vpack.c.b16 %v621, %v609
  %v898 = vpack.c.b16 %v622, %v610
  %v899 = vpack.c.b16 %v623, %v611
  %v900 = vpack.c.b16 %v624, %v612
  %v901 = vpack.c.b16 %v637, %v625
  %v902 = vpack.c.b16 %v638, %v626
  %v903 = vpack.c.b16 %v639, %v627
  %v904 = vpack.c.b16 %v640, %v628
  %v905 = vpack.c.b16 %v641, %v629
  %v906 = vpack.c.b16 %v642, %v630
  %v907 = vpack.c.b16 %v643, %v631
  %v908 = vpack.c.b16 %v644, %v632
  %v909 = vpack.c.b16 %v645, %v633
  %v910 = vpack.c.b16 %v646, %v634
  %v911 = vpack.c.b16 %v647, %v635
  %v912 = vpack.c.b16 %v648, %v636
  %v913 = vpack.c.b16 %v661, %v649
  %v914 = vpack.c.b16 %v662, %v650
  %v915 = vpack.c.b16 %v663, %v651
  %v916 = vpack.c.b16 %v664, %v652
  %v917 = vpack.c.b16 %v665, %v653
  %v918 = vpack.c.b16 %v666, %v654
  %v919 = vpack.c.b16 %v667, %v655
  %v920 = vpack.c.b16 %v668, %v656
  %v921 = vpack.c.b16 %v669, %v657
  %v922 = vpack.c.b16 %v670, %v658
  %v923 = vpack.c.b16 %v671, %v659
  %v924 = vpack.c.b16 %v672, %v660
  %v925 = vpack.c.b16 %v685, %v673
  %v926 = vpack.c.b16 %v686, %v674
  %v927 = vpack.c.b16 %v687, %v675
  %v928 = vpack.c.b16 %v688, %v676
  %v929 = vpack.c.b16 %v689, %v677
  %v930 = vpack.c.b16 %v690, %v678
  %v931 = vpack.c.b16 %v691, %v679
  %v932 = vpack.c.b16 %v692, %v680
  %v933 = vpack.c.b16 %v693, %v681
  %v934 = vpack.c.b16 %v694, %v682
  %v935 = vpack.c.b16 %v695, %v683
  %v936 = vpack.c.b16 %v696, %v684
  %v937 = vpack.c.b16 %v709, %v697
  %v938 = vpack.c.b16 %v710, %v698
  %v939 = vpack.c.b16 %v711, %v699
  %v940 = vpack.c.b16 %v712, %v700
  %v941 = vpack.c.b16 %v713, %v701
  %v942 = vpack.c.b16 %v714, %v702
  %v943 = vpack.c.b16 %v715, %v703
  %v944 = vpack.c.b16 %v716, %v704
  %v945 = vpack.c.b16 %v717, %v705
  %v946 = vpack.c.b16 %v718, %v706
  %v947 = vpack.c.b16 %v719, %v707
  %v948 = vpack.c.b16 %v720, %v708
  %v949 = vpack.c.b16 %v733, %v721
  %v950 = vpack.c.b16 %v734, %v722
  %v951 = vpack.c.b16 %v735, %v723
  %v952 = vpack.c.b16 %v736, %v724
  %v953 = vpack.c.b16 %v737, %v725
  %v954 = vpack.c.b16 %v738, %v726
  %v955 = vpack.c.b16 %v739, %v727
  %v956 = vpack.c.b16 %v740, %v728
  %v957 = vpack.c.b16 %v741, %v729
  %v958 = vpack.c.b16 %v742, %v730
  %v959 = vpack.c.b16 %v743, %v731
  %v960 = vpack.c.b16 %v744, %v732
  %v961 = vpack.c.b16 %v757, %v745
  %v962 = vpack.c.b16 %v758, %v746
  %v963 = vpack.c.b16 %v759, %v747
  %v964 = vpack.c.b16 %v760, %v748
  %v965 = vpack.c.b16 %v761, %v749
  %v966 = vpack.c.b16 %v762, %v750
  %v967 = vpack.c.b16 %v763, %v751
  %v968 = vpack.c.b16 %v764, %v752
  %v969 = vpack.c.b16 %v765, %v753
  %v970 = vpack.c.b16 %v766, %v754
  %v971 = vpack.c.b16 %v767, %v755
  %v972 = vpack.c.b16 %v768, %v756
  %v973 = vpack.c.b16 %v781, %v769
  %v974 = vpack.c.b16 %v782, %v770
  %v975 = vpack.c.b16 %v783, %v771
  %v976 = vpack.c.b16 %v784, %v772
  %v977 = vpack.c.b16 %v785, %v773
  %v978 = vpack.c.b16 %v786, %v774
  %v979 = vpack.c.b16 %v787, %v775
  %v980 = vpack.c.b16 %v788, %v776
  %v981 = vpack.c.b16 %v789, %v777
  %v982 = vpack.c.b16 %v790, %v778
  %v983 = vpack.c.b16 %v791, %v779
  %v984 = vpack.c.b16 %v792, %v780
  %1177 = vmatprep.subr.bf16.mxu0 %v794
  %1178 = vmatpush1.bf16.msra.mxu0 %v793
  %1179 = vmatprep.subr.bf16.mxu0 %v806
  %1180 = vmatpush1.bf16.msra.mxu0 %v805
  %1181 = vmatprep.subr.bf16.mxu0 %v818
  %1182 = vmatpush1.bf16.msra.mxu0 %v817
  %1183 = vmatprep.subr.bf16.mxu0 %v830
  %1184 = vmatpush1.bf16.msra.mxu0 %v829
  %1185 = vmatprep.subr.bf16.mxu0 %v842
  %1186 = vmatpush1.bf16.msra.mxu0 %v841
  %1187 = vmatprep.subr.bf16.mxu0 %v854
  %1188 = vmatpush1.bf16.msra.mxu0 %v853
  %1189 = vmatprep.subr.bf16.mxu0 %v866
  %1190 = vmatpush1.bf16.msra.mxu0 %v865
  %1191 = vmatprep.subr.bf16.mxu0 %v878
  %1192 = vmatpush1.bf16.msra.mxu0 %v877
  %1193 = vmatprep.subr.bf16.mxu0 %v890
  %1194 = vmatpush1.bf16.msra.mxu0 %v889
  %1195 = vmatprep.subr.bf16.mxu0 %v902
  %1196 = vmatpush1.bf16.msra.mxu0 %v901
  %1197 = vmatprep.subr.bf16.mxu0 %v914
  %1198 = vmatpush1.bf16.msra.mxu0 %v913
  %1199 = vmatprep.subr.bf16.mxu0 %v926
  %1200 = vmatpush1.bf16.msra.mxu0 %v925
  %1201 = vmatprep.subr.bf16.mxu0 %v938
  %1202 = vmatpush1.bf16.msra.mxu0 %v937
  %1203 = vmatprep.subr.bf16.mxu0 %v950
  %1204 = vmatpush1.bf16.msra.mxu0 %v949
  %1205 = vmatprep.subr.bf16.mxu0 %v962
  %1206 = vmatpush1.bf16.msra.mxu0 %v961
  %1207 = vmatprep.subr.bf16.mxu0 %v974
  %1208 = vmatpush1.bf16.msra.mxu0 %v973
  %1209 = vmatprep.mubr.bf16.mxu0 %v214
  %1210 = vmatmul.mubr.bf16.gmra.mrb[0].mxu0 %v213
  %v1211 = vpop.f32.mrb[0].mxu0
  %v1212 = vadd.f32 0.0, %v1211
  %v1213 = vpop.f32.mrb[0].mxu0
  %v1214 = vadd.f32 0.0, %v1213
  %v1215 = vpop.f32.mrb[0].mxu0
  %v1216 = vpop.f32.mrb[0].mxu0
  %1217 = vdwg.mxu0
  %1218 = vmatprep.subr.bf16.mxu0 %v796
  %1219 = vmatpush1.bf16.msra.mxu0 %v795
  %1220 = vmatprep.subr.bf16.mxu0 %v808
  %1221 = vmatpush1.bf16.msra.mxu0 %v807
  %1222 = vmatprep.subr.bf16.mxu0 %v820
  %1223 = vmatpush1.bf16.msra.mxu0 %v819
  %1224 = vmatprep.subr.bf16.mxu0 %v832
  %1225 = vmatpush1.bf16.msra.mxu0 %v831
  %1226 = vmatprep.subr.bf16.mxu0 %v844
  %1227 = vmatpush1.bf16.msra.mxu0 %v843
  %1228 = vmatprep.subr.bf16.mxu0 %v856
  %1229 = vmatpush1.bf16.msra.mxu0 %v855
  %1230 = vmatprep.subr.bf16.mxu0 %v868
  %1231 = vmatpush1.bf16.msra.mxu0 %v867
  %1232 = vmatprep.subr.bf16.mxu0 %v880
  %1233 = vmatpush1.bf16.msra.mxu0 %v879
  %1234 = vmatprep.subr.bf16.mxu0 %v892
  %1235 = vmatpush1.bf16.msra.mxu0 %v891
  %1236 = vmatprep.subr.bf16.mxu0 %v904
  %1237 = vmatpush1.bf16.msra.mxu0 %v903
  %1238 = vmatprep.subr.bf16.mxu0 %v916
  %1239 = vmatpush1.bf16.msra.mxu0 %v915
  %1240 = vmatprep.subr.bf16.mxu0 %v928
  %1241 = vmatpush1.bf16.msra.mxu0 %v927
  %1242 = vmatprep.subr.bf16.mxu0 %v940
  %1243 = vmatpush1.bf16.msra.mxu0 %v939
  %1244 = vmatprep.subr.bf16.mxu0 %v952
  %1245 = vmatpush1.bf16.msra.mxu0 %v951
  %1246 = vmatprep.subr.bf16.mxu0 %v964
  %1247 = vmatpush1.bf16.msra.mxu0 %v963
  %1248 = vmatprep.subr.bf16.mxu0 %v976
  %1249 = vmatpush1.bf16.msra.mxu0 %v975
  %1250 = vmatprep.mubr.bf16.mxu0 %v214
  %1251 = vmatmul.mubr.bf16.gmra.mrb[0].mxu0 %v213
  %v1252 = vpop.f32.mrb[0].mxu0
  %v1253 = vadd.f32 0.0, %v1252
  %v1254 = vpop.f32.mrb[0].mxu0
  %v1255 = vadd.f32 0.0, %v1254
  %v1256 = vpop.f32.mrb[0].mxu0
  %v1257 = vpop.f32.mrb[0].mxu0
  %1258 = vdwg.mxu0
  %1259 = vmatprep.subr.bf16.mxu0 %v798
  %1260 = vmatpush1.bf16.msra.mxu0 %v797
  %1261 = vmatprep.subr.bf16.mxu0 %v810
  %1262 = vmatpush1.bf16.msra.mxu0 %v809
  %1263 = vmatprep.subr.bf16.mxu0 %v822
  %1264 = vmatpush1.bf16.msra.mxu0 %v821
  %1265 = vmatprep.subr.bf16.mxu0 %v834
  %1266 = vmatpush1.bf16.msra.mxu0 %v833
  %1267 = vmatprep.subr.bf16.mxu0 %v846
  %1268 = vmatpush1.bf16.msra.mxu0 %v845
  %1269 = vmatprep.subr.bf16.mxu0 %v858
  %1270 = vmatpush1.bf16.msra.mxu0 %v857
  %1271 = vmatprep.subr.bf16.mxu0 %v870
  %1272 = vmatpush1.bf16.msra.mxu0 %v869
  %1273 = vmatprep.subr.bf16.mxu0 %v882
  %1274 = vmatpush1.bf16.msra.mxu0 %v881
  %1275 = vmatprep.subr.bf16.mxu0 %v894
  %1276 = vmatpush1.bf16.msra.mxu0 %v893
  %1277 = vmatprep.subr.bf16.mxu0 %v906
  %1278 = vmatpush1.bf16.msra.mxu0 %v905
  %1279 = vmatprep.subr.bf16.mxu0 %v918
  %1280 = vmatpush1.bf16.msra.mxu0 %v917
  %1281 = vmatprep.subr.bf16.mxu0 %v930
  %1282 = vmatpush1.bf16.msra.mxu0 %v929
  %1283 = vmatprep.subr.bf16.mxu0 %v942
  %1284 = vmatpush1.bf16.msra.mxu0 %v941
  %1285 = vmatprep.subr.bf16.mxu0 %v954
  %1286 = vmatpush1.bf16.msra.mxu0 %v953
  %1287 = vmatprep.subr.bf16.mxu0 %v966
  %1288 = vmatpush1.bf16.msra.mxu0 %v965
  %1289 = vmatprep.subr.bf16.mxu0 %v978
  %1290 = vmatpush1.bf16.msra.mxu0 %v977
  %1291 = vmatprep.mubr.bf16.mxu0 %v214
  %1292 = vmatmul.mubr.bf16.gmra.mrb[0].mxu0 %v213
  %v1293 = vpop.f32.mrb[0].mxu0
  %v1294 = vadd.f32 0.0, %v1293
  %v1295 = vpop.f32.mrb[0].mxu0
  %v1296 = vadd.f32 0.0, %v1295
  %v1297 = vpop.f32.mrb[0].mxu0
  %v1298 = vpop.f32.mrb[0].mxu0
  %1299 = vdwg.mxu0
  %1300 = vmatprep.subr.bf16.mxu0 %v800
  %1301 = vmatpush1.bf16.msra.mxu0 %v799
  %1302 = vmatprep.subr.bf16.mxu0 %v812
  %1303 = vmatpush1.bf16.msra.mxu0 %v811
  %1304 = vmatprep.subr.bf16.mxu0 %v824
  %1305 = vmatpush1.bf16.msra.mxu0 %v823
  %1306 = vmatprep.subr.bf16.mxu0 %v836
  %1307 = vmatpush1.bf16.msra.mxu0 %v835
  %1308 = vmatprep.subr.bf16.mxu0 %v848
  %1309 = vmatpush1.bf16.msra.mxu0 %v847
  %1310 = vmatprep.subr.bf16.mxu0 %v860
  %1311 = vmatpush1.bf16.msra.mxu0 %v859
  %1312 = vmatprep.subr.bf16.mxu0 %v872
  %1313 = vmatpush1.bf16.msra.mxu0 %v871
  %1314 = vmatprep.subr.bf16.mxu0 %v884
  %1315 = vmatpush1.bf16.msra.mxu0 %v883
  %1316 = vmatprep.subr.bf16.mxu0 %v896
  %1317 = vmatpush1.bf16.msra.mxu0 %v895
  %1318 = vmatprep.subr.bf16.mxu0 %v908
  %1319 = vmatpush1.bf16.msra.mxu0 %v907
  %1320 = vmatprep.subr.bf16.mxu0 %v920
  %1321 = vmatpush1.bf16.msra.mxu0 %v919
  %1322 = vmatprep.subr.bf16.mxu0 %v932
  %1323 = vmatpush1.bf16.msra.mxu0 %v931
  %1324 = vmatprep.subr.bf16.mxu0 %v944
  %1325 = vmatpush1.bf16.msra.mxu0 %v943
  %1326 = vmatprep.subr.bf16.mxu0 %v956
  %1327 = vmatpush1.bf16.msra.mxu0 %v955
  %1328 = vmatprep.subr.bf16.mxu0 %v968
  %1329 = vmatpush1.bf16.msra.mxu0 %v967
  %1330 = vmatprep.subr.bf16.mxu0 %v980
  %1331 = vmatpush1.bf16.msra.mxu0 %v979
  %1332 = vmatprep.mubr.bf16.mxu0 %v214
  %1333 = vmatmul.mubr.bf16.gmra.mrb[0].mxu0 %v213
  %v1334 = vpop.f32.mrb[0].mxu0
  %v1335 = vadd.f32 0.0, %v1334
  %v1336 = vpop.f32.mrb[0].mxu0
  %v1337 = vadd.f32 0.0, %v1336
  %v1338 = vpop.f32.mrb[0].mxu0
  %v1339 = vpop.f32.mrb[0].mxu0
  %1340 = vdwg.mxu0
  %1341 = vmatprep.subr.bf16.mxu0 %v802
  %1342 = vmatpush1.bf16.msra.mxu0 %v801
  %1343 = vmatprep.subr.bf16.mxu0 %v814
  %1344 = vmatpush1.bf16.msra.mxu0 %v813
  %1345 = vmatprep.subr.bf16.mxu0 %v826
  %1346 = vmatpush1.bf16.msra.mxu0 %v825
  %1347 = vmatprep.subr.bf16.mxu0 %v838
  %1348 = vmatpush1.bf16.msra.mxu0 %v837
  %1349 = vmatprep.subr.bf16.mxu0 %v850
  %1350 = vmatpush1.bf16.msra.mxu0 %v849
  %1351 = vmatprep.subr.bf16.mxu0 %v862
  %1352 = vmatpush1.bf16.msra.mxu0 %v861
  %1353 = vmatprep.subr.bf16.mxu0 %v874
  %1354 = vmatpush1.bf16.msra.mxu0 %v873
  %1355 = vmatprep.subr.bf16.mxu0 %v886
  %1356 = vmatpush1.bf16.msra.mxu0 %v885
  %1357 = vmatprep.subr.bf16.mxu0 %v898
  %1358 = vmatpush1.bf16.msra.mxu0 %v897
  %1359 = vmatprep.subr.bf16.mxu0 %v910
  %1360 = vmatpush1.bf16.msra.mxu0 %v909
  %1361 = vmatprep.subr.bf16.mxu0 %v922
  %1362 = vmatpush1.bf16.msra.mxu0 %v921
  %1363 = vmatprep.subr.bf16.mxu0 %v934
  %1364 = vmatpush1.bf16.msra.mxu0 %v933
  %1365 = vmatprep.subr.bf16.mxu0 %v946
  %1366 = vmatpush1.bf16.msra.mxu0 %v945
  %1367 = vmatprep.subr.bf16.mxu0 %v958
  %1368 = vmatpush1.bf16.msra.mxu0 %v957
  %1369 = vmatprep.subr.bf16.mxu0 %v970
  %1370 = vmatpush1.bf16.msra.mxu0 %v969
  %1371 = vmatprep.subr.bf16.mxu0 %v982
  %1372 = vmatpush1.bf16.msra.mxu0 %v981
  %1373 = vmatprep.mubr.bf16.mxu0 %v214
  %1374 = vmatmul.mubr.bf16.gmra.mrb[0].mxu0 %v213
  %v1375 = vpop.f32.mrb[0].mxu0
  %v1376 = vadd.f32 0.0, %v1375
  %v1377 = vpop.f32.mrb[0].mxu0
  %v1378 = vadd.f32 0.0, %v1377
  %v1379 = vpop.f32.mrb[0].mxu0
  %v1380 = vpop.f32.mrb[0].mxu0
  %1381 = vdwg.mxu0
  %1382 = vmatprep.subr.bf16.mxu0 %v804
  %1383 = vmatpush1.bf16.msra.mxu0 %v803
  %1384 = vmatprep.subr.bf16.mxu0 %v816
  %1385 = vmatpush1.bf16.msra.mxu0 %v815
  %1386 = vmatprep.subr.bf16.mxu0 %v828
  %1387 = vmatpush1.bf16.msra.mxu0 %v827
  %1388 = vmatprep.subr.bf16.mxu0 %v840
  %1389 = vmatpush1.bf16.msra.mxu0 %v839
  %1390 = vmatprep.subr.bf16.mxu0 %v852
  %1391 = vmatpush1.bf16.msra.mxu0 %v851
  %1392 = vmatprep.subr.bf16.mxu0 %v864
  %1393 = vmatpush1.bf16.msra.mxu0 %v863
  %1394 = vmatprep.subr.bf16.mxu0 %v876
  %1395 = vmatpush1.bf16.msra.mxu0 %v875
  %1396 = vmatprep.subr.bf16.mxu0 %v888
  %1397 = vmatpush1.bf16.msra.mxu0 %v887
  %1398 = vmatprep.subr.bf16.mxu0 %v900
  %1399 = vmatpush1.bf16.msra.mxu0 %v899
  %1400 = vmatprep.subr.bf16.mxu0 %v912
  %1401 = vmatpush1.bf16.msra.mxu0 %v911
  %1402 = vmatprep.subr.bf16.mxu0 %v924
  %1403 = vmatpush1.bf16.msra.mxu0 %v923
  %1404 = vmatprep.subr.bf16.mxu0 %v936
  %1405 = vmatpush1.bf16.msra.mxu0 %v935
  %1406 = vmatprep.subr.bf16.mxu0 %v948
  %1407 = vmatpush1.bf16.msra.mxu0 %v947
  %1408 = vmatprep.subr.bf16.mxu0 %v960
  %1409 = vmatpush1.bf16.msra.mxu0 %v959
  %1410 = vmatprep.subr.bf16.mxu0 %v972
  %1411 = vmatpush1.bf16.msra.mxu0 %v971
  %1412 = vmatprep.subr.bf16.mxu0 %v984
  %1413 = vmatpush1.bf16.msra.mxu0 %v983
  %1414 = vmatprep.mubr.bf16.mxu0 %v214
  %1415 = vmatmul.mubr.bf16.gmra.mrb[0].mxu0 %v213
  %v1416 = vpop.f32.mrb[0].mxu0
  %v1417 = vadd.f32 0.0, %v1416
  %v1418 = vpop.f32.mrb[0].mxu0
  %v1419 = vadd.f32 0.0, %v1418
  %v1420 = vpop.f32.mrb[0].mxu0
  %v1421 = vpop.f32.mrb[0].mxu0
  %1422 = vdwg.mxu0
  %v1423 = vld [vmem:[%s2] sm:$0xff]
  %v1424 = vld [vmem:[%s2 + $0x8] sm:$0xf]
  %v1427 = vlaneseq
  %v1428 = vshrl.u32 %v1427, 7
  %v1429 = vsub.s32 0, %v1428
  %v1430 = vrot.slane %v1423, %v1429
  %v1431 = vlaneseq
  %v1432 = vshrl.u32 %v1431, 7
  %v1433 = vsub.s32 1, %v1432
  %v1434 = vrot.slane %v1423, %v1433
  %v1435 = vlaneseq
  %v1436 = vshrl.u32 %v1435, 7
  %v1437 = vsub.s32 2, %v1436
  %v1438 = vrot.slane %v1423, %v1437
  %v1439 = vlaneseq
  %v1440 = vshrl.u32 %v1439, 7
  %v1441 = vsub.s32 3, %v1440
  %v1442 = vrot.slane %v1423, %v1441
  %v1443 = vlaneseq
  %v1444 = vshrl.u32 %v1443, 7
  %v1445 = vsub.s32 4, %v1444
  %v1446 = vrot.slane %v1423, %v1445
  %v1447 = vlaneseq
  %v1448 = vshrl.u32 %v1447, 7
  %v1449 = vsub.s32 5, %v1448
  %v1450 = vrot.slane %v1423, %v1449
  %v1451 = vlaneseq
  %v1452 = vshrl.u32 %v1451, 7
  %v1453 = vsub.s32 6, %v1452
  %v1454 = vrot.slane %v1423, %v1453
  %v1455 = vlaneseq
  %v1456 = vshrl.u32 %v1455, 7
  %v1457 = vsub.s32 7, %v1456
  %v1458 = vrot.slane %v1423, %v1457
  %v1459 = vlaneseq
  %v1460 = vshrl.u32 %v1459, 7
  %v1461 = vsub.s32 0, %v1460
  %v1462 = vrot.slane %v1424, %v1461
  %v1463 = vlaneseq
  %v1464 = vshrl.u32 %v1463, 7
  %v1465 = vsub.s32 1, %v1464
  %v1466 = vrot.slane %v1424, %v1465
  %v1467 = vlaneseq
  %v1468 = vshrl.u32 %v1467, 7
  %v1469 = vsub.s32 2, %v1468
  %v1470 = vrot.slane %v1424, %v1469
  %v1471 = vlaneseq
  %v1472 = vshrl.u32 %v1471, 7
  %v1473 = vsub.s32 3, %v1472
  %v1474 = vrot.slane %v1424, %v1473
  %v1487 = vmul.f32 %v1212, %v1430
  %v1488 = vmul.f32 %v1214, %v1434
  %v1489 = vmul.f32 %v1253, %v1438
  %v1490 = vmul.f32 %v1255, %v1442
  %v1491 = vmul.f32 %v1294, %v1446
  %v1492 = vmul.f32 %v1296, %v1450
  %v1493 = vmul.f32 %v1335, %v1454
  %v1494 = vmul.f32 %v1337, %v1458
  %v1495 = vmul.f32 %v1376, %v1462
  %v1496 = vmul.f32 %v1378, %v1466
  %v1497 = vmul.f32 %v1417, %v1470
  %v1498 = vmul.f32 %v1419, %v1474
  %v1499 = vld [vmem:[%s3] sm:$0xff]
  %v1500 = vld [vmem:[%s3 + $0x8] sm:$0xf]
  %v1503 = vlaneseq
  %v1504 = vshrl.u32 %v1503, 7
  %v1505 = vsub.s32 0, %v1504
  %v1506 = vrot.slane %v1499, %v1505
  %v1507 = vlaneseq
  %v1508 = vshrl.u32 %v1507, 7
  %v1509 = vsub.s32 1, %v1508
  %v1510 = vrot.slane %v1499, %v1509
  %v1511 = vlaneseq
  %v1512 = vshrl.u32 %v1511, 7
  %v1513 = vsub.s32 2, %v1512
  %v1514 = vrot.slane %v1499, %v1513
  %v1515 = vlaneseq
  %v1516 = vshrl.u32 %v1515, 7
  %v1517 = vsub.s32 3, %v1516
  %v1518 = vrot.slane %v1499, %v1517
  %v1519 = vlaneseq
  %v1520 = vshrl.u32 %v1519, 7
  %v1521 = vsub.s32 4, %v1520
  %v1522 = vrot.slane %v1499, %v1521
  %v1523 = vlaneseq
  %v1524 = vshrl.u32 %v1523, 7
  %v1525 = vsub.s32 5, %v1524
  %v1526 = vrot.slane %v1499, %v1525
  %v1527 = vlaneseq
  %v1528 = vshrl.u32 %v1527, 7
  %v1529 = vsub.s32 6, %v1528
  %v1530 = vrot.slane %v1499, %v1529
  %v1531 = vlaneseq
  %v1532 = vshrl.u32 %v1531, 7
  %v1533 = vsub.s32 7, %v1532
  %v1534 = vrot.slane %v1499, %v1533
  %v1535 = vlaneseq
  %v1536 = vshrl.u32 %v1535, 7
  %v1537 = vsub.s32 0, %v1536
  %v1538 = vrot.slane %v1500, %v1537
  %v1539 = vlaneseq
  %v1540 = vshrl.u32 %v1539, 7
  %v1541 = vsub.s32 1, %v1540
  %v1542 = vrot.slane %v1500, %v1541
  %v1543 = vlaneseq
  %v1544 = vshrl.u32 %v1543, 7
  %v1545 = vsub.s32 2, %v1544
  %v1546 = vrot.slane %v1500, %v1545
  %v1547 = vlaneseq
  %v1548 = vshrl.u32 %v1547, 7
  %v1549 = vsub.s32 3, %v1548
  %v1550 = vrot.slane %v1500, %v1549
  %v1563 = vadd.f32 %v1487, %v1506
  %v1564 = vadd.f32 %v1488, %v1510
  %v1565 = vadd.f32 %v1489, %v1514
  %v1566 = vadd.f32 %v1490, %v1518
  %v1567 = vadd.f32 %v1491, %v1522
  %v1568 = vadd.f32 %v1492, %v1526
  %v1569 = vadd.f32 %v1493, %v1530
  %v1570 = vadd.f32 %v1494, %v1534
  %v1571 = vadd.f32 %v1495, %v1538
  %v1572 = vadd.f32 %v1496, %v1542
  %v1573 = vadd.f32 %v1497, %v1546
  %v1574 = vadd.f32 %v1498, %v1550
  %v1575 = vxor.u32 %v1563, 2147483648
  %v1576 = vxor.u32 %v1564, 2147483648
  %v1577 = vxor.u32 %v1565, 2147483648
  %v1578 = vxor.u32 %v1566, 2147483648
  %v1579 = vxor.u32 %v1567, 2147483648
  %v1580 = vxor.u32 %v1568, 2147483648
  %v1581 = vxor.u32 %v1569, 2147483648
  %v1582 = vxor.u32 %v1570, 2147483648
  %v1583 = vxor.u32 %v1571, 2147483648
  %v1584 = vxor.u32 %v1572, 2147483648
  %v1585 = vxor.u32 %v1573, 2147483648
  %v1586 = vxor.u32 %v1574, 2147483648
  %v1587 = vmul.f32 %v1575, 1.442695
  %v1588 = vpow.pop %v1587
  %v1589 = vmul.f32 %v1576, 1.442695
  %v1590 = vpow.pop %v1589
  %v1591 = vmul.f32 %v1577, 1.442695
  %v1592 = vpow.pop %v1591
  %v1593 = vmul.f32 %v1578, 1.442695
  %v1594 = vpow.pop %v1593
  %v1595 = vmul.f32 %v1579, 1.442695
  %v1596 = vpow.pop %v1595
  %v1597 = vmul.f32 %v1580, 1.442695
  %v1598 = vpow.pop %v1597
  %v1599 = vmul.f32 %v1581, 1.442695
  %v1600 = vpow.pop %v1599
  %v1601 = vmul.f32 %v1582, 1.442695
  %v1602 = vpow.pop %v1601
  %v1603 = vmul.f32 %v1583, 1.442695
  %v1604 = vpow.pop %v1603
  %v1605 = vmul.f32 %v1584, 1.442695
  %v1606 = vpow.pop %v1605
  %v1607 = vmul.f32 %v1585, 1.442695
  %v1608 = vpow.pop %v1607
  %v1609 = vmul.f32 %v1586, 1.442695
  %v1610 = vpow.pop %v1609
  %v1611 = vadd.f32 %v1588, 1.0
  %v1612 = vadd.f32 %v1590, 1.0
  %v1613 = vadd.f32 %v1592, 1.0
  %v1614 = vadd.f32 %v1594, 1.0
  %v1615 = vadd.f32 %v1596, 1.0
  %v1616 = vadd.f32 %v1598, 1.0
  %v1617 = vadd.f32 %v1600, 1.0
  %v1618 = vadd.f32 %v1602, 1.0
  %v1619 = vadd.f32 %v1604, 1.0
  %v1620 = vadd.f32 %v1606, 1.0
  %v1621 = vadd.f32 %v1608, 1.0
  %v1622 = vadd.f32 %v1610, 1.0
  %v1623 = vrcp.pop %v1611
  %v1624 = vmul.f32 1.0, %v1623
  %v1625 = vrcp.pop %v1612
  %v1626 = vmul.f32 1.0, %v1625
  %v1627 = vrcp.pop %v1613
  %v1628 = vmul.f32 1.0, %v1627
  %v1629 = vrcp.pop %v1614
  %v1630 = vmul.f32 1.0, %v1629
  %v1631 = vrcp.pop %v1615
  %v1632 = vmul.f32 1.0, %v1631
  %v1633 = vrcp.pop %v1616
  %v1634 = vmul.f32 1.0, %v1633
  %v1635 = vrcp.pop %v1617
  %v1636 = vmul.f32 1.0, %v1635
  %v1637 = vrcp.pop %v1618
  %v1638 = vmul.f32 1.0, %v1637
  %v1639 = vrcp.pop %v1619
  %v1640 = vmul.f32 1.0, %v1639
  %v1641 = vrcp.pop %v1620
  %v1642 = vmul.f32 1.0, %v1641
  %v1643 = vrcp.pop %v1621
  %v1644 = vmul.f32 1.0, %v1643
  %v1645 = vrcp.pop %v1622
  %v1646 = vmul.f32 1.0, %v1645
  %v1647 = vmul.f32 %v1563, %v1624
  %v1648 = vmul.f32 %v1564, %v1626
  %v1649 = vmul.f32 %v1565, %v1628
  %v1650 = vmul.f32 %v1566, %v1630
  %v1651 = vmul.f32 %v1567, %v1632
  %v1652 = vmul.f32 %v1568, %v1634
  %v1653 = vmul.f32 %v1569, %v1636
  %v1654 = vmul.f32 %v1570, %v1638
  %v1655 = vmul.f32 %v1571, %v1640
  %v1656 = vmul.f32 %v1572, %v1642
  %v1657 = vmul.f32 %v1573, %v1644
  %v1658 = vmul.f32 %v1574, %v1646
  %v1659 = vpack.c.bf16 %v1647, %v1647
  %v1660 = vpack.c.bf16 %v1648, %v1648
  %v1661 = vpack.c.bf16 %v1649, %v1649
  %v1662 = vpack.c.bf16 %v1650, %v1650
  %v1663 = vpack.c.bf16 %v1651, %v1651
  %v1664 = vpack.c.bf16 %v1652, %v1652
  %v1665 = vpack.c.bf16 %v1653, %v1653
  %v1666 = vpack.c.bf16 %v1654, %v1654
  %v1667 = vpack.c.bf16 %v1655, %v1655
  %v1668 = vpack.c.bf16 %v1656, %v1656
  %v1669 = vpack.c.bf16 %v1657, %v1657
  %v1670 = vpack.c.bf16 %v1658, %v1658
  %v1683 = vunpack.c.l.b16 %v1659
  %v1684 = vunpack.c.l.b16 %v1660
  %v1685 = vunpack.c.l.b16 %v1661
  %v1686 = vunpack.c.l.b16 %v1662
  %v1687 = vunpack.c.l.b16 %v1663
  %v1688 = vunpack.c.l.b16 %v1664
  %v1689 = vunpack.c.l.b16 %v1665
  %v1690 = vunpack.c.l.b16 %v1666
  %v1691 = vunpack.c.l.b16 %v1667
  %v1692 = vunpack.c.l.b16 %v1668
  %v1693 = vunpack.c.l.b16 %v1669
  %v1694 = vunpack.c.l.b16 %v1670
  %v1695 = vpack.c.b16 %v1684, %v1683
  %v1696 = vpack.c.b16 %v1686, %v1685
  %v1697 = vpack.c.b16 %v1688, %v1687
  %v1698 = vpack.c.b16 %v1690, %v1689
  %v1699 = vpack.c.b16 %v1692, %v1691
  %v1700 = vpack.c.b16 %v1694, %v1693
  %1707 = vst [vmem:[%s4] sm:$0xff] %v1695
  %1708 = vst [vmem:[%s4 + $0x8] sm:$0xff] %v1696
  %1709 = vst [vmem:[%s4 + $0x10] sm:$0xff] %v1697
  %1710 = vst [vmem:[%s4 + $0x18] sm:$0xff] %v1698
  %1711 = vst [vmem:[%s4 + $0x20] sm:$0xff] %v1699
  %1712 = vst [vmem:[%s4 + $0x28] sm:$0xff] %v1700
  // Predicated region
  $region18: #{fph_forward.16} parent=0 // pred_check
    _
  $region19: #{fph_forward.16} parent=0 // pred_check_branch
    %1714 = sbr.rel (0) target = $region21
  $region20: #{fph_forward.16} parent=0 // pred_region
    _
  $region21: #{fph_forward.16} parent=0 // pred_fallthru
    _
  // Predicated region
  $region22: #{fph_forward.16} parent=0 // pred_check
    _
  $region23: #{fph_forward.16} parent=0 // pred_check_branch
    %1716 = sbr.rel (0) target = $region25
  $region24: #{fph_forward.16} parent=0 // pred_region
    _
  $region25: #{fph_forward.16} parent=0 // pred_fallthru
    _

// kernel: fph_forward.17
$region0: #{fph_forward.17}
  #allocation0 [shape = 'u32[]', space=smem, size = 0x4, offset = 0x4, fixed_abs, tag = 'smem constant byte address 0x4 - core index']
  #allocation1 [shape = 'u32[144,128]{1,0:T(1,128)}', space=vmem, size = 0x12000, scoped, tag = 'internal scratch']
  %s0 = inlined_call_operand.vmem [shape: bf16[2,4,4,1536], index: 0, kind: input, shape index: {}]
  %s1 = inlined_call_operand.vmem [shape: f32[3,3,1536], index: 1, kind: input, shape index: {}]
  %s2 = inlined_call_operand.vmem [shape: f32[1,1536], index: 2, kind: input, shape index: {}]
  %s3 = inlined_call_operand.vmem [shape: f32[1,1536], index: 3, kind: input, shape index: {}]
  %s4 = inlined_call_operand.vmem [shape: bf16[2,2,2,1536], index: 4, kind: output, shape index: {0}]
  %s5 = inlined_call_operand.vmem [shape: f32[2,1,1536], index: 5, kind: output, shape index: {1}]
  %6 = xla_tuple %s4, %s5
  %s7 = sld [smem:[#allocation0]]
  $region166: #{fph_forward.17} parent=0
    _
  %s9 = ssub.s32 1, %s7
  %s10 = scalar_select 0, %s9, %s7
  $region1: #{fph_forward.17} parent=0
    #allocation2 [shape = 'u8[16384]{0}', space=vmem, size = 0x4000, scoped, tag = 'input window, operand 0']
    #allocation3 [shape = 'u8[24576]{0}', space=vmem, size = 0x6000, scoped, tag = 'input window, operand 1']
    #allocation4 [shape = 'u8[4096]{0}', space=vmem, size = 0x1000, scoped, tag = 'output window, operand 0']
    loop: start=0, step=1, limit=14
    $region2: #{fph_forward.17} parent=1 // loop_pre_header
      _
    $region3: #{fph_forward.17} parent=1 // loop_header
      %s12 = sphi 0, %s16
      %p13 = scmp.ge.s32.totalorder %s12, 14
      %s19 = sphi 0, %s31
      %s20 = sphi 0, %s27
      %s21 = sphi 0, %s19
      %s22 = sphi 0, %s20
      %s23 = sphi 0, %s21
      %s24 = sphi 0, %s22
      %s36 = sphi 0, %s38
      %s39 = sphi 0, %s36
      %s40 = sphi 0, %s39
      %s56 = sphi 0, %s40
      %s62 = sphi 0, %s64
      %s65 = sphi 0, %s62
      %s66 = sphi 0, %s65
      %s82 = sphi 0, %s66
      %s88 = sphi 0, %s90
      %s91 = sphi 0, %s88
      %s92 = sphi 0, %s91
      %s108 = sphi 0, %s92
      %s114 = sphi 0, %s116
      %s117 = sphi 0, %s114
      %s118 = sphi 0, %s117
      %s134 = sphi 0, %s118
      %s142 = sphi 0, %s144
      %s145 = sphi 0, %s142
      %s146 = sphi 0, %s145
      %s162 = sphi 0, %s146
      %s170 = sphi 0, %s172
      %s173 = sphi 0, %s170
      %s174 = sphi 0, %s173
      %s190 = sphi 0, %s174
    $region4: #{fph_forward.17} parent=1 // loop_header_branch
      %15 = sbr.rel (%p13) target = $region8
    $region5: #{fph_forward.17} parent=1 // loop_body
      %s17 = ssub.s32 %s12, 1
      %s18 = ssub.s32 %s12, 2
      %s25 = sadd.s32 1, %s20
      %p26 = scmp.ge.s32.totalorder %s25, 6
      %s27 = scalar_select %p26, 0, %s25
      %s28 = sadd.s32 1, %s19
      %s29 = scalar_select %p26, %s28, %s19
      %p30 = scmp.ge.s32.totalorder %s29, 2
      %s31 = scalar_select %p30, 0, %s29
      %s32 = ssub.s32 %s19, %s31
      %s33 = ssub.s32 %s20, %s27
      %s34 = sor.u32 %s32, %s33
      %p35 = scmp.eq.s32.totalorder %s34, 0
      %s37 = sadd.s32 %s36, 1
      %s38 = scalar_select %p35, %s36, %s37
      %p41 = pneg %p35
      %p42 = scmp.eq.s32.totalorder %s12, 11
      %p43 = por %p41, %p42
      %p44 = scmp.ne.s32.totalorder %s36, %s39
      %p45 = scmp.eq.s32.totalorder %s12, 0
      %p46 = por %p44, %p45
      %p47 = scmp.ne.s32.totalorder %s36, %s39
      %p48 = scmp.eq.s32.totalorder %s17, 11
      %p49 = por %p47, %p48
      %p50 = scmp.ne.s32.totalorder %s39, %s40
      %p51 = scmp.eq.s32.totalorder %s17, 0
      %p52 = por %p50, %p51
      %p53 = scmp.ne.s32.totalorder %s39, %s40
      %p54 = scmp.eq.s32.totalorder %s18, 11
      %p55 = por %p53, %p54
      %p57 = scmp.ne.s32.totalorder %s40, %s56
      %p58 = scmp.eq.s32.totalorder %s18, 0
      %p59 = por %p57, %p58
      %s60 = ssub.s32 %s20, %s27
      %p61 = scmp.eq.s32.totalorder %s60, 0
      %s63 = sadd.s32 %s62, 1
      %s64 = scalar_select %p61, %s62, %s63
      %p67 = pneg %p61
      %p68 = scmp.eq.s32.totalorder %s12, 11
      %p69 = por %p67, %p68
      %p70 = scmp.ne.s32.totalorder %s62, %s65
      %p71 = scmp.eq.s32.totalorder %s12, 0
      %p72 = por %p70, %p71
      %p73 = scmp.ne.s32.totalorder %s62, %s65
      %p74 = scmp.eq.s32.totalorder %s17, 11
      %p75 = por %p73, %p74
      %p76 = scmp.ne.s32.totalorder %s65, %s66
      %p77 = scmp.eq.s32.totalorder %s17, 0
      %p78 = por %p76, %p77
      %p79 = scmp.ne.s32.totalorder %s65, %s66
      %p80 = scmp.eq.s32.totalorder %s18, 11
      %p81 = por %p79, %p80
      %p83 = scmp.ne.s32.totalorder %s66, %s82
      %p84 = scmp.eq.s32.totalorder %s18, 0
      %p85 = por %p83, %p84
      %s86 = ssub.s32 %s20, %s27
      %p87 = scmp.eq.s32.totalorder %s86, 0
      %s89 = sadd.s32 %s88, 1
      %s90 = scalar_select %p87, %s88, %s89
      %p93 = pneg %p87
      %p94 = scmp.eq.s32.totalorder %s12, 11
      %p95 = por %p93, %p94
      %p96 = scmp.ne.s32.totalorder %s88, %s91
      %p97 = scmp.eq.s32.totalorder %s12, 0
      %p98 = por %p96, %p97
      %p99 = scmp.ne.s32.totalorder %s88, %s91
      %p100 = scmp.eq.s32.totalorder %s17, 11
      %p101 = por %p99, %p100
      %p102 = scmp.ne.s32.totalorder %s91, %s92
      %p103 = scmp.eq.s32.totalorder %s17, 0
      %p104 = por %p102, %p103
      %p105 = scmp.ne.s32.totalorder %s91, %s92
      %p106 = scmp.eq.s32.totalorder %s18, 11
      %p107 = por %p105, %p106
      %p109 = scmp.ne.s32.totalorder %s92, %s108
      %p110 = scmp.eq.s32.totalorder %s18, 0
      %p111 = por %p109, %p110
      %s112 = ssub.s32 %s20, %s27
      %p113 = scmp.eq.s32.totalorder %s112, 0
      %s115 = sadd.s32 %s114, 1
      %s116 = scalar_select %p113, %s114, %s115
      %p119 = pneg %p113
      %p120 = scmp.eq.s32.totalorder %s12, 11
      %p121 = por %p119, %p120
      %p122 = scmp.ne.s32.totalorder %s114, %s117
      %p123 = scmp.eq.s32.totalorder %s12, 0
      %p124 = por %p122, %p123
      %p125 = scmp.ne.s32.totalorder %s114, %s117
      %p126 = scmp.eq.s32.totalorder %s17, 11
      %p127 = por %p125, %p126
      %p128 = scmp.ne.s32.totalorder %s117, %s118
      %p129 = scmp.eq.s32.totalorder %s17, 0
      %p130 = por %p128, %p129
      %p131 = scmp.ne.s32.totalorder %s117, %s118
      %p132 = scmp.eq.s32.totalorder %s18, 11
      %p133 = por %p131, %p132
      %p135 = scmp.ne.s32.totalorder %s118, %s134
      %p136 = scmp.eq.s32.totalorder %s18, 0
      %p137 = por %p135, %p136
      %s138 = ssub.s32 %s19, %s31
      %s139 = ssub.s32 %s20, %s27
      %s140 = sor.u32 %s138, %s139
      %p141 = scmp.eq.s32.totalorder %s140, 0
      %s143 = sadd.s32 %s142, 1
      %s144 = scalar_select %p141, %s142, %s143
      %p147 = pneg %p141
      %p148 = scmp.eq.s32.totalorder %s12, 11
      %p149 = por %p147, %p148
      %p150 = scmp.ne.s32.totalorder %s142, %s145
      %p151 = scmp.eq.s32.totalorder %s12, 0
      %p152 = por %p150, %p151
      %p153 = scmp.ne.s32.totalorder %s142, %s145
      %p154 = scmp.eq.s32.totalorder %s17, 11
      %p155 = por %p153, %p154
      %p156 = scmp.ne.s32.totalorder %s145, %s146
      %p157 = scmp.eq.s32.totalorder %s17, 0
      %p158 = por %p156, %p157
      %p159 = scmp.ne.s32.totalorder %s145, %s146
      %p160 = scmp.eq.s32.totalorder %s18, 11
      %p161 = por %p159, %p160
      %p163 = scmp.ne.s32.totalorder %s146, %s162
      %p164 = scmp.eq.s32.totalorder %s18, 0
      %p165 = por %p163, %p164
      %s166 = ssub.s32 %s19, %s31
      %s167 = ssub.s32 %s20, %s27
      %s168 = sor.u32 %s166, %s167
      %p169 = scmp.eq.s32.totalorder %s168, 0
      %s171 = sadd.s32 %s170, 1
      %s172 = scalar_select %p169, %s170, %s171
      %p175 = pneg %p169
      %p176 = scmp.eq.s32.totalorder %s12, 11
      %p177 = por %p175, %p176
      %p178 = scmp.ne.s32.totalorder %s170, %s173
      %p179 = scmp.eq.s32.totalorder %s12, 0
      %p180 = por %p178, %p179
      %p181 = scmp.ne.s32.totalorder %s170, %s173
      %p182 = scmp.eq.s32.totalorder %s17, 11
      %p183 = por %p181, %p182
      %p184 = scmp.ne.s32.totalorder %s173, %s174
      %p185 = scmp.eq.s32.totalorder %s17, 0
      %p186 = por %p184, %p185
      %p187 = scmp.ne.s32.totalorder %s173, %s174
      %p188 = scmp.eq.s32.totalorder %s18, 11
      %p189 = por %p187, %p188
      %p191 = scmp.ne.s32.totalorder %s174, %s190
      %p192 = scmp.eq.s32.totalorder %s18, 0
      %p193 = por %p191, %p192
      %p194 = scmp.le.s32.totalorder 1, %s12
      %p195 = scmp.lt.s32.totalorder %s12, 13
      %p196 = pnand %p194, %p195
      %p197 = pneg %p196
      // Predicated region
      $region9: #{fph_forward.17} parent=5 // pred_check
        _
      $region10: #{fph_forward.17} parent=5 // pred_check_branch
        %199 = sbr.rel (%p196) target = $region12
      $region11: #{fph_forward.17} parent=5 // pred_region
        %s200 = ssub.s32 %s12, 1
      $region12: #{fph_forward.17} parent=5 // pred_fallthru
        _
      %p201 = scmp.lt.s32.totalorder %s12, 12
      // Predicated region
      $region13: #{fph_forward.17} parent=5 // pred_check
        %p202 = pneg %p201
      $region14: #{fph_forward.17} parent=5 // pred_check_branch
        %204 = sbr.rel (%p202) target = $region16
      $region15: #{fph_forward.17} parent=5 // pred_region
        // Predicated region
        $region17: #{fph_forward.17} parent=15 // pred_check
          %p205 = pneg %p46
        $region18: #{fph_forward.17} parent=15 // pred_check_branch
          %207 = sbr.rel (%p205) target = $region20
        $region19: #{fph_forward.17} parent=15 // pred_region
          %s208 = sand.u32 %s36, 1
          %s209 = sand.u32 %s36, 1
          %s210 = smul.addr %s209, 16
          %s211 = scalar_lea.vmem [#allocation2], %s210
          %s212 = smul.u32 2, %s20
          %s213 = smul.addr %s19, 48
          %s214 = sadd.s32 %s212, %s213
          %s215 = smul.addr %s214, 2
          %s216 = scalar_lea.vmem %s0, %s215
          // Predicated region
          $region21: #{fph_forward.17} parent=19 // pred_check
            _
          $region22: #{fph_forward.17} parent=19 // pred_check_branch
            %218 = sbr.rel (0) target = $region24
          $region23: #{fph_forward.17} parent=19 // pred_region
            // Predicated region
            $region25: #{fph_forward.17} parent=23 // pred_check
              _
            $region26: #{fph_forward.17} parent=23 // pred_check_branch
              %220 = sbr.rel target = $region28
            $region27: #{fph_forward.17} parent=23 // pred_region
              // Predicated region
              $region40: #{fph_forward.17} parent=27 // pred_check
                _
              $region41: #{fph_forward.17} parent=27 // pred_check_branch
                %241 = sbr.rel (0) target = $region43
              $region42: #{fph_forward.17} parent=27 // pred_region
                loop: start=0, step=1, limit=1
                $region44: #{fph_forward.17} parent=42 // loop_pre_header
                  _
                $region45: #{fph_forward.17} parent=42 // loop_header
                  %s243 = sphi 0, %s247
                  %p244 = scmp.ge.s32.totalorder %s243, 1
                  %s248 = sphi %s216, %s216
                  %s249 = sphi %s211, %s211
                $region46: #{fph_forward.17} parent=42 // loop_header_branch
                  %246 = sbr.rel (%p244) target = $region50
                $region47: #{fph_forward.17} parent=42 // loop_body
                  _
                $region48: #{fph_forward.17} parent=42 // loop_footer
                  %s247 = sadd.s32 1, %s243
                $region49: #{fph_forward.17} parent=42 // loop_footer_branch
                  %242 = sbr.rel target = $region45
                $region50: #{fph_forward.17} parent=42 // loop_exit
                  _
                loop: start=0, step=1, limit=1
                $region51: #{fph_forward.17} parent=42 // loop_pre_header
                  _
                $region52: #{fph_forward.17} parent=42 // loop_header
                  %s252 = sphi 0, %s256
                  %p253 = scmp.ge.s32.totalorder %s252, 1
                  %s257 = sphi %s216, %s216
                  %s258 = sphi %s211, %s211
                $region53: #{fph_forward.17} parent=42 // loop_header_branch
                  %255 = sbr.rel (%p253) target = $region57
                $region54: #{fph_forward.17} parent=42 // loop_body
                  %v259 = vld [vmem:[%s257] sm:$0xf]
                  %260 = vst [vmem:[%s258] sm:$0xf] %v259
                  %v261 = vld [vmem:[%s257 + $0x18] sm:$0xf]
                  %262 = vst [vmem:[%s258 + $0x4] sm:$0xf] %v261
                  %v263 = vld [vmem:[%s257 + $0x30] sm:$0xf]
                  %264 = vst [vmem:[%s258 + $0x8] sm:$0xf] %v263
                  %v265 = vld [vmem:[%s257 + $0x48] sm:$0xf]
                  %266 = vst [vmem:[%s258 + $0xc] sm:$0xf] %v265
                $region55: #{fph_forward.17} parent=42 // loop_footer
                  %s256 = sadd.s32 1, %s252
                $region56: #{fph_forward.17} parent=42 // loop_footer_branch
                  %251 = sbr.rel target = $region52
                $region57: #{fph_forward.17} parent=42 // loop_exit
                  _
              $region43: #{fph_forward.17} parent=27 // pred_fallthru
                _
            $region28: #{fph_forward.17} parent=23 // pred_fallthru
              _
            // Predicated region
            $region29: #{fph_forward.17} parent=23 // pred_check
              _
            $region30: #{fph_forward.17} parent=23 // pred_check_branch
              %222 = sbr.rel (0) target = $region32
            $region31: #{fph_forward.17} parent=23 // pred_region
              loop: start=0, step=1, limit=1
              $region33: #{fph_forward.17} parent=31 // loop_pre_header
                _
              $region34: #{fph_forward.17} parent=31 // loop_header
                %s225 = sphi 0, %s229
                %p226 = scmp.ge.s32.totalorder %s225, 1
                %s230 = sphi %s216, %s216
                %s231 = sphi %s211, %s211
              $region35: #{fph_forward.17} parent=31 // loop_header_branch
                %228 = sbr.rel (%p226) target = $region39
              $region36: #{fph_forward.17} parent=31 // loop_body
                %v232 = vld [vmem:[%s230] sm:$0xf]
                %233 = vst [vmem:[%s231] sm:$0xf] %v232
                %v234 = vld [vmem:[%s230 + $0x18] sm:$0xf]
                %235 = vst [vmem:[%s231 + $0x4] sm:$0xf] %v234
                %v236 = vld [vmem:[%s230 + $0x30] sm:$0xf]
                %237 = vst [vmem:[%s231 + $0x8] sm:$0xf] %v236
                %v238 = vld [vmem:[%s230 + $0x48] sm:$0xf]
                %239 = vst [vmem:[%s231 + $0xc] sm:$0xf] %v238
              $region37: #{fph_forward.17} parent=31 // loop_footer
                %s229 = sadd.s32 1, %s225
              $region38: #{fph_forward.17} parent=31 // loop_footer_branch
                %224 = sbr.rel target = $region34
              $region39: #{fph_forward.17} parent=31 // loop_exit
                _
            $region32: #{fph_forward.17} parent=23 // pred_fallthru
              _
          $region24: #{fph_forward.17} parent=19 // pred_fallthru
            _
          %267 = vnop
        $region20: #{fph_forward.17} parent=15 // pred_fallthru
          _
        // Predicated region
        $region58: #{fph_forward.17} parent=15 // pred_check
          %p268 = pneg %p72
        $region59: #{fph_forward.17} parent=15 // pred_check_branch
          %270 = sbr.rel (%p268) target = $region61
        $region60: #{fph_forward.17} parent=15 // pred_region
          %s271 = sand.u32 %s62, 1
          %s272 = sand.u32 %s62, 1
          %s273 = smul.addr %s272, 24
          %s274 = scalar_lea.vmem [#allocation3], %s273
          %s275 = smul.u32 2, %s20
          %s276 = smul.addr %s275, 4
          %s277 = scalar_lea.vmem %s1, %s276
          // Predicated region
          $region62: #{fph_forward.17} parent=60 // pred_check
            _
          $region63: #{fph_forward.17} parent=60 // pred_check_branch
            %279 = sbr.rel (0) target = $region65
          $region64: #{fph_forward.17} parent=60 // pred_region
            // Predicated region
            $region66: #{fph_forward.17} parent=64 // pred_check
              _
            $region67: #{fph_forward.17} parent=64 // pred_check_branch
              %281 = sbr.rel (0) target = $region69
            $region68: #{fph_forward.17} parent=64 // pred_region
              // Predicated region
              $region81: #{fph_forward.17} parent=68 // pred_check
                _
              $region82: #{fph_forward.17} parent=68 // pred_check_branch
                %300 = sbr.rel (0) target = $region84
              $region83: #{fph_forward.17} parent=68 // pred_region
                loop: start=0, step=1, limit=1
                $region85: #{fph_forward.17} parent=83 // loop_pre_header
                  _
                $region86: #{fph_forward.17} parent=83 // loop_header
                  %s302 = sphi 0, %s306
                  %p303 = scmp.ge.s32.totalorder %s302, 1
                  %s307 = sphi %s277, %s277
                  %s308 = sphi %s274, %s274
                $region87: #{fph_forward.17} parent=83 // loop_header_branch
                  %305 = sbr.rel (%p303) target = $region91
                $region88: #{fph_forward.17} parent=83 // loop_body
                  %v309 = vld [vmem:[%s307] sm:$0xff]
                  %310 = vst [vmem:[%s308] sm:$0xff] %v309
                  %v311 = vld [vmem:[%s307 + $0x30] sm:$0xff]
                  %312 = vst [vmem:[%s308 + $0x8] sm:$0xff] %v311
                  %v313 = vld [vmem:[%s307 + $0x60] sm:$0xff]
                  %314 = vst [vmem:[%s308 + $0x10] sm:$0xff] %v313
                $region89: #{fph_forward.17} parent=83 // loop_footer
                  %s306 = sadd.s32 1, %s302
                $region90: #{fph_forward.17} parent=83 // loop_footer_branch
                  %301 = sbr.rel target = $region86
                $region91: #{fph_forward.17} parent=83 // loop_exit
                  _
              $region84: #{fph_forward.17} parent=68 // pred_fallthru
                _
              // Predicated region
              $region92: #{fph_forward.17} parent=68 // pred_check
                _
              $region93: #{fph_forward.17} parent=68 // pred_check_branch
                %316 = sbr.rel target = $region95
              $region94: #{fph_forward.17} parent=68 // pred_region
                _
              $region95: #{fph_forward.17} parent=68 // pred_fallthru
                _
            $region69: #{fph_forward.17} parent=64 // pred_fallthru
              _
            // Predicated region
            $region70: #{fph_forward.17} parent=64 // pred_check
              _
            $region71: #{fph_forward.17} parent=64 // pred_check_branch
              %283 = sbr.rel target = $region73
            $region72: #{fph_forward.17} parent=64 // pred_region
              loop: start=0, step=1, limit=1
              $region74: #{fph_forward.17} parent=72 // loop_pre_header
                _
              $region75: #{fph_forward.17} parent=72 // loop_header
                %s286 = sphi 0, %s290
                %p287 = scmp.ge.s32.totalorder %s286, 1
                %s291 = sphi %s277, %s277
                %s292 = sphi %s274, %s274
              $region76: #{fph_forward.17} parent=72 // loop_header_branch
                %289 = sbr.rel (%p287) target = $region80
              $region77: #{fph_forward.17} parent=72 // loop_body
                %v293 = vld [vmem:[%s291] sm:$0xff]
                %294 = vst [vmem:[%s292] sm:$0xff] %v293
                %v295 = vld [vmem:[%s291 + $0x30] sm:$0xff]
                %296 = vst [vmem:[%s292 + $0x8] sm:$0xff] %v295
                %v297 = vld [vmem:[%s291 + $0x60] sm:$0xff]
                %298 = vst [vmem:[%s292 + $0x10] sm:$0xff] %v297
              $region78: #{fph_forward.17} parent=72 // loop_footer
                %s290 = sadd.s32 1, %s286
              $region79: #{fph_forward.17} parent=72 // loop_footer_branch
                %285 = sbr.rel target = $region75
              $region80: #{fph_forward.17} parent=72 // loop_exit
                _
            $region73: #{fph_forward.17} parent=64 // pred_fallthru
              _
          $region65: #{fph_forward.17} parent=60 // pred_fallthru
            _
          %317 = vnop
        $region61: #{fph_forward.17} parent=15 // pred_fallthru
          _
        // Predicated region
        $region96: #{fph_forward.17} parent=15 // pred_check
          %p318 = pneg %p98
        $region97: #{fph_forward.17} parent=15 // pred_check_branch
          %320 = sbr.rel (%p318) target = $region99
        $region98: #{fph_forward.17} parent=15 // pred_region
          %s321 = smul.u32 2, %s20
          %p322 = scmp.lt.s32.totalorder %s321, 11
          %s323 = scalar_select %p322, %s321, 11
          %s324 = scalar_lea.vmem %s2, %s323
          %s325 = smul.u32 2, %s20
        $region99: #{fph_forward.17} parent=15 // pred_fallthru
          _
        // Predicated region
        $region100: #{fph_forward.17} parent=15 // pred_check
          %p326 = pneg %p124
        $region101: #{fph_forward.17} parent=15 // pred_check_branch
          %328 = sbr.rel (%p326) target = $region103
        $region102: #{fph_forward.17} parent=15 // pred_region
          %s329 = smul.u32 2, %s20
          %p330 = scmp.lt.s32.totalorder %s329, 11
          %s331 = scalar_select %p330, %s329, 11
          %s332 = scalar_lea.vmem %s3, %s331
          %s333 = smul.u32 2, %s20
        $region103: #{fph_forward.17} parent=15 // pred_fallthru
          _
      $region16: #{fph_forward.17} parent=5 // pred_fallthru
        _
      %p334 = scmp.le.s32.totalorder 1, %s12
      %p335 = scmp.lt.s32.totalorder %s12, 13
      %p336 = pnand %p334, %p335
      %p337 = pneg %p336
      // Predicated region
      $region104: #{fph_forward.17} parent=5 // pred_check
        _
      $region105: #{fph_forward.17} parent=5 // pred_check_branch
        %339 = sbr.rel (%p336) target = $region107
      $region106: #{fph_forward.17} parent=5 // pred_region
        %s340 = ssub.s32 %s12, 1
        %s341 = sand.u32 %s39, 1
        %s342 = sand.u32 %s39, 1
        %s343 = smul.addr %s342, 16
        %s344 = scalar_lea.vmem [#allocation2], %s343
        // Predicated region
        $region108: #{fph_forward.17} parent=106 // pred_check
          %p345 = pneg %p52
        $region109: #{fph_forward.17} parent=106 // pred_check_branch
          %347 = sbr.rel (%p345) target = $region111
        $region110: #{fph_forward.17} parent=106 // pred_region
          _
        $region111: #{fph_forward.17} parent=106 // pred_fallthru
          _
        %s348 = sand.u32 %s65, 1
        %s349 = sand.u32 %s65, 1
        %s350 = smul.addr %s349, 24
        %s351 = scalar_lea.vmem [#allocation3], %s350
        // Predicated region
        $region112: #{fph_forward.17} parent=106 // pred_check
          %p352 = pneg %p78
        $region113: #{fph_forward.17} parent=106 // pred_check_branch
          %354 = sbr.rel (%p352) target = $region115
        $region114: #{fph_forward.17} parent=106 // pred_region
          _
        $region115: #{fph_forward.17} parent=106 // pred_fallthru
          _
        %s355 = sand.u32 %s39, 1
        %s356 = sand.u32 %s39, 1
        %s357 = smul.addr %s356, 16
        %s358 = scalar_lea.vmem [#allocation2], %s357
        %p359 = pneg %p52
        %p360 = pneg %p49
        %s361 = sand.u32 %s65, 1
        %s362 = sand.u32 %s65, 1
        %s363 = smul.addr %s362, 24
        %s364 = scalar_lea.vmem [#allocation3], %s363
        %p365 = pneg %p78
        %p366 = pneg %p75
        %s367 = smul.u32 2, %s22
        %p368 = scmp.lt.s32.totalorder %s367, 11
        %s369 = scalar_select %p368, %s367, 11
        %s370 = scalar_lea.vmem %s2, %s369
        %p371 = pneg %p104
        %p372 = pneg %p101
        %s373 = smul.u32 2, %s22
        %p374 = scmp.lt.s32.totalorder %s373, 11
        %s375 = scalar_select %p374, %s373, 11
        %s376 = scalar_lea.vmem %s3, %s375
        %p377 = pneg %p130
        %p378 = pneg %p127
        %p379 = pneg %p158
        %p380 = pneg %p155
        %s381 = sand.u32 %s145, 1
        %s382 = sand.u32 %s145, 1
        %s383 = smul.addr %s382, 4
        %s384 = scalar_lea.vmem [#allocation4], %s383
        %p385 = pneg %p186
        %p386 = pneg %p183
        %s387 = smul.u32 2, %s22
        %p388 = scmp.lt.s32.totalorder %s21, 1
        %s389 = scalar_select %p388, %s21, 1
        %p390 = scmp.lt.s32.totalorder %s387, 11
        %s391 = scalar_select %p390, %s387, 11
        %s392 = smul.addr %s389, 12
        %s393 = sadd.s32 %s391, %s392
        %s394 = scalar_lea.vmem %s5, %s393
        %s395 = smul.u32 2, %s22
        %s396 = smul.u32 2, %s22
        %s397 = smul.u32 2, %s22
        %p398 = scmp.lt.s32.totalorder %s397, 11
        %s399 = scalar_select %p398, %s397, 11
        %s400 = scalar_lea.vmem %s2, %s399
        %s401 = smul.u32 2, %s22
        %s402 = smul.u32 2, %s22
        %p403 = scmp.lt.s32.totalorder %s402, 11
        %s404 = scalar_select %p403, %s402, 11
        %s405 = scalar_lea.vmem %s3, %s404
        %s406 = smul.u32 2, %s22
        %s407 = smul.u32 2, %s22
        %s408 = smul.u32 2, %s22
        %p409 = scmp.lt.s32.totalorder %s21, 1
        %s410 = scalar_select %p409, %s21, 1
        %p411 = scmp.lt.s32.totalorder %s408, 11
        %s412 = scalar_select %p411, %s408, 11
        %s413 = smul.addr %s410, 12
        %s414 = sadd.s32 %s412, %s413
        %s415 = scalar_lea.vmem %s5, %s414
        %s416 = smul.u32 2, %s22
        %v417 = vld [vmem:[%s344] sm:$0xf]
        %v418 = vld [vmem:[%s344 + $0x4] sm:$0xf]
        %v419 = vld [vmem:[%s344 + $0x8] sm:$0xf]
        %v420 = vld [vmem:[%s344 + $0xc] sm:$0xf]
        %v421 = vunpack.c.l.bf16 %v417
        %v422 = vunpack.c.l.bf16 %v418
        %v423 = vunpack.c.l.bf16 %v419
        %v424 = vunpack.c.l.bf16 %v420
        %v425 = vld [vmem:[%s351] sm:$0x77]
        %v426 = vld [vmem:[%s351 + $0x8] sm:$0x77]
        %v427 = vld [vmem:[%s351 + $0x10] sm:$0x77]
        %v429 = vlaneseq
        %v430 = vshrl.u32 %v429, 7
        %v431 = vsub.s32 0, %v430
        %v432 = vrot.slane %v425, %v431
        %v433 = vlaneseq
        %v434 = vshrl.u32 %v433, 7
        %v435 = vsub.s32 4, %v434
        %v436 = vrot.slane %v425, %v435
        %v439 = vlaneseq
        %v440 = vshrl.u32 %v439, 7
        %v441 = vsub.s32 0, %v440
        %v442 = vrot.slane %v432, %v441
        %v443 = vlaneseq
        %v444 = vshrl.u32 %v443, 7
        %v445 = vsub.s32 0, %v444
        %v446 = vrot.slane %v436, %v445
        %v449 = vcombine.low %v442, %v446
        %v451 = vmul.f32 %v421, %v449
        %v452 = vmul.f32 %v422, %v449
        %v453 = vadd.f32 %v451, 0.0
        %v454 = vadd.f32 %v452, 0.0
        %v455 = vlaneseq
        %v456 = vshrl.u32 %v455, 7
        %v457 = vsub.s32 1, %v456
        %v458 = vrot.slane %v425, %v457
        %v459 = vlaneseq
        %v460 = vshrl.u32 %v459, 7
        %v461 = vsub.s32 5, %v460
        %v462 = vrot.slane %v425, %v461
        %v465 = vlaneseq
        %v466 = vshrl.u32 %v465, 7
        %v467 = vsub.s32 1, %v466
        %v468 = vrot.slane %v458, %v467
        %v469 = vlaneseq
        %v470 = vshrl.u32 %v469, 7
        %v471 = vsub.s32 1, %v470
        %v472 = vrot.slane %v462, %v471
        %v475 = vcombine.low %v468, %v472
        %v476 = vrot.slane %v475, 7
        %v478 = vmul.f32 %v421, %v476
        %v479 = vmul.f32 %v422, %v476
        %v482 = vrot.slane %v478, 5
        %v483 = vrot.slane %v482, 4
        %v484 = vrot.slane %v479, 5
        %v485 = vrot.slane %v484, 4
        %v488 = vadd.f32 %v453, %v483
        %v489 = vadd.f32 %v454, %v485
        %v490 = vlaneseq
        %v491 = vshrl.u32 %v490, 7
        %v492 = vsub.s32 2, %v491
        %v493 = vrot.slane %v425, %v492
        %v494 = vlaneseq
        %v495 = vshrl.u32 %v494, 7
        %v496 = vsub.s32 6, %v495
        %v497 = vrot.slane %v425, %v496
        %v500 = vlaneseq
        %v501 = vshrl.u32 %v500, 7
        %v502 = vsub.s32 2, %v501
        %v503 = vrot.slane %v493, %v502
        %v504 = vlaneseq
        %v505 = vshrl.u32 %v504, 7
        %v506 = vsub.s32 2, %v505
        %v507 = vrot.slane %v497, %v506
        %v510 = vcombine.low %v503, %v507
        %v511 = vrot.slane %v510, 6
        %v513 = vmul.f32 %v421, %v511
        %v514 = vmul.f32 %v422, %v511
        %v517 = vrot.slane %v513, 6
        %v518 = vrot.slane %v517, 4
        %v519 = vrot.slane %v514, 6
        %v520 = vrot.slane %v519, 4
        %v523 = vadd.f32 %v488, %v518
        %v524 = vadd.f32 %v489, %v520
        %v526 = vlaneseq
        %v527 = vshrl.u32 %v526, 7
        %v528 = vsub.s32 0, %v527
        %v529 = vrot.slane %v426, %v528
        %v530 = vlaneseq
        %v531 = vshrl.u32 %v530, 7
        %v532 = vsub.s32 4, %v531
        %v533 = vrot.slane %v426, %v532
        %v536 = vlaneseq
        %v537 = vshrl.u32 %v536, 7
        %v538 = vsub.s32 0, %v537
        %v539 = vrot.slane %v529, %v538
        %v540 = vlaneseq
        %v541 = vshrl.u32 %v540, 7
        %v542 = vsub.s32 0, %v541
        %v543 = vrot.slane %v533, %v542
        %v546 = vcombine.low %v539, %v543
        %v548 = vmul.f32 %v422, %v546
        %v549 = vmul.f32 %v423, %v546
        %v550 = vadd.f32 %v523, %v548
        %v551 = vadd.f32 %v524, %v549
        %v552 = vlaneseq
        %v553 = vshrl.u32 %v552, 7
        %v554 = vsub.s32 1, %v553
        %v555 = vrot.slane %v426, %v554
        %v556 = vlaneseq
        %v557 = vshrl.u32 %v556, 7
        %v558 = vsub.s32 5, %v557
        %v559 = vrot.slane %v426, %v558
        %v562 = vlaneseq
        %v563 = vshrl.u32 %v562, 7
        %v564 = vsub.s32 1, %v563
        %v565 = vrot.slane %v555, %v564
        %v566 = vlaneseq
        %v567 = vshrl.u32 %v566, 7
        %v568 = vsub.s32 1, %v567
        %v569 = vrot.slane %v559, %v568
        %v572 = vcombine.low %v565, %v569
        %v573 = vrot.slane %v572, 7
        %v575 = vmul.f32 %v422, %v573
        %v576 = vmul.f32 %v423, %v573
        %v579 = vrot.slane %v575, 5
        %v580 = vrot.slane %v579, 4
        %v581 = vrot.slane %v576, 5
        %v582 = vrot.slane %v581, 4
        %v585 = vadd.f32 %v550, %v580
        %v586 = vadd.f32 %v551, %v582
        %v587 = vlaneseq
        %v588 = vshrl.u32 %v587, 7
        %v589 = vsub.s32 2, %v588
        %v590 = vrot.slane %v426, %v589
        %v591 = vlaneseq
        %v592 = vshrl.u32 %v591, 7
        %v593 = vsub.s32 6, %v592
        %v594 = vrot.slane %v426, %v593
        %v597 = vlaneseq
        %v598 = vshrl.u32 %v597, 7
        %v599 = vsub.s32 2, %v598
        %v600 = vrot.slane %v590, %v599
        %v601 = vlaneseq
        %v602 = vshrl.u32 %v601, 7
        %v603 = vsub.s32 2, %v602
        %v604 = vrot.slane %v594, %v603
        %v607 = vcombine.low %v600, %v604
        %v608 = vrot.slane %v607, 6
        %v610 = vmul.f32 %v422, %v608
        %v611 = vmul.f32 %v423, %v608
        %v614 = vrot.slane %v610, 6
        %v615 = vrot.slane %v614, 4
        %v616 = vrot.slane %v611, 6
        %v617 = vrot.slane %v616, 4
        %v620 = vadd.f32 %v585, %v615
        %v621 = vadd.f32 %v586, %v617
        %v623 = vlaneseq
        %v624 = vshrl.u32 %v623, 7
        %v625 = vsub.s32 0, %v624
        %v626 = vrot.slane %v427, %v625
        %v627 = vlaneseq
        %v628 = vshrl.u32 %v627, 7
        %v629 = vsub.s32 4, %v628
        %v630 = vrot.slane %v427, %v629
        %v633 = vlaneseq
        %v634 = vshrl.u32 %v633, 7
        %v635 = vsub.s32 0, %v634
        %v636 = vrot.slane %v626, %v635
        %v637 = vlaneseq
        %v638 = vshrl.u32 %v637, 7
        %v639 = vsub.s32 0, %v638
        %v640 = vrot.slane %v630, %v639
        %v643 = vcombine.low %v636, %v640
        %v645 = vmul.f32 %v423, %v643
        %v646 = vmul.f32 %v424, %v643
        %v647 = vadd.f32 %v620, %v645
        %v648 = vadd.f32 %v621, %v646
        %v649 = vlaneseq
        %v650 = vshrl.u32 %v649, 7
        %v651 = vsub.s32 1, %v650
        %v652 = vrot.slane %v427, %v651
        %v653 = vlaneseq
        %v654 = vshrl.u32 %v653, 7
        %v655 = vsub.s32 5, %v654
        %v656 = vrot.slane %v427, %v655
        %v659 = vlaneseq
        %v660 = vshrl.u32 %v659, 7
        %v661 = vsub.s32 1, %v660
        %v662 = vrot.slane %v652, %v661
        %v663 = vlaneseq
        %v664 = vshrl.u32 %v663, 7
        %v665 = vsub.s32 1, %v664
        %v666 = vrot.slane %v656, %v665
        %v669 = vcombine.low %v662, %v666
        %v670 = vrot.slane %v669, 7
        %v672 = vmul.f32 %v423, %v670
        %v673 = vmul.f32 %v424, %v670
        %v676 = vrot.slane %v672, 5
        %v677 = vrot.slane %v676, 4
        %v678 = vrot.slane %v673, 5
        %v679 = vrot.slane %v678, 4
        %v682 = vadd.f32 %v647, %v677
        %v683 = vadd.f32 %v648, %v679
        %v684 = vlaneseq
        %v685 = vshrl.u32 %v684, 7
        %v686 = vsub.s32 2, %v685
        %v687 = vrot.slane %v427, %v686
        %v688 = vlaneseq
        %v689 = vshrl.u32 %v688, 7
        %v690 = vsub.s32 6, %v689
        %v691 = vrot.slane %v427, %v690
        %v694 = vlaneseq
        %v695 = vshrl.u32 %v694, 7
        %v696 = vsub.s32 2, %v695
        %v697 = vrot.slane %v687, %v696
        %v698 = vlaneseq
        %v699 = vshrl.u32 %v698, 7
        %v700 = vsub.s32 2, %v699
        %v701 = vrot.slane %v691, %v700
        %v704 = vcombine.low %v697, %v701
        %v705 = vrot.slane %v704, 6
        %v707 = vmul.f32 %v423, %v705
        %v708 = vmul.f32 %v424, %v705
        %v711 = vrot.slane %v707, 6
        %v712 = vrot.slane %v711, 4
        %v713 = vrot.slane %v708, 6
        %v714 = vrot.slane %v713, 4
        %v717 = vadd.f32 %v682, %v712
        %v718 = vadd.f32 %v683, %v714
        %v719 = vld [vmem:[%s400] sm:$0x3]
        %v721 = vlaneseq
        %v722 = vshrl.u32 %v721, 7
        %v723 = vsub.s32 0, %v722
        %v724 = vrot.slane %v719, %v723
        %v725 = vlaneseq
        %v726 = vshrl.u32 %v725, 7
        %v727 = vsub.s32 1, %v726
        %v728 = vrot.slane %v719, %v727
        %v729 = vcombine.low %v724, %v728
        %v731 = vmul.f32 %v717, %v729
        %v732 = vmul.f32 %v718, %v729
        %v733 = vld [vmem:[%s405] sm:$0x3]
        %v735 = vlaneseq
        %v736 = vshrl.u32 %v735, 7
        %v737 = vsub.s32 0, %v736
        %v738 = vrot.slane %v733, %v737
        %v739 = vlaneseq
        %v740 = vshrl.u32 %v739, 7
        %v741 = vsub.s32 1, %v740
        %v742 = vrot.slane %v733, %v741
        %v743 = vcombine.low %v738, %v742
        %v745 = vadd.f32 %v731, %v743
        %v746 = vadd.f32 %v732, %v743
        %v747 = vxor.u32 %v745, 2147483648
        %v748 = vxor.u32 %v746, 2147483648
        %v749 = vmul.f32 %v747, 1.442695
        %v750 = vpow.pop %v749
        %v751 = vmul.f32 %v748, 1.442695
        %v752 = vpow.pop %v751
        %v753 = vadd.f32 %v750, 1.0
        %v754 = vadd.f32 %v752, 1.0
        %v755 = vrcp.pop %v753
        %v756 = vmul.f32 1.0, %v755
        %v757 = vrcp.pop %v754
        %v758 = vmul.f32 1.0, %v757
        %v759 = vmul.f32 %v745, %v756
        %v760 = vmul.f32 %v746, %v758
        %v763 = vcombine.high %v759, %v759
        %v764 = vcombine.high %v760, %v760
        %v767 = vpack.c.bf16 %v759, %v759
        %v768 = vpack.c.bf16 %v763, %v763
        %v769 = vpack.c.bf16 %v760, %v760
        %v770 = vpack.c.bf16 %v764, %v764
        %v775 = vcombine.low %v767, %v768
        %v777 = vunpack.c.l.s4 1966171168
        %v778 = vunpack.c.0.s8 %v777
        %v779 = vlaneseq
        %v780 = vshrl.u32 %v779, 7
        %v781 = vsub.s32 %v778, %v780
        %v782 = vrot.slane %v775, %v781
        %v784 = vunpack.c.l.s4 1966171168
        %v785 = vunpack.c.0.s8 %v784
        %v786 = vlaneseq
        %v787 = vshrl.u32 %v786, 7
        %v788 = vsub.s32 %v785, %v787
        %v789 = vrot.slane %v782, %v788
        %v790 = vcombine.low %v769, %v770
        %v792 = vunpack.c.l.s4 1966171168
        %v793 = vunpack.c.0.s8 %v792
        %v794 = vlaneseq
        %v795 = vshrl.u32 %v794, 7
        %v796 = vsub.s32 %v793, %v795
        %v797 = vrot.slane %v790, %v796
        %v799 = vunpack.c.l.s4 1966171168
        %v800 = vunpack.c.0.s8 %v799
        %v801 = vlaneseq
        %v802 = vshrl.u32 %v801, 7
        %v803 = vsub.s32 %v800, %v802
        %v804 = vrot.slane %v797, %v803
        %807 = vst [vmem:[%s384] sm:$0x3] %v789
        %808 = vst [vmem:[%s384 + $0x2] sm:$0x3] %v804
        %vm809 = vcmask 1041408
        %v810 = vsel %vm809, %v759, 0.0
        %v811 = vsel %vm809, %v760, 0.0
        %v812 = vadd.f32 %v810, %v811
        %v813 = vrot.slane %v812, 4
        %v814 = vadd.f32 %v812, %v813
        %v815 = vrot.slane %v814, 2
        %v816 = vadd.f32 %v814, %v815
        %v817 = vrot.slane %v816, 1
        %v818 = vadd.f32 %v816, %v817
        %v819 = vsel %vm809, %v763, 0.0
        %v820 = vsel %vm809, %v764, 0.0
        %v821 = vadd.f32 %v819, %v820
        %v822 = vrot.slane %v821, 4
        %v823 = vadd.f32 %v821, %v822
        %v824 = vrot.slane %v823, 2
        %v825 = vadd.f32 %v823, %v824
        %v826 = vrot.slane %v825, 1
        %v827 = vadd.f32 %v825, %v826
        %v828 = vrcp.pop 4.0
        %v829 = vmul.f32 %v818, %v828
        %v830 = vmul.f32 %v827, %v828
        %v833 = vcombine.low %v829, %v830
        %v835 = vunpack.c.l.s4 1966171168
        %v836 = vunpack.c.0.s8 %v835
        %v837 = vlaneseq
        %v838 = vshrl.u32 %v837, 7
        %v839 = vsub.s32 %v836, %v838
        %v840 = vrot.slane %v833, %v839
        %v842 = vunpack.c.l.s4 1966171168
        %v843 = vunpack.c.0.s8 %v842
        %v844 = vlaneseq
        %v845 = vshrl.u32 %v844, 7
        %v846 = vsub.s32 %v843, %v845
        %v847 = vrot.slane %v840, %v846
        %v849 = vlaneseq
        %vm850 = vcmp.ge.s32.totalorder %v849, 0
        %vm851 = vcmp.lt.s32.totalorder %v849, 256
        %vm852 = vmand %vm850, %vm851
        %853 = vst.msk [vmem:[%s415] sm:$0x3] %vm852, %v847
        %s854 = sand.u32 %s145, 1
        %s855 = sand.u32 %s145, 1
        %s856 = smul.addr %s855, 4
        %s857 = scalar_lea.vmem [#allocation4], %s856
        %s858 = smul.u32 2, %s22
        %p859 = scmp.lt.s32.totalorder %s21, 1
        %s860 = scalar_select %p859, %s21, 1
        %p861 = scmp.lt.s32.totalorder %s858, 11
        %s862 = scalar_select %p861, %s858, 11
        %s863 = smul.addr %s860, 12
        %s864 = sadd.s32 %s862, %s863
        %s865 = scalar_lea.vmem %s5, %s864
        // Predicated region
        $region116: #{fph_forward.17} parent=106 // pred_check
          %p866 = pneg %p155
        $region117: #{fph_forward.17} parent=106 // pred_check_branch
          %868 = sbr.rel (%p866) target = $region119
        $region118: #{fph_forward.17} parent=106 // pred_region
          %s869 = smul.u32 2, %s22
          %s870 = smul.addr %s21, 24
          %s871 = sadd.s32 %s869, %s870
          %s872 = scalar_lea.vmem %s4, %s871
          // Predicated region
          $region120: #{fph_forward.17} parent=118 // pred_check
            _
          $region121: #{fph_forward.17} parent=118 // pred_check_branch
            %874 = sbr.rel (0) target = $region123
          $region122: #{fph_forward.17} parent=118 // pred_region
            // Predicated region
            $region124: #{fph_forward.17} parent=122 // pred_check
              _
            $region125: #{fph_forward.17} parent=122 // pred_check_branch
              %876 = sbr.rel target = $region127
            $region126: #{fph_forward.17} parent=122 // pred_region
              // Predicated region
              $region139: #{fph_forward.17} parent=126 // pred_check
                _
              $region140: #{fph_forward.17} parent=126 // pred_check_branch
                %893 = sbr.rel (0) target = $region142
              $region141: #{fph_forward.17} parent=126 // pred_region
                loop: start=0, step=1, limit=1
                $region143: #{fph_forward.17} parent=141 // loop_pre_header
                  _
                $region144: #{fph_forward.17} parent=141 // loop_header
                  %s896 = sphi 0, %s900
                  %p897 = scmp.ge.s32.totalorder %s896, 1
                  %s901 = sphi %s857, %s857
                  %s902 = sphi %s872, %s872
                $region145: #{fph_forward.17} parent=141 // loop_header_branch
                  %899 = sbr.rel (%p897) target = $region149
                $region146: #{fph_forward.17} parent=141 // loop_body
                  %v903 = vld [vmem:[%s901] sm:$0x3]
                  %904 = vst [vmem:[%s902] sm:$0x3] %v903
                  %v905 = vld [vmem:[%s901 + $0x2] sm:$0x3]
                  %906 = vst [vmem:[%s902 + $0xc] sm:$0x3] %v905
                $region147: #{fph_forward.17} parent=141 // loop_footer
                  %s900 = sadd.s32 1, %s896
                $region148: #{fph_forward.17} parent=141 // loop_footer_branch
                  %895 = sbr.rel target = $region144
                $region149: #{fph_forward.17} parent=141 // loop_exit
                  _
              $region142: #{fph_forward.17} parent=126 // pred_fallthru
                _
            $region127: #{fph_forward.17} parent=122 // pred_fallthru
              _
            // Predicated region
            $region128: #{fph_forward.17} parent=122 // pred_check
              _
            $region129: #{fph_forward.17} parent=122 // pred_check_branch
              %878 = sbr.rel (0) target = $region131
            $region130: #{fph_forward.17} parent=122 // pred_region
              loop: start=0, step=1, limit=1
              $region132: #{fph_forward.17} parent=130 // loop_pre_header
                _
              $region133: #{fph_forward.17} parent=130 // loop_header
                %s881 = sphi 0, %s885
                %p882 = scmp.ge.s32.totalorder %s881, 1
                %s886 = sphi %s857, %s857
                %s887 = sphi %s872, %s872
              $region134: #{fph_forward.17} parent=130 // loop_header_branch
                %884 = sbr.rel (%p882) target = $region138
              $region135: #{fph_forward.17} parent=130 // loop_body
                %v888 = vld [vmem:[%s886] sm:$0x3]
                %889 = vst [vmem:[%s887] sm:$0x3] %v888
                %v890 = vld [vmem:[%s886 + $0x2] sm:$0x3]
                %891 = vst [vmem:[%s887 + $0xc] sm:$0x3] %v890
              $region136: #{fph_forward.17} parent=130 // loop_footer
                %s885 = sadd.s32 1, %s881
              $region137: #{fph_forward.17} parent=130 // loop_footer_branch
                %880 = sbr.rel target = $region133
              $region138: #{fph_forward.17} parent=130 // loop_exit
                _
            $region131: #{fph_forward.17} parent=122 // pred_fallthru
              _
          $region123: #{fph_forward.17} parent=118 // pred_fallthru
            _
          %907 = vnop
        $region119: #{fph_forward.17} parent=106 // pred_fallthru
          _
        // Predicated region
        $region150: #{fph_forward.17} parent=106 // pred_check
          %p908 = pneg %p183
        $region151: #{fph_forward.17} parent=106 // pred_check_branch
          %910 = sbr.rel (%p908) target = $region153
        $region152: #{fph_forward.17} parent=106 // pred_region
          %s911 = smul.u32 2, %s22
        $region153: #{fph_forward.17} parent=106 // pred_fallthru
          _
      $region107: #{fph_forward.17} parent=5 // pred_fallthru
        _
      %p912 = scmp.le.s32.totalorder 2, %s12
      // Predicated region
      $region154: #{fph_forward.17} parent=5 // pred_check
        %p913 = pneg %p912
      $region155: #{fph_forward.17} parent=5 // pred_check_branch
        %915 = sbr.rel (%p913) target = $region157
      $region156: #{fph_forward.17} parent=5 // pred_region
        %s916 = ssub.s32 %s12, 2
        // Predicated region
        $region158: #{fph_forward.17} parent=156 // pred_check
          %p917 = pneg %p161
        $region159: #{fph_forward.17} parent=156 // pred_check_branch
          %919 = sbr.rel (%p917) target = $region161
        $region160: #{fph_forward.17} parent=156 // pred_region
          %s920 = sand.u32 %s146, 1
          %s921 = sand.u32 %s146, 1
          %s922 = smul.addr %s921, 4
          %s923 = scalar_lea.vmem [#allocation4], %s922
        $region161: #{fph_forward.17} parent=156 // pred_fallthru
          _
        // Predicated region
        $region162: #{fph_forward.17} parent=156 // pred_check
          %p924 = pneg %p189
        $region163: #{fph_forward.17} parent=156 // pred_check_branch
          %926 = sbr.rel (%p924) target = $region165
        $region164: #{fph_forward.17} parent=156 // pred_region
          %s927 = smul.u32 2, %s24
          %p928 = scmp.lt.s32.totalorder %s23, 1
          %s929 = scalar_select %p928, %s23, 1
          %p930 = scmp.lt.s32.totalorder %s927, 11
          %s931 = scalar_select %p930, %s927, 11
          %s932 = smul.addr %s929, 12
          %s933 = sadd.s32 %s931, %s932
          %s934 = scalar_lea.vmem %s5, %s933
        $region165: #{fph_forward.17} parent=156 // pred_fallthru
          _
      $region157: #{fph_forward.17} parent=5 // pred_fallthru
        _
    $region6: #{fph_forward.17} parent=1 // loop_footer
      %s16 = sadd.s32 1, %s12
    $region7: #{fph_forward.17} parent=1 // loop_footer_branch
      %11 = sbr.rel target = $region3
    $region8: #{fph_forward.17} parent=1 // loop_exit
      _

// kernel: fph_forward.18
$region0: #{fph_forward.18}
  #allocation0 [shape = 'u32[]', space=smem, size = 0x4, offset = 0x4, fixed_abs, tag = 'smem constant byte address 0x4 - core index']
  #allocation1 [shape = 'u32[144,128]{1,0:T(1,128)}', space=vmem, size = 0x12000, scoped, tag = 'internal scratch']
  %s0 = inlined_call_operand.vmem [shape: f32[2,1536], index: 0, kind: input, shape index: {}]
  %s1 = inlined_call_operand.vmem [shape: bf16[1536,64], index: 1, kind: input, shape index: {}]
  %s2 = inlined_call_operand.vmem [shape: f32[1,64], index: 2, kind: input, shape index: {}]
  %s3 = inlined_call_operand.vmem [shape: bf16[64,1536], index: 3, kind: input, shape index: {}]
  %s4 = inlined_call_operand.vmem [shape: f32[1,1536], index: 4, kind: input, shape index: {}]
  %s5 = inlined_call_operand.vmem [shape: f32[2,1536], index: 5, kind: output, shape index: {}]
  %s6 = sld [smem:[#allocation0]]
  $region30: #{fph_forward.18} parent=0
    _
  %s8 = ssub.s32 1, %s6
  %s9 = scalar_select 0, %s8, %s6
  // Predicated region
  $region2: #{fph_forward.18} parent=0 // pred_check
    _
  $region3: #{fph_forward.18} parent=0 // pred_check_branch
    %11 = sbr.rel (0) target = $region5
  $region4: #{fph_forward.18} parent=0 // pred_region
    _
  $region5: #{fph_forward.18} parent=0 // pred_fallthru
    _
  // Predicated region
  $region6: #{fph_forward.18} parent=0 // pred_check
    _
  $region7: #{fph_forward.18} parent=0 // pred_check_branch
    %13 = sbr.rel (0) target = $region9
  $region8: #{fph_forward.18} parent=0 // pred_region
    _
  $region9: #{fph_forward.18} parent=0 // pred_fallthru
    _
  // Predicated region
  $region10: #{fph_forward.18} parent=0 // pred_check
    _
  $region11: #{fph_forward.18} parent=0 // pred_check_branch
    %15 = sbr.rel (0) target = $region13
  $region12: #{fph_forward.18} parent=0 // pred_region
    _
  $region13: #{fph_forward.18} parent=0 // pred_fallthru
    _
  // Predicated region
  $region14: #{fph_forward.18} parent=0 // pred_check
    _
  $region15: #{fph_forward.18} parent=0 // pred_check_branch
    %17 = sbr.rel (0) target = $region17
  $region16: #{fph_forward.18} parent=0 // pred_region
    _
  $region17: #{fph_forward.18} parent=0 // pred_fallthru
    _
  // Predicated region
  $region18: #{fph_forward.18} parent=0 // pred_check
    _
  $region19: #{fph_forward.18} parent=0 // pred_check_branch
    %19 = sbr.rel (0) target = $region21
  $region20: #{fph_forward.18} parent=0 // pred_region
    _
  $region21: #{fph_forward.18} parent=0 // pred_fallthru
    _
  %v21 = vld [vmem:[%s0] sm:$0xff]
  %v22 = vld [vmem:[%s0 + $0x8] sm:$0xff]
  %v23 = vld [vmem:[%s0 + $0x10] sm:$0xff]
  %v27 = vcombine.high %v21, %v21
  %v29 = vunpack.c.l.s4 1983009808
  %v30 = vunpack.c.0.s8 %v29
  %v31 = vlaneseq
  %v32 = vshrl.u32 %v31, 7
  %v33 = vsub.s32 %v30, %v32
  %v34 = vrot.slane %v21, %v33
  %v36 = vunpack.c.l.s4 1983009808
  %v37 = vunpack.c.0.s8 %v36
  %v38 = vlaneseq
  %v39 = vshrl.u32 %v38, 7
  %v40 = vsub.s32 %v37, %v39
  %v41 = vrot.slane %v27, %v40
  %v42 = vcombine.high %v34, %v34
  %v43 = vcombine.high %v41, %v41
  %v44 = vcombine.high %v22, %v22
  %v46 = vunpack.c.l.s4 1983009808
  %v47 = vunpack.c.0.s8 %v46
  %v48 = vlaneseq
  %v49 = vshrl.u32 %v48, 7
  %v50 = vsub.s32 %v47, %v49
  %v51 = vrot.slane %v22, %v50
  %v53 = vunpack.c.l.s4 1983009808
  %v54 = vunpack.c.0.s8 %v53
  %v55 = vlaneseq
  %v56 = vshrl.u32 %v55, 7
  %v57 = vsub.s32 %v54, %v56
  %v58 = vrot.slane %v44, %v57
  %v59 = vcombine.high %v51, %v51
  %v60 = vcombine.high %v58, %v58
  %v61 = vcombine.high %v23, %v23
  %v63 = vunpack.c.l.s4 1983009808
  %v64 = vunpack.c.0.s8 %v63
  %v65 = vlaneseq
  %v66 = vshrl.u32 %v65, 7
  %v67 = vsub.s32 %v64, %v66
  %v68 = vrot.slane %v23, %v67
  %v70 = vunpack.c.l.s4 1983009808
  %v71 = vunpack.c.0.s8 %v70
  %v72 = vlaneseq
  %v73 = vshrl.u32 %v72, 7
  %v74 = vsub.s32 %v71, %v73
  %v75 = vrot.slane %v61, %v74
  %v76 = vcombine.high %v68, %v68
  %v77 = vcombine.high %v75, %v75
  %v90 = vpack.c.bf16 %v34, %v34
  %v91 = vpack.c.bf16 %v42, %v42
  %v92 = vpack.c.bf16 %v41, %v41
  %v93 = vpack.c.bf16 %v43, %v43
  %v94 = vpack.c.bf16 %v51, %v51
  %v95 = vpack.c.bf16 %v59, %v59
  %v96 = vpack.c.bf16 %v58, %v58
  %v97 = vpack.c.bf16 %v60, %v60
  %v98 = vpack.c.bf16 %v68, %v68
  %v99 = vpack.c.bf16 %v76, %v76
  %v100 = vpack.c.bf16 %v75, %v75
  %v101 = vpack.c.bf16 %v77, %v77
  %v102 = vld [vmem:[%s1] sm:$0xf]
  %v103 = vld [vmem:[%s1 + $0x4] sm:$0xf]
  %v104 = vld [vmem:[%s1 + $0x8] sm:$0xf]
  %v105 = vld [vmem:[%s1 + $0xc] sm:$0xf]
  %v106 = vld [vmem:[%s1 + $0x10] sm:$0xf]
  %v107 = vld [vmem:[%s1 + $0x14] sm:$0xf]
  %v108 = vld [vmem:[%s1 + $0x18] sm:$0xf]
  %v109 = vld [vmem:[%s1 + $0x1c] sm:$0xf]
  %v110 = vld [vmem:[%s1 + $0x20] sm:$0xf]
  %v111 = vld [vmem:[%s1 + $0x24] sm:$0xf]
  %v112 = vld [vmem:[%s1 + $0x28] sm:$0xf]
  %v113 = vld [vmem:[%s1 + $0x2c] sm:$0xf]
  %v114 = vld [vmem:[%s1 + $0x30] sm:$0xf]
  %v115 = vld [vmem:[%s1 + $0x34] sm:$0xf]
  %v116 = vld [vmem:[%s1 + $0x38] sm:$0xf]
  %v117 = vld [vmem:[%s1 + $0x3c] sm:$0xf]
  %v118 = vld [vmem:[%s1 + $0x40] sm:$0xf]
  %v119 = vld [vmem:[%s1 + $0x44] sm:$0xf]
  %v120 = vld [vmem:[%s1 + $0x48] sm:$0xf]
  %v121 = vld [vmem:[%s1 + $0x4c] sm:$0xf]
  %v122 = vld [vmem:[%s1 + $0x50] sm:$0xf]
  %v123 = vld [vmem:[%s1 + $0x54] sm:$0xf]
  %v124 = vld [vmem:[%s1 + $0x58] sm:$0xf]
  %v125 = vld [vmem:[%s1 + $0x5c] sm:$0xf]
  %v126 = vld [vmem:[%s1 + $0x60] sm:$0xf]
  %v127 = vld [vmem:[%s1 + $0x64] sm:$0xf]
  %v128 = vld [vmem:[%s1 + $0x68] sm:$0xf]
  %v129 = vld [vmem:[%s1 + $0x6c] sm:$0xf]
  %v130 = vld [vmem:[%s1 + $0x70] sm:$0xf]
  %v131 = vld [vmem:[%s1 + $0x74] sm:$0xf]
  %v132 = vld [vmem:[%s1 + $0x78] sm:$0xf]
  %v133 = vld [vmem:[%s1 + $0x7c] sm:$0xf]
  %v134 = vld [vmem:[%s1 + $0x80] sm:$0xf]
  %v135 = vld [vmem:[%s1 + $0x84] sm:$0xf]
  %v136 = vld [vmem:[%s1 + $0x88] sm:$0xf]
  %v137 = vld [vmem:[%s1 + $0x8c] sm:$0xf]
  %v138 = vld [vmem:[%s1 + $0x90] sm:$0xf]
  %v139 = vld [vmem:[%s1 + $0x94] sm:$0xf]
  %v140 = vld [vmem:[%s1 + $0x98] sm:$0xf]
  %v141 = vld [vmem:[%s1 + $0x9c] sm:$0xf]
  %v142 = vld [vmem:[%s1 + $0xa0] sm:$0xf]
  %v143 = vld [vmem:[%s1 + $0xa4] sm:$0xf]
  %v144 = vld [vmem:[%s1 + $0xa8] sm:$0xf]
  %v145 = vld [vmem:[%s1 + $0xac] sm:$0xf]
  %v146 = vld [vmem:[%s1 + $0xb0] sm:$0xf]
  %v147 = vld [vmem:[%s1 + $0xb4] sm:$0xf]
  %v148 = vld [vmem:[%s1 + $0xb8] sm:$0xf]
  %v149 = vld [vmem:[%s1 + $0xbc] sm:$0xf]
  %v150 = vld [vmem:[%s1 + $0xc0] sm:$0xf]
  %v151 = vld [vmem:[%s1 + $0xc4] sm:$0xf]
  %v152 = vld [vmem:[%s1 + $0xc8] sm:$0xf]
  %v153 = vld [vmem:[%s1 + $0xcc] sm:$0xf]
  %v154 = vld [vmem:[%s1 + $0xd0] sm:$0xf]
  %v155 = vld [vmem:[%s1 + $0xd4] sm:$0xf]
  %v156 = vld [vmem:[%s1 + $0xd8] sm:$0xf]
  %v157 = vld [vmem:[%s1 + $0xdc] sm:$0xf]
  %v158 = vld [vmem:[%s1 + $0xe0] sm:$0xf]
  %v159 = vld [vmem:[%s1 + $0xe4] sm:$0xf]
  %v160 = vld [vmem:[%s1 + $0xe8] sm:$0xf]
  %v161 = vld [vmem:[%s1 + $0xec] sm:$0xf]
  %v162 = vld [vmem:[%s1 + $0xf0] sm:$0xf]
  %v163 = vld [vmem:[%s1 + $0xf4] sm:$0xf]
  %v164 = vld [vmem:[%s1 + $0xf8] sm:$0xf]
  %v165 = vld [vmem:[%s1 + $0xfc] sm:$0xf]
  %v166 = vld [vmem:[%s1 + $0x100] sm:$0xf]
  %v167 = vld [vmem:[%s1 + $0x104] sm:$0xf]
  %v168 = vld [vmem:[%s1 + $0x108] sm:$0xf]
  %v169 = vld [vmem:[%s1 + $0x10c] sm:$0xf]
  %v170 = vld [vmem:[%s1 + $0x110] sm:$0xf]
  %v171 = vld [vmem:[%s1 + $0x114] sm:$0xf]
  %v172 = vld [vmem:[%s1 + $0x118] sm:$0xf]
  %v173 = vld [vmem:[%s1 + $0x11c] sm:$0xf]
  %v174 = vld [vmem:[%s1 + $0x120] sm:$0xf]
  %v175 = vld [vmem:[%s1 + $0x124] sm:$0xf]
  %v176 = vld [vmem:[%s1 + $0x128] sm:$0xf]
  %v177 = vld [vmem:[%s1 + $0x12c] sm:$0xf]
  %v178 = vld [vmem:[%s1 + $0x130] sm:$0xf]
  %v179 = vld [vmem:[%s1 + $0x134] sm:$0xf]
  %v180 = vld [vmem:[%s1 + $0x138] sm:$0xf]
  %v181 = vld [vmem:[%s1 + $0x13c] sm:$0xf]
  %v182 = vld [vmem:[%s1 + $0x140] sm:$0xf]
  %v183 = vld [vmem:[%s1 + $0x144] sm:$0xf]
  %v184 = vld [vmem:[%s1 + $0x148] sm:$0xf]
  %v185 = vld [vmem:[%s1 + $0x14c] sm:$0xf]
  %v186 = vld [vmem:[%s1 + $0x150] sm:$0xf]
  %v187 = vld [vmem:[%s1 + $0x154] sm:$0xf]
  %v188 = vld [vmem:[%s1 + $0x158] sm:$0xf]
  %v189 = vld [vmem:[%s1 + $0x15c] sm:$0xf]
  %v190 = vld [vmem:[%s1 + $0x160] sm:$0xf]
  %v191 = vld [vmem:[%s1 + $0x164] sm:$0xf]
  %v192 = vld [vmem:[%s1 + $0x168] sm:$0xf]
  %v193 = vld [vmem:[%s1 + $0x16c] sm:$0xf]
  %v194 = vld [vmem:[%s1 + $0x170] sm:$0xf]
  %v195 = vld [vmem:[%s1 + $0x174] sm:$0xf]
  %v196 = vld [vmem:[%s1 + $0x178] sm:$0xf]
  %v197 = vld [vmem:[%s1 + $0x17c] sm:$0xf]
  %v198 = vld [vmem:[%s1 + $0x180] sm:$0xf]
  %v199 = vld [vmem:[%s1 + $0x184] sm:$0xf]
  %v200 = vld [vmem:[%s1 + $0x188] sm:$0xf]
  %v201 = vld [vmem:[%s1 + $0x18c] sm:$0xf]
  %v202 = vld [vmem:[%s1 + $0x190] sm:$0xf]
  %v203 = vld [vmem:[%s1 + $0x194] sm:$0xf]
  %v204 = vld [vmem:[%s1 + $0x198] sm:$0xf]
  %v205 = vld [vmem:[%s1 + $0x19c] sm:$0xf]
  %v206 = vld [vmem:[%s1 + $0x1a0] sm:$0xf]
  %v207 = vld [vmem:[%s1 + $0x1a4] sm:$0xf]
  %v208 = vld [vmem:[%s1 + $0x1a8] sm:$0xf]
  %v209 = vld [vmem:[%s1 + $0x1ac] sm:$0xf]
  %v210 = vld [vmem:[%s1 + $0x1b0] sm:$0xf]
  %v211 = vld [vmem:[%s1 + $0x1b4] sm:$0xf]
  %v212 = vld [vmem:[%s1 + $0x1b8] sm:$0xf]
  %v213 = vld [vmem:[%s1 + $0x1bc] sm:$0xf]
  %v214 = vld [vmem:[%s1 + $0x1c0] sm:$0xf]
  %v215 = vld [vmem:[%s1 + $0x1c4] sm:$0xf]
  %v216 = vld [vmem:[%s1 + $0x1c8] sm:$0xf]
  %v217 = vld [vmem:[%s1 + $0x1cc] sm:$0xf]
  %v218 = vld [vmem:[%s1 + $0x1d0] sm:$0xf]
  %v219 = vld [vmem:[%s1 + $0x1d4] sm:$0xf]
  %v220 = vld [vmem:[%s1 + $0x1d8] sm:$0xf]
  %v221 = vld [vmem:[%s1 + $0x1dc] sm:$0xf]
  %v222 = vld [vmem:[%s1 + $0x1e0] sm:$0xf]
  %v223 = vld [vmem:[%s1 + $0x1e4] sm:$0xf]
  %v224 = vld [vmem:[%s1 + $0x1e8] sm:$0xf]
  %v225 = vld [vmem:[%s1 + $0x1ec] sm:$0xf]
  %v226 = vld [vmem:[%s1 + $0x1f0] sm:$0xf]
  %v227 = vld [vmem:[%s1 + $0x1f4] sm:$0xf]
  %v228 = vld [vmem:[%s1 + $0x1f8] sm:$0xf]
  %v229 = vld [vmem:[%s1 + $0x1fc] sm:$0xf]
  %v230 = vld [vmem:[%s1 + $0x200] sm:$0xf]
  %v231 = vld [vmem:[%s1 + $0x204] sm:$0xf]
  %v232 = vld [vmem:[%s1 + $0x208] sm:$0xf]
  %v233 = vld [vmem:[%s1 + $0x20c] sm:$0xf]
  %v234 = vld [vmem:[%s1 + $0x210] sm:$0xf]
  %v235 = vld [vmem:[%s1 + $0x214] sm:$0xf]
  %v236 = vld [vmem:[%s1 + $0x218] sm:$0xf]
  %v237 = vld [vmem:[%s1 + $0x21c] sm:$0xf]
  %v238 = vld [vmem:[%s1 + $0x220] sm:$0xf]
  %v239 = vld [vmem:[%s1 + $0x224] sm:$0xf]
  %v240 = vld [vmem:[%s1 + $0x228] sm:$0xf]
  %v241 = vld [vmem:[%s1 + $0x22c] sm:$0xf]
  %v242 = vld [vmem:[%s1 + $0x230] sm:$0xf]
  %v243 = vld [vmem:[%s1 + $0x234] sm:$0xf]
  %v244 = vld [vmem:[%s1 + $0x238] sm:$0xf]
  %v245 = vld [vmem:[%s1 + $0x23c] sm:$0xf]
  %v246 = vld [vmem:[%s1 + $0x240] sm:$0xf]
  %v247 = vld [vmem:[%s1 + $0x244] sm:$0xf]
  %v248 = vld [vmem:[%s1 + $0x248] sm:$0xf]
  %v249 = vld [vmem:[%s1 + $0x24c] sm:$0xf]
  %v250 = vld [vmem:[%s1 + $0x250] sm:$0xf]
  %v251 = vld [vmem:[%s1 + $0x254] sm:$0xf]
  %v252 = vld [vmem:[%s1 + $0x258] sm:$0xf]
  %v253 = vld [vmem:[%s1 + $0x25c] sm:$0xf]
  %v254 = vld [vmem:[%s1 + $0x260] sm:$0xf]
  %v255 = vld [vmem:[%s1 + $0x264] sm:$0xf]
  %v256 = vld [vmem:[%s1 + $0x268] sm:$0xf]
  %v257 = vld [vmem:[%s1 + $0x26c] sm:$0xf]
  %v258 = vld [vmem:[%s1 + $0x270] sm:$0xf]
  %v259 = vld [vmem:[%s1 + $0x274] sm:$0xf]
  %v260 = vld [vmem:[%s1 + $0x278] sm:$0xf]
  %v261 = vld [vmem:[%s1 + $0x27c] sm:$0xf]
  %v262 = vld [vmem:[%s1 + $0x280] sm:$0xf]
  %v263 = vld [vmem:[%s1 + $0x284] sm:$0xf]
  %v264 = vld [vmem:[%s1 + $0x288] sm:$0xf]
  %v265 = vld [vmem:[%s1 + $0x28c] sm:$0xf]
  %v266 = vld [vmem:[%s1 + $0x290] sm:$0xf]
  %v267 = vld [vmem:[%s1 + $0x294] sm:$0xf]
  %v268 = vld [vmem:[%s1 + $0x298] sm:$0xf]
  %v269 = vld [vmem:[%s1 + $0x29c] sm:$0xf]
  %v270 = vld [vmem:[%s1 + $0x2a0] sm:$0xf]
  %v271 = vld [vmem:[%s1 + $0x2a4] sm:$0xf]
  %v272 = vld [vmem:[%s1 + $0x2a8] sm:$0xf]
  %v273 = vld [vmem:[%s1 + $0x2ac] sm:$0xf]
  %v274 = vld [vmem:[%s1 + $0x2b0] sm:$0xf]
  %v275 = vld [vmem:[%s1 + $0x2b4] sm:$0xf]
  %v276 = vld [vmem:[%s1 + $0x2b8] sm:$0xf]
  %v277 = vld [vmem:[%s1 + $0x2bc] sm:$0xf]
  %v278 = vld [vmem:[%s1 + $0x2c0] sm:$0xf]
  %v279 = vld [vmem:[%s1 + $0x2c4] sm:$0xf]
  %v280 = vld [vmem:[%s1 + $0x2c8] sm:$0xf]
  %v281 = vld [vmem:[%s1 + $0x2cc] sm:$0xf]
  %v282 = vld [vmem:[%s1 + $0x2d0] sm:$0xf]
  %v283 = vld [vmem:[%s1 + $0x2d4] sm:$0xf]
  %v284 = vld [vmem:[%s1 + $0x2d8] sm:$0xf]
  %v285 = vld [vmem:[%s1 + $0x2dc] sm:$0xf]
  %v286 = vld [vmem:[%s1 + $0x2e0] sm:$0xf]
  %v287 = vld [vmem:[%s1 + $0x2e4] sm:$0xf]
  %v288 = vld [vmem:[%s1 + $0x2e8] sm:$0xf]
  %v289 = vld [vmem:[%s1 + $0x2ec] sm:$0xf]
  %v290 = vld [vmem:[%s1 + $0x2f0] sm:$0xf]
  %v291 = vld [vmem:[%s1 + $0x2f4] sm:$0xf]
  %v292 = vld [vmem:[%s1 + $0x2f8] sm:$0xf]
  %v293 = vld [vmem:[%s1 + $0x2fc] sm:$0xf]
  %v294 = vld [vmem:[%s2] sm:$0x1]
  %v296 = vlaneseq
  %v297 = vshrl.u32 %v296, 7
  %v298 = vsub.s32 0, %v297
  %v299 = vrot.slane %v294, %v298
  %v493 = vunpack.c.l.b16 %v102
  %v494 = vunpack.c.l.b16 %v103
  %v495 = vunpack.c.l.b16 %v104
  %v496 = vunpack.c.l.b16 %v105
  %v497 = vunpack.c.l.b16 %v106
  %v498 = vunpack.c.l.b16 %v107
  %v499 = vunpack.c.l.b16 %v108
  %v500 = vunpack.c.l.b16 %v109
  %v501 = vunpack.c.l.b16 %v110
  %v502 = vunpack.c.l.b16 %v111
  %v503 = vunpack.c.l.b16 %v112
  %v504 = vunpack.c.l.b16 %v113
  %v505 = vunpack.c.l.b16 %v114
  %v506 = vunpack.c.l.b16 %v115
  %v507 = vunpack.c.l.b16 %v116
  %v508 = vunpack.c.l.b16 %v117
  %v509 = vunpack.c.l.b16 %v118
  %v510 = vunpack.c.l.b16 %v119
  %v511 = vunpack.c.l.b16 %v120
  %v512 = vunpack.c.l.b16 %v121
  %v513 = vunpack.c.l.b16 %v122
  %v514 = vunpack.c.l.b16 %v123
  %v515 = vunpack.c.l.b16 %v124
  %v516 = vunpack.c.l.b16 %v125
  %v517 = vunpack.c.l.b16 %v126
  %v518 = vunpack.c.l.b16 %v127
  %v519 = vunpack.c.l.b16 %v128
  %v520 = vunpack.c.l.b16 %v129
  %v521 = vunpack.c.l.b16 %v130
  %v522 = vunpack.c.l.b16 %v131
  %v523 = vunpack.c.l.b16 %v132
  %v524 = vunpack.c.l.b16 %v133
  %v525 = vunpack.c.l.b16 %v134
  %v526 = vunpack.c.l.b16 %v135
  %v527 = vunpack.c.l.b16 %v136
  %v528 = vunpack.c.l.b16 %v137
  %v529 = vunpack.c.l.b16 %v138
  %v530 = vunpack.c.l.b16 %v139
  %v531 = vunpack.c.l.b16 %v140
  %v532 = vunpack.c.l.b16 %v141
  %v533 = vunpack.c.l.b16 %v142
  %v534 = vunpack.c.l.b16 %v143
  %v535 = vunpack.c.l.b16 %v144
  %v536 = vunpack.c.l.b16 %v145
  %v537 = vunpack.c.l.b16 %v146
  %v538 = vunpack.c.l.b16 %v147
  %v539 = vunpack.c.l.b16 %v148
  %v540 = vunpack.c.l.b16 %v149
  %v541 = vunpack.c.l.b16 %v150
  %v542 = vunpack.c.l.b16 %v151
  %v543 = vunpack.c.l.b16 %v152
  %v544 = vunpack.c.l.b16 %v153
  %v545 = vunpack.c.l.b16 %v154
  %v546 = vunpack.c.l.b16 %v155
  %v547 = vunpack.c.l.b16 %v156
  %v548 = vunpack.c.l.b16 %v157
  %v549 = vunpack.c.l.b16 %v158
  %v550 = vunpack.c.l.b16 %v159
  %v551 = vunpack.c.l.b16 %v160
  %v552 = vunpack.c.l.b16 %v161
  %v553 = vunpack.c.l.b16 %v162
  %v554 = vunpack.c.l.b16 %v163
  %v555 = vunpack.c.l.b16 %v164
  %v556 = vunpack.c.l.b16 %v165
  %v557 = vunpack.c.l.b16 %v166
  %v558 = vunpack.c.l.b16 %v167
  %v559 = vunpack.c.l.b16 %v168
  %v560 = vunpack.c.l.b16 %v169
  %v561 = vunpack.c.l.b16 %v170
  %v562 = vunpack.c.l.b16 %v171
  %v563 = vunpack.c.l.b16 %v172
  %v564 = vunpack.c.l.b16 %v173
  %v565 = vunpack.c.l.b16 %v174
  %v566 = vunpack.c.l.b16 %v175
  %v567 = vunpack.c.l.b16 %v176
  %v568 = vunpack.c.l.b16 %v177
  %v569 = vunpack.c.l.b16 %v178
  %v570 = vunpack.c.l.b16 %v179
  %v571 = vunpack.c.l.b16 %v180
  %v572 = vunpack.c.l.b16 %v181
  %v573 = vunpack.c.l.b16 %v182
  %v574 = vunpack.c.l.b16 %v183
  %v575 = vunpack.c.l.b16 %v184
  %v576 = vunpack.c.l.b16 %v185
  %v577 = vunpack.c.l.b16 %v186
  %v578 = vunpack.c.l.b16 %v187
  %v579 = vunpack.c.l.b16 %v188
  %v580 = vunpack.c.l.b16 %v189
  %v581 = vunpack.c.l.b16 %v190
  %v582 = vunpack.c.l.b16 %v191
  %v583 = vunpack.c.l.b16 %v192
  %v584 = vunpack.c.l.b16 %v193
  %v585 = vunpack.c.l.b16 %v194
  %v586 = vunpack.c.l.b16 %v195
  %v587 = vunpack.c.l.b16 %v196
  %v588 = vunpack.c.l.b16 %v197
  %v589 = vunpack.c.l.b16 %v198
  %v590 = vunpack.c.l.b16 %v199
  %v591 = vunpack.c.l.b16 %v200
  %v592 = vunpack.c.l.b16 %v201
  %v593 = vunpack.c.l.b16 %v202
  %v594 = vunpack.c.l.b16 %v203
  %v595 = vunpack.c.l.b16 %v204
  %v596 = vunpack.c.l.b16 %v205
  %v597 = vunpack.c.l.b16 %v206
  %v598 = vunpack.c.l.b16 %v207
  %v599 = vunpack.c.l.b16 %v208
  %v600 = vunpack.c.l.b16 %v209
  %v601 = vunpack.c.l.b16 %v210
  %v602 = vunpack.c.l.b16 %v211
  %v603 = vunpack.c.l.b16 %v212
  %v604 = vunpack.c.l.b16 %v213
  %v605 = vunpack.c.l.b16 %v214
  %v606 = vunpack.c.l.b16 %v215
  %v607 = vunpack.c.l.b16 %v216
  %v608 = vunpack.c.l.b16 %v217
  %v609 = vunpack.c.l.b16 %v218
  %v610 = vunpack.c.l.b16 %v219
  %v611 = vunpack.c.l.b16 %v220
  %v612 = vunpack.c.l.b16 %v221
  %v613 = vunpack.c.l.b16 %v222
  %v614 = vunpack.c.l.b16 %v223
  %v615 = vunpack.c.l.b16 %v224
  %v616 = vunpack.c.l.b16 %v225
  %v617 = vunpack.c.l.b16 %v226
  %v618 = vunpack.c.l.b16 %v227
  %v619 = vunpack.c.l.b16 %v228
  %v620 = vunpack.c.l.b16 %v229
  %v621 = vunpack.c.l.b16 %v230
  %v622 = vunpack.c.l.b16 %v231
  %v623 = vunpack.c.l.b16 %v232
  %v624 = vunpack.c.l.b16 %v233
  %v625 = vunpack.c.l.b16 %v234
  %v626 = vunpack.c.l.b16 %v235
  %v627 = vunpack.c.l.b16 %v236
  %v628 = vunpack.c.l.b16 %v237
  %v629 = vunpack.c.l.b16 %v238
  %v630 = vunpack.c.l.b16 %v239
  %v631 = vunpack.c.l.b16 %v240
  %v632 = vunpack.c.l.b16 %v241
  %v633 = vunpack.c.l.b16 %v242
  %v634 = vunpack.c.l.b16 %v243
  %v635 = vunpack.c.l.b16 %v244
  %v636 = vunpack.c.l.b16 %v245
  %v637 = vunpack.c.l.b16 %v246
  %v638 = vunpack.c.l.b16 %v247
  %v639 = vunpack.c.l.b16 %v248
  %v640 = vunpack.c.l.b16 %v249
  %v641 = vunpack.c.l.b16 %v250
  %v642 = vunpack.c.l.b16 %v251
  %v643 = vunpack.c.l.b16 %v252
  %v644 = vunpack.c.l.b16 %v253
  %v645 = vunpack.c.l.b16 %v254
  %v646 = vunpack.c.l.b16 %v255
  %v647 = vunpack.c.l.b16 %v256
  %v648 = vunpack.c.l.b16 %v257
  %v649 = vunpack.c.l.b16 %v258
  %v650 = vunpack.c.l.b16 %v259
  %v651 = vunpack.c.l.b16 %v260
  %v652 = vunpack.c.l.b16 %v261
  %v653 = vunpack.c.l.b16 %v262
  %v654 = vunpack.c.l.b16 %v263
  %v655 = vunpack.c.l.b16 %v264
  %v656 = vunpack.c.l.b16 %v265
  %v657 = vunpack.c.l.b16 %v266
  %v658 = vunpack.c.l.b16 %v267
  %v659 = vunpack.c.l.b16 %v268
  %v660 = vunpack.c.l.b16 %v269
  %v661 = vunpack.c.l.b16 %v270
  %v662 = vunpack.c.l.b16 %v271
  %v663 = vunpack.c.l.b16 %v272
  %v664 = vunpack.c.l.b16 %v273
  %v665 = vunpack.c.l.b16 %v274
  %v666 = vunpack.c.l.b16 %v275
  %v667 = vunpack.c.l.b16 %v276
  %v668 = vunpack.c.l.b16 %v277
  %v669 = vunpack.c.l.b16 %v278
  %v670 = vunpack.c.l.b16 %v279
  %v671 = vunpack.c.l.b16 %v280
  %v672 = vunpack.c.l.b16 %v281
  %v673 = vunpack.c.l.b16 %v282
  %v674 = vunpack.c.l.b16 %v283
  %v675 = vunpack.c.l.b16 %v284
  %v676 = vunpack.c.l.b16 %v285
  %v677 = vunpack.c.l.b16 %v286
  %v678 = vunpack.c.l.b16 %v287
  %v679 = vunpack.c.l.b16 %v288
  %v680 = vunpack.c.l.b16 %v289
  %v681 = vunpack.c.l.b16 %v290
  %v682 = vunpack.c.l.b16 %v291
  %v683 = vunpack.c.l.b16 %v292
  %v684 = vunpack.c.l.b16 %v293
  %v685 = vpack.c.b16 %v494, %v493
  %v686 = vpack.c.b16 %v496, %v495
  %v687 = vpack.c.b16 %v498, %v497
  %v688 = vpack.c.b16 %v500, %v499
  %v689 = vpack.c.b16 %v502, %v501
  %v690 = vpack.c.b16 %v504, %v503
  %v691 = vpack.c.b16 %v506, %v505
  %v692 = vpack.c.b16 %v508, %v507
  %v693 = vpack.c.b16 %v510, %v509
  %v694 = vpack.c.b16 %v512, %v511
  %v695 = vpack.c.b16 %v514, %v513
  %v696 = vpack.c.b16 %v516, %v515
  %v697 = vpack.c.b16 %v518, %v517
  %v698 = vpack.c.b16 %v520, %v519
  %v699 = vpack.c.b16 %v522, %v521
  %v700 = vpack.c.b16 %v524, %v523
  %v701 = vpack.c.b16 %v526, %v525
  %v702 = vpack.c.b16 %v528, %v527
  %v703 = vpack.c.b16 %v530, %v529
  %v704 = vpack.c.b16 %v532, %v531
  %v705 = vpack.c.b16 %v534, %v533
  %v706 = vpack.c.b16 %v536, %v535
  %v707 = vpack.c.b16 %v538, %v537
  %v708 = vpack.c.b16 %v540, %v539
  %v709 = vpack.c.b16 %v542, %v541
  %v710 = vpack.c.b16 %v544, %v543
  %v711 = vpack.c.b16 %v546, %v545
  %v712 = vpack.c.b16 %v548, %v547
  %v713 = vpack.c.b16 %v550, %v549
  %v714 = vpack.c.b16 %v552, %v551
  %v715 = vpack.c.b16 %v554, %v553
  %v716 = vpack.c.b16 %v556, %v555
  %v717 = vpack.c.b16 %v558, %v557
  %v718 = vpack.c.b16 %v560, %v559
  %v719 = vpack.c.b16 %v562, %v561
  %v720 = vpack.c.b16 %v564, %v563
  %v721 = vpack.c.b16 %v566, %v565
  %v722 = vpack.c.b16 %v568, %v567
  %v723 = vpack.c.b16 %v570, %v569
  %v724 = vpack.c.b16 %v572, %v571
  %v725 = vpack.c.b16 %v574, %v573
  %v726 = vpack.c.b16 %v576, %v575
  %v727 = vpack.c.b16 %v578, %v577
  %v728 = vpack.c.b16 %v580, %v579
  %v729 = vpack.c.b16 %v582, %v581
  %v730 = vpack.c.b16 %v584, %v583
  %v731 = vpack.c.b16 %v586, %v585
  %v732 = vpack.c.b16 %v588, %v587
  %v733 = vpack.c.b16 %v590, %v589
  %v734 = vpack.c.b16 %v592, %v591
  %v735 = vpack.c.b16 %v594, %v593
  %v736 = vpack.c.b16 %v596, %v595
  %v737 = vpack.c.b16 %v598, %v597
  %v738 = vpack.c.b16 %v600, %v599
  %v739 = vpack.c.b16 %v602, %v601
  %v740 = vpack.c.b16 %v604, %v603
  %v741 = vpack.c.b16 %v606, %v605
  %v742 = vpack.c.b16 %v608, %v607
  %v743 = vpack.c.b16 %v610, %v609
  %v744 = vpack.c.b16 %v612, %v611
  %v745 = vpack.c.b16 %v614, %v613
  %v746 = vpack.c.b16 %v616, %v615
  %v747 = vpack.c.b16 %v618, %v617
  %v748 = vpack.c.b16 %v620, %v619
  %v749 = vpack.c.b16 %v622, %v621
  %v750 = vpack.c.b16 %v624, %v623
  %v751 = vpack.c.b16 %v626, %v625
  %v752 = vpack.c.b16 %v628, %v627
  %v753 = vpack.c.b16 %v630, %v629
  %v754 = vpack.c.b16 %v632, %v631
  %v755 = vpack.c.b16 %v634, %v633
  %v756 = vpack.c.b16 %v636, %v635
  %v757 = vpack.c.b16 %v638, %v637
  %v758 = vpack.c.b16 %v640, %v639
  %v759 = vpack.c.b16 %v642, %v641
  %v760 = vpack.c.b16 %v644, %v643
  %v761 = vpack.c.b16 %v646, %v645
  %v762 = vpack.c.b16 %v648, %v647
  %v763 = vpack.c.b16 %v650, %v649
  %v764 = vpack.c.b16 %v652, %v651
  %v765 = vpack.c.b16 %v654, %v653
  %v766 = vpack.c.b16 %v656, %v655
  %v767 = vpack.c.b16 %v658, %v657
  %v768 = vpack.c.b16 %v660, %v659
  %v769 = vpack.c.b16 %v662, %v661
  %v770 = vpack.c.b16 %v664, %v663
  %v771 = vpack.c.b16 %v666, %v665
  %v772 = vpack.c.b16 %v668, %v667
  %v773 = vpack.c.b16 %v670, %v669
  %v774 = vpack.c.b16 %v672, %v671
  %v775 = vpack.c.b16 %v674, %v673
  %v776 = vpack.c.b16 %v676, %v675
  %v777 = vpack.c.b16 %v678, %v677
  %v778 = vpack.c.b16 %v680, %v679
  %v779 = vpack.c.b16 %v682, %v681
  %v780 = vpack.c.b16 %v684, %v683
  %877 = vmatprep.subr.bf16.mxu0 0
  %878 = vmatpush1.bf16.msra.mxu0 %v685
  %879 = vmatprep.subr.bf16.mxu0 0
  %880 = vmatpush1.bf16.msra.mxu0 %v686
  %881 = vmatprep.subr.bf16.mxu0 0
  %882 = vmatpush1.bf16.msra.mxu0 %v687
  %883 = vmatprep.subr.bf16.mxu0 0
  %884 = vmatpush1.bf16.msra.mxu0 %v688
  %885 = vmatprep.subr.bf16.mxu0 0
  %886 = vmatpush1.bf16.msra.mxu0 %v689
  %887 = vmatprep.subr.bf16.mxu0 0
  %888 = vmatpush1.bf16.msra.mxu0 %v690
  %889 = vmatprep.subr.bf16.mxu0 0
  %890 = vmatpush1.bf16.msra.mxu0 %v691
  %891 = vmatprep.subr.bf16.mxu0 0
  %892 = vmatpush1.bf16.msra.mxu0 %v692
  %893 = vmatprep.subr.bf16.mxu0 0
  %894 = vmatpush1.bf16.msra.mxu0 %v693
  %895 = vmatprep.subr.bf16.mxu0 0
  %896 = vmatpush1.bf16.msra.mxu0 %v694
  %897 = vmatprep.subr.bf16.mxu0 0
  %898 = vmatpush1.bf16.msra.mxu0 %v695
  %899 = vmatprep.subr.bf16.mxu0 0
  %900 = vmatpush1.bf16.msra.mxu0 %v696
  %901 = vmatprep.subr.bf16.mxu0 0
  %902 = vmatpush1.bf16.msra.mxu0 %v697
  %903 = vmatprep.subr.bf16.mxu0 0
  %904 = vmatpush1.bf16.msra.mxu0 %v698
  %905 = vmatprep.subr.bf16.mxu0 0
  %906 = vmatpush1.bf16.msra.mxu0 %v699
  %907 = vmatprep.subr.bf16.mxu0 0
  %908 = vmatpush1.bf16.msra.mxu0 %v700
  %909 = vmatprep.mubr.bf16.mxu0 %v91
  %910 = vmatmul.mubr.bf16.gmra.mrb[0].mxu0 %v90
  %v911 = vpop.f32.mrb[0].mxu0
  %v912 = vadd.f32 %v299, %v911
  %v913 = vpop.f32.mrb[0].mxu0
  %v914 = vpop.f32.mrb[0].mxu0
  %v915 = vpop.f32.mrb[0].mxu0
  %916 = vdwg.mxu0
  %917 = vmatprep.subr.bf16.mxu0 0
  %918 = vmatpush1.bf16.msra.mxu0 %v701
  %919 = vmatprep.subr.bf16.mxu0 0
  %920 = vmatpush1.bf16.msra.mxu0 %v702
  %921 = vmatprep.subr.bf16.mxu0 0
  %922 = vmatpush1.bf16.msra.mxu0 %v703
  %923 = vmatprep.subr.bf16.mxu0 0
  %924 = vmatpush1.bf16.msra.mxu0 %v704
  %925 = vmatprep.subr.bf16.mxu0 0
  %926 = vmatpush1.bf16.msra.mxu0 %v705
  %927 = vmatprep.subr.bf16.mxu0 0
  %928 = vmatpush1.bf16.msra.mxu0 %v706
  %929 = vmatprep.subr.bf16.mxu0 0
  %930 = vmatpush1.bf16.msra.mxu0 %v707
  %931 = vmatprep.subr.bf16.mxu0 0
  %932 = vmatpush1.bf16.msra.mxu0 %v708
  %933 = vmatprep.subr.bf16.mxu0 0
  %934 = vmatpush1.bf16.msra.mxu0 %v709
  %935 = vmatprep.subr.bf16.mxu0 0
  %936 = vmatpush1.bf16.msra.mxu0 %v710
  %937 = vmatprep.subr.bf16.mxu0 0
  %938 = vmatpush1.bf16.msra.mxu0 %v711
  %939 = vmatprep.subr.bf16.mxu0 0
  %940 = vmatpush1.bf16.msra.mxu0 %v712
  %941 = vmatprep.subr.bf16.mxu0 0
  %942 = vmatpush1.bf16.msra.mxu0 %v713
  %943 = vmatprep.subr.bf16.mxu0 0
  %944 = vmatpush1.bf16.msra.mxu0 %v714
  %945 = vmatprep.subr.bf16.mxu0 0
  %946 = vmatpush1.bf16.msra.mxu0 %v715
  %947 = vmatprep.subr.bf16.mxu0 0
  %948 = vmatpush1.bf16.msra.mxu0 %v716
  %949 = vmatprep.mubr.bf16.mxu0 %v93
  %950 = vmatmul.mubr.bf16.gmra.mrb[0].mxu0 %v92
  %v951 = vpop.f32.mrb[0].mxu0
  %v952 = vadd.f32 %v912, %v951
  %v953 = vpop.f32.mrb[0].mxu0
  %v954 = vpop.f32.mrb[0].mxu0
  %v955 = vpop.f32.mrb[0].mxu0
  %956 = vdwg.mxu0
  %957 = vmatprep.subr.bf16.mxu0 0
  %958 = vmatpush1.bf16.msra.mxu0 %v717
  %959 = vmatprep.subr.bf16.mxu0 0
  %960 = vmatpush1.bf16.msra.mxu0 %v718
  %961 = vmatprep.subr.bf16.mxu0 0
  %962 = vmatpush1.bf16.msra.mxu0 %v719
  %963 = vmatprep.subr.bf16.mxu0 0
  %964 = vmatpush1.bf16.msra.mxu0 %v720
  %965 = vmatprep.subr.bf16.mxu0 0
  %966 = vmatpush1.bf16.msra.mxu0 %v721
  %967 = vmatprep.subr.bf16.mxu0 0
  %968 = vmatpush1.bf16.msra.mxu0 %v722
  %969 = vmatprep.subr.bf16.mxu0 0
  %970 = vmatpush1.bf16.msra.mxu0 %v723
  %971 = vmatprep.subr.bf16.mxu0 0
  %972 = vmatpush1.bf16.msra.mxu0 %v724
  %973 = vmatprep.subr.bf16.mxu0 0
  %974 = vmatpush1.bf16.msra.mxu0 %v725
  %975 = vmatprep.subr.bf16.mxu0 0
  %976 = vmatpush1.bf16.msra.mxu0 %v726
  %977 = vmatprep.subr.bf16.mxu0 0
  %978 = vmatpush1.bf16.msra.mxu0 %v727
  %979 = vmatprep.subr.bf16.mxu0 0
  %980 = vmatpush1.bf16.msra.mxu0 %v728
  %981 = vmatprep.subr.bf16.mxu0 0
  %982 = vmatpush1.bf16.msra.mxu0 %v729
  %983 = vmatprep.subr.bf16.mxu0 0
  %984 = vmatpush1.bf16.msra.mxu0 %v730
  %985 = vmatprep.subr.bf16.mxu0 0
  %986 = vmatpush1.bf16.msra.mxu0 %v731
  %987 = vmatprep.subr.bf16.mxu0 0
  %988 = vmatpush1.bf16.msra.mxu0 %v732
  %989 = vmatprep.mubr.bf16.mxu0 %v95
  %990 = vmatmul.mubr.bf16.gmra.mrb[0].mxu0 %v94
  %v991 = vpop.f32.mrb[0].mxu0
  %v992 = vadd.f32 %v952, %v991
  %v993 = vpop.f32.mrb[0].mxu0
  %v994 = vpop.f32.mrb[0].mxu0
  %v995 = vpop.f32.mrb[0].mxu0
  %996 = vdwg.mxu0
  %997 = vmatprep.subr.bf16.mxu0 0
  %998 = vmatpush1.bf16.msra.mxu0 %v733
  %999 = vmatprep.subr.bf16.mxu0 0
  %1000 = vmatpush1.bf16.msra.mxu0 %v734
  %1001 = vmatprep.subr.bf16.mxu0 0
  %1002 = vmatpush1.bf16.msra.mxu0 %v735
  %1003 = vmatprep.subr.bf16.mxu0 0
  %1004 = vmatpush1.bf16.msra.mxu0 %v736
  %1005 = vmatprep.subr.bf16.mxu0 0
  %1006 = vmatpush1.bf16.msra.mxu0 %v737
  %1007 = vmatprep.subr.bf16.mxu0 0
  %1008 = vmatpush1.bf16.msra.mxu0 %v738
  %1009 = vmatprep.subr.bf16.mxu0 0
  %1010 = vmatpush1.bf16.msra.mxu0 %v739
  %1011 = vmatprep.subr.bf16.mxu0 0
  %1012 = vmatpush1.bf16.msra.mxu0 %v740
  %1013 = vmatprep.subr.bf16.mxu0 0
  %1014 = vmatpush1.bf16.msra.mxu0 %v741
  %1015 = vmatprep.subr.bf16.mxu0 0
  %1016 = vmatpush1.bf16.msra.mxu0 %v742
  %1017 = vmatprep.subr.bf16.mxu0 0
  %1018 = vmatpush1.bf16.msra.mxu0 %v743
  %1019 = vmatprep.subr.bf16.mxu0 0
  %1020 = vmatpush1.bf16.msra.mxu0 %v744
  %1021 = vmatprep.subr.bf16.mxu0 0
  %1022 = vmatpush1.bf16.msra.mxu0 %v745
  %1023 = vmatprep.subr.bf16.mxu0 0
  %1024 = vmatpush1.bf16.msra.mxu0 %v746
  %1025 = vmatprep.subr.bf16.mxu0 0
  %1026 = vmatpush1.bf16.msra.mxu0 %v747
  %1027 = vmatprep.subr.bf16.mxu0 0
  %1028 = vmatpush1.bf16.msra.mxu0 %v748
  %1029 = vmatprep.mubr.bf16.mxu0 %v97
  %1030 = vmatmul.mubr.bf16.gmra.mrb[0].mxu0 %v96
  %v1031 = vpop.f32.mrb[0].mxu0
  %v1032 = vadd.f32 %v992, %v1031
  %v1033 = vpop.f32.mrb[0].mxu0
  %v1034 = vpop.f32.mrb[0].mxu0
  %v1035 = vpop.f32.mrb[0].mxu0
  %1036 = vdwg.mxu0
  %1037 = vmatprep.subr.bf16.mxu0 0
  %1038 = vmatpush1.bf16.msra.mxu0 %v749
  %1039 = vmatprep.subr.bf16.mxu0 0
  %1040 = vmatpush1.bf16.msra.mxu0 %v750
  %1041 = vmatprep.subr.bf16.mxu0 0
  %1042 = vmatpush1.bf16.msra.mxu0 %v751
  %1043 = vmatprep.subr.bf16.mxu0 0
  %1044 = vmatpush1.bf16.msra.mxu0 %v752
  %1045 = vmatprep.subr.bf16.mxu0 0
  %1046 = vmatpush1.bf16.msra.mxu0 %v753
  %1047 = vmatprep.subr.bf16.mxu0 0
  %1048 = vmatpush1.bf16.msra.mxu0 %v754
  %1049 = vmatprep.subr.bf16.mxu0 0
  %1050 = vmatpush1.bf16.msra.mxu0 %v755
  %1051 = vmatprep.subr.bf16.mxu0 0
  %1052 = vmatpush1.bf16.msra.mxu0 %v756
  %1053 = vmatprep.subr.bf16.mxu0 0
  %1054 = vmatpush1.bf16.msra.mxu0 %v757
  %1055 = vmatprep.subr.bf16.mxu0 0
  %1056 = vmatpush1.bf16.msra.mxu0 %v758
  %1057 = vmatprep.subr.bf16.mxu0 0
  %1058 = vmatpush1.bf16.msra.mxu0 %v759
  %1059 = vmatprep.subr.bf16.mxu0 0
  %1060 = vmatpush1.bf16.msra.mxu0 %v760
  %1061 = vmatprep.subr.bf16.mxu0 0
  %1062 = vmatpush1.bf16.msra.mxu0 %v761
  %1063 = vmatprep.subr.bf16.mxu0 0
  %1064 = vmatpush1.bf16.msra.mxu0 %v762
  %1065 = vmatprep.subr.bf16.mxu0 0
  %1066 = vmatpush1.bf16.msra.mxu0 %v763
  %1067 = vmatprep.subr.bf16.mxu0 0
  %1068 = vmatpush1.bf16.msra.mxu0 %v764
  %1069 = vmatprep.mubr.bf16.mxu0 %v99
  %1070 = vmatmul.mubr.bf16.gmra.mrb[0].mxu0 %v98
  %v1071 = vpop.f32.mrb[0].mxu0
  %v1072 = vadd.f32 %v1032, %v1071
  %v1073 = vpop.f32.mrb[0].mxu0
  %v1074 = vpop.f32.mrb[0].mxu0
  %v1075 = vpop.f32.mrb[0].mxu0
  %1076 = vdwg.mxu0
  %1077 = vmatprep.subr.bf16.mxu0 0
  %1078 = vmatpush1.bf16.msra.mxu0 %v765
  %1079 = vmatprep.subr.bf16.mxu0 0
  %1080 = vmatpush1.bf16.msra.mxu0 %v766
  %1081 = vmatprep.subr.bf16.mxu0 0
  %1082 = vmatpush1.bf16.msra.mxu0 %v767
  %1083 = vmatprep.subr.bf16.mxu0 0
  %1084 = vmatpush1.bf16.msra.mxu0 %v768
  %1085 = vmatprep.subr.bf16.mxu0 0
  %1086 = vmatpush1.bf16.msra.mxu0 %v769
  %1087 = vmatprep.subr.bf16.mxu0 0
  %1088 = vmatpush1.bf16.msra.mxu0 %v770
  %1089 = vmatprep.subr.bf16.mxu0 0
  %1090 = vmatpush1.bf16.msra.mxu0 %v771
  %1091 = vmatprep.subr.bf16.mxu0 0
  %1092 = vmatpush1.bf16.msra.mxu0 %v772
  %1093 = vmatprep.subr.bf16.mxu0 0
  %1094 = vmatpush1.bf16.msra.mxu0 %v773
  %1095 = vmatprep.subr.bf16.mxu0 0
  %1096 = vmatpush1.bf16.msra.mxu0 %v774
  %1097 = vmatprep.subr.bf16.mxu0 0
  %1098 = vmatpush1.bf16.msra.mxu0 %v775
  %1099 = vmatprep.subr.bf16.mxu0 0
  %1100 = vmatpush1.bf16.msra.mxu0 %v776
  %1101 = vmatprep.subr.bf16.mxu0 0
  %1102 = vmatpush1.bf16.msra.mxu0 %v777
  %1103 = vmatprep.subr.bf16.mxu0 0
  %1104 = vmatpush1.bf16.msra.mxu0 %v778
  %1105 = vmatprep.subr.bf16.mxu0 0
  %1106 = vmatpush1.bf16.msra.mxu0 %v779
  %1107 = vmatprep.subr.bf16.mxu0 0
  %1108 = vmatpush1.bf16.msra.mxu0 %v780
  %1109 = vmatprep.mubr.bf16.mxu0 %v101
  %1110 = vmatmul.mubr.bf16.gmra.mrb[0].mxu0 %v100
  %v1111 = vpop.f32.mrb[0].mxu0
  %v1112 = vadd.f32 %v1072, %v1111
  %v1113 = vpop.f32.mrb[0].mxu0
  %v1114 = vpop.f32.mrb[0].mxu0
  %v1115 = vpop.f32.mrb[0].mxu0
  %1116 = vdwg.mxu0
  %v1117 = vxor.u32 %v1112, 2147483648
  %v1118 = vmul.f32 %v1117, 1.442695
  %v1119 = vpow.pop %v1118
  %v1120 = vadd.f32 %v1119, 1.0
  %v1121 = vrcp.pop %v1120
  %v1122 = vmul.f32 1.0, %v1121
  %v1123 = vmul.f32 %v1112, %v1122
  %v1124 = vpack.c.bf16 %v1123, %v1123
  %v1125 = vld [vmem:[%s3] sm:$0xff]
  %v1126 = vld [vmem:[%s3 + $0x8] sm:$0xff]
  %v1127 = vld [vmem:[%s3 + $0x10] sm:$0xff]
  %v1128 = vld [vmem:[%s3 + $0x18] sm:$0xff]
  %v1129 = vld [vmem:[%s3 + $0x20] sm:$0xff]
  %v1130 = vld [vmem:[%s3 + $0x28] sm:$0xff]
  %v1131 = vld [vmem:[%s3 + $0x30] sm:$0xff]
  %v1132 = vld [vmem:[%s3 + $0x38] sm:$0xff]
  %v1133 = vld [vmem:[%s3 + $0x40] sm:$0xff]
  %v1134 = vld [vmem:[%s3 + $0x48] sm:$0xff]
  %v1135 = vld [vmem:[%s3 + $0x50] sm:$0xff]
  %v1136 = vld [vmem:[%s3 + $0x58] sm:$0xff]
  %v1137 = vld [vmem:[%s3 + $0x60] sm:$0xff]
  %v1138 = vld [vmem:[%s3 + $0x68] sm:$0xff]
  %v1139 = vld [vmem:[%s3 + $0x70] sm:$0xff]
  %v1140 = vld [vmem:[%s3 + $0x78] sm:$0xff]
  %v1141 = vld [vmem:[%s3 + $0x80] sm:$0xff]
  %v1142 = vld [vmem:[%s3 + $0x88] sm:$0xff]
  %v1143 = vld [vmem:[%s3 + $0x90] sm:$0xff]
  %v1144 = vld [vmem:[%s3 + $0x98] sm:$0xff]
  %v1145 = vld [vmem:[%s3 + $0xa0] sm:$0xff]
  %v1146 = vld [vmem:[%s3 + $0xa8] sm:$0xff]
  %v1147 = vld [vmem:[%s3 + $0xb0] sm:$0xff]
  %v1148 = vld [vmem:[%s3 + $0xb8] sm:$0xff]
  %v1149 = vld [vmem:[%s3 + $0xc0] sm:$0xff]
  %v1150 = vld [vmem:[%s3 + $0xc8] sm:$0xff]
  %v1151 = vld [vmem:[%s3 + $0xd0] sm:$0xff]
  %v1152 = vld [vmem:[%s3 + $0xd8] sm:$0xff]
  %v1153 = vld [vmem:[%s3 + $0xe0] sm:$0xff]
  %v1154 = vld [vmem:[%s3 + $0xe8] sm:$0xff]
  %v1155 = vld [vmem:[%s3 + $0xf0] sm:$0xff]
  %v1156 = vld [vmem:[%s3 + $0xf8] sm:$0xff]
  %v1157 = vld [vmem:[%s3 + $0x100] sm:$0xff]
  %v1158 = vld [vmem:[%s3 + $0x108] sm:$0xff]
  %v1159 = vld [vmem:[%s3 + $0x110] sm:$0xff]
  %v1160 = vld [vmem:[%s3 + $0x118] sm:$0xff]
  %v1161 = vld [vmem:[%s3 + $0x120] sm:$0xff]
  %v1162 = vld [vmem:[%s3 + $0x128] sm:$0xff]
  %v1163 = vld [vmem:[%s3 + $0x130] sm:$0xff]
  %v1164 = vld [vmem:[%s3 + $0x138] sm:$0xff]
  %v1165 = vld [vmem:[%s3 + $0x140] sm:$0xff]
  %v1166 = vld [vmem:[%s3 + $0x148] sm:$0xff]
  %v1167 = vld [vmem:[%s3 + $0x150] sm:$0xff]
  %v1168 = vld [vmem:[%s3 + $0x158] sm:$0xff]
  %v1169 = vld [vmem:[%s3 + $0x160] sm:$0xff]
  %v1170 = vld [vmem:[%s3 + $0x168] sm:$0xff]
  %v1171 = vld [vmem:[%s3 + $0x170] sm:$0xff]
  %v1172 = vld [vmem:[%s3 + $0x178] sm:$0xff]
  %v1173 = vld [vmem:[%s4] sm:$0xff]
  %v1174 = vld [vmem:[%s4 + $0x8] sm:$0xf]
  %v1177 = vlaneseq
  %v1178 = vshrl.u32 %v1177, 7
  %v1179 = vsub.s32 0, %v1178
  %v1180 = vrot.slane %v1173, %v1179
  %v1181 = vlaneseq
  %v1182 = vshrl.u32 %v1181, 7
  %v1183 = vsub.s32 1, %v1182
  %v1184 = vrot.slane %v1173, %v1183
  %v1185 = vlaneseq
  %v1186 = vshrl.u32 %v1185, 7
  %v1187 = vsub.s32 2, %v1186
  %v1188 = vrot.slane %v1173, %v1187
  %v1189 = vlaneseq
  %v1190 = vshrl.u32 %v1189, 7
  %v1191 = vsub.s32 3, %v1190
  %v1192 = vrot.slane %v1173, %v1191
  %v1193 = vlaneseq
  %v1194 = vshrl.u32 %v1193, 7
  %v1195 = vsub.s32 4, %v1194
  %v1196 = vrot.slane %v1173, %v1195
  %v1197 = vlaneseq
  %v1198 = vshrl.u32 %v1197, 7
  %v1199 = vsub.s32 5, %v1198
  %v1200 = vrot.slane %v1173, %v1199
  %v1201 = vlaneseq
  %v1202 = vshrl.u32 %v1201, 7
  %v1203 = vsub.s32 6, %v1202
  %v1204 = vrot.slane %v1173, %v1203
  %v1205 = vlaneseq
  %v1206 = vshrl.u32 %v1205, 7
  %v1207 = vsub.s32 7, %v1206
  %v1208 = vrot.slane %v1173, %v1207
  %v1209 = vlaneseq
  %v1210 = vshrl.u32 %v1209, 7
  %v1211 = vsub.s32 0, %v1210
  %v1212 = vrot.slane %v1174, %v1211
  %v1213 = vlaneseq
  %v1214 = vshrl.u32 %v1213, 7
  %v1215 = vsub.s32 1, %v1214
  %v1216 = vrot.slane %v1174, %v1215
  %v1217 = vlaneseq
  %v1218 = vshrl.u32 %v1217, 7
  %v1219 = vsub.s32 2, %v1218
  %v1220 = vrot.slane %v1174, %v1219
  %v1221 = vlaneseq
  %v1222 = vshrl.u32 %v1221, 7
  %v1223 = vsub.s32 3, %v1222
  %v1224 = vrot.slane %v1174, %v1223
  %v1285 = vunpack.c.l.b16 %v1125
  %v1286 = vunpack.c.h.b16 %v1125
  %v1287 = vunpack.c.l.b16 %v1126
  %v1288 = vunpack.c.h.b16 %v1126
  %v1289 = vunpack.c.l.b16 %v1127
  %v1290 = vunpack.c.h.b16 %v1127
  %v1291 = vunpack.c.l.b16 %v1128
  %v1292 = vunpack.c.h.b16 %v1128
  %v1293 = vunpack.c.l.b16 %v1129
  %v1294 = vunpack.c.h.b16 %v1129
  %v1295 = vunpack.c.l.b16 %v1130
  %v1296 = vunpack.c.h.b16 %v1130
  %v1297 = vunpack.c.l.b16 %v1131
  %v1298 = vunpack.c.h.b16 %v1131
  %v1299 = vunpack.c.l.b16 %v1132
  %v1300 = vunpack.c.h.b16 %v1132
  %v1301 = vunpack.c.l.b16 %v1133
  %v1302 = vunpack.c.h.b16 %v1133
  %v1303 = vunpack.c.l.b16 %v1134
  %v1304 = vunpack.c.h.b16 %v1134
  %v1305 = vunpack.c.l.b16 %v1135
  %v1306 = vunpack.c.h.b16 %v1135
  %v1307 = vunpack.c.l.b16 %v1136
  %v1308 = vunpack.c.h.b16 %v1136
  %v1309 = vunpack.c.l.b16 %v1137
  %v1310 = vunpack.c.h.b16 %v1137
  %v1311 = vunpack.c.l.b16 %v1138
  %v1312 = vunpack.c.h.b16 %v1138
  %v1313 = vunpack.c.l.b16 %v1139
  %v1314 = vunpack.c.h.b16 %v1139
  %v1315 = vunpack.c.l.b16 %v1140
  %v1316 = vunpack.c.h.b16 %v1140
  %v1317 = vunpack.c.l.b16 %v1141
  %v1318 = vunpack.c.h.b16 %v1141
  %v1319 = vunpack.c.l.b16 %v1142
  %v1320 = vunpack.c.h.b16 %v1142
  %v1321 = vunpack.c.l.b16 %v1143
  %v1322 = vunpack.c.h.b16 %v1143
  %v1323 = vunpack.c.l.b16 %v1144
  %v1324 = vunpack.c.h.b16 %v1144
  %v1325 = vunpack.c.l.b16 %v1145
  %v1326 = vunpack.c.h.b16 %v1145
  %v1327 = vunpack.c.l.b16 %v1146
  %v1328 = vunpack.c.h.b16 %v1146
  %v1329 = vunpack.c.l.b16 %v1147
  %v1330 = vunpack.c.h.b16 %v1147
  %v1331 = vunpack.c.l.b16 %v1148
  %v1332 = vunpack.c.h.b16 %v1148
  %v1333 = vunpack.c.l.b16 %v1149
  %v1334 = vunpack.c.h.b16 %v1149
  %v1335 = vunpack.c.l.b16 %v1150
  %v1336 = vunpack.c.h.b16 %v1150
  %v1337 = vunpack.c.l.b16 %v1151
  %v1338 = vunpack.c.h.b16 %v1151
  %v1339 = vunpack.c.l.b16 %v1152
  %v1340 = vunpack.c.h.b16 %v1152
  %v1341 = vunpack.c.l.b16 %v1153
  %v1342 = vunpack.c.h.b16 %v1153
  %v1343 = vunpack.c.l.b16 %v1154
  %v1344 = vunpack.c.h.b16 %v1154
  %v1345 = vunpack.c.l.b16 %v1155
  %v1346 = vunpack.c.h.b16 %v1155
  %v1347 = vunpack.c.l.b16 %v1156
  %v1348 = vunpack.c.h.b16 %v1156
  %v1349 = vunpack.c.l.b16 %v1157
  %v1350 = vunpack.c.h.b16 %v1157
  %v1351 = vunpack.c.l.b16 %v1158
  %v1352 = vunpack.c.h.b16 %v1158
  %v1353 = vunpack.c.l.b16 %v1159
  %v1354 = vunpack.c.h.b16 %v1159
  %v1355 = vunpack.c.l.b16 %v1160
  %v1356 = vunpack.c.h.b16 %v1160
  %v1357 = vunpack.c.l.b16 %v1161
  %v1358 = vunpack.c.h.b16 %v1161
  %v1359 = vunpack.c.l.b16 %v1162
  %v1360 = vunpack.c.h.b16 %v1162
  %v1361 = vunpack.c.l.b16 %v1163
  %v1362 = vunpack.c.h.b16 %v1163
  %v1363 = vunpack.c.l.b16 %v1164
  %v1364 = vunpack.c.h.b16 %v1164
  %v1365 = vunpack.c.l.b16 %v1165
  %v1366 = vunpack.c.h.b16 %v1165
  %v1367 = vunpack.c.l.b16 %v1166
  %v1368 = vunpack.c.h.b16 %v1166
  %v1369 = vunpack.c.l.b16 %v1167
  %v1370 = vunpack.c.h.b16 %v1167
  %v1371 = vunpack.c.l.b16 %v1168
  %v1372 = vunpack.c.h.b16 %v1168
  %v1373 = vunpack.c.l.b16 %v1169
  %v1374 = vunpack.c.h.b16 %v1169
  %v1375 = vunpack.c.l.b16 %v1170
  %v1376 = vunpack.c.h.b16 %v1170
  %v1377 = vunpack.c.l.b16 %v1171
  %v1378 = vunpack.c.h.b16 %v1171
  %v1379 = vunpack.c.l.b16 %v1172
  %v1380 = vunpack.c.h.b16 %v1172
  %v1381 = vpack.c.b16 %v1297, %v1285
  %v1382 = vpack.c.b16 %v1298, %v1286
  %v1383 = vpack.c.b16 %v1299, %v1287
  %v1384 = vpack.c.b16 %v1300, %v1288
  %v1385 = vpack.c.b16 %v1301, %v1289
  %v1386 = vpack.c.b16 %v1302, %v1290
  %v1387 = vpack.c.b16 %v1303, %v1291
  %v1388 = vpack.c.b16 %v1304, %v1292
  %v1389 = vpack.c.b16 %v1305, %v1293
  %v1390 = vpack.c.b16 %v1306, %v1294
  %v1391 = vpack.c.b16 %v1307, %v1295
  %v1392 = vpack.c.b16 %v1308, %v1296
  %v1393 = vpack.c.b16 %v1321, %v1309
  %v1394 = vpack.c.b16 %v1322, %v1310
  %v1395 = vpack.c.b16 %v1323, %v1311
  %v1396 = vpack.c.b16 %v1324, %v1312
  %v1397 = vpack.c.b16 %v1325, %v1313
  %v1398 = vpack.c.b16 %v1326, %v1314
  %v1399 = vpack.c.b16 %v1327, %v1315
  %v1400 = vpack.c.b16 %v1328, %v1316
  %v1401 = vpack.c.b16 %v1329, %v1317
  %v1402 = vpack.c.b16 %v1330, %v1318
  %v1403 = vpack.c.b16 %v1331, %v1319
  %v1404 = vpack.c.b16 %v1332, %v1320
  %v1405 = vpack.c.b16 %v1345, %v1333
  %v1406 = vpack.c.b16 %v1346, %v1334
  %v1407 = vpack.c.b16 %v1347, %v1335
  %v1408 = vpack.c.b16 %v1348, %v1336
  %v1409 = vpack.c.b16 %v1349, %v1337
  %v1410 = vpack.c.b16 %v1350, %v1338
  %v1411 = vpack.c.b16 %v1351, %v1339
  %v1412 = vpack.c.b16 %v1352, %v1340
  %v1413 = vpack.c.b16 %v1353, %v1341
  %v1414 = vpack.c.b16 %v1354, %v1342
  %v1415 = vpack.c.b16 %v1355, %v1343
  %v1416 = vpack.c.b16 %v1356, %v1344
  %v1417 = vpack.c.b16 %v1369, %v1357
  %v1418 = vpack.c.b16 %v1370, %v1358
  %v1419 = vpack.c.b16 %v1371, %v1359
  %v1420 = vpack.c.b16 %v1372, %v1360
  %v1421 = vpack.c.b16 %v1373, %v1361
  %v1422 = vpack.c.b16 %v1374, %v1362
  %v1423 = vpack.c.b16 %v1375, %v1363
  %v1424 = vpack.c.b16 %v1376, %v1364
  %v1425 = vpack.c.b16 %v1377, %v1365
  %v1426 = vpack.c.b16 %v1378, %v1366
  %v1427 = vpack.c.b16 %v1379, %v1367
  %v1428 = vpack.c.b16 %v1380, %v1368
  %vm1477 = vcmask 523264
  %v1479 = vsel %vm1477, %v1124, 0
  %1481 = vmatprep.subr.bf16.mxu0 %v1382
  %1482 = vmatpush1.bf16.msra.mxu0 %v1381
  %1483 = vmatprep.subr.bf16.mxu0 %v1394
  %1484 = vmatpush1.bf16.msra.mxu0 %v1393
  %1485 = vmatprep.subr.bf16.mxu0 %v1406
  %1486 = vmatpush1.bf16.msra.mxu0 %v1405
  %1487 = vmatprep.subr.bf16.mxu0 %v1418
  %1488 = vmatpush1.bf16.msra.mxu0 %v1417
  %1489 = vmatprep.subr.bf16.mxu0 0
  %1490 = vmatpush1.bf16.msra.mxu0 0
  %1491 = vmatprep.subr.bf16.mxu0 0
  %1492 = vmatpush1.bf16.msra.mxu0 0
  %1493 = vmatprep.subr.bf16.mxu0 0
  %1494 = vmatpush1.bf16.msra.mxu0 0
  %1495 = vmatprep.subr.bf16.mxu0 0
  %1496 = vmatpush1.bf16.msra.mxu0 0
  %1497 = vmatprep.subr.bf16.mxu0 0
  %1498 = vmatpush1.bf16.msra.mxu0 0
  %1499 = vmatprep.subr.bf16.mxu0 0
  %1500 = vmatpush1.bf16.msra.mxu0 0
  %1501 = vmatprep.subr.bf16.mxu0 0
  %1502 = vmatpush1.bf16.msra.mxu0 0
  %1503 = vmatprep.subr.bf16.mxu0 0
  %1504 = vmatpush1.bf16.msra.mxu0 0
  %1505 = vmatprep.subr.bf16.mxu0 0
  %1506 = vmatpush1.bf16.msra.mxu0 0
  %1507 = vmatprep.subr.bf16.mxu0 0
  %1508 = vmatpush1.bf16.msra.mxu0 0
  %1509 = vmatprep.subr.bf16.mxu0 0
  %1510 = vmatpush1.bf16.msra.mxu0 0
  %1511 = vmatprep.subr.bf16.mxu0 0
  %1512 = vmatpush1.bf16.msra.mxu0 0
  %1513 = vmatprep.mubr.bf16.mxu0 0
  %1514 = vmatmul.mubr.bf16.gmra.mrb[0].mxu0 %v1479
  %v1515 = vpop.f32.mrb[0].mxu0
  %v1516 = vadd.f32 %v1180, %v1515
  %v1517 = vpop.f32.mrb[0].mxu0
  %v1518 = vadd.f32 %v1184, %v1517
  %v1519 = vpop.f32.mrb[0].mxu0
  %v1520 = vpop.f32.mrb[0].mxu0
  %1521 = vdwg.mxu0
  %1522 = vmatprep.subr.bf16.mxu0 %v1384
  %1523 = vmatpush1.bf16.msra.mxu0 %v1383
  %1524 = vmatprep.subr.bf16.mxu0 %v1396
  %1525 = vmatpush1.bf16.msra.mxu0 %v1395
  %1526 = vmatprep.subr.bf16.mxu0 %v1408
  %1527 = vmatpush1.bf16.msra.mxu0 %v1407
  %1528 = vmatprep.subr.bf16.mxu0 %v1420
  %1529 = vmatpush1.bf16.msra.mxu0 %v1419
  %1530 = vmatprep.subr.bf16.mxu0 0
  %1531 = vmatpush1.bf16.msra.mxu0 0
  %1532 = vmatprep.subr.bf16.mxu0 0
  %1533 = vmatpush1.bf16.msra.mxu0 0
  %1534 = vmatprep.subr.bf16.mxu0 0
  %1535 = vmatpush1.bf16.msra.mxu0 0
  %1536 = vmatprep.subr.bf16.mxu0 0
  %1537 = vmatpush1.bf16.msra.mxu0 0
  %1538 = vmatprep.subr.bf16.mxu0 0
  %1539 = vmatpush1.bf16.msra.mxu0 0
  %1540 = vmatprep.subr.bf16.mxu0 0
  %1541 = vmatpush1.bf16.msra.mxu0 0
  %1542 = vmatprep.subr.bf16.mxu0 0
  %1543 = vmatpush1.bf16.msra.mxu0 0
  %1544 = vmatprep.subr.bf16.mxu0 0
  %1545 = vmatpush1.bf16.msra.mxu0 0
  %1546 = vmatprep.subr.bf16.mxu0 0
  %1547 = vmatpush1.bf16.msra.mxu0 0
  %1548 = vmatprep.subr.bf16.mxu0 0
  %1549 = vmatpush1.bf16.msra.mxu0 0
  %1550 = vmatprep.subr.bf16.mxu0 0
  %1551 = vmatpush1.bf16.msra.mxu0 0
  %1552 = vmatprep.subr.bf16.mxu0 0
  %1553 = vmatpush1.bf16.msra.mxu0 0
  %1554 = vmatprep.mubr.bf16.mxu0 0
  %1555 = vmatmul.mubr.bf16.gmra.mrb[0].mxu0 %v1479
  %v1556 = vpop.f32.mrb[0].mxu0
  %v1557 = vadd.f32 %v1188, %v1556
  %v1558 = vpop.f32.mrb[0].mxu0
  %v1559 = vadd.f32 %v1192, %v1558
  %v1560 = vpop.f32.mrb[0].mxu0
  %v1561 = vpop.f32.mrb[0].mxu0
  %1562 = vdwg.mxu0
  %1563 = vmatprep.subr.bf16.mxu0 %v1386
  %1564 = vmatpush1.bf16.msra.mxu0 %v1385
  %1565 = vmatprep.subr.bf16.mxu0 %v1398
  %1566 = vmatpush1.bf16.msra.mxu0 %v1397
  %1567 = vmatprep.subr.bf16.mxu0 %v1410
  %1568 = vmatpush1.bf16.msra.mxu0 %v1409
  %1569 = vmatprep.subr.bf16.mxu0 %v1422
  %1570 = vmatpush1.bf16.msra.mxu0 %v1421
  %1571 = vmatprep.subr.bf16.mxu0 0
  %1572 = vmatpush1.bf16.msra.mxu0 0
  %1573 = vmatprep.subr.bf16.mxu0 0
  %1574 = vmatpush1.bf16.msra.mxu0 0
  %1575 = vmatprep.subr.bf16.mxu0 0
  %1576 = vmatpush1.bf16.msra.mxu0 0
  %1577 = vmatprep.subr.bf16.mxu0 0
  %1578 = vmatpush1.bf16.msra.mxu0 0
  %1579 = vmatprep.subr.bf16.mxu0 0
  %1580 = vmatpush1.bf16.msra.mxu0 0
  %1581 = vmatprep.subr.bf16.mxu0 0
  %1582 = vmatpush1.bf16.msra.mxu0 0
  %1583 = vmatprep.subr.bf16.mxu0 0
  %1584 = vmatpush1.bf16.msra.mxu0 0
  %1585 = vmatprep.subr.bf16.mxu0 0
  %1586 = vmatpush1.bf16.msra.mxu0 0
  %1587 = vmatprep.subr.bf16.mxu0 0
  %1588 = vmatpush1.bf16.msra.mxu0 0
  %1589 = vmatprep.subr.bf16.mxu0 0
  %1590 = vmatpush1.bf16.msra.mxu0 0
  %1591 = vmatprep.subr.bf16.mxu0 0
  %1592 = vmatpush1.bf16.msra.mxu0 0
  %1593 = vmatprep.subr.bf16.mxu0 0
  %1594 = vmatpush1.bf16.msra.mxu0 0
  %1595 = vmatprep.mubr.bf16.mxu0 0
  %1596 = vmatmul.mubr.bf16.gmra.mrb[0].mxu0 %v1479
  %v1597 = vpop.f32.mrb[0].mxu0
  %v1598 = vadd.f32 %v1196, %v1597
  %v1599 = vpop.f32.mrb[0].mxu0
  %v1600 = vadd.f32 %v1200, %v1599
  %v1601 = vpop.f32.mrb[0].mxu0
  %v1602 = vpop.f32.mrb[0].mxu0
  %1603 = vdwg.mxu0
  %1604 = vmatprep.subr.bf16.mxu0 %v1388
  %1605 = vmatpush1.bf16.msra.mxu0 %v1387
  %1606 = vmatprep.subr.bf16.mxu0 %v1400
  %1607 = vmatpush1.bf16.msra.mxu0 %v1399
  %1608 = vmatprep.subr.bf16.mxu0 %v1412
  %1609 = vmatpush1.bf16.msra.mxu0 %v1411
  %1610 = vmatprep.subr.bf16.mxu0 %v1424
  %1611 = vmatpush1.bf16.msra.mxu0 %v1423
  %1612 = vmatprep.subr.bf16.mxu0 0
  %1613 = vmatpush1.bf16.msra.mxu0 0
  %1614 = vmatprep.subr.bf16.mxu0 0
  %1615 = vmatpush1.bf16.msra.mxu0 0
  %1616 = vmatprep.subr.bf16.mxu0 0
  %1617 = vmatpush1.bf16.msra.mxu0 0
  %1618 = vmatprep.subr.bf16.mxu0 0
  %1619 = vmatpush1.bf16.msra.mxu0 0
  %1620 = vmatprep.subr.bf16.mxu0 0
  %1621 = vmatpush1.bf16.msra.mxu0 0
  %1622 = vmatprep.subr.bf16.mxu0 0
  %1623 = vmatpush1.bf16.msra.mxu0 0
  %1624 = vmatprep.subr.bf16.mxu0 0
  %1625 = vmatpush1.bf16.msra.mxu0 0
  %1626 = vmatprep.subr.bf16.mxu0 0
  %1627 = vmatpush1.bf16.msra.mxu0 0
  %1628 = vmatprep.subr.bf16.mxu0 0
  %1629 = vmatpush1.bf16.msra.mxu0 0
  %1630 = vmatprep.subr.bf16.mxu0 0
  %1631 = vmatpush1.bf16.msra.mxu0 0
  %1632 = vmatprep.subr.bf16.mxu0 0
  %1633 = vmatpush1.bf16.msra.mxu0 0
  %1634 = vmatprep.subr.bf16.mxu0 0
  %1635 = vmatpush1.bf16.msra.mxu0 0
  %1636 = vmatprep.mubr.bf16.mxu0 0
  %1637 = vmatmul.mubr.bf16.gmra.mrb[0].mxu0 %v1479
  %v1638 = vpop.f32.mrb[0].mxu0
  %v1639 = vadd.f32 %v1204, %v1638
  %v1640 = vpop.f32.mrb[0].mxu0
  %v1641 = vadd.f32 %v1208, %v1640
  %v1642 = vpop.f32.mrb[0].mxu0
  %v1643 = vpop.f32.mrb[0].mxu0
  %1644 = vdwg.mxu0
  %1645 = vmatprep.subr.bf16.mxu0 %v1390
  %1646 = vmatpush1.bf16.msra.mxu0 %v1389
  %1647 = vmatprep.subr.bf16.mxu0 %v1402
  %1648 = vmatpush1.bf16.msra.mxu0 %v1401
  %1649 = vmatprep.subr.bf16.mxu0 %v1414
  %1650 = vmatpush1.bf16.msra.mxu0 %v1413
  %1651 = vmatprep.subr.bf16.mxu0 %v1426
  %1652 = vmatpush1.bf16.msra.mxu0 %v1425
  %1653 = vmatprep.subr.bf16.mxu0 0
  %1654 = vmatpush1.bf16.msra.mxu0 0
  %1655 = vmatprep.subr.bf16.mxu0 0
  %1656 = vmatpush1.bf16.msra.mxu0 0
  %1657 = vmatprep.subr.bf16.mxu0 0
  %1658 = vmatpush1.bf16.msra.mxu0 0
  %1659 = vmatprep.subr.bf16.mxu0 0
  %1660 = vmatpush1.bf16.msra.mxu0 0
  %1661 = vmatprep.subr.bf16.mxu0 0
  %1662 = vmatpush1.bf16.msra.mxu0 0
  %1663 = vmatprep.subr.bf16.mxu0 0
  %1664 = vmatpush1.bf16.msra.mxu0 0
  %1665 = vmatprep.subr.bf16.mxu0 0
  %1666 = vmatpush1.bf16.msra.mxu0 0
  %1667 = vmatprep.subr.bf16.mxu0 0
  %1668 = vmatpush1.bf16.msra.mxu0 0
  %1669 = vmatprep.subr.bf16.mxu0 0
  %1670 = vmatpush1.bf16.msra.mxu0 0
  %1671 = vmatprep.subr.bf16.mxu0 0
  %1672 = vmatpush1.bf16.msra.mxu0 0
  %1673 = vmatprep.subr.bf16.mxu0 0
  %1674 = vmatpush1.bf16.msra.mxu0 0
  %1675 = vmatprep.subr.bf16.mxu0 0
  %1676 = vmatpush1.bf16.msra.mxu0 0
  %1677 = vmatprep.mubr.bf16.mxu0 0
  %1678 = vmatmul.mubr.bf16.gmra.mrb[0].mxu0 %v1479
  %v1679 = vpop.f32.mrb[0].mxu0
  %v1680 = vadd.f32 %v1212, %v1679
  %v1681 = vpop.f32.mrb[0].mxu0
  %v1682 = vadd.f32 %v1216, %v1681
  %v1683 = vpop.f32.mrb[0].mxu0
  %v1684 = vpop.f32.mrb[0].mxu0
  %1685 = vdwg.mxu0
  %1686 = vmatprep.subr.bf16.mxu0 %v1392
  %1687 = vmatpush1.bf16.msra.mxu0 %v1391
  %1688 = vmatprep.subr.bf16.mxu0 %v1404
  %1689 = vmatpush1.bf16.msra.mxu0 %v1403
  %1690 = vmatprep.subr.bf16.mxu0 %v1416
  %1691 = vmatpush1.bf16.msra.mxu0 %v1415
  %1692 = vmatprep.subr.bf16.mxu0 %v1428
  %1693 = vmatpush1.bf16.msra.mxu0 %v1427
  %1694 = vmatprep.subr.bf16.mxu0 0
  %1695 = vmatpush1.bf16.msra.mxu0 0
  %1696 = vmatprep.subr.bf16.mxu0 0
  %1697 = vmatpush1.bf16.msra.mxu0 0
  %1698 = vmatprep.subr.bf16.mxu0 0
  %1699 = vmatpush1.bf16.msra.mxu0 0
  %1700 = vmatprep.subr.bf16.mxu0 0
  %1701 = vmatpush1.bf16.msra.mxu0 0
  %1702 = vmatprep.subr.bf16.mxu0 0
  %1703 = vmatpush1.bf16.msra.mxu0 0
  %1704 = vmatprep.subr.bf16.mxu0 0
  %1705 = vmatpush1.bf16.msra.mxu0 0
  %1706 = vmatprep.subr.bf16.mxu0 0
  %1707 = vmatpush1.bf16.msra.mxu0 0
  %1708 = vmatprep.subr.bf16.mxu0 0
  %1709 = vmatpush1.bf16.msra.mxu0 0
  %1710 = vmatprep.subr.bf16.mxu0 0
  %1711 = vmatpush1.bf16.msra.mxu0 0
  %1712 = vmatprep.subr.bf16.mxu0 0
  %1713 = vmatpush1.bf16.msra.mxu0 0
  %1714 = vmatprep.subr.bf16.mxu0 0
  %1715 = vmatpush1.bf16.msra.mxu0 0
  %1716 = vmatprep.subr.bf16.mxu0 0
  %1717 = vmatpush1.bf16.msra.mxu0 0
  %1718 = vmatprep.mubr.bf16.mxu0 0
  %1719 = vmatmul.mubr.bf16.gmra.mrb[0].mxu0 %v1479
  %v1720 = vpop.f32.mrb[0].mxu0
  %v1721 = vadd.f32 %v1220, %v1720
  %v1722 = vpop.f32.mrb[0].mxu0
  %v1723 = vadd.f32 %v1224, %v1722
  %v1724 = vpop.f32.mrb[0].mxu0
  %v1725 = vpop.f32.mrb[0].mxu0
  %1726 = vdwg.mxu0
  %v1727 = vxor.u32 %v1516, 2147483648
  %v1728 = vxor.u32 %v1518, 2147483648
  %v1729 = vxor.u32 %v1557, 2147483648
  %v1730 = vxor.u32 %v1559, 2147483648
  %v1731 = vxor.u32 %v1598, 2147483648
  %v1732 = vxor.u32 %v1600, 2147483648
  %v1733 = vxor.u32 %v1639, 2147483648
  %v1734 = vxor.u32 %v1641, 2147483648
  %v1735 = vxor.u32 %v1680, 2147483648
  %v1736 = vxor.u32 %v1682, 2147483648
  %v1737 = vxor.u32 %v1721, 2147483648
  %v1738 = vxor.u32 %v1723, 2147483648
  %v1739 = vmul.f32 %v1727, 1.442695
  %v1740 = vpow.pop %v1739
  %v1741 = vmul.f32 %v1728, 1.442695
  %v1742 = vpow.pop %v1741
  %v1743 = vmul.f32 %v1729, 1.442695
  %v1744 = vpow.pop %v1743
  %v1745 = vmul.f32 %v1730, 1.442695
  %v1746 = vpow.pop %v1745
  %v1747 = vmul.f32 %v1731, 1.442695
  %v1748 = vpow.pop %v1747
  %v1749 = vmul.f32 %v1732, 1.442695
  %v1750 = vpow.pop %v1749
  %v1751 = vmul.f32 %v1733, 1.442695
  %v1752 = vpow.pop %v1751
  %v1753 = vmul.f32 %v1734, 1.442695
  %v1754 = vpow.pop %v1753
  %v1755 = vmul.f32 %v1735, 1.442695
  %v1756 = vpow.pop %v1755
  %v1757 = vmul.f32 %v1736, 1.442695
  %v1758 = vpow.pop %v1757
  %v1759 = vmul.f32 %v1737, 1.442695
  %v1760 = vpow.pop %v1759
  %v1761 = vmul.f32 %v1738, 1.442695
  %v1762 = vpow.pop %v1761
  %v1763 = vadd.f32 %v1740, 1.0
  %v1764 = vadd.f32 %v1742, 1.0
  %v1765 = vadd.f32 %v1744, 1.0
  %v1766 = vadd.f32 %v1746, 1.0
  %v1767 = vadd.f32 %v1748, 1.0
  %v1768 = vadd.f32 %v1750, 1.0
  %v1769 = vadd.f32 %v1752, 1.0
  %v1770 = vadd.f32 %v1754, 1.0
  %v1771 = vadd.f32 %v1756, 1.0
  %v1772 = vadd.f32 %v1758, 1.0
  %v1773 = vadd.f32 %v1760, 1.0
  %v1774 = vadd.f32 %v1762, 1.0
  %v1775 = vrcp.pop %v1763
  %v1776 = vmul.f32 1.0, %v1775
  %v1777 = vrcp.pop %v1764
  %v1778 = vmul.f32 1.0, %v1777
  %v1779 = vrcp.pop %v1765
  %v1780 = vmul.f32 1.0, %v1779
  %v1781 = vrcp.pop %v1766
  %v1782 = vmul.f32 1.0, %v1781
  %v1783 = vrcp.pop %v1767
  %v1784 = vmul.f32 1.0, %v1783
  %v1785 = vrcp.pop %v1768
  %v1786 = vmul.f32 1.0, %v1785
  %v1787 = vrcp.pop %v1769
  %v1788 = vmul.f32 1.0, %v1787
  %v1789 = vrcp.pop %v1770
  %v1790 = vmul.f32 1.0, %v1789
  %v1791 = vrcp.pop %v1771
  %v1792 = vmul.f32 1.0, %v1791
  %v1793 = vrcp.pop %v1772
  %v1794 = vmul.f32 1.0, %v1793
  %v1795 = vrcp.pop %v1773
  %v1796 = vmul.f32 1.0, %v1795
  %v1797 = vrcp.pop %v1774
  %v1798 = vmul.f32 1.0, %v1797
  %v1811 = vcombine.low %v1776, %v1778
  %v1812 = vcombine.low %v1780, %v1782
  %v1814 = vunpack.c.l.s4 1983009808
  %v1815 = vunpack.c.0.s8 %v1814
  %v1816 = vlaneseq
  %v1817 = vshrl.u32 %v1816, 7
  %v1818 = vsub.s32 %v1815, %v1817
  %v1819 = vrot.slane %v1811, %v1818
  %v1821 = vunpack.c.l.s4 1983009808
  %v1822 = vunpack.c.0.s8 %v1821
  %v1823 = vlaneseq
  %v1824 = vshrl.u32 %v1823, 7
  %v1825 = vsub.s32 %v1822, %v1824
  %v1826 = vrot.slane %v1812, %v1825
  %v1827 = vcombine.low %v1819, %v1826
  %v1828 = vcombine.low %v1784, %v1786
  %v1829 = vcombine.low %v1788, %v1790
  %v1831 = vunpack.c.l.s4 1983009808
  %v1832 = vunpack.c.0.s8 %v1831
  %v1833 = vlaneseq
  %v1834 = vshrl.u32 %v1833, 7
  %v1835 = vsub.s32 %v1832, %v1834
  %v1836 = vrot.slane %v1828, %v1835
  %v1838 = vunpack.c.l.s4 1983009808
  %v1839 = vunpack.c.0.s8 %v1838
  %v1840 = vlaneseq
  %v1841 = vshrl.u32 %v1840, 7
  %v1842 = vsub.s32 %v1839, %v1841
  %v1843 = vrot.slane %v1829, %v1842
  %v1844 = vcombine.low %v1836, %v1843
  %v1845 = vcombine.low %v1792, %v1794
  %v1846 = vcombine.low %v1796, %v1798
  %v1848 = vunpack.c.l.s4 1983009808
  %v1849 = vunpack.c.0.s8 %v1848
  %v1850 = vlaneseq
  %v1851 = vshrl.u32 %v1850, 7
  %v1852 = vsub.s32 %v1849, %v1851
  %v1853 = vrot.slane %v1845, %v1852
  %v1855 = vunpack.c.l.s4 1983009808
  %v1856 = vunpack.c.0.s8 %v1855
  %v1857 = vlaneseq
  %v1858 = vshrl.u32 %v1857, 7
  %v1859 = vsub.s32 %v1856, %v1858
  %v1860 = vrot.slane %v1846, %v1859
  %v1861 = vcombine.low %v1853, %v1860
  %1865 = vst [vmem:[%s5] sm:$0xff] %v1827
  %1866 = vst [vmem:[%s5 + $0x8] sm:$0xff] %v1844
  %1867 = vst [vmem:[%s5 + $0x10] sm:$0xff] %v1861
  // Predicated region
  $region22: #{fph_forward.18} parent=0 // pred_check
    _
  $region23: #{fph_forward.18} parent=0 // pred_check_branch
    %1869 = sbr.rel (0) target = $region25
  $region24: #{fph_forward.18} parent=0 // pred_region
    _
  $region25: #{fph_forward.18} parent=0 // pred_fallthru
    _
  // Predicated region
  $region26: #{fph_forward.18} parent=0 // pred_check
    _
  $region27: #{fph_forward.18} parent=0 // pred_check_branch
    %1871 = sbr.rel (0) target = $region29
  $region28: #{fph_forward.18} parent=0 // pred_region
    _
  $region29: #{fph_forward.18} parent=0 // pred_fallthru
    _

// kernel: fph_forward.19
$region0: #{fph_forward.19}
  #allocation0 [shape = 'u32[]', space=smem, size = 0x4, offset = 0x4, fixed_abs, tag = 'smem constant byte address 0x4 - core index']
  #allocation1 [shape = 'u32[144,128]{1,0:T(1,128)}', space=vmem, size = 0x12000, scoped, tag = 'internal scratch']
  %s0 = inlined_call_operand.vmem [shape: bf16[2,4,1536], index: 0, kind: input, shape index: {}]
  %s1 = inlined_call_operand.vmem [shape: f32[2,1,1536], index: 1, kind: input, shape index: {}]
  %s2 = inlined_call_operand.vmem [shape: bf16[1536,256], index: 2, kind: input, shape index: {}]
  %s3 = inlined_call_operand.vmem [shape: f32[1,256], index: 3, kind: input, shape index: {}]
  %s4 = inlined_call_operand.vmem [shape: f32[1,256], index: 4, kind: input, shape index: {}]
  %s5 = inlined_call_operand.vmem [shape: f32[2,4,256], index: 5, kind: output, shape index: {}]
  %s6 = sld [smem:[#allocation0]]
  $region53: #{fph_forward.19} parent=0
    _
  %s8 = ssub.s32 1, %s6
  %s9 = scalar_select 0, %s8, %s6
  loop: start=0, step=1, limit=4
  $region2: #{fph_forward.19} parent=0 // loop_pre_header
    _
  $region3: #{fph_forward.19} parent=0 // loop_header
    %s11 = sphi 0, %s15
    %p12 = scmp.ge.s32.totalorder %s11, 4
    %s18 = sphi 0, %s30
    %s19 = sphi 0, %s26
    %s20 = sphi 0, %s18
    %s21 = sphi 0, %s19
    %s22 = sphi 0, %s20
    %s23 = sphi 0, %s21
    %s35 = sphi 0, %s37
    %s38 = sphi 0, %s35
    %s39 = sphi 0, %s38
    %s55 = sphi 0, %s39
    %s61 = sphi 0, %s63
    %s64 = sphi 0, %s61
    %s65 = sphi 0, %s64
    %s81 = sphi 0, %s65
    %s85 = sphi 0, %s85
    %s87 = sphi 0, %s85
    %s88 = sphi 0, %s87
    %s102 = sphi 0, %s88
    %s106 = sphi 0, %s106
    %s108 = sphi 0, %s106
    %s109 = sphi 0, %s108
    %s123 = sphi 0, %s109
    %s127 = sphi 0, %s127
    %s129 = sphi 0, %s127
    %s130 = sphi 0, %s129
    %s144 = sphi 0, %s130
    %s152 = sphi 0, %s154
    %s155 = sphi 0, %s152
    %s156 = sphi 0, %s155
    %s172 = sphi 0, %s156
  $region4: #{fph_forward.19} parent=0 // loop_header_branch
    %14 = sbr.rel (%p12) target = $region8
  $region5: #{fph_forward.19} parent=0 // loop_body
    %s16 = ssub.s32 %s11, 1
    %s17 = ssub.s32 %s11, 2
    %s24 = sadd.s32 1, %s19
    %p25 = scmp.ge.s32.totalorder %s24, 1
    %s26 = scalar_select %p25, 0, %s24
    %s27 = sadd.s32 1, %s18
    %s28 = scalar_select %p25, %s27, %s18
    %p29 = scmp.ge.s32.totalorder %s28, 2
    %s30 = scalar_select %p29, 0, %s28
    %s31 = ssub.s32 %s18, %s30
    %s32 = ssub.s32 %s19, %s26
    %s33 = sor.u32 %s31, %s32
    %p34 = scmp.eq.s32.totalorder %s33, 0
    %s36 = sadd.s32 %s35, 1
    %s37 = scalar_select %p34, %s35, %s36
    %p40 = pneg %p34
    %p41 = scmp.eq.s32.totalorder %s11, 1
    %p42 = por %p40, %p41
    %p43 = scmp.ne.s32.totalorder %s35, %s38
    %p44 = scmp.eq.s32.totalorder %s11, 0
    %p45 = por %p43, %p44
    %p46 = scmp.ne.s32.totalorder %s35, %s38
    %p47 = scmp.eq.s32.totalorder %s16, 1
    %p48 = por %p46, %p47
    %p49 = scmp.ne.s32.totalorder %s38, %s39
    %p50 = scmp.eq.s32.totalorder %s16, 0
    %p51 = por %p49, %p50
    %p52 = scmp.ne.s32.totalorder %s38, %s39
    %p53 = scmp.eq.s32.totalorder %s17, 1
    %p54 = por %p52, %p53
    %p56 = scmp.ne.s32.totalorder %s39, %s55
    %p57 = scmp.eq.s32.totalorder %s17, 0
    %p58 = por %p56, %p57
    %s59 = ssub.s32 %s18, %s30
    %p60 = scmp.eq.s32.totalorder %s59, 0
    %s62 = sadd.s32 %s61, 1
    %s63 = scalar_select %p60, %s61, %s62
    %p66 = pneg %p60
    %p67 = scmp.eq.s32.totalorder %s11, 1
    %p68 = por %p66, %p67
    %p69 = scmp.ne.s32.totalorder %s61, %s64
    %p70 = scmp.eq.s32.totalorder %s11, 0
    %p71 = por %p69, %p70
    %p72 = scmp.ne.s32.totalorder %s61, %s64
    %p73 = scmp.eq.s32.totalorder %s16, 1
    %p74 = por %p72, %p73
    %p75 = scmp.ne.s32.totalorder %s64, %s65
    %p76 = scmp.eq.s32.totalorder %s16, 0
    %p77 = por %p75, %p76
    %p78 = scmp.ne.s32.totalorder %s64, %s65
    %p79 = scmp.eq.s32.totalorder %s17, 1
    %p80 = por %p78, %p79
    %p82 = scmp.ne.s32.totalorder %s65, %s81
    %p83 = scmp.eq.s32.totalorder %s17, 0
    %p84 = por %p82, %p83
    %s86 = sadd.s32 %s85, 1
    %p89 = scmp.eq.s32.totalorder %s11, 1
    %p90 = scmp.ne.s32.totalorder %s85, %s87
    %p91 = scmp.eq.s32.totalorder %s11, 0
    %p92 = por %p90, %p91
    %p93 = scmp.ne.s32.totalorder %s85, %s87
    %p94 = scmp.eq.s32.totalorder %s16, 1
    %p95 = por %p93, %p94
    %p96 = scmp.ne.s32.totalorder %s87, %s88
    %p97 = scmp.eq.s32.totalorder %s16, 0
    %p98 = por %p96, %p97
    %p99 = scmp.ne.s32.totalorder %s87, %s88
    %p100 = scmp.eq.s32.totalorder %s17, 1
    %p101 = por %p99, %p100
    %p103 = scmp.ne.s32.totalorder %s88, %s102
    %p104 = scmp.eq.s32.totalorder %s17, 0
    %p105 = por %p103, %p104
    %s107 = sadd.s32 %s106, 1
    %p110 = scmp.eq.s32.totalorder %s11, 1
    %p111 = scmp.ne.s32.totalorder %s106, %s108
    %p112 = scmp.eq.s32.totalorder %s11, 0
    %p113 = por %p111, %p112
    %p114 = scmp.ne.s32.totalorder %s106, %s108
    %p115 = scmp.eq.s32.totalorder %s16, 1
    %p116 = por %p114, %p115
    %p117 = scmp.ne.s32.totalorder %s108, %s109
    %p118 = scmp.eq.s32.totalorder %s16, 0
    %p119 = por %p117, %p118
    %p120 = scmp.ne.s32.totalorder %s108, %s109
    %p121 = scmp.eq.s32.totalorder %s17, 1
    %p122 = por %p120, %p121
    %p124 = scmp.ne.s32.totalorder %s109, %s123
    %p125 = scmp.eq.s32.totalorder %s17, 0
    %p126 = por %p124, %p125
    %s128 = sadd.s32 %s127, 1
    %p131 = scmp.eq.s32.totalorder %s11, 1
    %p132 = scmp.ne.s32.totalorder %s127, %s129
    %p133 = scmp.eq.s32.totalorder %s11, 0
    %p134 = por %p132, %p133
    %p135 = scmp.ne.s32.totalorder %s127, %s129
    %p136 = scmp.eq.s32.totalorder %s16, 1
    %p137 = por %p135, %p136
    %p138 = scmp.ne.s32.totalorder %s129, %s130
    %p139 = scmp.eq.s32.totalorder %s16, 0
    %p140 = por %p138, %p139
    %p141 = scmp.ne.s32.totalorder %s129, %s130
    %p142 = scmp.eq.s32.totalorder %s17, 1
    %p143 = por %p141, %p142
    %p145 = scmp.ne.s32.totalorder %s130, %s144
    %p146 = scmp.eq.s32.totalorder %s17, 0
    %p147 = por %p145, %p146
    %s148 = ssub.s32 %s18, %s30
    %s149 = ssub.s32 %s19, %s26
    %s150 = sor.u32 %s148, %s149
    %p151 = scmp.eq.s32.totalorder %s150, 0
    %s153 = sadd.s32 %s152, 1
    %s154 = scalar_select %p151, %s152, %s153
    %p157 = pneg %p151
    %p158 = scmp.eq.s32.totalorder %s11, 1
    %p159 = por %p157, %p158
    %p160 = scmp.ne.s32.totalorder %s152, %s155
    %p161 = scmp.eq.s32.totalorder %s11, 0
    %p162 = por %p160, %p161
    %p163 = scmp.ne.s32.totalorder %s152, %s155
    %p164 = scmp.eq.s32.totalorder %s16, 1
    %p165 = por %p163, %p164
    %p166 = scmp.ne.s32.totalorder %s155, %s156
    %p167 = scmp.eq.s32.totalorder %s16, 0
    %p168 = por %p166, %p167
    %p169 = scmp.ne.s32.totalorder %s155, %s156
    %p170 = scmp.eq.s32.totalorder %s17, 1
    %p171 = por %p169, %p170
    %p173 = scmp.ne.s32.totalorder %s156, %s172
    %p174 = scmp.eq.s32.totalorder %s17, 0
    %p175 = por %p173, %p174
    %p176 = scmp.le.s32.totalorder 1, %s11
    %p177 = scmp.lt.s32.totalorder %s11, 3
    %p178 = pnand %p176, %p177
    %p179 = pneg %p178
    // Predicated region
    $region9: #{fph_forward.19} parent=5 // pred_check
      _
    $region10: #{fph_forward.19} parent=5 // pred_check_branch
      %181 = sbr.rel (%p178) target = $region12
    $region11: #{fph_forward.19} parent=5 // pred_region
      %s182 = ssub.s32 %s11, 1
      // Predicated region
      $region13: #{fph_forward.19} parent=11 // pred_check
        %p183 = pneg %p98
      $region14: #{fph_forward.19} parent=11 // pred_check_branch
        %185 = sbr.rel (%p183) target = $region16
      $region15: #{fph_forward.19} parent=11 // pred_region
        _
      $region16: #{fph_forward.19} parent=11 // pred_fallthru
        _
      // Predicated region
      $region17: #{fph_forward.19} parent=11 // pred_check
        %p186 = pneg %p119
      $region18: #{fph_forward.19} parent=11 // pred_check_branch
        %188 = sbr.rel (%p186) target = $region20
      $region19: #{fph_forward.19} parent=11 // pred_region
        _
      $region20: #{fph_forward.19} parent=11 // pred_fallthru
        _
      // Predicated region
      $region21: #{fph_forward.19} parent=11 // pred_check
        %p189 = pneg %p140
      $region22: #{fph_forward.19} parent=11 // pred_check_branch
        %191 = sbr.rel (%p189) target = $region24
      $region23: #{fph_forward.19} parent=11 // pred_region
        _
      $region24: #{fph_forward.19} parent=11 // pred_fallthru
        _
    $region12: #{fph_forward.19} parent=5 // pred_fallthru
      _
    %p192 = scmp.lt.s32.totalorder %s11, 2
    // Predicated region
    $region25: #{fph_forward.19} parent=5 // pred_check
      %p193 = pneg %p192
    $region26: #{fph_forward.19} parent=5 // pred_check_branch
      %195 = sbr.rel (%p193) target = $region28
    $region27: #{fph_forward.19} parent=5 // pred_region
      // Predicated region
      $region29: #{fph_forward.19} parent=27 // pred_check
        %p196 = pneg %p45
      $region30: #{fph_forward.19} parent=27 // pred_check_branch
        %198 = sbr.rel (%p196) target = $region32
      $region31: #{fph_forward.19} parent=27 // pred_region
        %p199 = scmp.lt.s32.totalorder %s18, 1
        %s200 = scalar_select %p199, %s18, 1
        %p201 = scmp.lt.s32.totalorder %s19, 0
        %s202 = scalar_select %p201, %s19, 0
        %s203 = smul.addr %s202, 12
        %s204 = smul.addr %s200, 12
        %s205 = sadd.s32 %s203, %s204
        %s206 = smul.addr %s205, 2
        %s207 = scalar_lea.vmem %s0, %s206
      $region32: #{fph_forward.19} parent=27 // pred_fallthru
        _
      // Predicated region
      $region33: #{fph_forward.19} parent=27 // pred_check
        %p208 = pneg %p71
      $region34: #{fph_forward.19} parent=27 // pred_check_branch
        %210 = sbr.rel (%p208) target = $region36
      $region35: #{fph_forward.19} parent=27 // pred_region
        %p211 = scmp.lt.s32.totalorder %s18, 1
        %s212 = scalar_select %p211, %s18, 1
        %s213 = smul.addr %s212, 12
        %s214 = scalar_lea.vmem %s1, %s213
      $region36: #{fph_forward.19} parent=27 // pred_fallthru
        _
    $region28: #{fph_forward.19} parent=5 // pred_fallthru
      _
    %p215 = scmp.le.s32.totalorder 1, %s11
    %p216 = scmp.lt.s32.totalorder %s11, 3
    %p217 = pnand %p215, %p216
    %p218 = pneg %p217
    // Predicated region
    $region37: #{fph_forward.19} parent=5 // pred_check
      _
    $region38: #{fph_forward.19} parent=5 // pred_check_branch
      %220 = sbr.rel (%p217) target = $region40
    $region39: #{fph_forward.19} parent=5 // pred_region
      %s221 = ssub.s32 %s11, 1
      %p222 = scmp.lt.s32.totalorder %s20, 1
      %s223 = scalar_select %p222, %s20, 1
      %p224 = scmp.lt.s32.totalorder %s21, 0
      %s225 = scalar_select %p224, %s21, 0
      %s226 = smul.addr %s225, 12
      %s227 = smul.addr %s223, 12
      %s228 = sadd.s32 %s226, %s227
      %s229 = smul.addr %s228, 2
      %s230 = scalar_lea.vmem %s0, %s229
      %p231 = pneg %p51
      %p232 = pneg %p48
      %p233 = scmp.lt.s32.totalorder %s20, 1
      %s234 = scalar_select %p233, %s20, 1
      %s235 = smul.addr %s234, 12
      %s236 = scalar_lea.vmem %s1, %s235
      %p237 = pneg %p77
      %p238 = pneg %p74
      %p239 = pneg %p98
      %p240 = pneg %p95
      %p241 = pneg %p119
      %p242 = pneg %p116
      %p243 = pneg %p140
      %p244 = pneg %p137
      %p245 = pneg %p168
      %p246 = pneg %p165
      %p247 = scmp.lt.s32.totalorder %s20, 1
      %s248 = scalar_select %p247, %s20, 1
      %p249 = scmp.lt.s32.totalorder %s21, 0
      %s250 = scalar_select %p249, %s21, 0
      %s251 = smul.addr %s250, 2
      %s252 = smul.addr %s248, 2
      %s253 = sadd.s32 %s251, %s252
      %s254 = smul.addr %s253, 4
      %s255 = scalar_lea.vmem %s5, %s254
      %p256 = scmp.lt.s32.totalorder %s20, 1
      %s257 = scalar_select %p256, %s20, 1
      %p258 = scmp.lt.s32.totalorder %s21, 0
      %s259 = scalar_select %p258, %s21, 0
      %s260 = smul.addr %s259, 12
      %s261 = smul.addr %s257, 12
      %s262 = sadd.s32 %s260, %s261
      %s263 = smul.addr %s262, 2
      %s264 = scalar_lea.vmem %s0, %s263
      %p265 = scmp.lt.s32.totalorder %s20, 1
      %s266 = scalar_select %p265, %s20, 1
      %s267 = smul.addr %s266, 12
      %s268 = scalar_lea.vmem %s1, %s267
      %p269 = scmp.lt.s32.totalorder %s20, 1
      %s270 = scalar_select %p269, %s20, 1
      %p271 = scmp.lt.s32.totalorder %s21, 0
      %s272 = scalar_select %p271, %s21, 0
      %s273 = smul.addr %s272, 2
      %s274 = smul.addr %s270, 2
      %s275 = sadd.s32 %s273, %s274
      %s276 = smul.addr %s275, 4
      %s277 = scalar_lea.vmem %s5, %s276
      %v278 = vld [vmem:[%s268] sm:$0xff]
      %v279 = vld [vmem:[%s268 + $0x8] sm:$0xf]
      %v280 = vld [vmem:[%s264] sm:$0xff]
      %v281 = vld [vmem:[%s264 + $0x8] sm:$0xff]
      %v282 = vld [vmem:[%s264 + $0x10] sm:$0xff]
      %v283 = vunpack.c.l.bf16 %v280
      %v284 = vunpack.c.h.bf16 %v280
      %v285 = vunpack.c.l.bf16 %v281
      %v286 = vunpack.c.h.bf16 %v281
      %v287 = vunpack.c.l.bf16 %v282
      %v288 = vunpack.c.h.bf16 %v282
      %v291 = vlaneseq
      %v292 = vshrl.u32 %v291, 7
      %v293 = vsub.s32 0, %v292
      %v294 = vrot.slane %v278, %v293
      %v295 = vlaneseq
      %v296 = vshrl.u32 %v295, 7
      %v297 = vsub.s32 1, %v296
      %v298 = vrot.slane %v278, %v297
      %v299 = vlaneseq
      %v300 = vshrl.u32 %v299, 7
      %v301 = vsub.s32 2, %v300
      %v302 = vrot.slane %v278, %v301
      %v303 = vlaneseq
      %v304 = vshrl.u32 %v303, 7
      %v305 = vsub.s32 3, %v304
      %v306 = vrot.slane %v278, %v305
      %v307 = vlaneseq
      %v308 = vshrl.u32 %v307, 7
      %v309 = vsub.s32 4, %v308
      %v310 = vrot.slane %v278, %v309
      %v311 = vlaneseq
      %v312 = vshrl.u32 %v311, 7
      %v313 = vsub.s32 5, %v312
      %v314 = vrot.slane %v278, %v313
      %v315 = vlaneseq
      %v316 = vshrl.u32 %v315, 7
      %v317 = vsub.s32 6, %v316
      %v318 = vrot.slane %v278, %v317
      %v319 = vlaneseq
      %v320 = vshrl.u32 %v319, 7
      %v321 = vsub.s32 7, %v320
      %v322 = vrot.slane %v278, %v321
      %v323 = vlaneseq
      %v324 = vshrl.u32 %v323, 7
      %v325 = vsub.s32 0, %v324
      %v326 = vrot.slane %v279, %v325
      %v327 = vlaneseq
      %v328 = vshrl.u32 %v327, 7
      %v329 = vsub.s32 1, %v328
      %v330 = vrot.slane %v279, %v329
      %v331 = vlaneseq
      %v332 = vshrl.u32 %v331, 7
      %v333 = vsub.s32 2, %v332
      %v334 = vrot.slane %v279, %v333
      %v335 = vlaneseq
      %v336 = vshrl.u32 %v335, 7
      %v337 = vsub.s32 3, %v336
      %v338 = vrot.slane %v279, %v337
      %v339 = vcombine.low %v294, %v298
      %v340 = vcombine.low %v302, %v306
      %v341 = vcombine.low %v310, %v314
      %v342 = vcombine.low %v318, %v322
      %v343 = vcombine.low %v326, %v330
      %v344 = vcombine.low %v334, %v338
      %v351 = vmul.f32 %v283, %v339
      %v352 = vmul.f32 %v284, %v340
      %v353 = vmul.f32 %v285, %v341
      %v354 = vmul.f32 %v286, %v342
      %v355 = vmul.f32 %v287, %v343
      %v356 = vmul.f32 %v288, %v344
      %v363 = vcombine.high %v351, %v351
      %v364 = vcombine.high %v352, %v352
      %v365 = vcombine.high %v353, %v353
      %v366 = vcombine.high %v354, %v354
      %v367 = vcombine.high %v355, %v355
      %v368 = vcombine.high %v356, %v356
      %v375 = vpack.c.bf16 %v351, %v351
      %v376 = vpack.c.bf16 %v363, %v363
      %v377 = vpack.c.bf16 %v352, %v352
      %v378 = vpack.c.bf16 %v364, %v364
      %v379 = vpack.c.bf16 %v353, %v353
      %v380 = vpack.c.bf16 %v365, %v365
      %v381 = vpack.c.bf16 %v354, %v354
      %v382 = vpack.c.bf16 %v366, %v366
      %v383 = vpack.c.bf16 %v355, %v355
      %v384 = vpack.c.bf16 %v367, %v367
      %v385 = vpack.c.bf16 %v356, %v356
      %v386 = vpack.c.bf16 %v368, %v368
      %v387 = vld [vmem:[%s2] sm:$0xff]
      %v388 = vld [vmem:[%s2 + $0x8] sm:$0xff]
      %v389 = vld [vmem:[%s2 + $0x10] sm:$0xff]
      %v390 = vld [vmem:[%s2 + $0x18] sm:$0xff]
      %v391 = vld [vmem:[%s2 + $0x20] sm:$0xff]
      %v392 = vld [vmem:[%s2 + $0x28] sm:$0xff]
      %v393 = vld [vmem:[%s2 + $0x30] sm:$0xff]
      %v394 = vld [vmem:[%s2 + $0x38] sm:$0xff]
      %v395 = vld [vmem:[%s2 + $0x40] sm:$0xff]
      %v396 = vld [vmem:[%s2 + $0x48] sm:$0xff]
      %v397 = vld [vmem:[%s2 + $0x50] sm:$0xff]
      %v398 = vld [vmem:[%s2 + $0x58] sm:$0xff]
      %v399 = vld [vmem:[%s2 + $0x60] sm:$0xff]
      %v400 = vld [vmem:[%s2 + $0x68] sm:$0xff]
      %v401 = vld [vmem:[%s2 + $0x70] sm:$0xff]
      %v402 = vld [vmem:[%s2 + $0x78] sm:$0xff]
      %v403 = vld [vmem:[%s2 + $0x80] sm:$0xff]
      %v404 = vld [vmem:[%s2 + $0x88] sm:$0xff]
      %v405 = vld [vmem:[%s2 + $0x90] sm:$0xff]
      %v406 = vld [vmem:[%s2 + $0x98] sm:$0xff]
      %v407 = vld [vmem:[%s2 + $0xa0] sm:$0xff]
      %v408 = vld [vmem:[%s2 + $0xa8] sm:$0xff]
      %v409 = vld [vmem:[%s2 + $0xb0] sm:$0xff]
      %v410 = vld [vmem:[%s2 + $0xb8] sm:$0xff]
      %v411 = vld [vmem:[%s2 + $0xc0] sm:$0xff]
      %v412 = vld [vmem:[%s2 + $0xc8] sm:$0xff]
      %v413 = vld [vmem:[%s2 + $0xd0] sm:$0xff]
      %v414 = vld [vmem:[%s2 + $0xd8] sm:$0xff]
      %v415 = vld [vmem:[%s2 + $0xe0] sm:$0xff]
      %v416 = vld [vmem:[%s2 + $0xe8] sm:$0xff]
      %v417 = vld [vmem:[%s2 + $0xf0] sm:$0xff]
      %v418 = vld [vmem:[%s2 + $0xf8] sm:$0xff]
      %v419 = vld [vmem:[%s2 + $0x100] sm:$0xff]
      %v420 = vld [vmem:[%s2 + $0x108] sm:$0xff]
      %v421 = vld [vmem:[%s2 + $0x110] sm:$0xff]
      %v422 = vld [vmem:[%s2 + $0x118] sm:$0xff]
      %v423 = vld [vmem:[%s2 + $0x120] sm:$0xff]
      %v424 = vld [vmem:[%s2 + $0x128] sm:$0xff]
      %v425 = vld [vmem:[%s2 + $0x130] sm:$0xff]
      %v426 = vld [vmem:[%s2 + $0x138] sm:$0xff]
      %v427 = vld [vmem:[%s2 + $0x140] sm:$0xff]
      %v428 = vld [vmem:[%s2 + $0x148] sm:$0xff]
      %v429 = vld [vmem:[%s2 + $0x150] sm:$0xff]
      %v430 = vld [vmem:[%s2 + $0x158] sm:$0xff]
      %v431 = vld [vmem:[%s2 + $0x160] sm:$0xff]
      %v432 = vld [vmem:[%s2 + $0x168] sm:$0xff]
      %v433 = vld [vmem:[%s2 + $0x170] sm:$0xff]
      %v434 = vld [vmem:[%s2 + $0x178] sm:$0xff]
      %v435 = vld [vmem:[%s2 + $0x180] sm:$0xff]
      %v436 = vld [vmem:[%s2 + $0x188] sm:$0xff]
      %v437 = vld [vmem:[%s2 + $0x190] sm:$0xff]
      %v438 = vld [vmem:[%s2 + $0x198] sm:$0xff]
      %v439 = vld [vmem:[%s2 + $0x1a0] sm:$0xff]
      %v440 = vld [vmem:[%s2 + $0x1a8] sm:$0xff]
      %v441 = vld [vmem:[%s2 + $0x1b0] sm:$0xff]
      %v442 = vld [vmem:[%s2 + $0x1b8] sm:$0xff]
      %v443 = vld [vmem:[%s2 + $0x1c0] sm:$0xff]
      %v444 = vld [vmem:[%s2 + $0x1c8] sm:$0xff]
      %v445 = vld [vmem:[%s2 + $0x1d0] sm:$0xff]
      %v446 = vld [vmem:[%s2 + $0x1d8] sm:$0xff]
      %v447 = vld [vmem:[%s2 + $0x1e0] sm:$0xff]
      %v448 = vld [vmem:[%s2 + $0x1e8] sm:$0xff]
      %v449 = vld [vmem:[%s2 + $0x1f0] sm:$0xff]
      %v450 = vld [vmem:[%s2 + $0x1f8] sm:$0xff]
      %v451 = vld [vmem:[%s2 + $0x200] sm:$0xff]
      %v452 = vld [vmem:[%s2 + $0x208] sm:$0xff]
      %v453 = vld [vmem:[%s2 + $0x210] sm:$0xff]
      %v454 = vld [vmem:[%s2 + $0x218] sm:$0xff]
      %v455 = vld [vmem:[%s2 + $0x220] sm:$0xff]
      %v456 = vld [vmem:[%s2 + $0x228] sm:$0xff]
      %v457 = vld [vmem:[%s2 + $0x230] sm:$0xff]
      %v458 = vld [vmem:[%s2 + $0x238] sm:$0xff]
      %v459 = vld [vmem:[%s2 + $0x240] sm:$0xff]
      %v460 = vld [vmem:[%s2 + $0x248] sm:$0xff]
      %v461 = vld [vmem:[%s2 + $0x250] sm:$0xff]
      %v462 = vld [vmem:[%s2 + $0x258] sm:$0xff]
      %v463 = vld [vmem:[%s2 + $0x260] sm:$0xff]
      %v464 = vld [vmem:[%s2 + $0x268] sm:$0xff]
      %v465 = vld [vmem:[%s2 + $0x270] sm:$0xff]
      %v466 = vld [vmem:[%s2 + $0x278] sm:$0xff]
      %v467 = vld [vmem:[%s2 + $0x280] sm:$0xff]
      %v468 = vld [vmem:[%s2 + $0x288] sm:$0xff]
      %v469 = vld [vmem:[%s2 + $0x290] sm:$0xff]
      %v470 = vld [vmem:[%s2 + $0x298] sm:$0xff]
      %v471 = vld [vmem:[%s2 + $0x2a0] sm:$0xff]
      %v472 = vld [vmem:[%s2 + $0x2a8] sm:$0xff]
      %v473 = vld [vmem:[%s2 + $0x2b0] sm:$0xff]
      %v474 = vld [vmem:[%s2 + $0x2b8] sm:$0xff]
      %v475 = vld [vmem:[%s2 + $0x2c0] sm:$0xff]
      %v476 = vld [vmem:[%s2 + $0x2c8] sm:$0xff]
      %v477 = vld [vmem:[%s2 + $0x2d0] sm:$0xff]
      %v478 = vld [vmem:[%s2 + $0x2d8] sm:$0xff]
      %v479 = vld [vmem:[%s2 + $0x2e0] sm:$0xff]
      %v480 = vld [vmem:[%s2 + $0x2e8] sm:$0xff]
      %v481 = vld [vmem:[%s2 + $0x2f0] sm:$0xff]
      %v482 = vld [vmem:[%s2 + $0x2f8] sm:$0xff]
      %v483 = vld [vmem:[%s2 + $0x300] sm:$0xff]
      %v484 = vld [vmem:[%s2 + $0x308] sm:$0xff]
      %v485 = vld [vmem:[%s2 + $0x310] sm:$0xff]
      %v486 = vld [vmem:[%s2 + $0x318] sm:$0xff]
      %v487 = vld [vmem:[%s2 + $0x320] sm:$0xff]
      %v488 = vld [vmem:[%s2 + $0x328] sm:$0xff]
      %v489 = vld [vmem:[%s2 + $0x330] sm:$0xff]
      %v490 = vld [vmem:[%s2 + $0x338] sm:$0xff]
      %v491 = vld [vmem:[%s2 + $0x340] sm:$0xff]
      %v492 = vld [vmem:[%s2 + $0x348] sm:$0xff]
      %v493 = vld [vmem:[%s2 + $0x350] sm:$0xff]
      %v494 = vld [vmem:[%s2 + $0x358] sm:$0xff]
      %v495 = vld [vmem:[%s2 + $0x360] sm:$0xff]
      %v496 = vld [vmem:[%s2 + $0x368] sm:$0xff]
      %v497 = vld [vmem:[%s2 + $0x370] sm:$0xff]
      %v498 = vld [vmem:[%s2 + $0x378] sm:$0xff]
      %v499 = vld [vmem:[%s2 + $0x380] sm:$0xff]
      %v500 = vld [vmem:[%s2 + $0x388] sm:$0xff]
      %v501 = vld [vmem:[%s2 + $0x390] sm:$0xff]
      %v502 = vld [vmem:[%s2 + $0x398] sm:$0xff]
      %v503 = vld [vmem:[%s2 + $0x3a0] sm:$0xff]
      %v504 = vld [vmem:[%s2 + $0x3a8] sm:$0xff]
      %v505 = vld [vmem:[%s2 + $0x3b0] sm:$0xff]
      %v506 = vld [vmem:[%s2 + $0x3b8] sm:$0xff]
      %v507 = vld [vmem:[%s2 + $0x3c0] sm:$0xff]
      %v508 = vld [vmem:[%s2 + $0x3c8] sm:$0xff]
      %v509 = vld [vmem:[%s2 + $0x3d0] sm:$0xff]
      %v510 = vld [vmem:[%s2 + $0x3d8] sm:$0xff]
      %v511 = vld [vmem:[%s2 + $0x3e0] sm:$0xff]
      %v512 = vld [vmem:[%s2 + $0x3e8] sm:$0xff]
      %v513 = vld [vmem:[%s2 + $0x3f0] sm:$0xff]
      %v514 = vld [vmem:[%s2 + $0x3f8] sm:$0xff]
      %v515 = vld [vmem:[%s2 + $0x400] sm:$0xff]
      %v516 = vld [vmem:[%s2 + $0x408] sm:$0xff]
      %v517 = vld [vmem:[%s2 + $0x410] sm:$0xff]
      %v518 = vld [vmem:[%s2 + $0x418] sm:$0xff]
      %v519 = vld [vmem:[%s2 + $0x420] sm:$0xff]
      %v520 = vld [vmem:[%s2 + $0x428] sm:$0xff]
      %v521 = vld [vmem:[%s2 + $0x430] sm:$0xff]
      %v522 = vld [vmem:[%s2 + $0x438] sm:$0xff]
      %v523 = vld [vmem:[%s2 + $0x440] sm:$0xff]
      %v524 = vld [vmem:[%s2 + $0x448] sm:$0xff]
      %v525 = vld [vmem:[%s2 + $0x450] sm:$0xff]
      %v526 = vld [vmem:[%s2 + $0x458] sm:$0xff]
      %v527 = vld [vmem:[%s2 + $0x460] sm:$0xff]
      %v528 = vld [vmem:[%s2 + $0x468] sm:$0xff]
      %v529 = vld [vmem:[%s2 + $0x470] sm:$0xff]
      %v530 = vld [vmem:[%s2 + $0x478] sm:$0xff]
      %v531 = vld [vmem:[%s2 + $0x480] sm:$0xff]
      %v532 = vld [vmem:[%s2 + $0x488] sm:$0xff]
      %v533 = vld [vmem:[%s2 + $0x490] sm:$0xff]
      %v534 = vld [vmem:[%s2 + $0x498] sm:$0xff]
      %v535 = vld [vmem:[%s2 + $0x4a0] sm:$0xff]
      %v536 = vld [vmem:[%s2 + $0x4a8] sm:$0xff]
      %v537 = vld [vmem:[%s2 + $0x4b0] sm:$0xff]
      %v538 = vld [vmem:[%s2 + $0x4b8] sm:$0xff]
      %v539 = vld [vmem:[%s2 + $0x4c0] sm:$0xff]
      %v540 = vld [vmem:[%s2 + $0x4c8] sm:$0xff]
      %v541 = vld [vmem:[%s2 + $0x4d0] sm:$0xff]
      %v542 = vld [vmem:[%s2 + $0x4d8] sm:$0xff]
      %v543 = vld [vmem:[%s2 + $0x4e0] sm:$0xff]
      %v544 = vld [vmem:[%s2 + $0x4e8] sm:$0xff]
      %v545 = vld [vmem:[%s2 + $0x4f0] sm:$0xff]
      %v546 = vld [vmem:[%s2 + $0x4f8] sm:$0xff]
      %v547 = vld [vmem:[%s2 + $0x500] sm:$0xff]
      %v548 = vld [vmem:[%s2 + $0x508] sm:$0xff]
      %v549 = vld [vmem:[%s2 + $0x510] sm:$0xff]
      %v550 = vld [vmem:[%s2 + $0x518] sm:$0xff]
      %v551 = vld [vmem:[%s2 + $0x520] sm:$0xff]
      %v552 = vld [vmem:[%s2 + $0x528] sm:$0xff]
      %v553 = vld [vmem:[%s2 + $0x530] sm:$0xff]
      %v554 = vld [vmem:[%s2 + $0x538] sm:$0xff]
      %v555 = vld [vmem:[%s2 + $0x540] sm:$0xff]
      %v556 = vld [vmem:[%s2 + $0x548] sm:$0xff]
      %v557 = vld [vmem:[%s2 + $0x550] sm:$0xff]
      %v558 = vld [vmem:[%s2 + $0x558] sm:$0xff]
      %v559 = vld [vmem:[%s2 + $0x560] sm:$0xff]
      %v560 = vld [vmem:[%s2 + $0x568] sm:$0xff]
      %v561 = vld [vmem:[%s2 + $0x570] sm:$0xff]
      %v562 = vld [vmem:[%s2 + $0x578] sm:$0xff]
      %v563 = vld [vmem:[%s2 + $0x580] sm:$0xff]
      %v564 = vld [vmem:[%s2 + $0x588] sm:$0xff]
      %v565 = vld [vmem:[%s2 + $0x590] sm:$0xff]
      %v566 = vld [vmem:[%s2 + $0x598] sm:$0xff]
      %v567 = vld [vmem:[%s2 + $0x5a0] sm:$0xff]
      %v568 = vld [vmem:[%s2 + $0x5a8] sm:$0xff]
      %v569 = vld [vmem:[%s2 + $0x5b0] sm:$0xff]
      %v570 = vld [vmem:[%s2 + $0x5b8] sm:$0xff]
      %v571 = vld [vmem:[%s2 + $0x5c0] sm:$0xff]
      %v572 = vld [vmem:[%s2 + $0x5c8] sm:$0xff]
      %v573 = vld [vmem:[%s2 + $0x5d0] sm:$0xff]
      %v574 = vld [vmem:[%s2 + $0x5d8] sm:$0xff]
      %v575 = vld [vmem:[%s2 + $0x5e0] sm:$0xff]
      %v576 = vld [vmem:[%s2 + $0x5e8] sm:$0xff]
      %v577 = vld [vmem:[%s2 + $0x5f0] sm:$0xff]
      %v578 = vld [vmem:[%s2 + $0x5f8] sm:$0xff]
      %v771 = vunpack.c.l.b16 %v387
      %v772 = vunpack.c.h.b16 %v387
      %v773 = vunpack.c.l.b16 %v388
      %v774 = vunpack.c.h.b16 %v388
      %v775 = vunpack.c.l.b16 %v389
      %v776 = vunpack.c.h.b16 %v389
      %v777 = vunpack.c.l.b16 %v390
      %v778 = vunpack.c.h.b16 %v390
      %v779 = vunpack.c.l.b16 %v391
      %v780 = vunpack.c.h.b16 %v391
      %v781 = vunpack.c.l.b16 %v392
      %v782 = vunpack.c.h.b16 %v392
      %v783 = vunpack.c.l.b16 %v393
      %v784 = vunpack.c.h.b16 %v393
      %v785 = vunpack.c.l.b16 %v394
      %v786 = vunpack.c.h.b16 %v394
      %v787 = vunpack.c.l.b16 %v395
      %v788 = vunpack.c.h.b16 %v395
      %v789 = vunpack.c.l.b16 %v396
      %v790 = vunpack.c.h.b16 %v396
      %v791 = vunpack.c.l.b16 %v397
      %v792 = vunpack.c.h.b16 %v397
      %v793 = vunpack.c.l.b16 %v398
      %v794 = vunpack.c.h.b16 %v398
      %v795 = vunpack.c.l.b16 %v399
      %v796 = vunpack.c.h.b16 %v399
      %v797 = vunpack.c.l.b16 %v400
      %v798 = vunpack.c.h.b16 %v400
      %v799 = vunpack.c.l.b16 %v401
      %v800 = vunpack.c.h.b16 %v401
      %v801 = vunpack.c.l.b16 %v402
      %v802 = vunpack.c.h.b16 %v402
      %v803 = vunpack.c.l.b16 %v403
      %v804 = vunpack.c.h.b16 %v403
      %v805 = vunpack.c.l.b16 %v404
      %v806 = vunpack.c.h.b16 %v404
      %v807 = vunpack.c.l.b16 %v405
      %v808 = vunpack.c.h.b16 %v405
      %v809 = vunpack.c.l.b16 %v406
      %v810 = vunpack.c.h.b16 %v406
      %v811 = vunpack.c.l.b16 %v407
      %v812 = vunpack.c.h.b16 %v407
      %v813 = vunpack.c.l.b16 %v408
      %v814 = vunpack.c.h.b16 %v408
      %v815 = vunpack.c.l.b16 %v409
      %v816 = vunpack.c.h.b16 %v409
      %v817 = vunpack.c.l.b16 %v410
      %v818 = vunpack.c.h.b16 %v410
      %v819 = vunpack.c.l.b16 %v411
      %v820 = vunpack.c.h.b16 %v411
      %v821 = vunpack.c.l.b16 %v412
      %v822 = vunpack.c.h.b16 %v412
      %v823 = vunpack.c.l.b16 %v413
      %v824 = vunpack.c.h.b16 %v413
      %v825 = vunpack.c.l.b16 %v414
      %v826 = vunpack.c.h.b16 %v414
      %v827 = vunpack.c.l.b16 %v415
      %v828 = vunpack.c.h.b16 %v415
      %v829 = vunpack.c.l.b16 %v416
      %v830 = vunpack.c.h.b16 %v416
      %v831 = vunpack.c.l.b16 %v417
      %v832 = vunpack.c.h.b16 %v417
      %v833 = vunpack.c.l.b16 %v418
      %v834 = vunpack.c.h.b16 %v418
      %v835 = vunpack.c.l.b16 %v419
      %v836 = vunpack.c.h.b16 %v419
      %v837 = vunpack.c.l.b16 %v420
      %v838 = vunpack.c.h.b16 %v420
      %v839 = vunpack.c.l.b16 %v421
      %v840 = vunpack.c.h.b16 %v421
      %v841 = vunpack.c.l.b16 %v422
      %v842 = vunpack.c.h.b16 %v422
      %v843 = vunpack.c.l.b16 %v423
      %v844 = vunpack.c.h.b16 %v423
      %v845 = vunpack.c.l.b16 %v424
      %v846 = vunpack.c.h.b16 %v424
      %v847 = vunpack.c.l.b16 %v425
      %v848 = vunpack.c.h.b16 %v425
      %v849 = vunpack.c.l.b16 %v426
      %v850 = vunpack.c.h.b16 %v426
      %v851 = vunpack.c.l.b16 %v427
      %v852 = vunpack.c.h.b16 %v427
      %v853 = vunpack.c.l.b16 %v428
      %v854 = vunpack.c.h.b16 %v428
      %v855 = vunpack.c.l.b16 %v429
      %v856 = vunpack.c.h.b16 %v429
      %v857 = vunpack.c.l.b16 %v430
      %v858 = vunpack.c.h.b16 %v430
      %v859 = vunpack.c.l.b16 %v431
      %v860 = vunpack.c.h.b16 %v431
      %v861 = vunpack.c.l.b16 %v432
      %v862 = vunpack.c.h.b16 %v432
      %v863 = vunpack.c.l.b16 %v433
      %v864 = vunpack.c.h.b16 %v433
      %v865 = vunpack.c.l.b16 %v434
      %v866 = vunpack.c.h.b16 %v434
      %v867 = vunpack.c.l.b16 %v435
      %v868 = vunpack.c.h.b16 %v435
      %v869 = vunpack.c.l.b16 %v436
      %v870 = vunpack.c.h.b16 %v436
      %v871 = vunpack.c.l.b16 %v437
      %v872 = vunpack.c.h.b16 %v437
      %v873 = vunpack.c.l.b16 %v438
      %v874 = vunpack.c.h.b16 %v438
      %v875 = vunpack.c.l.b16 %v439
      %v876 = vunpack.c.h.b16 %v439
      %v877 = vunpack.c.l.b16 %v440
      %v878 = vunpack.c.h.b16 %v440
      %v879 = vunpack.c.l.b16 %v441
      %v880 = vunpack.c.h.b16 %v441
      %v881 = vunpack.c.l.b16 %v442
      %v882 = vunpack.c.h.b16 %v442
      %v883 = vunpack.c.l.b16 %v443
      %v884 = vunpack.c.h.b16 %v443
      %v885 = vunpack.c.l.b16 %v444
      %v886 = vunpack.c.h.b16 %v444
      %v887 = vunpack.c.l.b16 %v445
      %v888 = vunpack.c.h.b16 %v445
      %v889 = vunpack.c.l.b16 %v446
      %v890 = vunpack.c.h.b16 %v446
      %v891 = vunpack.c.l.b16 %v447
      %v892 = vunpack.c.h.b16 %v447
      %v893 = vunpack.c.l.b16 %v448
      %v894 = vunpack.c.h.b16 %v448
      %v895 = vunpack.c.l.b16 %v449
      %v896 = vunpack.c.h.b16 %v449
      %v897 = vunpack.c.l.b16 %v450
      %v898 = vunpack.c.h.b16 %v450
      %v899 = vunpack.c.l.b16 %v451
      %v900 = vunpack.c.h.b16 %v451
      %v901 = vunpack.c.l.b16 %v452
      %v902 = vunpack.c.h.b16 %v452
      %v903 = vunpack.c.l.b16 %v453
      %v904 = vunpack.c.h.b16 %v453
      %v905 = vunpack.c.l.b16 %v454
      %v906 = vunpack.c.h.b16 %v454
      %v907 = vunpack.c.l.b16 %v455
      %v908 = vunpack.c.h.b16 %v455
      %v909 = vunpack.c.l.b16 %v456
      %v910 = vunpack.c.h.b16 %v456
      %v911 = vunpack.c.l.b16 %v457
      %v912 = vunpack.c.h.b16 %v457
      %v913 = vunpack.c.l.b16 %v458
      %v914 = vunpack.c.h.b16 %v458
      %v915 = vunpack.c.l.b16 %v459
      %v916 = vunpack.c.h.b16 %v459
      %v917 = vunpack.c.l.b16 %v460
      %v918 = vunpack.c.h.b16 %v460
      %v919 = vunpack.c.l.b16 %v461
      %v920 = vunpack.c.h.b16 %v461
      %v921 = vunpack.c.l.b16 %v462
      %v922 = vunpack.c.h.b16 %v462
      %v923 = vunpack.c.l.b16 %v463
      %v924 = vunpack.c.h.b16 %v463
      %v925 = vunpack.c.l.b16 %v464
      %v926 = vunpack.c.h.b16 %v464
      %v927 = vunpack.c.l.b16 %v465
      %v928 = vunpack.c.h.b16 %v465
      %v929 = vunpack.c.l.b16 %v466
      %v930 = vunpack.c.h.b16 %v466
      %v931 = vunpack.c.l.b16 %v467
      %v932 = vunpack.c.h.b16 %v467
      %v933 = vunpack.c.l.b16 %v468
      %v934 = vunpack.c.h.b16 %v468
      %v935 = vunpack.c.l.b16 %v469
      %v936 = vunpack.c.h.b16 %v469
      %v937 = vunpack.c.l.b16 %v470
      %v938 = vunpack.c.h.b16 %v470
      %v939 = vunpack.c.l.b16 %v471
      %v940 = vunpack.c.h.b16 %v471
      %v941 = vunpack.c.l.b16 %v472
      %v942 = vunpack.c.h.b16 %v472
      %v943 = vunpack.c.l.b16 %v473
      %v944 = vunpack.c.h.b16 %v473
      %v945 = vunpack.c.l.b16 %v474
      %v946 = vunpack.c.h.b16 %v474
      %v947 = vunpack.c.l.b16 %v475
      %v948 = vunpack.c.h.b16 %v475
      %v949 = vunpack.c.l.b16 %v476
      %v950 = vunpack.c.h.b16 %v476
      %v951 = vunpack.c.l.b16 %v477
      %v952 = vunpack.c.h.b16 %v477
      %v953 = vunpack.c.l.b16 %v478
      %v954 = vunpack.c.h.b16 %v478
      %v955 = vunpack.c.l.b16 %v479
      %v956 = vunpack.c.h.b16 %v479
      %v957 = vunpack.c.l.b16 %v480
      %v958 = vunpack.c.h.b16 %v480
      %v959 = vunpack.c.l.b16 %v481
      %v960 = vunpack.c.h.b16 %v481
      %v961 = vunpack.c.l.b16 %v482
      %v962 = vunpack.c.h.b16 %v482
      %v963 = vunpack.c.l.b16 %v483
      %v964 = vunpack.c.h.b16 %v483
      %v965 = vunpack.c.l.b16 %v484
      %v966 = vunpack.c.h.b16 %v484
      %v967 = vunpack.c.l.b16 %v485
      %v968 = vunpack.c.h.b16 %v485
      %v969 = vunpack.c.l.b16 %v486
      %v970 = vunpack.c.h.b16 %v486
      %v971 = vunpack.c.l.b16 %v487
      %v972 = vunpack.c.h.b16 %v487
      %v973 = vunpack.c.l.b16 %v488
      %v974 = vunpack.c.h.b16 %v488
      %v975 = vunpack.c.l.b16 %v489
      %v976 = vunpack.c.h.b16 %v489
      %v977 = vunpack.c.l.b16 %v490
      %v978 = vunpack.c.h.b16 %v490
      %v979 = vunpack.c.l.b16 %v491
      %v980 = vunpack.c.h.b16 %v491
      %v981 = vunpack.c.l.b16 %v492
      %v982 = vunpack.c.h.b16 %v492
      %v983 = vunpack.c.l.b16 %v493
      %v984 = vunpack.c.h.b16 %v493
      %v985 = vunpack.c.l.b16 %v494
      %v986 = vunpack.c.h.b16 %v494
      %v987 = vunpack.c.l.b16 %v495
      %v988 = vunpack.c.h.b16 %v495
      %v989 = vunpack.c.l.b16 %v496
      %v990 = vunpack.c.h.b16 %v496
      %v991 = vunpack.c.l.b16 %v497
      %v992 = vunpack.c.h.b16 %v497
      %v993 = vunpack.c.l.b16 %v498
      %v994 = vunpack.c.h.b16 %v498
      %v995 = vunpack.c.l.b16 %v499
      %v996 = vunpack.c.h.b16 %v499
      %v997 = vunpack.c.l.b16 %v500
      %v998 = vunpack.c.h.b16 %v500
      %v999 = vunpack.c.l.b16 %v501
      %v1000 = vunpack.c.h.b16 %v501
      %v1001 = vunpack.c.l.b16 %v502
      %v1002 = vunpack.c.h.b16 %v502
      %v1003 = vunpack.c.l.b16 %v503
      %v1004 = vunpack.c.h.b16 %v503
      %v1005 = vunpack.c.l.b16 %v504
      %v1006 = vunpack.c.h.b16 %v504
      %v1007 = vunpack.c.l.b16 %v505
      %v1008 = vunpack.c.h.b16 %v505
      %v1009 = vunpack.c.l.b16 %v506
      %v1010 = vunpack.c.h.b16 %v506
      %v1011 = vunpack.c.l.b16 %v507
      %v1012 = vunpack.c.h.b16 %v507
      %v1013 = vunpack.c.l.b16 %v508
      %v1014 = vunpack.c.h.b16 %v508
      %v1015 = vunpack.c.l.b16 %v509
      %v1016 = vunpack.c.h.b16 %v509
      %v1017 = vunpack.c.l.b16 %v510
      %v1018 = vunpack.c.h.b16 %v510
      %v1019 = vunpack.c.l.b16 %v511
      %v1020 = vunpack.c.h.b16 %v511
      %v1021 = vunpack.c.l.b16 %v512
      %v1022 = vunpack.c.h.b16 %v512
      %v1023 = vunpack.c.l.b16 %v513
      %v1024 = vunpack.c.h.b16 %v513
      %v1025 = vunpack.c.l.b16 %v514
      %v1026 = vunpack.c.h.b16 %v514
      %v1027 = vunpack.c.l.b16 %v515
      %v1028 = vunpack.c.h.b16 %v515
      %v1029 = vunpack.c.l.b16 %v516
      %v1030 = vunpack.c.h.b16 %v516
      %v1031 = vunpack.c.l.b16 %v517
      %v1032 = vunpack.c.h.b16 %v517
      %v1033 = vunpack.c.l.b16 %v518
      %v1034 = vunpack.c.h.b16 %v518
      %v1035 = vunpack.c.l.b16 %v519
      %v1036 = vunpack.c.h.b16 %v519
      %v1037 = vunpack.c.l.b16 %v520
      %v1038 = vunpack.c.h.b16 %v520
      %v1039 = vunpack.c.l.b16 %v521
      %v1040 = vunpack.c.h.b16 %v521
      %v1041 = vunpack.c.l.b16 %v522
      %v1042 = vunpack.c.h.b16 %v522
      %v1043 = vunpack.c.l.b16 %v523
      %v1044 = vunpack.c.h.b16 %v523
      %v1045 = vunpack.c.l.b16 %v524
      %v1046 = vunpack.c.h.b16 %v524
      %v1047 = vunpack.c.l.b16 %v525
      %v1048 = vunpack.c.h.b16 %v525
      %v1049 = vunpack.c.l.b16 %v526
      %v1050 = vunpack.c.h.b16 %v526
      %v1051 = vunpack.c.l.b16 %v527
      %v1052 = vunpack.c.h.b16 %v527
      %v1053 = vunpack.c.l.b16 %v528
      %v1054 = vunpack.c.h.b16 %v528
      %v1055 = vunpack.c.l.b16 %v529
      %v1056 = vunpack.c.h.b16 %v529
      %v1057 = vunpack.c.l.b16 %v530
      %v1058 = vunpack.c.h.b16 %v530
      %v1059 = vunpack.c.l.b16 %v531
      %v1060 = vunpack.c.h.b16 %v531
      %v1061 = vunpack.c.l.b16 %v532
      %v1062 = vunpack.c.h.b16 %v532
      %v1063 = vunpack.c.l.b16 %v533
      %v1064 = vunpack.c.h.b16 %v533
      %v1065 = vunpack.c.l.b16 %v534
      %v1066 = vunpack.c.h.b16 %v534
      %v1067 = vunpack.c.l.b16 %v535
      %v1068 = vunpack.c.h.b16 %v535
      %v1069 = vunpack.c.l.b16 %v536
      %v1070 = vunpack.c.h.b16 %v536
      %v1071 = vunpack.c.l.b16 %v537
      %v1072 = vunpack.c.h.b16 %v537
      %v1073 = vunpack.c.l.b16 %v538
      %v1074 = vunpack.c.h.b16 %v538
      %v1075 = vunpack.c.l.b16 %v539
      %v1076 = vunpack.c.h.b16 %v539
      %v1077 = vunpack.c.l.b16 %v540
      %v1078 = vunpack.c.h.b16 %v540
      %v1079 = vunpack.c.l.b16 %v541
      %v1080 = vunpack.c.h.b16 %v541
      %v1081 = vunpack.c.l.b16 %v542
      %v1082 = vunpack.c.h.b16 %v542
      %v1083 = vunpack.c.l.b16 %v543
      %v1084 = vunpack.c.h.b16 %v543
      %v1085 = vunpack.c.l.b16 %v544
      %v1086 = vunpack.c.h.b16 %v544
      %v1087 = vunpack.c.l.b16 %v545
      %v1088 = vunpack.c.h.b16 %v545
      %v1089 = vunpack.c.l.b16 %v546
      %v1090 = vunpack.c.h.b16 %v546
      %v1091 = vunpack.c.l.b16 %v547
      %v1092 = vunpack.c.h.b16 %v547
      %v1093 = vunpack.c.l.b16 %v548
      %v1094 = vunpack.c.h.b16 %v548
      %v1095 = vunpack.c.l.b16 %v549
      %v1096 = vunpack.c.h.b16 %v549
      %v1097 = vunpack.c.l.b16 %v550
      %v1098 = vunpack.c.h.b16 %v550
      %v1099 = vunpack.c.l.b16 %v551
      %v1100 = vunpack.c.h.b16 %v551
      %v1101 = vunpack.c.l.b16 %v552
      %v1102 = vunpack.c.h.b16 %v552
      %v1103 = vunpack.c.l.b16 %v553
      %v1104 = vunpack.c.h.b16 %v553
      %v1105 = vunpack.c.l.b16 %v554
      %v1106 = vunpack.c.h.b16 %v554
      %v1107 = vunpack.c.l.b16 %v555
      %v1108 = vunpack.c.h.b16 %v555
      %v1109 = vunpack.c.l.b16 %v556
      %v1110 = vunpack.c.h.b16 %v556
      %v1111 = vunpack.c.l.b16 %v557
      %v1112 = vunpack.c.h.b16 %v557
      %v1113 = vunpack.c.l.b16 %v558
      %v1114 = vunpack.c.h.b16 %v558
      %v1115 = vunpack.c.l.b16 %v559
      %v1116 = vunpack.c.h.b16 %v559
      %v1117 = vunpack.c.l.b16 %v560
      %v1118 = vunpack.c.h.b16 %v560
      %v1119 = vunpack.c.l.b16 %v561
      %v1120 = vunpack.c.h.b16 %v561
      %v1121 = vunpack.c.l.b16 %v562
      %v1122 = vunpack.c.h.b16 %v562
      %v1123 = vunpack.c.l.b16 %v563
      %v1124 = vunpack.c.h.b16 %v563
      %v1125 = vunpack.c.l.b16 %v564
      %v1126 = vunpack.c.h.b16 %v564
      %v1127 = vunpack.c.l.b16 %v565
      %v1128 = vunpack.c.h.b16 %v565
      %v1129 = vunpack.c.l.b16 %v566
      %v1130 = vunpack.c.h.b16 %v566
      %v1131 = vunpack.c.l.b16 %v567
      %v1132 = vunpack.c.h.b16 %v567
      %v1133 = vunpack.c.l.b16 %v568
      %v1134 = vunpack.c.h.b16 %v568
      %v1135 = vunpack.c.l.b16 %v569
      %v1136 = vunpack.c.h.b16 %v569
      %v1137 = vunpack.c.l.b16 %v570
      %v1138 = vunpack.c.h.b16 %v570
      %v1139 = vunpack.c.l.b16 %v571
      %v1140 = vunpack.c.h.b16 %v571
      %v1141 = vunpack.c.l.b16 %v572
      %v1142 = vunpack.c.h.b16 %v572
      %v1143 = vunpack.c.l.b16 %v573
      %v1144 = vunpack.c.h.b16 %v573
      %v1145 = vunpack.c.l.b16 %v574
      %v1146 = vunpack.c.h.b16 %v574
      %v1147 = vunpack.c.l.b16 %v575
      %v1148 = vunpack.c.h.b16 %v575
      %v1149 = vunpack.c.l.b16 %v576
      %v1150 = vunpack.c.h.b16 %v576
      %v1151 = vunpack.c.l.b16 %v577
      %v1152 = vunpack.c.h.b16 %v577
      %v1153 = vunpack.c.l.b16 %v578
      %v1154 = vunpack.c.h.b16 %v578
      %v1155 = vpack.c.b16 %v773, %v771
      %v1156 = vpack.c.b16 %v774, %v772
      %v1157 = vpack.c.b16 %v777, %v775
      %v1158 = vpack.c.b16 %v778, %v776
      %v1159 = vpack.c.b16 %v781, %v779
      %v1160 = vpack.c.b16 %v782, %v780
      %v1161 = vpack.c.b16 %v785, %v783
      %v1162 = vpack.c.b16 %v786, %v784
      %v1163 = vpack.c.b16 %v789, %v787
      %v1164 = vpack.c.b16 %v790, %v788
      %v1165 = vpack.c.b16 %v793, %v791
      %v1166 = vpack.c.b16 %v794, %v792
      %v1167 = vpack.c.b16 %v797, %v795
      %v1168 = vpack.c.b16 %v798, %v796
      %v1169 = vpack.c.b16 %v801, %v799
      %v1170 = vpack.c.b16 %v802, %v800
      %v1171 = vpack.c.b16 %v805, %v803
      %v1172 = vpack.c.b16 %v806, %v804
      %v1173 = vpack.c.b16 %v809, %v807
      %v1174 = vpack.c.b16 %v810, %v808
      %v1175 = vpack.c.b16 %v813, %v811
      %v1176 = vpack.c.b16 %v814, %v812
      %v1177 = vpack.c.b16 %v817, %v815
      %v1178 = vpack.c.b16 %v818, %v816
      %v1179 = vpack.c.b16 %v821, %v819
      %v1180 = vpack.c.b16 %v822, %v820
      %v1181 = vpack.c.b16 %v825, %v823
      %v1182 = vpack.c.b16 %v826, %v824
      %v1183 = vpack.c.b16 %v829, %v827
      %v1184 = vpack.c.b16 %v830, %v828
      %v1185 = vpack.c.b16 %v833, %v831
      %v1186 = vpack.c.b16 %v834, %v832
      %v1187 = vpack.c.b16 %v837, %v835
      %v1188 = vpack.c.b16 %v838, %v836
      %v1189 = vpack.c.b16 %v841, %v839
      %v1190 = vpack.c.b16 %v842, %v840
      %v1191 = vpack.c.b16 %v845, %v843
      %v1192 = vpack.c.b16 %v846, %v844
      %v1193 = vpack.c.b16 %v849, %v847
      %v1194 = vpack.c.b16 %v850, %v848
      %v1195 = vpack.c.b16 %v853, %v851
      %v1196 = vpack.c.b16 %v854, %v852
      %v1197 = vpack.c.b16 %v857, %v855
      %v1198 = vpack.c.b16 %v858, %v856
      %v1199 = vpack.c.b16 %v861, %v859
      %v1200 = vpack.c.b16 %v862, %v860
      %v1201 = vpack.c.b16 %v865, %v863
      %v1202 = vpack.c.b16 %v866, %v864
      %v1203 = vpack.c.b16 %v869, %v867
      %v1204 = vpack.c.b16 %v870, %v868
      %v1205 = vpack.c.b16 %v873, %v871
      %v1206 = vpack.c.b16 %v874, %v872
      %v1207 = vpack.c.b16 %v877, %v875
      %v1208 = vpack.c.b16 %v878, %v876
      %v1209 = vpack.c.b16 %v881, %v879
      %v1210 = vpack.c.b16 %v882, %v880
      %v1211 = vpack.c.b16 %v885, %v883
      %v1212 = vpack.c.b16 %v886, %v884
      %v1213 = vpack.c.b16 %v889, %v887
      %v1214 = vpack.c.b16 %v890, %v888
      %v1215 = vpack.c.b16 %v893, %v891
      %v1216 = vpack.c.b16 %v894, %v892
      %v1217 = vpack.c.b16 %v897, %v895
      %v1218 = vpack.c.b16 %v898, %v896
      %v1219 = vpack.c.b16 %v901, %v899
      %v1220 = vpack.c.b16 %v902, %v900
      %v1221 = vpack.c.b16 %v905, %v903
      %v1222 = vpack.c.b16 %v906, %v904
      %v1223 = vpack.c.b16 %v909, %v907
      %v1224 = vpack.c.b16 %v910, %v908
      %v1225 = vpack.c.b16 %v913, %v911
      %v1226 = vpack.c.b16 %v914, %v912
      %v1227 = vpack.c.b16 %v917, %v915
      %v1228 = vpack.c.b16 %v918, %v916
      %v1229 = vpack.c.b16 %v921, %v919
      %v1230 = vpack.c.b16 %v922, %v920
      %v1231 = vpack.c.b16 %v925, %v923
      %v1232 = vpack.c.b16 %v926, %v924
      %v1233 = vpack.c.b16 %v929, %v927
      %v1234 = vpack.c.b16 %v930, %v928
      %v1235 = vpack.c.b16 %v933, %v931
      %v1236 = vpack.c.b16 %v934, %v932
      %v1237 = vpack.c.b16 %v937, %v935
      %v1238 = vpack.c.b16 %v938, %v936
      %v1239 = vpack.c.b16 %v941, %v939
      %v1240 = vpack.c.b16 %v942, %v940
      %v1241 = vpack.c.b16 %v945, %v943
      %v1242 = vpack.c.b16 %v946, %v944
      %v1243 = vpack.c.b16 %v949, %v947
      %v1244 = vpack.c.b16 %v950, %v948
      %v1245 = vpack.c.b16 %v953, %v951
      %v1246 = vpack.c.b16 %v954, %v952
      %v1247 = vpack.c.b16 %v957, %v955
      %v1248 = vpack.c.b16 %v958, %v956
      %v1249 = vpack.c.b16 %v961, %v959
      %v1250 = vpack.c.b16 %v962, %v960
      %v1251 = vpack.c.b16 %v965, %v963
      %v1252 = vpack.c.b16 %v966, %v964
      %v1253 = vpack.c.b16 %v969, %v967
      %v1254 = vpack.c.b16 %v970, %v968
      %v1255 = vpack.c.b16 %v973, %v971
      %v1256 = vpack.c.b16 %v974, %v972
      %v1257 = vpack.c.b16 %v977, %v975
      %v1258 = vpack.c.b16 %v978, %v976
      %v1259 = vpack.c.b16 %v981, %v979
      %v1260 = vpack.c.b16 %v982, %v980
      %v1261 = vpack.c.b16 %v985, %v983
      %v1262 = vpack.c.b16 %v986, %v984
      %v1263 = vpack.c.b16 %v989, %v987
      %v1264 = vpack.c.b16 %v990, %v988
      %v1265 = vpack.c.b16 %v993, %v991
      %v1266 = vpack.c.b16 %v994, %v992
      %v1267 = vpack.c.b16 %v997, %v995
      %v1268 = vpack.c.b16 %v998, %v996
      %v1269 = vpack.c.b16 %v1001, %v999
      %v1270 = vpack.c.b16 %v1002, %v1000
      %v1271 = vpack.c.b16 %v1005, %v1003
      %v1272 = vpack.c.b16 %v1006, %v1004
      %v1273 = vpack.c.b16 %v1009, %v1007
      %v1274 = vpack.c.b16 %v1010, %v1008
      %v1275 = vpack.c.b16 %v1013, %v1011
      %v1276 = vpack.c.b16 %v1014, %v1012
      %v1277 = vpack.c.b16 %v1017, %v1015
      %v1278 = vpack.c.b16 %v1018, %v1016
      %v1279 = vpack.c.b16 %v1021, %v1019
      %v1280 = vpack.c.b16 %v1022, %v1020
      %v1281 = vpack.c.b16 %v1025, %v1023
      %v1282 = vpack.c.b16 %v1026, %v1024
      %v1283 = vpack.c.b16 %v1029, %v1027
      %v1284 = vpack.c.b16 %v1030, %v1028
      %v1285 = vpack.c.b16 %v1033, %v1031
      %v1286 = vpack.c.b16 %v1034, %v1032
      %v1287 = vpack.c.b16 %v1037, %v1035
      %v1288 = vpack.c.b16 %v1038, %v1036
      %v1289 = vpack.c.b16 %v1041, %v1039
      %v1290 = vpack.c.b16 %v1042, %v1040
      %v1291 = vpack.c.b16 %v1045, %v1043
      %v1292 = vpack.c.b16 %v1046, %v1044
      %v1293 = vpack.c.b16 %v1049, %v1047
      %v1294 = vpack.c.b16 %v1050, %v1048
      %v1295 = vpack.c.b16 %v1053, %v1051
      %v1296 = vpack.c.b16 %v1054, %v1052
      %v1297 = vpack.c.b16 %v1057, %v1055
      %v1298 = vpack.c.b16 %v1058, %v1056
      %v1299 = vpack.c.b16 %v1061, %v1059
      %v1300 = vpack.c.b16 %v1062, %v1060
      %v1301 = vpack.c.b16 %v1065, %v1063
      %v1302 = vpack.c.b16 %v1066, %v1064
      %v1303 = vpack.c.b16 %v1069, %v1067
      %v1304 = vpack.c.b16 %v1070, %v1068
      %v1305 = vpack.c.b16 %v1073, %v1071
      %v1306 = vpack.c.b16 %v1074, %v1072
      %v1307 = vpack.c.b16 %v1077, %v1075
      %v1308 = vpack.c.b16 %v1078, %v1076
      %v1309 = vpack.c.b16 %v1081, %v1079
      %v1310 = vpack.c.b16 %v1082, %v1080
      %v1311 = vpack.c.b16 %v1085, %v1083
      %v1312 = vpack.c.b16 %v1086, %v1084
      %v1313 = vpack.c.b16 %v1089, %v1087
      %v1314 = vpack.c.b16 %v1090, %v1088
      %v1315 = vpack.c.b16 %v1093, %v1091
      %v1316 = vpack.c.b16 %v1094, %v1092
      %v1317 = vpack.c.b16 %v1097, %v1095
      %v1318 = vpack.c.b16 %v1098, %v1096
      %v1319 = vpack.c.b16 %v1101, %v1099
      %v1320 = vpack.c.b16 %v1102, %v1100
      %v1321 = vpack.c.b16 %v1105, %v1103
      %v1322 = vpack.c.b16 %v1106, %v1104
      %v1323 = vpack.c.b16 %v1109, %v1107
      %v1324 = vpack.c.b16 %v1110, %v1108
      %v1325 = vpack.c.b16 %v1113, %v1111
      %v1326 = vpack.c.b16 %v1114, %v1112
      %v1327 = vpack.c.b16 %v1117, %v1115
      %v1328 = vpack.c.b16 %v1118, %v1116
      %v1329 = vpack.c.b16 %v1121, %v1119
      %v1330 = vpack.c.b16 %v1122, %v1120
      %v1331 = vpack.c.b16 %v1125, %v1123
      %v1332 = vpack.c.b16 %v1126, %v1124
      %v1333 = vpack.c.b16 %v1129, %v1127
      %v1334 = vpack.c.b16 %v1130, %v1128
      %v1335 = vpack.c.b16 %v1133, %v1131
      %v1336 = vpack.c.b16 %v1134, %v1132
      %v1337 = vpack.c.b16 %v1137, %v1135
      %v1338 = vpack.c.b16 %v1138, %v1136
      %v1339 = vpack.c.b16 %v1141, %v1139
      %v1340 = vpack.c.b16 %v1142, %v1140
      %v1341 = vpack.c.b16 %v1145, %v1143
      %v1342 = vpack.c.b16 %v1146, %v1144
      %v1343 = vpack.c.b16 %v1149, %v1147
      %v1344 = vpack.c.b16 %v1150, %v1148
      %v1345 = vpack.c.b16 %v1153, %v1151
      %v1346 = vpack.c.b16 %v1154, %v1152
      %1539 = vmatprep.subr.bf16.mxu0 %v1156
      %1540 = vmatpush1.bf16.msra.mxu0 %v1155
      %1541 = vmatprep.subr.bf16.mxu0 %v1158
      %1542 = vmatpush1.bf16.msra.mxu0 %v1157
      %1543 = vmatprep.subr.bf16.mxu0 %v1160
      %1544 = vmatpush1.bf16.msra.mxu0 %v1159
      %1545 = vmatprep.subr.bf16.mxu0 %v1162
      %1546 = vmatpush1.bf16.msra.mxu0 %v1161
      %1547 = vmatprep.subr.bf16.mxu0 %v1164
      %1548 = vmatpush1.bf16.msra.mxu0 %v1163
      %1549 = vmatprep.subr.bf16.mxu0 %v1166
      %1550 = vmatpush1.bf16.msra.mxu0 %v1165
      %1551 = vmatprep.subr.bf16.mxu0 %v1168
      %1552 = vmatpush1.bf16.msra.mxu0 %v1167
      %1553 = vmatprep.subr.bf16.mxu0 %v1170
      %1554 = vmatpush1.bf16.msra.mxu0 %v1169
      %1555 = vmatprep.subr.bf16.mxu0 %v1172
      %1556 = vmatpush1.bf16.msra.mxu0 %v1171
      %1557 = vmatprep.subr.bf16.mxu0 %v1174
      %1558 = vmatpush1.bf16.msra.mxu0 %v1173
      %1559 = vmatprep.subr.bf16.mxu0 %v1176
      %1560 = vmatpush1.bf16.msra.mxu0 %v1175
      %1561 = vmatprep.subr.bf16.mxu0 %v1178
      %1562 = vmatpush1.bf16.msra.mxu0 %v1177
      %1563 = vmatprep.subr.bf16.mxu0 %v1180
      %1564 = vmatpush1.bf16.msra.mxu0 %v1179
      %1565 = vmatprep.subr.bf16.mxu0 %v1182
      %1566 = vmatpush1.bf16.msra.mxu0 %v1181
      %1567 = vmatprep.subr.bf16.mxu0 %v1184
      %1568 = vmatpush1.bf16.msra.mxu0 %v1183
      %1569 = vmatprep.subr.bf16.mxu0 %v1186
      %1570 = vmatpush1.bf16.msra.mxu0 %v1185
      %1571 = vmatprep.mubr.bf16.mxu0 %v376
      %1572 = vmatmul.mubr.bf16.gmra.mrb[0].mxu0 %v375
      %v1573 = vpop.f32.mrb[0].mxu0
      %v1574 = vadd.f32 0.0, %v1573
      %v1575 = vpop.f32.mrb[0].mxu0
      %v1576 = vadd.f32 0.0, %v1575
      %v1577 = vpop.f32.mrb[0].mxu0
      %v1578 = vpop.f32.mrb[0].mxu0
      %1579 = vdwg.mxu0
      %1580 = vmatprep.subr.bf16.mxu0 %v1188
      %1581 = vmatpush1.bf16.msra.mxu0 %v1187
      %1582 = vmatprep.subr.bf16.mxu0 %v1190
      %1583 = vmatpush1.bf16.msra.mxu0 %v1189
      %1584 = vmatprep.subr.bf16.mxu0 %v1192
      %1585 = vmatpush1.bf16.msra.mxu0 %v1191
      %1586 = vmatprep.subr.bf16.mxu0 %v1194
      %1587 = vmatpush1.bf16.msra.mxu0 %v1193
      %1588 = vmatprep.subr.bf16.mxu0 %v1196
      %1589 = vmatpush1.bf16.msra.mxu0 %v1195
      %1590 = vmatprep.subr.bf16.mxu0 %v1198
      %1591 = vmatpush1.bf16.msra.mxu0 %v1197
      %1592 = vmatprep.subr.bf16.mxu0 %v1200
      %1593 = vmatpush1.bf16.msra.mxu0 %v1199
      %1594 = vmatprep.subr.bf16.mxu0 %v1202
      %1595 = vmatpush1.bf16.msra.mxu0 %v1201
      %1596 = vmatprep.subr.bf16.mxu0 %v1204
      %1597 = vmatpush1.bf16.msra.mxu0 %v1203
      %1598 = vmatprep.subr.bf16.mxu0 %v1206
      %1599 = vmatpush1.bf16.msra.mxu0 %v1205
      %1600 = vmatprep.subr.bf16.mxu0 %v1208
      %1601 = vmatpush1.bf16.msra.mxu0 %v1207
      %1602 = vmatprep.subr.bf16.mxu0 %v1210
      %1603 = vmatpush1.bf16.msra.mxu0 %v1209
      %1604 = vmatprep.subr.bf16.mxu0 %v1212
      %1605 = vmatpush1.bf16.msra.mxu0 %v1211
      %1606 = vmatprep.subr.bf16.mxu0 %v1214
      %1607 = vmatpush1.bf16.msra.mxu0 %v1213
      %1608 = vmatprep.subr.bf16.mxu0 %v1216
      %1609 = vmatpush1.bf16.msra.mxu0 %v1215
      %1610 = vmatprep.subr.bf16.mxu0 %v1218
      %1611 = vmatpush1.bf16.msra.mxu0 %v1217
      %1612 = vmatprep.mubr.bf16.mxu0 %v378
      %1613 = vmatmul.mubr.bf16.gmra.mrb[0].mxu0 %v377
      %v1614 = vpop.f32.mrb[0].mxu0
      %v1615 = vadd.f32 %v1574, %v1614
      %v1616 = vpop.f32.mrb[0].mxu0
      %v1617 = vadd.f32 %v1576, %v1616
      %v1618 = vpop.f32.mrb[0].mxu0
      %v1619 = vpop.f32.mrb[0].mxu0
      %1620 = vdwg.mxu0
      %1621 = vmatprep.subr.bf16.mxu0 %v1220
      %1622 = vmatpush1.bf16.msra.mxu0 %v1219
      %1623 = vmatprep.subr.bf16.mxu0 %v1222
      %1624 = vmatpush1.bf16.msra.mxu0 %v1221
      %1625 = vmatprep.subr.bf16.mxu0 %v1224
      %1626 = vmatpush1.bf16.msra.mxu0 %v1223
      %1627 = vmatprep.subr.bf16.mxu0 %v1226
      %1628 = vmatpush1.bf16.msra.mxu0 %v1225
      %1629 = vmatprep.subr.bf16.mxu0 %v1228
      %1630 = vmatpush1.bf16.msra.mxu0 %v1227
      %1631 = vmatprep.subr.bf16.mxu0 %v1230
      %1632 = vmatpush1.bf16.msra.mxu0 %v1229
      %1633 = vmatprep.subr.bf16.mxu0 %v1232
      %1634 = vmatpush1.bf16.msra.mxu0 %v1231
      %1635 = vmatprep.subr.bf16.mxu0 %v1234
      %1636 = vmatpush1.bf16.msra.mxu0 %v1233
      %1637 = vmatprep.subr.bf16.mxu0 %v1236
      %1638 = vmatpush1.bf16.msra.mxu0 %v1235
      %1639 = vmatprep.subr.bf16.mxu0 %v1238
      %1640 = vmatpush1.bf16.msra.mxu0 %v1237
      %1641 = vmatprep.subr.bf16.mxu0 %v1240
      %1642 = vmatpush1.bf16.msra.mxu0 %v1239
      %1643 = vmatprep.subr.bf16.mxu0 %v1242
      %1644 = vmatpush1.bf16.msra.mxu0 %v1241
      %1645 = vmatprep.subr.bf16.mxu0 %v1244
      %1646 = vmatpush1.bf16.msra.mxu0 %v1243
      %1647 = vmatprep.subr.bf16.mxu0 %v1246
      %1648 = vmatpush1.bf16.msra.mxu0 %v1245
      %1649 = vmatprep.subr.bf16.mxu0 %v1248
      %1650 = vmatpush1.bf16.msra.mxu0 %v1247
      %1651 = vmatprep.subr.bf16.mxu0 %v1250
      %1652 = vmatpush1.bf16.msra.mxu0 %v1249
      %1653 = vmatprep.mubr.bf16.mxu0 %v380
      %1654 = vmatmul.mubr.bf16.gmra.mrb[0].mxu0 %v379
      %v1655 = vpop.f32.mrb[0].mxu0
      %v1656 = vadd.f32 %v1615, %v1655
      %v1657 = vpop.f32.mrb[0].mxu0
      %v1658 = vadd.f32 %v1617, %v1657
      %v1659 = vpop.f32.mrb[0].mxu0
      %v1660 = vpop.f32.mrb[0].mxu0
      %1661 = vdwg.mxu0
      %1662 = vmatprep.subr.bf16.mxu0 %v1252
      %1663 = vmatpush1.bf16.msra.mxu0 %v1251
      %1664 = vmatprep.subr.bf16.mxu0 %v1254
      %1665 = vmatpush1.bf16.msra.mxu0 %v1253
      %1666 = vmatprep.subr.bf16.mxu0 %v1256
      %1667 = vmatpush1.bf16.msra.mxu0 %v1255
      %1668 = vmatprep.subr.bf16.mxu0 %v1258
      %1669 = vmatpush1.bf16.msra.mxu0 %v1257
      %1670 = vmatprep.subr.bf16.mxu0 %v1260
      %1671 = vmatpush1.bf16.msra.mxu0 %v1259
      %1672 = vmatprep.subr.bf16.mxu0 %v1262
      %1673 = vmatpush1.bf16.msra.mxu0 %v1261
      %1674 = vmatprep.subr.bf16.mxu0 %v1264
      %1675 = vmatpush1.bf16.msra.mxu0 %v1263
      %1676 = vmatprep.subr.bf16.mxu0 %v1266
      %1677 = vmatpush1.bf16.msra.mxu0 %v1265
      %1678 = vmatprep.subr.bf16.mxu0 %v1268
      %1679 = vmatpush1.bf16.msra.mxu0 %v1267
      %1680 = vmatprep.subr.bf16.mxu0 %v1270
      %1681 = vmatpush1.bf16.msra.mxu0 %v1269
      %1682 = vmatprep.subr.bf16.mxu0 %v1272
      %1683 = vmatpush1.bf16.msra.mxu0 %v1271
      %1684 = vmatprep.subr.bf16.mxu0 %v1274
      %1685 = vmatpush1.bf16.msra.mxu0 %v1273
      %1686 = vmatprep.subr.bf16.mxu0 %v1276
      %1687 = vmatpush1.bf16.msra.mxu0 %v1275
      %1688 = vmatprep.subr.bf16.mxu0 %v1278
      %1689 = vmatpush1.bf16.msra.mxu0 %v1277
      %1690 = vmatprep.subr.bf16.mxu0 %v1280
      %1691 = vmatpush1.bf16.msra.mxu0 %v1279
      %1692 = vmatprep.subr.bf16.mxu0 %v1282
      %1693 = vmatpush1.bf16.msra.mxu0 %v1281
      %1694 = vmatprep.mubr.bf16.mxu0 %v382
      %1695 = vmatmul.mubr.bf16.gmra.mrb[0].mxu0 %v381
      %v1696 = vpop.f32.mrb[0].mxu0
      %v1697 = vadd.f32 %v1656, %v1696
      %v1698 = vpop.f32.mrb[0].mxu0
      %v1699 = vadd.f32 %v1658, %v1698
      %v1700 = vpop.f32.mrb[0].mxu0
      %v1701 = vpop.f32.mrb[0].mxu0
      %1702 = vdwg.mxu0
      %1703 = vmatprep.subr.bf16.mxu0 %v1284
      %1704 = vmatpush1.bf16.msra.mxu0 %v1283
      %1705 = vmatprep.subr.bf16.mxu0 %v1286
      %1706 = vmatpush1.bf16.msra.mxu0 %v1285
      %1707 = vmatprep.subr.bf16.mxu0 %v1288
      %1708 = vmatpush1.bf16.msra.mxu0 %v1287
      %1709 = vmatprep.subr.bf16.mxu0 %v1290
      %1710 = vmatpush1.bf16.msra.mxu0 %v1289
      %1711 = vmatprep.subr.bf16.mxu0 %v1292
      %1712 = vmatpush1.bf16.msra.mxu0 %v1291
      %1713 = vmatprep.subr.bf16.mxu0 %v1294
      %1714 = vmatpush1.bf16.msra.mxu0 %v1293
      %1715 = vmatprep.subr.bf16.mxu0 %v1296
      %1716 = vmatpush1.bf16.msra.mxu0 %v1295
      %1717 = vmatprep.subr.bf16.mxu0 %v1298
      %1718 = vmatpush1.bf16.msra.mxu0 %v1297
      %1719 = vmatprep.subr.bf16.mxu0 %v1300
      %1720 = vmatpush1.bf16.msra.mxu0 %v1299
      %1721 = vmatprep.subr.bf16.mxu0 %v1302
      %1722 = vmatpush1.bf16.msra.mxu0 %v1301
      %1723 = vmatprep.subr.bf16.mxu0 %v1304
      %1724 = vmatpush1.bf16.msra.mxu0 %v1303
      %1725 = vmatprep.subr.bf16.mxu0 %v1306
      %1726 = vmatpush1.bf16.msra.mxu0 %v1305
      %1727 = vmatprep.subr.bf16.mxu0 %v1308
      %1728 = vmatpush1.bf16.msra.mxu0 %v1307
      %1729 = vmatprep.subr.bf16.mxu0 %v1310
      %1730 = vmatpush1.bf16.msra.mxu0 %v1309
      %1731 = vmatprep.subr.bf16.mxu0 %v1312
      %1732 = vmatpush1.bf16.msra.mxu0 %v1311
      %1733 = vmatprep.subr.bf16.mxu0 %v1314
      %1734 = vmatpush1.bf16.msra.mxu0 %v1313
      %1735 = vmatprep.mubr.bf16.mxu0 %v384
      %1736 = vmatmul.mubr.bf16.gmra.mrb[0].mxu0 %v383
      %v1737 = vpop.f32.mrb[0].mxu0
      %v1738 = vadd.f32 %v1697, %v1737
      %v1739 = vpop.f32.mrb[0].mxu0
      %v1740 = vadd.f32 %v1699, %v1739
      %v1741 = vpop.f32.mrb[0].mxu0
      %v1742 = vpop.f32.mrb[0].mxu0
      %1743 = vdwg.mxu0
      %1744 = vmatprep.subr.bf16.mxu0 %v1316
      %1745 = vmatpush1.bf16.msra.mxu0 %v1315
      %1746 = vmatprep.subr.bf16.mxu0 %v1318
      %1747 = vmatpush1.bf16.msra.mxu0 %v1317
      %1748 = vmatprep.subr.bf16.mxu0 %v1320
      %1749 = vmatpush1.bf16.msra.mxu0 %v1319
      %1750 = vmatprep.subr.bf16.mxu0 %v1322
      %1751 = vmatpush1.bf16.msra.mxu0 %v1321
      %1752 = vmatprep.subr.bf16.mxu0 %v1324
      %1753 = vmatpush1.bf16.msra.mxu0 %v1323
      %1754 = vmatprep.subr.bf16.mxu0 %v1326
      %1755 = vmatpush1.bf16.msra.mxu0 %v1325
      %1756 = vmatprep.subr.bf16.mxu0 %v1328
      %1757 = vmatpush1.bf16.msra.mxu0 %v1327
      %1758 = vmatprep.subr.bf16.mxu0 %v1330
      %1759 = vmatpush1.bf16.msra.mxu0 %v1329
      %1760 = vmatprep.subr.bf16.mxu0 %v1332
      %1761 = vmatpush1.bf16.msra.mxu0 %v1331
      %1762 = vmatprep.subr.bf16.mxu0 %v1334
      %1763 = vmatpush1.bf16.msra.mxu0 %v1333
      %1764 = vmatprep.subr.bf16.mxu0 %v1336
      %1765 = vmatpush1.bf16.msra.mxu0 %v1335
      %1766 = vmatprep.subr.bf16.mxu0 %v1338
      %1767 = vmatpush1.bf16.msra.mxu0 %v1337
      %1768 = vmatprep.subr.bf16.mxu0 %v1340
      %1769 = vmatpush1.bf16.msra.mxu0 %v1339
      %1770 = vmatprep.subr.bf16.mxu0 %v1342
      %1771 = vmatpush1.bf16.msra.mxu0 %v1341
      %1772 = vmatprep.subr.bf16.mxu0 %v1344
      %1773 = vmatpush1.bf16.msra.mxu0 %v1343
      %1774 = vmatprep.subr.bf16.mxu0 %v1346
      %1775 = vmatpush1.bf16.msra.mxu0 %v1345
      %1776 = vmatprep.mubr.bf16.mxu0 %v386
      %1777 = vmatmul.mubr.bf16.gmra.mrb[0].mxu0 %v385
      %v1778 = vpop.f32.mrb[0].mxu0
      %v1779 = vadd.f32 %v1738, %v1778
      %v1780 = vpop.f32.mrb[0].mxu0
      %v1781 = vadd.f32 %v1740, %v1780
      %v1782 = vpop.f32.mrb[0].mxu0
      %v1783 = vpop.f32.mrb[0].mxu0
      %1784 = vdwg.mxu0
      %v1785 = vld [vmem:[%s3] sm:$0x3]
      %v1787 = vlaneseq
      %v1788 = vshrl.u32 %v1787, 7
      %v1789 = vsub.s32 0, %v1788
      %v1790 = vrot.slane %v1785, %v1789
      %v1791 = vlaneseq
      %v1792 = vshrl.u32 %v1791, 7
      %v1793 = vsub.s32 1, %v1792
      %v1794 = vrot.slane %v1785, %v1793
      %v1797 = vmul.f32 %v1779, %v1790
      %v1798 = vmul.f32 %v1781, %v1794
      %v1799 = vld [vmem:[%s4] sm:$0x3]
      %v1801 = vlaneseq
      %v1802 = vshrl.u32 %v1801, 7
      %v1803 = vsub.s32 0, %v1802
      %v1804 = vrot.slane %v1799, %v1803
      %v1805 = vlaneseq
      %v1806 = vshrl.u32 %v1805, 7
      %v1807 = vsub.s32 1, %v1806
      %v1808 = vrot.slane %v1799, %v1807
      %v1811 = vadd.f32 %v1797, %v1804
      %v1812 = vadd.f32 %v1798, %v1808
      %v1815 = vcombine.low %v1811, %v1812
      %1817 = vst [vmem:[%s277] sm:$0xff] %v1815
      %p1818 = scmp.lt.s32.totalorder %s20, 1
      %s1819 = scalar_select %p1818, %s20, 1
      %p1820 = scmp.lt.s32.totalorder %s21, 0
      %s1821 = scalar_select %p1820, %s21, 0
      %s1822 = smul.addr %s1821, 2
      %s1823 = smul.addr %s1819, 2
      %s1824 = sadd.s32 %s1822, %s1823
      %s1825 = smul.addr %s1824, 4
      %s1826 = scalar_lea.vmem %s5, %s1825
      // Predicated region
      $region41: #{fph_forward.19} parent=39 // pred_check
        %p1827 = pneg %p165
      $region42: #{fph_forward.19} parent=39 // pred_check_branch
        %1829 = sbr.rel (%p1827) target = $region44
      $region43: #{fph_forward.19} parent=39 // pred_region
        _
      $region44: #{fph_forward.19} parent=39 // pred_fallthru
        _
    $region40: #{fph_forward.19} parent=5 // pred_fallthru
      _
    %p1830 = scmp.le.s32.totalorder 2, %s11
    // Predicated region
    $region45: #{fph_forward.19} parent=5 // pred_check
      %p1831 = pneg %p1830
    $region46: #{fph_forward.19} parent=5 // pred_check_branch
      %1833 = sbr.rel (%p1831) target = $region48
    $region47: #{fph_forward.19} parent=5 // pred_region
      %s1834 = ssub.s32 %s11, 2
      // Predicated region
      $region49: #{fph_forward.19} parent=47 // pred_check
        %p1835 = pneg %p171
      $region50: #{fph_forward.19} parent=47 // pred_check_branch
        %1837 = sbr.rel (%p1835) target = $region52
      $region51: #{fph_forward.19} parent=47 // pred_region
        %p1838 = scmp.lt.s32.totalorder %s22, 1
        %s1839 = scalar_select %p1838, %s22, 1
        %p1840 = scmp.lt.s32.totalorder %s23, 0
        %s1841 = scalar_select %p1840, %s23, 0
        %s1842 = smul.addr %s1841, 2
        %s1843 = smul.addr %s1839, 2
        %s1844 = sadd.s32 %s1842, %s1843
        %s1845 = smul.addr %s1844, 4
        %s1846 = scalar_lea.vmem %s5, %s1845
      $region52: #{fph_forward.19} parent=47 // pred_fallthru
        _
    $region48: #{fph_forward.19} parent=5 // pred_fallthru
      _
  $region6: #{fph_forward.19} parent=0 // loop_footer
    %s15 = sadd.s32 1, %s11
  $region7: #{fph_forward.19} parent=0 // loop_footer_branch
    %10 = sbr.rel target = $region3
  $region8: #{fph_forward.19} parent=0 // loop_exit
    _

</llo_original>
